<compile_context>
chip_gen: v5e
topology: v5e:2x2
jax: 0.10.0
libtpu: 0.0.40
codegen_flags: <defaults>
</compile_context>

<pallas_src>
import jax
import jax.numpy as jnp
import numpy as np
from jax.experimental import pallas as pl
from jax.experimental.pallas import tpu as pltpu

# ----- synthetic encoder config (small BERT-like) -----
VOCAB = 64
SEQ = 8
HIDDEN = 32
N_HEADS = 4
HEAD_DIM = HIDDEN // N_HEADS
N_LAYERS = 2
INTER = 64
LN_EPS = 1e-12


def _layer_norm(x, g, b):
    mu = jnp.mean(x, axis=-1, keepdims=True)
    var = jnp.mean(jnp.square(x - mu), axis=-1, keepdims=True)
    return (x - mu) * jax.lax.rsqrt(var + LN_EPS) * g + b


# ---------------------------------------------------------------------------
# Pallas kernel: one grid step == one tile of B_TILE sequences.
# ---------------------------------------------------------------------------
def make_encoder_kernel(representation, b_tile):
    S, H, L = SEQ, HIDDEN, N_LAYERS
    HD, NH = HEAD_DIM, N_HEADS
    scale = 1.0 / (HD ** 0.5)

    def kernel(x_ref, mask_ref, w_qkvo_ref, b_qkvo_ref,
               w1_ref, b1_ref, w2_ref, b2_ref, ln_ref, out_ref):
        # Activations: flatten the whole tile for the shared-weight matmuls.
        x = x_ref[...].reshape(b_tile * S, H)              # [BT*S, H] f32
        m = mask_ref[...]                                  # [BT, 1, S] f32 (1=keep)

        # Weights (tiny: load once per step).
        w_qkvo = w_qkvo_ref[...]                           # [L, H, 4H] bf16
        b_qkvo = b_qkvo_ref[...]                           # [L, 1, 4H] f32
        w1 = w1_ref[...]                                   # [L, H, I]  bf16
        b1 = b1_ref[...]                                   # [L, 1, I]  f32
        w2 = w2_ref[...]                                   # [L, I, H]  bf16
        b2 = b2_ref[...]                                   # [L, 1, H]  f32
        ln = ln_ref[...]                                   # [1+2L, 2, H] f32

        # Embedding layer norm (f32).
        x = _layer_norm(x, ln[0, 0:1, :], ln[0, 1:2, :])

        bias = (1.0 - m) * -1e9                            # [BT, 1, S] additive key mask

        for l in range(L):
            w_l = w_qkvo[l]                                # [H, 4H] bf16 (qkv | wo)
            b_l = b_qkvo[l]                                # [1, 4H] f32

            # Fused QKV projection: one fat bf16 matmul, f32 accumulation.
            qkv = jnp.dot(x.astype(jnp.bfloat16), w_l[:, :3 * H],
                          preferred_element_type=jnp.float32) + b_l[:, :3 * H]
            q = qkv[:, 0:H].reshape(b_tile, S, H)
            k = qkv[:, H:2 * H].reshape(b_tile, S, H)
            v = qkv[:, 2 * H:3 * H].reshape(b_tile, S, H)

            wo_l = w_l[:, 3 * H:4 * H]                     # [H, H] bf16
            attn_out = jnp.zeros((b_tile * S, H), jnp.float32)
            for h in range(NH):                            # heads unrolled; seqs batched
                sl = slice(h * HD, (h + 1) * HD)
                qh = (q[..., sl] * scale).astype(jnp.bfloat16)   # [BT, S, HD]
                kh = k[..., sl].astype(jnp.bfloat16)
                vh = v[..., sl].astype(jnp.bfloat16)
                s = jnp.einsum('bqd,bkd->bqk', qh, kh,
                               preferred_element_type=jnp.float32) + bias
                s = s - jnp.max(s, axis=-1, keepdims=True)
                p = jnp.exp(s)
                p = p * pl.reciprocal(jnp.sum(p, axis=-1, keepdims=True), approx=True)
                ctx = jnp.einsum('bqk,bkd->bqd', p.astype(jnp.bfloat16), vh,
                                 preferred_element_type=jnp.float32)  # [BT, S, HD]
                # Fused per-head output projection: avoids lane-concat of heads.
                attn_out = attn_out + jnp.dot(
                    ctx.reshape(b_tile * S, HD).astype(jnp.bfloat16), wo_l[sl, :],
                    preferred_element_type=jnp.float32)
            attn_out = attn_out + b_l[:, 3 * H:4 * H]
            x = _layer_norm(x + attn_out, ln[1 + 2 * l, 0:1, :], ln[1 + 2 * l, 1:2, :])

            # FFN (bf16 matmuls, f32 accumulation; GELU in f32).
            hmid = jnp.dot(x.astype(jnp.bfloat16), w1[l],
                           preferred_element_type=jnp.float32) + b1[l]
            hmid = jax.nn.gelu(hmid)
            ffn = jnp.dot(hmid.astype(jnp.bfloat16), w2[l],
                          preferred_element_type=jnp.float32) + b2[l]
            x = _layer_norm(x + ffn, ln[2 + 2 * l, 0:1, :], ln[2 + 2 * l, 1:2, :])

        x3 = x.reshape(b_tile, S, H)
        if representation == 'cls':
            out_ref[...] = x3[:, 0, :]                     # [BT, H] dense store
        else:  # 'mean': masked mean pool then L2 normalize
            pooled = jnp.einsum('bos,bsh->boh', m, x3,
                                preferred_element_type=jnp.float32)  # [BT, 1, H]
            denom = jnp.sum(m, axis=-1, keepdims=True)               # [BT, 1, 1]
            pooled = pooled * pl.reciprocal(denom, approx=True)
            sumsq = jnp.sum(pooled * pooled, axis=-1, keepdims=True)
            pooled = pooled * jax.lax.rsqrt(jnp.maximum(sumsq, 1e-24))
            out_ref[...] = pooled.reshape(b_tile, H)

    return kernel


def _const_spec(shape):
    rank = len(shape)
    return pl.BlockSpec(shape, lambda t, _r=rank: (0,) * _r)


def _pack_weights(params):
    """Pack 18 parameter arrays into 7 kernel inputs (fewer DMA descriptors)."""
    w_qkvo = jnp.concatenate(
        [params['wq'], params['wk'], params['wv'], params['wo']],
        axis=-1).astype(jnp.bfloat16)                               # [L, H, 4H]
    b_qkvo = jnp.concatenate(
        [params['bq'], params['bk'], params['bv'], params['bo']],
        axis=-1).astype(jnp.float32)                                # [L, 1, 4H]
    rows = [jnp.concatenate([params['ln_e_g'], params['ln_e_b']], axis=0)]
    for l in range(N_LAYERS):
        rows.append(jnp.concatenate([params['ln1_g'][l], params['ln1_b'][l]], axis=0))
        rows.append(jnp.concatenate([params['ln2_g'][l], params['ln2_b'][l]], axis=0))
    ln_gb = jnp.stack(rows, axis=0).astype(jnp.float32)             # [1+2L, 2, H]
    return (w_qkvo, b_qkvo,
            params['w1'].astype(jnp.bfloat16), params['b1'].astype(jnp.float32),
            params['w2'].astype(jnp.bfloat16), params['b2'].astype(jnp.float32),
            ln_gb)


def encoder_pooled(params, input_ids, attention_mask, representation='cls'):
    """Encoder.get_representation(): pooled [B, H] output via the Pallas kernel."""
    B, S = input_ids.shape
    emb = (params['word_emb'][input_ids]
           + params['pos_emb'][None, :S, :]
           + params['type_emb'][0][None, None, :]).astype(jnp.float32)
    mask3 = attention_mask.astype(jnp.float32).reshape(B, 1, S)
    weights = _pack_weights(params)

    # Tile choice: one fat tile (whole batch) on single-TC v5e/v6e-style usage;
    # when the batch allows, split into 2 "parallel" grid steps with sublane-
    # dense (multiple-of-8) tiles so both v7x TensorCores get work.
    if B >= 16 and B % 16 == 0:
        b_tile = B // 2
    else:
        b_tile = B
    grid = (B // b_tile,)

    in_specs = [pl.BlockSpec((b_tile, S, HIDDEN), lambda t: (t, 0, 0)),
                pl.BlockSpec((b_tile, 1, S), lambda t: (t, 0, 0))]
    in_specs += [_const_spec(tuple(w.shape)) for w in weights]

    out = pl.pallas_call(
        make_encoder_kernel(representation, b_tile),
        out_shape=jax.ShapeDtypeStruct((B, HIDDEN), jnp.float32),
        grid_spec=pltpu.PrefetchScalarGridSpec(
            num_scalar_prefetch=0,
            grid=grid,
            in_specs=in_specs,
            out_specs=pl.BlockSpec((b_tile, HIDDEN), lambda t: (t, 0)),
        ),
        compiler_params=pltpu.CompilerParams(dimension_semantics=("parallel",)),
    )(emb, mask3, *weights)
    return out


# ---------------------------------------------------------------------------
# Pure-JAX f32 reference (module semantics) for correctness checking.
# ---------------------------------------------------------------------------
def encoder_pooled_ref(params, input_ids, attention_mask, representation='cls'):
    B, S = input_ids.shape
    x = (params['word_emb'][input_ids]
         + params['pos_emb'][None, :S, :]
         + params['type_emb'][0][None, None, :]).astype(jnp.float32)
    m = attention_mask.astype(jnp.float32)                       # [B, S]
    x = _layer_norm(x, params['ln_e_g'], params['ln_e_b'])
    bias = (1.0 - m)[:, None, :] * -1e9                          # [B, 1, S]
    scale = 1.0 / (HEAD_DIM ** 0.5)
    for l in range(N_LAYERS):
        q = x @ params['wq'][l] + params['bq'][l]
        k = x @ params['wk'][l] + params['bk'][l]
        v = x @ params['wv'][l] + params['bv'][l]
        heads = []
        for h in range(N_HEADS):
            sl = slice(h * HEAD_DIM, (h + 1) * HEAD_DIM)
            qh, kh, vh = q[..., sl], k[..., sl], v[..., sl]
            s = jnp.einsum('bqd,bkd->bqk', qh, kh) * scale + bias
            p = jax.nn.softmax(s, axis=-1)
            heads.append(jnp.einsum('bqk,bkd->bqd', p, vh))
        ctx = jnp.concatenate(heads, axis=-1)
        x = _layer_norm(x + ctx @ params['wo'][l] + params['bo'][l],
                        params['ln1_g'][l], params['ln1_b'][l])
        hmid = jax.nn.gelu(x @ params['w1'][l] + params['b1'][l])
        x = _layer_norm(x + hmid @ params['w2'][l] + params['b2'][l],
                        params['ln2_g'][l], params['ln2_b'][l])
    if representation == 'cls':
        return x[:, 0, :]
    s = jnp.sum(x * m[..., None], axis=1)
    d = jnp.sum(m, axis=1, keepdims=True)
    pooled = s / d
    return pooled / jnp.maximum(jnp.linalg.norm(pooled, axis=-1, keepdims=True), 1e-12)


# ---------------------------------------------------------------------------
# BiEncoder: two encoders (query / context) sharing the same kernel code.
# ---------------------------------------------------------------------------
class BiEncoderPallas:
    def __init__(self, q_params, ctx_params, representation='cls'):
        self.q_params = q_params
        self.ctx_params = ctx_params
        self.representation = representation

    def __call__(self, q_ids, q_attn_mask, ctx_ids, ctx_attn_mask):
        q_out = encoder_pooled(self.q_params, q_ids, q_attn_mask, self.representation)
        ctx_out = encoder_pooled(self.ctx_params, ctx_ids, ctx_attn_mask, self.representation)
        return (q_out, ctx_out)

    def get_models(self):
        return (self.q_params, self.ctx_params)


def init_encoder_params(key):
    ks = iter(jax.random.split(key, 24))

    def nrm(shape, scale=0.02):
        return (scale * jax.random.normal(next(ks), shape)).astype(jnp.float32)

    L, H, I = N_LAYERS, HIDDEN, INTER
    return dict(
        word_emb=nrm((VOCAB, H), 0.05),
        pos_emb=nrm((SEQ, H), 0.05),
        type_emb=nrm((2, H), 0.05),
        ln_e_g=1.0 + nrm((1, H), 0.1),
        ln_e_b=nrm((1, H), 0.1),
        wq=nrm((L, H, H)), bq=nrm((L, 1, H)),
        wk=nrm((L, H, H)), bk=nrm((L, 1, H)),
        wv=nrm((L, H, H)), bv=nrm((L, 1, H)),
        wo=nrm((L, H, H)), bo=nrm((L, 1, H)),
        ln1_g=1.0 + nrm((L, 1, H), 0.1), ln1_b=nrm((L, 1, H), 0.1),
        w1=nrm((L, H, I)), b1=nrm((L, 1, I)),
        w2=nrm((L, I, H)), b2=nrm((L, 1, H)),
        ln2_g=1.0 + nrm((L, 1, H), 0.1), ln2_b=nrm((L, 1, H), 0.1),
    )


if __name__ == "__main__":
    q_params = init_encoder_params(jax.random.PRNGKey(1))
    ctx_params = init_encoder_params(jax.random.PRNGKey(2))

    B = 16                                   # 2 grid steps x 8-sequence tiles
    key = jax.random.PRNGKey(0)
    k_qid, k_cid = jax.random.split(key, 2)
    q_ids = jax.random.randint(k_qid, (B, SEQ), 0, VOCAB, dtype=jnp.int32)
    ctx_ids = jax.random.randint(k_cid, (B, SEQ), 0, VOCAB, dtype=jnp.int32)

    pos = jnp.arange(SEQ, dtype=jnp.int32)[None, :]
    q_len = 1 + (jnp.arange(B, dtype=jnp.int32) % SEQ)
    c_len = 1 + ((jnp.arange(B, dtype=jnp.int32) * 3 + 2) % SEQ)
    q_mask = (pos < q_len[:, None]).astype(jnp.int32)
    ctx_mask = (pos < c_len[:, None]).astype(jnp.int32)

    # Kernel uses bf16 matmuls + approx reciprocals; reference is pure f32,
    # hence the looser tolerance.
    TOL = dict(atol=2e-2, rtol=2e-2)

    # 'cls' representation (module default)
    model = BiEncoderPallas(q_params, ctx_params, representation='cls')
    q_out, ctx_out = model(q_ids, q_mask, ctx_ids, ctx_mask)
    jax.block_until_ready((q_out, ctx_out))
    q_ref = encoder_pooled_ref(q_params, q_ids, q_mask, 'cls')
    c_ref = encoder_pooled_ref(ctx_params, ctx_ids, ctx_mask, 'cls')
    assert np.allclose(np.asarray(q_out), np.asarray(q_ref), **TOL)
    assert np.allclose(np.asarray(ctx_out), np.asarray(c_ref), **TOL)

    # 'mean' representation path (masked mean pool + L2 normalize)
    model_mean = BiEncoderPallas(q_params, ctx_params, representation='mean')
    q_out_m, ctx_out_m = model_mean(q_ids, q_mask, ctx_ids, ctx_mask)
    jax.block_until_ready((q_out_m, ctx_out_m))
    q_ref_m = encoder_pooled_ref(q_params, q_ids, q_mask, 'mean')
    c_ref_m = encoder_pooled_ref(ctx_params, ctx_ids, ctx_mask, 'mean')
    assert np.allclose(np.asarray(q_out_m), np.asarray(q_ref_m), **TOL)
    assert np.allclose(np.asarray(ctx_out_m), np.asarray(c_ref_m), **TOL)

    print("KERNEL_OK")
</pallas_src>

<mosaic_0001>
module attributes {stable_mosaic.version = 11 : i64} {
  func.func @kernel(%arg0: i32, %arg1: memref<8x8x32xf32, #tpu.memory_space<vmem>>, %arg2: memref<8x1x8xf32, #tpu.memory_space<vmem>>, %arg3: memref<2x32x128xbf16, #tpu.memory_space<vmem>>, %arg4: memref<2x1x128xf32, #tpu.memory_space<vmem>>, %arg5: memref<2x32x64xbf16, #tpu.memory_space<vmem>>, %arg6: memref<2x1x64xf32, #tpu.memory_space<vmem>>, %arg7: memref<2x64x32xbf16, #tpu.memory_space<vmem>>, %arg8: memref<2x1x32xf32, #tpu.memory_space<vmem>>, %arg9: memref<5x2x32xf32, #tpu.memory_space<vmem>>, %arg10: memref<8x32xf32, #tpu.memory_space<vmem>>) attributes {dimension_semantics = [#tpu.dimension_semantics<parallel>], iteration_bounds = array<i64: 2>, scalar_prefetch = 0 : i64, scratch_operands = 0 : i64, tpu.core_type = #tpu.core_type<tc>, window_params = [{transform_indices = @transform_0, window_bounds = array<i64: 8, 8, 32>}, {transform_indices = @transform_1, window_bounds = array<i64: 8, 1, 8>}, {pipeline_mode = #tpu.pipeline_mode<synchronous>, transform_indices = @transform_2, window_bounds = array<i64: 2, 32, 128>}, {pipeline_mode = #tpu.pipeline_mode<synchronous>, transform_indices = @transform_3, window_bounds = array<i64: 2, 1, 128>}, {pipeline_mode = #tpu.pipeline_mode<synchronous>, transform_indices = @transform_4, window_bounds = array<i64: 2, 32, 64>}, {pipeline_mode = #tpu.pipeline_mode<synchronous>, transform_indices = @transform_5, window_bounds = array<i64: 2, 1, 64>}, {pipeline_mode = #tpu.pipeline_mode<synchronous>, transform_indices = @transform_6, window_bounds = array<i64: 2, 64, 32>}, {pipeline_mode = #tpu.pipeline_mode<synchronous>, transform_indices = @transform_7, window_bounds = array<i64: 2, 1, 32>}, {pipeline_mode = #tpu.pipeline_mode<synchronous>, transform_indices = @transform_8, window_bounds = array<i64: 5, 2, 32>}, {transform_indices = @transform_9, window_bounds = array<i64: 8, 32>}]} {
    %c0 = arith.constant 0 : index
    %c0_0 = arith.constant 0 : index
    %c0_1 = arith.constant 0 : index
    %0 = vector.load %arg1[%c0, %c0_0, %c0_1] : memref<8x8x32xf32, #tpu.memory_space<vmem>>, vector<8x8x32xf32>
    %1 = vector.shape_cast %0 : vector<8x8x32xf32> to vector<64x32xf32>
    %c0_2 = arith.constant 0 : index
    %c0_3 = arith.constant 0 : index
    %c0_4 = arith.constant 0 : index
    %2 = vector.load %arg2[%c0_2, %c0_3, %c0_4] : memref<8x1x8xf32, #tpu.memory_space<vmem>>, vector<8x1x8xf32>
    %c0_5 = arith.constant 0 : index
    %c0_6 = arith.constant 0 : index
    %c0_7 = arith.constant 0 : index
    %3 = vector.load %arg3[%c0_5, %c0_6, %c0_7] : memref<2x32x128xbf16, #tpu.memory_space<vmem>>, vector<2x32x128xbf16>
    %c0_8 = arith.constant 0 : index
    %c0_9 = arith.constant 0 : index
    %c0_10 = arith.constant 0 : index
    %4 = vector.load %arg4[%c0_8, %c0_9, %c0_10] : memref<2x1x128xf32, #tpu.memory_space<vmem>>, vector<2x1x128xf32>
    %c0_11 = arith.constant 0 : index
    %c0_12 = arith.constant 0 : index
    %c0_13 = arith.constant 0 : index
    %5 = vector.load %arg5[%c0_11, %c0_12, %c0_13] : memref<2x32x64xbf16, #tpu.memory_space<vmem>>, vector<2x32x64xbf16>
    %c0_14 = arith.constant 0 : index
    %c0_15 = arith.constant 0 : index
    %c0_16 = arith.constant 0 : index
    %6 = vector.load %arg6[%c0_14, %c0_15, %c0_16] : memref<2x1x64xf32, #tpu.memory_space<vmem>>, vector<2x1x64xf32>
    %c0_17 = arith.constant 0 : index
    %c0_18 = arith.constant 0 : index
    %c0_19 = arith.constant 0 : index
    %7 = vector.load %arg7[%c0_17, %c0_18, %c0_19] : memref<2x64x32xbf16, #tpu.memory_space<vmem>>, vector<2x64x32xbf16>
    %c0_20 = arith.constant 0 : index
    %c0_21 = arith.constant 0 : index
    %c0_22 = arith.constant 0 : index
    %8 = vector.load %arg8[%c0_20, %c0_21, %c0_22] : memref<2x1x32xf32, #tpu.memory_space<vmem>>, vector<2x1x32xf32>
    %c0_23 = arith.constant 0 : index
    %c0_24 = arith.constant 0 : index
    %c0_25 = arith.constant 0 : index
    %9 = vector.load %arg9[%c0_23, %c0_24, %c0_25] : memref<5x2x32xf32, #tpu.memory_space<vmem>>, vector<5x2x32xf32>
    %10 = vector.extract_strided_slice %9 {offsets = [0, 0, 0], sizes = [1, 1, 32], strides = [1, 1, 1]} : vector<5x2x32xf32> to vector<1x1x32xf32>
    %11 = vector.shape_cast %10 : vector<1x1x32xf32> to vector<1x32xf32>
    %12 = vector.extract_strided_slice %9 {offsets = [0, 1, 0], sizes = [1, 1, 32], strides = [1, 1, 1]} : vector<5x2x32xf32> to vector<1x1x32xf32>
    %13 = vector.shape_cast %12 : vector<1x1x32xf32> to vector<1x32xf32>
    %cst = arith.constant dense<0.000000e+00> : vector<64xf32>
    %14 = vector.multi_reduction <add>, %1, %cst [1] : vector<64x32xf32> to vector<64xf32>
    %15 = vector.shape_cast %14 : vector<64xf32> to vector<64x1xf32>
    %cst_26 = arith.constant 3.200000e+01 : f32
    %16 = vector.broadcast %cst_26 : f32 to vector<64x1xf32>
    %17 = arith.divf %15, %16 : vector<64x1xf32>
    %18 = vector.broadcast %17 : vector<64x1xf32> to vector<64x32xf32>
    %19 = arith.subf %1, %18 : vector<64x32xf32>
    %20 = arith.mulf %19, %19 : vector<64x32xf32>
    %cst_27 = arith.constant dense<0.000000e+00> : vector<64xf32>
    %21 = vector.multi_reduction <add>, %20, %cst_27 [1] : vector<64x32xf32> to vector<64xf32>
    %22 = vector.shape_cast %21 : vector<64xf32> to vector<64x1xf32>
    %cst_28 = arith.constant 3.200000e+01 : f32
    %23 = vector.broadcast %cst_28 : f32 to vector<64x1xf32>
    %24 = arith.divf %22, %23 : vector<64x1xf32>
    %25 = vector.broadcast %17 : vector<64x1xf32> to vector<64x32xf32>
    %26 = arith.subf %1, %25 : vector<64x32xf32>
    %cst_29 = arith.constant 9.99999996E-13 : f32
    %27 = vector.broadcast %cst_29 : f32 to vector<64x1xf32>
    %28 = arith.addf %24, %27 : vector<64x1xf32>
    %29 = math.rsqrt %28 : vector<64x1xf32>
    %30 = vector.broadcast %29 : vector<64x1xf32> to vector<64x32xf32>
    %31 = arith.mulf %26, %30 : vector<64x32xf32>
    %32 = vector.broadcast %11 : vector<1x32xf32> to vector<64x32xf32>
    %33 = arith.mulf %31, %32 : vector<64x32xf32>
    %34 = vector.broadcast %13 : vector<1x32xf32> to vector<64x32xf32>
    %35 = arith.addf %33, %34 : vector<64x32xf32>
    %cst_30 = arith.constant 1.000000e+00 : f32
    %36 = vector.broadcast %cst_30 : f32 to vector<8x1x8xf32>
    %37 = arith.subf %36, %2 : vector<8x1x8xf32>
    %cst_31 = arith.constant -1.000000e+09 : f32
    %38 = vector.broadcast %cst_31 : f32 to vector<8x1x8xf32>
    %39 = arith.mulf %37, %38 : vector<8x1x8xf32>
    %40 = vector.extract_strided_slice %3 {offsets = [0, 0, 0], sizes = [1, 32, 128], strides = [1, 1, 1]} : vector<2x32x128xbf16> to vector<1x32x128xbf16>
    %41 = vector.shape_cast %40 : vector<1x32x128xbf16> to vector<32x128xbf16>
    %42 = vector.extract_strided_slice %4 {offsets = [0, 0, 0], sizes = [1, 1, 128], strides = [1, 1, 1]} : vector<2x1x128xf32> to vector<1x1x128xf32>
    %43 = vector.shape_cast %42 : vector<1x1x128xf32> to vector<1x128xf32>
    %44 = arith.truncf %35 : vector<64x32xf32> to vector<64x32xbf16>
    %45 = vector.extract_strided_slice %41 {offsets = [0, 0], sizes = [32, 96], strides = [1, 1]} : vector<32x128xbf16> to vector<32x96xbf16>
    %cst_32 = arith.constant dense<0.000000e+00> : vector<64x96xf32>
    %46 = tpu.matmul %44, %45, %cst_32 {dimension_numbers = #tpu.dot_dimension_numbers<[1], [0], [0], [1], [0, 0, 1, 1], [], []>} : vector<64x32xbf16>, vector<32x96xbf16>, vector<64x96xf32> -> vector<64x96xf32>
    %47 = vector.extract_strided_slice %43 {offsets = [0, 0], sizes = [1, 96], strides = [1, 1]} : vector<1x128xf32> to vector<1x96xf32>
    %48 = vector.broadcast %47 : vector<1x96xf32> to vector<64x96xf32>
    %49 = arith.addf %46, %48 : vector<64x96xf32>
    %50 = vector.extract_strided_slice %49 {offsets = [0, 0], sizes = [64, 32], strides = [1, 1]} : vector<64x96xf32> to vector<64x32xf32>
    %51 = vector.shape_cast %50 : vector<64x32xf32> to vector<8x8x32xf32>
    %52 = vector.extract_strided_slice %49 {offsets = [0, 32], sizes = [64, 32], strides = [1, 1]} : vector<64x96xf32> to vector<64x32xf32>
    %53 = vector.shape_cast %52 : vector<64x32xf32> to vector<8x8x32xf32>
    %54 = vector.extract_strided_slice %49 {offsets = [0, 64], sizes = [64, 32], strides = [1, 1]} : vector<64x96xf32> to vector<64x32xf32>
    %55 = vector.shape_cast %54 : vector<64x32xf32> to vector<8x8x32xf32>
    %56 = vector.extract_strided_slice %41 {offsets = [0, 96], sizes = [32, 32], strides = [1, 1]} : vector<32x128xbf16> to vector<32x32xbf16>
    %cst_33 = arith.constant 0.000000e+00 : f32
    %57 = vector.broadcast %cst_33 : f32 to vector<64x32xf32>
    %58 = vector.extract_strided_slice %51 {offsets = [0, 0, 0], sizes = [8, 8, 8], strides = [1, 1, 1]} : vector<8x8x32xf32> to vector<8x8x8xf32>
    %cst_34 = arith.constant 0.353553385 : f32
    %59 = vector.broadcast %cst_34 : f32 to vector<8x8x8xf32>
    %60 = arith.mulf %58, %59 : vector<8x8x8xf32>
    %61 = arith.truncf %60 : vector<8x8x8xf32> to vector<8x8x8xbf16>
    %62 = vector.extract_strided_slice %53 {offsets = [0, 0, 0], sizes = [8, 8, 8], strides = [1, 1, 1]} : vector<8x8x32xf32> to vector<8x8x8xf32>
    %63 = arith.truncf %62 : vector<8x8x8xf32> to vector<8x8x8xbf16>
    %64 = vector.extract_strided_slice %55 {offsets = [0, 0, 0], sizes = [8, 8, 8], strides = [1, 1, 1]} : vector<8x8x32xf32> to vector<8x8x8xf32>
    %65 = arith.truncf %64 : vector<8x8x8xf32> to vector<8x8x8xbf16>
    "tpu.trace_start"() <{level = 10 : i32, message = "bqd,bkd->bqk"}> : () -> ()
    %cst_35 = arith.constant dense<0.000000e+00> : vector<8x8x8xf32>
    %66 = tpu.matmul %61, %63, %cst_35 {dimension_numbers = #tpu.dot_dimension_numbers<[2], [2], [1], [1], [0, 0, 0, 1, 1, 1], [0], [0]>} : vector<8x8x8xbf16>, vector<8x8x8xbf16>, vector<8x8x8xf32> -> vector<8x8x8xf32>
    "tpu.trace_stop"() : () -> ()
    %67 = vector.broadcast %39 : vector<8x1x8xf32> to vector<8x8x8xf32>
    %68 = arith.addf %66, %67 : vector<8x8x8xf32>
    %cst_36 = arith.constant dense<0xFF800000> : vector<8x8xf32>
    %69 = vector.multi_reduction <maximumf>, %68, %cst_36 [2] : vector<8x8x8xf32> to vector<8x8xf32>
    %70 = vector.shape_cast %69 : vector<8x8xf32> to vector<8x8x1xf32>
    %71 = vector.broadcast %70 : vector<8x8x1xf32> to vector<8x8x8xf32>
    %72 = arith.subf %68, %71 : vector<8x8x8xf32>
    %73 = math.exp %72 : vector<8x8x8xf32>
    %cst_37 = arith.constant dense<0.000000e+00> : vector<8x8xf32>
    %74 = vector.multi_reduction <add>, %73, %cst_37 [2] : vector<8x8x8xf32> to vector<8x8xf32>
    %75 = vector.shape_cast %74 : vector<8x8xf32> to vector<8x8x1xf32>
    %76 = tpu.reciprocal %75 {approx = true} : vector<8x8x1xf32> -> vector<8x8x1xf32>
    %77 = vector.broadcast %76 : vector<8x8x1xf32> to vector<8x8x8xf32>
    %78 = arith.mulf %73, %77 : vector<8x8x8xf32>
    %79 = arith.truncf %78 : vector<8x8x8xf32> to vector<8x8x8xbf16>
    "tpu.trace_start"() <{level = 10 : i32, message = "bqk,bkd->bqd"}> : () -> ()
    %cst_38 = arith.constant dense<0.000000e+00> : vector<8x8x8xf32>
    %80 = tpu.matmul %79, %65, %cst_38 {dimension_numbers = #tpu.dot_dimension_numbers<[2], [1], [1], [2], [0, 0, 0, 1, 1, 2], [0], [0]>} : vector<8x8x8xbf16>, vector<8x8x8xbf16>, vector<8x8x8xf32> -> vector<8x8x8xf32>
    "tpu.trace_stop"() : () -> ()
    %81 = vector.shape_cast %80 : vector<8x8x8xf32> to vector<64x8xf32>
    %82 = arith.truncf %81 : vector<64x8xf32> to vector<64x8xbf16>
    %83 = vector.extract_strided_slice %56 {offsets = [0, 0], sizes = [8, 32], strides = [1, 1]} : vector<32x32xbf16> to vector<8x32xbf16>
    %cst_39 = arith.constant dense<0.000000e+00> : vector<64x32xf32>
    %84 = tpu.matmul %82, %83, %cst_39 {dimension_numbers = #tpu.dot_dimension_numbers<[1], [0], [0], [1], [0, 0, 1, 1], [], []>} : vector<64x8xbf16>, vector<8x32xbf16>, vector<64x32xf32> -> vector<64x32xf32>
    %85 = arith.addf %57, %84 : vector<64x32xf32>
    %86 = vector.extract_strided_slice %51 {offsets = [0, 0, 8], sizes = [8, 8, 8], strides = [1, 1, 1]} : vector<8x8x32xf32> to vector<8x8x8xf32>
    %cst_40 = arith.constant 0.353553385 : f32
    %87 = vector.broadcast %cst_40 : f32 to vector<8x8x8xf32>
    %88 = arith.mulf %86, %87 : vector<8x8x8xf32>
    %89 = arith.truncf %88 : vector<8x8x8xf32> to vector<8x8x8xbf16>
    %90 = vector.extract_strided_slice %53 {offsets = [0, 0, 8], sizes = [8, 8, 8], strides = [1, 1, 1]} : vector<8x8x32xf32> to vector<8x8x8xf32>
    %91 = arith.truncf %90 : vector<8x8x8xf32> to vector<8x8x8xbf16>
    %92 = vector.extract_strided_slice %55 {offsets = [0, 0, 8], sizes = [8, 8, 8], strides = [1, 1, 1]} : vector<8x8x32xf32> to vector<8x8x8xf32>
    %93 = arith.truncf %92 : vector<8x8x8xf32> to vector<8x8x8xbf16>
    "tpu.trace_start"() <{level = 10 : i32, message = "bqd,bkd->bqk"}> : () -> ()
    %cst_41 = arith.constant dense<0.000000e+00> : vector<8x8x8xf32>
    %94 = tpu.matmul %89, %91, %cst_41 {dimension_numbers = #tpu.dot_dimension_numbers<[2], [2], [1], [1], [0, 0, 0, 1, 1, 1], [0], [0]>} : vector<8x8x8xbf16>, vector<8x8x8xbf16>, vector<8x8x8xf32> -> vector<8x8x8xf32>
    "tpu.trace_stop"() : () -> ()
    %95 = vector.broadcast %39 : vector<8x1x8xf32> to vector<8x8x8xf32>
    %96 = arith.addf %94, %95 : vector<8x8x8xf32>
    %cst_42 = arith.constant dense<0xFF800000> : vector<8x8xf32>
    %97 = vector.multi_reduction <maximumf>, %96, %cst_42 [2] : vector<8x8x8xf32> to vector<8x8xf32>
    %98 = vector.shape_cast %97 : vector<8x8xf32> to vector<8x8x1xf32>
    %99 = vector.broadcast %98 : vector<8x8x1xf32> to vector<8x8x8xf32>
    %100 = arith.subf %96, %99 : vector<8x8x8xf32>
    %101 = math.exp %100 : vector<8x8x8xf32>
    %cst_43 = arith.constant dense<0.000000e+00> : vector<8x8xf32>
    %102 = vector.multi_reduction <add>, %101, %cst_43 [2] : vector<8x8x8xf32> to vector<8x8xf32>
    %103 = vector.shape_cast %102 : vector<8x8xf32> to vector<8x8x1xf32>
    %104 = tpu.reciprocal %103 {approx = true} : vector<8x8x1xf32> -> vector<8x8x1xf32>
    %105 = vector.broadcast %104 : vector<8x8x1xf32> to vector<8x8x8xf32>
    %106 = arith.mulf %101, %105 : vector<8x8x8xf32>
    %107 = arith.truncf %106 : vector<8x8x8xf32> to vector<8x8x8xbf16>
    "tpu.trace_start"() <{level = 10 : i32, message = "bqk,bkd->bqd"}> : () -> ()
    %cst_44 = arith.constant dense<0.000000e+00> : vector<8x8x8xf32>
    %108 = tpu.matmul %107, %93, %cst_44 {dimension_numbers = #tpu.dot_dimension_numbers<[2], [1], [1], [2], [0, 0, 0, 1, 1, 2], [0], [0]>} : vector<8x8x8xbf16>, vector<8x8x8xbf16>, vector<8x8x8xf32> -> vector<8x8x8xf32>
    "tpu.trace_stop"() : () -> ()
    %109 = vector.shape_cast %108 : vector<8x8x8xf32> to vector<64x8xf32>
    %110 = arith.truncf %109 : vector<64x8xf32> to vector<64x8xbf16>
    %111 = vector.extract_strided_slice %56 {offsets = [8, 0], sizes = [8, 32], strides = [1, 1]} : vector<32x32xbf16> to vector<8x32xbf16>
    %cst_45 = arith.constant dense<0.000000e+00> : vector<64x32xf32>
    %112 = tpu.matmul %110, %111, %cst_45 {dimension_numbers = #tpu.dot_dimension_numbers<[1], [0], [0], [1], [0, 0, 1, 1], [], []>} : vector<64x8xbf16>, vector<8x32xbf16>, vector<64x32xf32> -> vector<64x32xf32>
    %113 = arith.addf %85, %112 : vector<64x32xf32>
    %114 = vector.extract_strided_slice %51 {offsets = [0, 0, 16], sizes = [8, 8, 8], strides = [1, 1, 1]} : vector<8x8x32xf32> to vector<8x8x8xf32>
    %cst_46 = arith.constant 0.353553385 : f32
    %115 = vector.broadcast %cst_46 : f32 to vector<8x8x8xf32>
    %116 = arith.mulf %114, %115 : vector<8x8x8xf32>
    %117 = arith.truncf %116 : vector<8x8x8xf32> to vector<8x8x8xbf16>
    %118 = vector.extract_strided_slice %53 {offsets = [0, 0, 16], sizes = [8, 8, 8], strides = [1, 1, 1]} : vector<8x8x32xf32> to vector<8x8x8xf32>
    %119 = arith.truncf %118 : vector<8x8x8xf32> to vector<8x8x8xbf16>
    %120 = vector.extract_strided_slice %55 {offsets = [0, 0, 16], sizes = [8, 8, 8], strides = [1, 1, 1]} : vector<8x8x32xf32> to vector<8x8x8xf32>
    %121 = arith.truncf %120 : vector<8x8x8xf32> to vector<8x8x8xbf16>
    "tpu.trace_start"() <{level = 10 : i32, message = "bqd,bkd->bqk"}> : () -> ()
    %cst_47 = arith.constant dense<0.000000e+00> : vector<8x8x8xf32>
    %122 = tpu.matmul %117, %119, %cst_47 {dimension_numbers = #tpu.dot_dimension_numbers<[2], [2], [1], [1], [0, 0, 0, 1, 1, 1], [0], [0]>} : vector<8x8x8xbf16>, vector<8x8x8xbf16>, vector<8x8x8xf32> -> vector<8x8x8xf32>
    "tpu.trace_stop"() : () -> ()
    %123 = vector.broadcast %39 : vector<8x1x8xf32> to vector<8x8x8xf32>
    %124 = arith.addf %122, %123 : vector<8x8x8xf32>
    %cst_48 = arith.constant dense<0xFF800000> : vector<8x8xf32>
    %125 = vector.multi_reduction <maximumf>, %124, %cst_48 [2] : vector<8x8x8xf32> to vector<8x8xf32>
    %126 = vector.shape_cast %125 : vector<8x8xf32> to vector<8x8x1xf32>
    %127 = vector.broadcast %126 : vector<8x8x1xf32> to vector<8x8x8xf32>
    %128 = arith.subf %124, %127 : vector<8x8x8xf32>
    %129 = math.exp %128 : vector<8x8x8xf32>
    %cst_49 = arith.constant dense<0.000000e+00> : vector<8x8xf32>
    %130 = vector.multi_reduction <add>, %129, %cst_49 [2] : vector<8x8x8xf32> to vector<8x8xf32>
    %131 = vector.shape_cast %130 : vector<8x8xf32> to vector<8x8x1xf32>
    %132 = tpu.reciprocal %131 {approx = true} : vector<8x8x1xf32> -> vector<8x8x1xf32>
    %133 = vector.broadcast %132 : vector<8x8x1xf32> to vector<8x8x8xf32>
    %134 = arith.mulf %129, %133 : vector<8x8x8xf32>
    %135 = arith.truncf %134 : vector<8x8x8xf32> to vector<8x8x8xbf16>
    "tpu.trace_start"() <{level = 10 : i32, message = "bqk,bkd->bqd"}> : () -> ()
    %cst_50 = arith.constant dense<0.000000e+00> : vector<8x8x8xf32>
    %136 = tpu.matmul %135, %121, %cst_50 {dimension_numbers = #tpu.dot_dimension_numbers<[2], [1], [1], [2], [0, 0, 0, 1, 1, 2], [0], [0]>} : vector<8x8x8xbf16>, vector<8x8x8xbf16>, vector<8x8x8xf32> -> vector<8x8x8xf32>
    "tpu.trace_stop"() : () -> ()
    %137 = vector.shape_cast %136 : vector<8x8x8xf32> to vector<64x8xf32>
    %138 = arith.truncf %137 : vector<64x8xf32> to vector<64x8xbf16>
    %139 = vector.extract_strided_slice %56 {offsets = [16, 0], sizes = [8, 32], strides = [1, 1]} : vector<32x32xbf16> to vector<8x32xbf16>
    %cst_51 = arith.constant dense<0.000000e+00> : vector<64x32xf32>
    %140 = tpu.matmul %138, %139, %cst_51 {dimension_numbers = #tpu.dot_dimension_numbers<[1], [0], [0], [1], [0, 0, 1, 1], [], []>} : vector<64x8xbf16>, vector<8x32xbf16>, vector<64x32xf32> -> vector<64x32xf32>
    %141 = arith.addf %113, %140 : vector<64x32xf32>
    %142 = vector.extract_strided_slice %51 {offsets = [0, 0, 24], sizes = [8, 8, 8], strides = [1, 1, 1]} : vector<8x8x32xf32> to vector<8x8x8xf32>
    %cst_52 = arith.constant 0.353553385 : f32
    %143 = vector.broadcast %cst_52 : f32 to vector<8x8x8xf32>
    %144 = arith.mulf %142, %143 : vector<8x8x8xf32>
    %145 = arith.truncf %144 : vector<8x8x8xf32> to vector<8x8x8xbf16>
    %146 = vector.extract_strided_slice %53 {offsets = [0, 0, 24], sizes = [8, 8, 8], strides = [1, 1, 1]} : vector<8x8x32xf32> to vector<8x8x8xf32>
    %147 = arith.truncf %146 : vector<8x8x8xf32> to vector<8x8x8xbf16>
    %148 = vector.extract_strided_slice %55 {offsets = [0, 0, 24], sizes = [8, 8, 8], strides = [1, 1, 1]} : vector<8x8x32xf32> to vector<8x8x8xf32>
    %149 = arith.truncf %148 : vector<8x8x8xf32> to vector<8x8x8xbf16>
    "tpu.trace_start"() <{level = 10 : i32, message = "bqd,bkd->bqk"}> : () -> ()
    %cst_53 = arith.constant dense<0.000000e+00> : vector<8x8x8xf32>
    %150 = tpu.matmul %145, %147, %cst_53 {dimension_numbers = #tpu.dot_dimension_numbers<[2], [2], [1], [1], [0, 0, 0, 1, 1, 1], [0], [0]>} : vector<8x8x8xbf16>, vector<8x8x8xbf16>, vector<8x8x8xf32> -> vector<8x8x8xf32>
    "tpu.trace_stop"() : () -> ()
    %151 = vector.broadcast %39 : vector<8x1x8xf32> to vector<8x8x8xf32>
    %152 = arith.addf %150, %151 : vector<8x8x8xf32>
    %cst_54 = arith.constant dense<0xFF800000> : vector<8x8xf32>
    %153 = vector.multi_reduction <maximumf>, %152, %cst_54 [2] : vector<8x8x8xf32> to vector<8x8xf32>
    %154 = vector.shape_cast %153 : vector<8x8xf32> to vector<8x8x1xf32>
    %155 = vector.broadcast %154 : vector<8x8x1xf32> to vector<8x8x8xf32>
    %156 = arith.subf %152, %155 : vector<8x8x8xf32>
    %157 = math.exp %156 : vector<8x8x8xf32>
    %cst_55 = arith.constant dense<0.000000e+00> : vector<8x8xf32>
    %158 = vector.multi_reduction <add>, %157, %cst_55 [2] : vector<8x8x8xf32> to vector<8x8xf32>
    %159 = vector.shape_cast %158 : vector<8x8xf32> to vector<8x8x1xf32>
    %160 = tpu.reciprocal %159 {approx = true} : vector<8x8x1xf32> -> vector<8x8x1xf32>
    %161 = vector.broadcast %160 : vector<8x8x1xf32> to vector<8x8x8xf32>
    %162 = arith.mulf %157, %161 : vector<8x8x8xf32>
    %163 = arith.truncf %162 : vector<8x8x8xf32> to vector<8x8x8xbf16>
    "tpu.trace_start"() <{level = 10 : i32, message = "bqk,bkd->bqd"}> : () -> ()
    %cst_56 = arith.constant dense<0.000000e+00> : vector<8x8x8xf32>
    %164 = tpu.matmul %163, %149, %cst_56 {dimension_numbers = #tpu.dot_dimension_numbers<[2], [1], [1], [2], [0, 0, 0, 1, 1, 2], [0], [0]>} : vector<8x8x8xbf16>, vector<8x8x8xbf16>, vector<8x8x8xf32> -> vector<8x8x8xf32>
    "tpu.trace_stop"() : () -> ()
    %165 = vector.shape_cast %164 : vector<8x8x8xf32> to vector<64x8xf32>
    %166 = arith.truncf %165 : vector<64x8xf32> to vector<64x8xbf16>
    %167 = vector.extract_strided_slice %56 {offsets = [24, 0], sizes = [8, 32], strides = [1, 1]} : vector<32x32xbf16> to vector<8x32xbf16>
    %cst_57 = arith.constant dense<0.000000e+00> : vector<64x32xf32>
    %168 = tpu.matmul %166, %167, %cst_57 {dimension_numbers = #tpu.dot_dimension_numbers<[1], [0], [0], [1], [0, 0, 1, 1], [], []>} : vector<64x8xbf16>, vector<8x32xbf16>, vector<64x32xf32> -> vector<64x32xf32>
    %169 = arith.addf %141, %168 : vector<64x32xf32>
    %170 = vector.extract_strided_slice %43 {offsets = [0, 96], sizes = [1, 32], strides = [1, 1]} : vector<1x128xf32> to vector<1x32xf32>
    %171 = vector.broadcast %170 : vector<1x32xf32> to vector<64x32xf32>
    %172 = arith.addf %169, %171 : vector<64x32xf32>
    %173 = arith.addf %35, %172 : vector<64x32xf32>
    %174 = vector.extract_strided_slice %9 {offsets = [1, 0, 0], sizes = [1, 1, 32], strides = [1, 1, 1]} : vector<5x2x32xf32> to vector<1x1x32xf32>
    %175 = vector.shape_cast %174 : vector<1x1x32xf32> to vector<1x32xf32>
    %176 = vector.extract_strided_slice %9 {offsets = [1, 1, 0], sizes = [1, 1, 32], strides = [1, 1, 1]} : vector<5x2x32xf32> to vector<1x1x32xf32>
    %177 = vector.shape_cast %176 : vector<1x1x32xf32> to vector<1x32xf32>
    %cst_58 = arith.constant dense<0.000000e+00> : vector<64xf32>
    %178 = vector.multi_reduction <add>, %173, %cst_58 [1] : vector<64x32xf32> to vector<64xf32>
    %179 = vector.shape_cast %178 : vector<64xf32> to vector<64x1xf32>
    %cst_59 = arith.constant 3.200000e+01 : f32
    %180 = vector.broadcast %cst_59 : f32 to vector<64x1xf32>
    %181 = arith.divf %179, %180 : vector<64x1xf32>
    %182 = vector.broadcast %181 : vector<64x1xf32> to vector<64x32xf32>
    %183 = arith.subf %173, %182 : vector<64x32xf32>
    %184 = arith.mulf %183, %183 : vector<64x32xf32>
    %cst_60 = arith.constant dense<0.000000e+00> : vector<64xf32>
    %185 = vector.multi_reduction <add>, %184, %cst_60 [1] : vector<64x32xf32> to vector<64xf32>
    %186 = vector.shape_cast %185 : vector<64xf32> to vector<64x1xf32>
    %cst_61 = arith.constant 3.200000e+01 : f32
    %187 = vector.broadcast %cst_61 : f32 to vector<64x1xf32>
    %188 = arith.divf %186, %187 : vector<64x1xf32>
    %189 = vector.broadcast %181 : vector<64x1xf32> to vector<64x32xf32>
    %190 = arith.subf %173, %189 : vector<64x32xf32>
    %cst_62 = arith.constant 9.99999996E-13 : f32
    %191 = vector.broadcast %cst_62 : f32 to vector<64x1xf32>
    %192 = arith.addf %188, %191 : vector<64x1xf32>
    %193 = math.rsqrt %192 : vector<64x1xf32>
    %194 = vector.broadcast %193 : vector<64x1xf32> to vector<64x32xf32>
    %195 = arith.mulf %190, %194 : vector<64x32xf32>
    %196 = vector.broadcast %175 : vector<1x32xf32> to vector<64x32xf32>
    %197 = arith.mulf %195, %196 : vector<64x32xf32>
    %198 = vector.broadcast %177 : vector<1x32xf32> to vector<64x32xf32>
    %199 = arith.addf %197, %198 : vector<64x32xf32>
    %200 = arith.truncf %199 : vector<64x32xf32> to vector<64x32xbf16>
    %201 = vector.extract_strided_slice %5 {offsets = [0, 0, 0], sizes = [1, 32, 64], strides = [1, 1, 1]} : vector<2x32x64xbf16> to vector<1x32x64xbf16>
    %202 = vector.shape_cast %201 : vector<1x32x64xbf16> to vector<32x64xbf16>
    %cst_63 = arith.constant dense<0.000000e+00> : vector<64x64xf32>
    %203 = tpu.matmul %200, %202, %cst_63 {dimension_numbers = #tpu.dot_dimension_numbers<[1], [0], [0], [1], [0, 0, 1, 1], [], []>} : vector<64x32xbf16>, vector<32x64xbf16>, vector<64x64xf32> -> vector<64x64xf32>
    %204 = vector.extract_strided_slice %6 {offsets = [0, 0, 0], sizes = [1, 1, 64], strides = [1, 1, 1]} : vector<2x1x64xf32> to vector<1x1x64xf32>
    %205 = vector.shape_cast %204 : vector<1x1x64xf32> to vector<1x64xf32>
    %206 = vector.broadcast %205 : vector<1x64xf32> to vector<64x64xf32>
    %207 = arith.addf %203, %206 : vector<64x64xf32>
    %208 = arith.mulf %207, %207 : vector<64x64xf32>
    %209 = arith.mulf %207, %208 : vector<64x64xf32>
    %cst_64 = arith.constant 4.471500e-02 : f32
    %210 = vector.broadcast %cst_64 : f32 to vector<64x64xf32>
    %211 = arith.mulf %210, %209 : vector<64x64xf32>
    %212 = arith.addf %207, %211 : vector<64x64xf32>
    %cst_65 = arith.constant 0.797884583 : f32
    %213 = vector.broadcast %cst_65 : f32 to vector<64x64xf32>
    %214 = arith.mulf %213, %212 : vector<64x64xf32>
    %215 = math.tanh %214 : vector<64x64xf32>
    %cst_66 = arith.constant 1.000000e+00 : f32
    %216 = vector.broadcast %cst_66 : f32 to vector<64x64xf32>
    %217 = arith.addf %216, %215 : vector<64x64xf32>
    %cst_67 = arith.constant 5.000000e-01 : f32
    %218 = vector.broadcast %cst_67 : f32 to vector<64x64xf32>
    %219 = arith.mulf %218, %217 : vector<64x64xf32>
    %220 = arith.mulf %207, %219 : vector<64x64xf32>
    %221 = arith.truncf %220 : vector<64x64xf32> to vector<64x64xbf16>
    %222 = vector.extract_strided_slice %7 {offsets = [0, 0, 0], sizes = [1, 64, 32], strides = [1, 1, 1]} : vector<2x64x32xbf16> to vector<1x64x32xbf16>
    %223 = vector.shape_cast %222 : vector<1x64x32xbf16> to vector<64x32xbf16>
    %cst_68 = arith.constant dense<0.000000e+00> : vector<64x32xf32>
    %224 = tpu.matmul %221, %223, %cst_68 {dimension_numbers = #tpu.dot_dimension_numbers<[1], [0], [0], [1], [0, 0, 1, 1], [], []>} : vector<64x64xbf16>, vector<64x32xbf16>, vector<64x32xf32> -> vector<64x32xf32>
    %225 = vector.extract_strided_slice %8 {offsets = [0, 0, 0], sizes = [1, 1, 32], strides = [1, 1, 1]} : vector<2x1x32xf32> to vector<1x1x32xf32>
    %226 = vector.shape_cast %225 : vector<1x1x32xf32> to vector<1x32xf32>
    %227 = vector.broadcast %226 : vector<1x32xf32> to vector<64x32xf32>
    %228 = arith.addf %224, %227 : vector<64x32xf32>
    %229 = arith.addf %199, %228 : vector<64x32xf32>
    %230 = vector.extract_strided_slice %9 {offsets = [2, 0, 0], sizes = [1, 1, 32], strides = [1, 1, 1]} : vector<5x2x32xf32> to vector<1x1x32xf32>
    %231 = vector.shape_cast %230 : vector<1x1x32xf32> to vector<1x32xf32>
    %232 = vector.extract_strided_slice %9 {offsets = [2, 1, 0], sizes = [1, 1, 32], strides = [1, 1, 1]} : vector<5x2x32xf32> to vector<1x1x32xf32>
    %233 = vector.shape_cast %232 : vector<1x1x32xf32> to vector<1x32xf32>
    %cst_69 = arith.constant dense<0.000000e+00> : vector<64xf32>
    %234 = vector.multi_reduction <add>, %229, %cst_69 [1] : vector<64x32xf32> to vector<64xf32>
    %235 = vector.shape_cast %234 : vector<64xf32> to vector<64x1xf32>
    %cst_70 = arith.constant 3.200000e+01 : f32
    %236 = vector.broadcast %cst_70 : f32 to vector<64x1xf32>
    %237 = arith.divf %235, %236 : vector<64x1xf32>
    %238 = vector.broadcast %237 : vector<64x1xf32> to vector<64x32xf32>
    %239 = arith.subf %229, %238 : vector<64x32xf32>
    %240 = arith.mulf %239, %239 : vector<64x32xf32>
    %cst_71 = arith.constant dense<0.000000e+00> : vector<64xf32>
    %241 = vector.multi_reduction <add>, %240, %cst_71 [1] : vector<64x32xf32> to vector<64xf32>
    %242 = vector.shape_cast %241 : vector<64xf32> to vector<64x1xf32>
    %cst_72 = arith.constant 3.200000e+01 : f32
    %243 = vector.broadcast %cst_72 : f32 to vector<64x1xf32>
    %244 = arith.divf %242, %243 : vector<64x1xf32>
    %245 = vector.broadcast %237 : vector<64x1xf32> to vector<64x32xf32>
    %246 = arith.subf %229, %245 : vector<64x32xf32>
    %cst_73 = arith.constant 9.99999996E-13 : f32
    %247 = vector.broadcast %cst_73 : f32 to vector<64x1xf32>
    %248 = arith.addf %244, %247 : vector<64x1xf32>
    %249 = math.rsqrt %248 : vector<64x1xf32>
    %250 = vector.broadcast %249 : vector<64x1xf32> to vector<64x32xf32>
    %251 = arith.mulf %246, %250 : vector<64x32xf32>
    %252 = vector.broadcast %231 : vector<1x32xf32> to vector<64x32xf32>
    %253 = arith.mulf %251, %252 : vector<64x32xf32>
    %254 = vector.broadcast %233 : vector<1x32xf32> to vector<64x32xf32>
    %255 = arith.addf %253, %254 : vector<64x32xf32>
    %256 = vector.extract_strided_slice %3 {offsets = [1, 0, 0], sizes = [1, 32, 128], strides = [1, 1, 1]} : vector<2x32x128xbf16> to vector<1x32x128xbf16>
    %257 = vector.shape_cast %256 : vector<1x32x128xbf16> to vector<32x128xbf16>
    %258 = vector.extract_strided_slice %4 {offsets = [1, 0, 0], sizes = [1, 1, 128], strides = [1, 1, 1]} : vector<2x1x128xf32> to vector<1x1x128xf32>
    %259 = vector.shape_cast %258 : vector<1x1x128xf32> to vector<1x128xf32>
    %260 = arith.truncf %255 : vector<64x32xf32> to vector<64x32xbf16>
    %261 = vector.extract_strided_slice %257 {offsets = [0, 0], sizes = [32, 96], strides = [1, 1]} : vector<32x128xbf16> to vector<32x96xbf16>
    %cst_74 = arith.constant dense<0.000000e+00> : vector<64x96xf32>
    %262 = tpu.matmul %260, %261, %cst_74 {dimension_numbers = #tpu.dot_dimension_numbers<[1], [0], [0], [1], [0, 0, 1, 1], [], []>} : vector<64x32xbf16>, vector<32x96xbf16>, vector<64x96xf32> -> vector<64x96xf32>
    %263 = vector.extract_strided_slice %259 {offsets = [0, 0], sizes = [1, 96], strides = [1, 1]} : vector<1x128xf32> to vector<1x96xf32>
    %264 = vector.broadcast %263 : vector<1x96xf32> to vector<64x96xf32>
    %265 = arith.addf %262, %264 : vector<64x96xf32>
    %266 = vector.extract_strided_slice %265 {offsets = [0, 0], sizes = [64, 32], strides = [1, 1]} : vector<64x96xf32> to vector<64x32xf32>
    %267 = vector.shape_cast %266 : vector<64x32xf32> to vector<8x8x32xf32>
    %268 = vector.extract_strided_slice %265 {offsets = [0, 32], sizes = [64, 32], strides = [1, 1]} : vector<64x96xf32> to vector<64x32xf32>
    %269 = vector.shape_cast %268 : vector<64x32xf32> to vector<8x8x32xf32>
    %270 = vector.extract_strided_slice %265 {offsets = [0, 64], sizes = [64, 32], strides = [1, 1]} : vector<64x96xf32> to vector<64x32xf32>
    %271 = vector.shape_cast %270 : vector<64x32xf32> to vector<8x8x32xf32>
    %272 = vector.extract_strided_slice %257 {offsets = [0, 96], sizes = [32, 32], strides = [1, 1]} : vector<32x128xbf16> to vector<32x32xbf16>
    %cst_75 = arith.constant 0.000000e+00 : f32
    %273 = vector.broadcast %cst_75 : f32 to vector<64x32xf32>
    %274 = vector.extract_strided_slice %267 {offsets = [0, 0, 0], sizes = [8, 8, 8], strides = [1, 1, 1]} : vector<8x8x32xf32> to vector<8x8x8xf32>
    %cst_76 = arith.constant 0.353553385 : f32
    %275 = vector.broadcast %cst_76 : f32 to vector<8x8x8xf32>
    %276 = arith.mulf %274, %275 : vector<8x8x8xf32>
    %277 = arith.truncf %276 : vector<8x8x8xf32> to vector<8x8x8xbf16>
    %278 = vector.extract_strided_slice %269 {offsets = [0, 0, 0], sizes = [8, 8, 8], strides = [1, 1, 1]} : vector<8x8x32xf32> to vector<8x8x8xf32>
    %279 = arith.truncf %278 : vector<8x8x8xf32> to vector<8x8x8xbf16>
    %280 = vector.extract_strided_slice %271 {offsets = [0, 0, 0], sizes = [8, 8, 8], strides = [1, 1, 1]} : vector<8x8x32xf32> to vector<8x8x8xf32>
    %281 = arith.truncf %280 : vector<8x8x8xf32> to vector<8x8x8xbf16>
    "tpu.trace_start"() <{level = 10 : i32, message = "bqd,bkd->bqk"}> : () -> ()
    %cst_77 = arith.constant dense<0.000000e+00> : vector<8x8x8xf32>
    %282 = tpu.matmul %277, %279, %cst_77 {dimension_numbers = #tpu.dot_dimension_numbers<[2], [2], [1], [1], [0, 0, 0, 1, 1, 1], [0], [0]>} : vector<8x8x8xbf16>, vector<8x8x8xbf16>, vector<8x8x8xf32> -> vector<8x8x8xf32>
    "tpu.trace_stop"() : () -> ()
    %283 = vector.broadcast %39 : vector<8x1x8xf32> to vector<8x8x8xf32>
    %284 = arith.addf %282, %283 : vector<8x8x8xf32>
    %cst_78 = arith.constant dense<0xFF800000> : vector<8x8xf32>
    %285 = vector.multi_reduction <maximumf>, %284, %cst_78 [2] : vector<8x8x8xf32> to vector<8x8xf32>
    %286 = vector.shape_cast %285 : vector<8x8xf32> to vector<8x8x1xf32>
    %287 = vector.broadcast %286 : vector<8x8x1xf32> to vector<8x8x8xf32>
    %288 = arith.subf %284, %287 : vector<8x8x8xf32>
    %289 = math.exp %288 : vector<8x8x8xf32>
    %cst_79 = arith.constant dense<0.000000e+00> : vector<8x8xf32>
    %290 = vector.multi_reduction <add>, %289, %cst_79 [2] : vector<8x8x8xf32> to vector<8x8xf32>
    %291 = vector.shape_cast %290 : vector<8x8xf32> to vector<8x8x1xf32>
    %292 = tpu.reciprocal %291 {approx = true} : vector<8x8x1xf32> -> vector<8x8x1xf32>
    %293 = vector.broadcast %292 : vector<8x8x1xf32> to vector<8x8x8xf32>
    %294 = arith.mulf %289, %293 : vector<8x8x8xf32>
    %295 = arith.truncf %294 : vector<8x8x8xf32> to vector<8x8x8xbf16>
    "tpu.trace_start"() <{level = 10 : i32, message = "bqk,bkd->bqd"}> : () -> ()
    %cst_80 = arith.constant dense<0.000000e+00> : vector<8x8x8xf32>
    %296 = tpu.matmul %295, %281, %cst_80 {dimension_numbers = #tpu.dot_dimension_numbers<[2], [1], [1], [2], [0, 0, 0, 1, 1, 2], [0], [0]>} : vector<8x8x8xbf16>, vector<8x8x8xbf16>, vector<8x8x8xf32> -> vector<8x8x8xf32>
    "tpu.trace_stop"() : () -> ()
    %297 = vector.shape_cast %296 : vector<8x8x8xf32> to vector<64x8xf32>
    %298 = arith.truncf %297 : vector<64x8xf32> to vector<64x8xbf16>
    %299 = vector.extract_strided_slice %272 {offsets = [0, 0], sizes = [8, 32], strides = [1, 1]} : vector<32x32xbf16> to vector<8x32xbf16>
    %cst_81 = arith.constant dense<0.000000e+00> : vector<64x32xf32>
    %300 = tpu.matmul %298, %299, %cst_81 {dimension_numbers = #tpu.dot_dimension_numbers<[1], [0], [0], [1], [0, 0, 1, 1], [], []>} : vector<64x8xbf16>, vector<8x32xbf16>, vector<64x32xf32> -> vector<64x32xf32>
    %301 = arith.addf %273, %300 : vector<64x32xf32>
    %302 = vector.extract_strided_slice %267 {offsets = [0, 0, 8], sizes = [8, 8, 8], strides = [1, 1, 1]} : vector<8x8x32xf32> to vector<8x8x8xf32>
    %cst_82 = arith.constant 0.353553385 : f32
    %303 = vector.broadcast %cst_82 : f32 to vector<8x8x8xf32>
    %304 = arith.mulf %302, %303 : vector<8x8x8xf32>
    %305 = arith.truncf %304 : vector<8x8x8xf32> to vector<8x8x8xbf16>
    %306 = vector.extract_strided_slice %269 {offsets = [0, 0, 8], sizes = [8, 8, 8], strides = [1, 1, 1]} : vector<8x8x32xf32> to vector<8x8x8xf32>
    %307 = arith.truncf %306 : vector<8x8x8xf32> to vector<8x8x8xbf16>
    %308 = vector.extract_strided_slice %271 {offsets = [0, 0, 8], sizes = [8, 8, 8], strides = [1, 1, 1]} : vector<8x8x32xf32> to vector<8x8x8xf32>
    %309 = arith.truncf %308 : vector<8x8x8xf32> to vector<8x8x8xbf16>
    "tpu.trace_start"() <{level = 10 : i32, message = "bqd,bkd->bqk"}> : () -> ()
    %cst_83 = arith.constant dense<0.000000e+00> : vector<8x8x8xf32>
    %310 = tpu.matmul %305, %307, %cst_83 {dimension_numbers = #tpu.dot_dimension_numbers<[2], [2], [1], [1], [0, 0, 0, 1, 1, 1], [0], [0]>} : vector<8x8x8xbf16>, vector<8x8x8xbf16>, vector<8x8x8xf32> -> vector<8x8x8xf32>
    "tpu.trace_stop"() : () -> ()
    %311 = vector.broadcast %39 : vector<8x1x8xf32> to vector<8x8x8xf32>
    %312 = arith.addf %310, %311 : vector<8x8x8xf32>
    %cst_84 = arith.constant dense<0xFF800000> : vector<8x8xf32>
    %313 = vector.multi_reduction <maximumf>, %312, %cst_84 [2] : vector<8x8x8xf32> to vector<8x8xf32>
    %314 = vector.shape_cast %313 : vector<8x8xf32> to vector<8x8x1xf32>
    %315 = vector.broadcast %314 : vector<8x8x1xf32> to vector<8x8x8xf32>
    %316 = arith.subf %312, %315 : vector<8x8x8xf32>
    %317 = math.exp %316 : vector<8x8x8xf32>
    %cst_85 = arith.constant dense<0.000000e+00> : vector<8x8xf32>
    %318 = vector.multi_reduction <add>, %317, %cst_85 [2] : vector<8x8x8xf32> to vector<8x8xf32>
    %319 = vector.shape_cast %318 : vector<8x8xf32> to vector<8x8x1xf32>
    %320 = tpu.reciprocal %319 {approx = true} : vector<8x8x1xf32> -> vector<8x8x1xf32>
    %321 = vector.broadcast %320 : vector<8x8x1xf32> to vector<8x8x8xf32>
    %322 = arith.mulf %317, %321 : vector<8x8x8xf32>
    %323 = arith.truncf %322 : vector<8x8x8xf32> to vector<8x8x8xbf16>
    "tpu.trace_start"() <{level = 10 : i32, message = "bqk,bkd->bqd"}> : () -> ()
    %cst_86 = arith.constant dense<0.000000e+00> : vector<8x8x8xf32>
    %324 = tpu.matmul %323, %309, %cst_86 {dimension_numbers = #tpu.dot_dimension_numbers<[2], [1], [1], [2], [0, 0, 0, 1, 1, 2], [0], [0]>} : vector<8x8x8xbf16>, vector<8x8x8xbf16>, vector<8x8x8xf32> -> vector<8x8x8xf32>
    "tpu.trace_stop"() : () -> ()
    %325 = vector.shape_cast %324 : vector<8x8x8xf32> to vector<64x8xf32>
    %326 = arith.truncf %325 : vector<64x8xf32> to vector<64x8xbf16>
    %327 = vector.extract_strided_slice %272 {offsets = [8, 0], sizes = [8, 32], strides = [1, 1]} : vector<32x32xbf16> to vector<8x32xbf16>
    %cst_87 = arith.constant dense<0.000000e+00> : vector<64x32xf32>
    %328 = tpu.matmul %326, %327, %cst_87 {dimension_numbers = #tpu.dot_dimension_numbers<[1], [0], [0], [1], [0, 0, 1, 1], [], []>} : vector<64x8xbf16>, vector<8x32xbf16>, vector<64x32xf32> -> vector<64x32xf32>
    %329 = arith.addf %301, %328 : vector<64x32xf32>
    %330 = vector.extract_strided_slice %267 {offsets = [0, 0, 16], sizes = [8, 8, 8], strides = [1, 1, 1]} : vector<8x8x32xf32> to vector<8x8x8xf32>
    %cst_88 = arith.constant 0.353553385 : f32
    %331 = vector.broadcast %cst_88 : f32 to vector<8x8x8xf32>
    %332 = arith.mulf %330, %331 : vector<8x8x8xf32>
    %333 = arith.truncf %332 : vector<8x8x8xf32> to vector<8x8x8xbf16>
    %334 = vector.extract_strided_slice %269 {offsets = [0, 0, 16], sizes = [8, 8, 8], strides = [1, 1, 1]} : vector<8x8x32xf32> to vector<8x8x8xf32>
    %335 = arith.truncf %334 : vector<8x8x8xf32> to vector<8x8x8xbf16>
    %336 = vector.extract_strided_slice %271 {offsets = [0, 0, 16], sizes = [8, 8, 8], strides = [1, 1, 1]} : vector<8x8x32xf32> to vector<8x8x8xf32>
    %337 = arith.truncf %336 : vector<8x8x8xf32> to vector<8x8x8xbf16>
    "tpu.trace_start"() <{level = 10 : i32, message = "bqd,bkd->bqk"}> : () -> ()
    %cst_89 = arith.constant dense<0.000000e+00> : vector<8x8x8xf32>
    %338 = tpu.matmul %333, %335, %cst_89 {dimension_numbers = #tpu.dot_dimension_numbers<[2], [2], [1], [1], [0, 0, 0, 1, 1, 1], [0], [0]>} : vector<8x8x8xbf16>, vector<8x8x8xbf16>, vector<8x8x8xf32> -> vector<8x8x8xf32>
    "tpu.trace_stop"() : () -> ()
    %339 = vector.broadcast %39 : vector<8x1x8xf32> to vector<8x8x8xf32>
    %340 = arith.addf %338, %339 : vector<8x8x8xf32>
    %cst_90 = arith.constant dense<0xFF800000> : vector<8x8xf32>
    %341 = vector.multi_reduction <maximumf>, %340, %cst_90 [2] : vector<8x8x8xf32> to vector<8x8xf32>
    %342 = vector.shape_cast %341 : vector<8x8xf32> to vector<8x8x1xf32>
    %343 = vector.broadcast %342 : vector<8x8x1xf32> to vector<8x8x8xf32>
    %344 = arith.subf %340, %343 : vector<8x8x8xf32>
    %345 = math.exp %344 : vector<8x8x8xf32>
    %cst_91 = arith.constant dense<0.000000e+00> : vector<8x8xf32>
    %346 = vector.multi_reduction <add>, %345, %cst_91 [2] : vector<8x8x8xf32> to vector<8x8xf32>
    %347 = vector.shape_cast %346 : vector<8x8xf32> to vector<8x8x1xf32>
    %348 = tpu.reciprocal %347 {approx = true} : vector<8x8x1xf32> -> vector<8x8x1xf32>
    %349 = vector.broadcast %348 : vector<8x8x1xf32> to vector<8x8x8xf32>
    %350 = arith.mulf %345, %349 : vector<8x8x8xf32>
    %351 = arith.truncf %350 : vector<8x8x8xf32> to vector<8x8x8xbf16>
    "tpu.trace_start"() <{level = 10 : i32, message = "bqk,bkd->bqd"}> : () -> ()
    %cst_92 = arith.constant dense<0.000000e+00> : vector<8x8x8xf32>
    %352 = tpu.matmul %351, %337, %cst_92 {dimension_numbers = #tpu.dot_dimension_numbers<[2], [1], [1], [2], [0, 0, 0, 1, 1, 2], [0], [0]>} : vector<8x8x8xbf16>, vector<8x8x8xbf16>, vector<8x8x8xf32> -> vector<8x8x8xf32>
    "tpu.trace_stop"() : () -> ()
    %353 = vector.shape_cast %352 : vector<8x8x8xf32> to vector<64x8xf32>
    %354 = arith.truncf %353 : vector<64x8xf32> to vector<64x8xbf16>
    %355 = vector.extract_strided_slice %272 {offsets = [16, 0], sizes = [8, 32], strides = [1, 1]} : vector<32x32xbf16> to vector<8x32xbf16>
    %cst_93 = arith.constant dense<0.000000e+00> : vector<64x32xf32>
    %356 = tpu.matmul %354, %355, %cst_93 {dimension_numbers = #tpu.dot_dimension_numbers<[1], [0], [0], [1], [0, 0, 1, 1], [], []>} : vector<64x8xbf16>, vector<8x32xbf16>, vector<64x32xf32> -> vector<64x32xf32>
    %357 = arith.addf %329, %356 : vector<64x32xf32>
    %358 = vector.extract_strided_slice %267 {offsets = [0, 0, 24], sizes = [8, 8, 8], strides = [1, 1, 1]} : vector<8x8x32xf32> to vector<8x8x8xf32>
    %cst_94 = arith.constant 0.353553385 : f32
    %359 = vector.broadcast %cst_94 : f32 to vector<8x8x8xf32>
    %360 = arith.mulf %358, %359 : vector<8x8x8xf32>
    %361 = arith.truncf %360 : vector<8x8x8xf32> to vector<8x8x8xbf16>
    %362 = vector.extract_strided_slice %269 {offsets = [0, 0, 24], sizes = [8, 8, 8], strides = [1, 1, 1]} : vector<8x8x32xf32> to vector<8x8x8xf32>
    %363 = arith.truncf %362 : vector<8x8x8xf32> to vector<8x8x8xbf16>
    %364 = vector.extract_strided_slice %271 {offsets = [0, 0, 24], sizes = [8, 8, 8], strides = [1, 1, 1]} : vector<8x8x32xf32> to vector<8x8x8xf32>
    %365 = arith.truncf %364 : vector<8x8x8xf32> to vector<8x8x8xbf16>
    "tpu.trace_start"() <{level = 10 : i32, message = "bqd,bkd->bqk"}> : () -> ()
    %cst_95 = arith.constant dense<0.000000e+00> : vector<8x8x8xf32>
    %366 = tpu.matmul %361, %363, %cst_95 {dimension_numbers = #tpu.dot_dimension_numbers<[2], [2], [1], [1], [0, 0, 0, 1, 1, 1], [0], [0]>} : vector<8x8x8xbf16>, vector<8x8x8xbf16>, vector<8x8x8xf32> -> vector<8x8x8xf32>
    "tpu.trace_stop"() : () -> ()
    %367 = vector.broadcast %39 : vector<8x1x8xf32> to vector<8x8x8xf32>
    %368 = arith.addf %366, %367 : vector<8x8x8xf32>
    %cst_96 = arith.constant dense<0xFF800000> : vector<8x8xf32>
    %369 = vector.multi_reduction <maximumf>, %368, %cst_96 [2] : vector<8x8x8xf32> to vector<8x8xf32>
    %370 = vector.shape_cast %369 : vector<8x8xf32> to vector<8x8x1xf32>
    %371 = vector.broadcast %370 : vector<8x8x1xf32> to vector<8x8x8xf32>
    %372 = arith.subf %368, %371 : vector<8x8x8xf32>
    %373 = math.exp %372 : vector<8x8x8xf32>
    %cst_97 = arith.constant dense<0.000000e+00> : vector<8x8xf32>
    %374 = vector.multi_reduction <add>, %373, %cst_97 [2] : vector<8x8x8xf32> to vector<8x8xf32>
    %375 = vector.shape_cast %374 : vector<8x8xf32> to vector<8x8x1xf32>
    %376 = tpu.reciprocal %375 {approx = true} : vector<8x8x1xf32> -> vector<8x8x1xf32>
    %377 = vector.broadcast %376 : vector<8x8x1xf32> to vector<8x8x8xf32>
    %378 = arith.mulf %373, %377 : vector<8x8x8xf32>
    %379 = arith.truncf %378 : vector<8x8x8xf32> to vector<8x8x8xbf16>
    "tpu.trace_start"() <{level = 10 : i32, message = "bqk,bkd->bqd"}> : () -> ()
    %cst_98 = arith.constant dense<0.000000e+00> : vector<8x8x8xf32>
    %380 = tpu.matmul %379, %365, %cst_98 {dimension_numbers = #tpu.dot_dimension_numbers<[2], [1], [1], [2], [0, 0, 0, 1, 1, 2], [0], [0]>} : vector<8x8x8xbf16>, vector<8x8x8xbf16>, vector<8x8x8xf32> -> vector<8x8x8xf32>
    "tpu.trace_stop"() : () -> ()
    %381 = vector.shape_cast %380 : vector<8x8x8xf32> to vector<64x8xf32>
    %382 = arith.truncf %381 : vector<64x8xf32> to vector<64x8xbf16>
    %383 = vector.extract_strided_slice %272 {offsets = [24, 0], sizes = [8, 32], strides = [1, 1]} : vector<32x32xbf16> to vector<8x32xbf16>
    %cst_99 = arith.constant dense<0.000000e+00> : vector<64x32xf32>
    %384 = tpu.matmul %382, %383, %cst_99 {dimension_numbers = #tpu.dot_dimension_numbers<[1], [0], [0], [1], [0, 0, 1, 1], [], []>} : vector<64x8xbf16>, vector<8x32xbf16>, vector<64x32xf32> -> vector<64x32xf32>
    %385 = arith.addf %357, %384 : vector<64x32xf32>
    %386 = vector.extract_strided_slice %259 {offsets = [0, 96], sizes = [1, 32], strides = [1, 1]} : vector<1x128xf32> to vector<1x32xf32>
    %387 = vector.broadcast %386 : vector<1x32xf32> to vector<64x32xf32>
    %388 = arith.addf %385, %387 : vector<64x32xf32>
    %389 = arith.addf %255, %388 : vector<64x32xf32>
    %390 = vector.extract_strided_slice %9 {offsets = [3, 0, 0], sizes = [1, 1, 32], strides = [1, 1, 1]} : vector<5x2x32xf32> to vector<1x1x32xf32>
    %391 = vector.shape_cast %390 : vector<1x1x32xf32> to vector<1x32xf32>
    %392 = vector.extract_strided_slice %9 {offsets = [3, 1, 0], sizes = [1, 1, 32], strides = [1, 1, 1]} : vector<5x2x32xf32> to vector<1x1x32xf32>
    %393 = vector.shape_cast %392 : vector<1x1x32xf32> to vector<1x32xf32>
    %cst_100 = arith.constant dense<0.000000e+00> : vector<64xf32>
    %394 = vector.multi_reduction <add>, %389, %cst_100 [1] : vector<64x32xf32> to vector<64xf32>
    %395 = vector.shape_cast %394 : vector<64xf32> to vector<64x1xf32>
    %cst_101 = arith.constant 3.200000e+01 : f32
    %396 = vector.broadcast %cst_101 : f32 to vector<64x1xf32>
    %397 = arith.divf %395, %396 : vector<64x1xf32>
    %398 = vector.broadcast %397 : vector<64x1xf32> to vector<64x32xf32>
    %399 = arith.subf %389, %398 : vector<64x32xf32>
    %400 = arith.mulf %399, %399 : vector<64x32xf32>
    %cst_102 = arith.constant dense<0.000000e+00> : vector<64xf32>
    %401 = vector.multi_reduction <add>, %400, %cst_102 [1] : vector<64x32xf32> to vector<64xf32>
    %402 = vector.shape_cast %401 : vector<64xf32> to vector<64x1xf32>
    %cst_103 = arith.constant 3.200000e+01 : f32
    %403 = vector.broadcast %cst_103 : f32 to vector<64x1xf32>
    %404 = arith.divf %402, %403 : vector<64x1xf32>
    %405 = vector.broadcast %397 : vector<64x1xf32> to vector<64x32xf32>
    %406 = arith.subf %389, %405 : vector<64x32xf32>
    %cst_104 = arith.constant 9.99999996E-13 : f32
    %407 = vector.broadcast %cst_104 : f32 to vector<64x1xf32>
    %408 = arith.addf %404, %407 : vector<64x1xf32>
    %409 = math.rsqrt %408 : vector<64x1xf32>
    %410 = vector.broadcast %409 : vector<64x1xf32> to vector<64x32xf32>
    %411 = arith.mulf %406, %410 : vector<64x32xf32>
    %412 = vector.broadcast %391 : vector<1x32xf32> to vector<64x32xf32>
    %413 = arith.mulf %411, %412 : vector<64x32xf32>
    %414 = vector.broadcast %393 : vector<1x32xf32> to vector<64x32xf32>
    %415 = arith.addf %413, %414 : vector<64x32xf32>
    %416 = arith.truncf %415 : vector<64x32xf32> to vector<64x32xbf16>
    %417 = vector.extract_strided_slice %5 {offsets = [1, 0, 0], sizes = [1, 32, 64], strides = [1, 1, 1]} : vector<2x32x64xbf16> to vector<1x32x64xbf16>
    %418 = vector.shape_cast %417 : vector<1x32x64xbf16> to vector<32x64xbf16>
    %cst_105 = arith.constant dense<0.000000e+00> : vector<64x64xf32>
    %419 = tpu.matmul %416, %418, %cst_105 {dimension_numbers = #tpu.dot_dimension_numbers<[1], [0], [0], [1], [0, 0, 1, 1], [], []>} : vector<64x32xbf16>, vector<32x64xbf16>, vector<64x64xf32> -> vector<64x64xf32>
    %420 = vector.extract_strided_slice %6 {offsets = [1, 0, 0], sizes = [1, 1, 64], strides = [1, 1, 1]} : vector<2x1x64xf32> to vector<1x1x64xf32>
    %421 = vector.shape_cast %420 : vector<1x1x64xf32> to vector<1x64xf32>
    %422 = vector.broadcast %421 : vector<1x64xf32> to vector<64x64xf32>
    %423 = arith.addf %419, %422 : vector<64x64xf32>
    %424 = arith.mulf %423, %423 : vector<64x64xf32>
    %425 = arith.mulf %423, %424 : vector<64x64xf32>
    %cst_106 = arith.constant 4.471500e-02 : f32
    %426 = vector.broadcast %cst_106 : f32 to vector<64x64xf32>
    %427 = arith.mulf %426, %425 : vector<64x64xf32>
    %428 = arith.addf %423, %427 : vector<64x64xf32>
    %cst_107 = arith.constant 0.797884583 : f32
    %429 = vector.broadcast %cst_107 : f32 to vector<64x64xf32>
    %430 = arith.mulf %429, %428 : vector<64x64xf32>
    %431 = math.tanh %430 : vector<64x64xf32>
    %cst_108 = arith.constant 1.000000e+00 : f32
    %432 = vector.broadcast %cst_108 : f32 to vector<64x64xf32>
    %433 = arith.addf %432, %431 : vector<64x64xf32>
    %cst_109 = arith.constant 5.000000e-01 : f32
    %434 = vector.broadcast %cst_109 : f32 to vector<64x64xf32>
    %435 = arith.mulf %434, %433 : vector<64x64xf32>
    %436 = arith.mulf %423, %435 : vector<64x64xf32>
    %437 = arith.truncf %436 : vector<64x64xf32> to vector<64x64xbf16>
    %438 = vector.extract_strided_slice %7 {offsets = [1, 0, 0], sizes = [1, 64, 32], strides = [1, 1, 1]} : vector<2x64x32xbf16> to vector<1x64x32xbf16>
    %439 = vector.shape_cast %438 : vector<1x64x32xbf16> to vector<64x32xbf16>
    %cst_110 = arith.constant dense<0.000000e+00> : vector<64x32xf32>
    %440 = tpu.matmul %437, %439, %cst_110 {dimension_numbers = #tpu.dot_dimension_numbers<[1], [0], [0], [1], [0, 0, 1, 1], [], []>} : vector<64x64xbf16>, vector<64x32xbf16>, vector<64x32xf32> -> vector<64x32xf32>
    %441 = vector.extract_strided_slice %8 {offsets = [1, 0, 0], sizes = [1, 1, 32], strides = [1, 1, 1]} : vector<2x1x32xf32> to vector<1x1x32xf32>
    %442 = vector.shape_cast %441 : vector<1x1x32xf32> to vector<1x32xf32>
    %443 = vector.broadcast %442 : vector<1x32xf32> to vector<64x32xf32>
    %444 = arith.addf %440, %443 : vector<64x32xf32>
    %445 = arith.addf %415, %444 : vector<64x32xf32>
    %446 = vector.extract_strided_slice %9 {offsets = [4, 0, 0], sizes = [1, 1, 32], strides = [1, 1, 1]} : vector<5x2x32xf32> to vector<1x1x32xf32>
    %447 = vector.shape_cast %446 : vector<1x1x32xf32> to vector<1x32xf32>
    %448 = vector.extract_strided_slice %9 {offsets = [4, 1, 0], sizes = [1, 1, 32], strides = [1, 1, 1]} : vector<5x2x32xf32> to vector<1x1x32xf32>
    %449 = vector.shape_cast %448 : vector<1x1x32xf32> to vector<1x32xf32>
    %cst_111 = arith.constant dense<0.000000e+00> : vector<64xf32>
    %450 = vector.multi_reduction <add>, %445, %cst_111 [1] : vector<64x32xf32> to vector<64xf32>
    %451 = vector.shape_cast %450 : vector<64xf32> to vector<64x1xf32>
    %cst_112 = arith.constant 3.200000e+01 : f32
    %452 = vector.broadcast %cst_112 : f32 to vector<64x1xf32>
    %453 = arith.divf %451, %452 : vector<64x1xf32>
    %454 = vector.broadcast %453 : vector<64x1xf32> to vector<64x32xf32>
    %455 = arith.subf %445, %454 : vector<64x32xf32>
    %456 = arith.mulf %455, %455 : vector<64x32xf32>
    %cst_113 = arith.constant dense<0.000000e+00> : vector<64xf32>
    %457 = vector.multi_reduction <add>, %456, %cst_113 [1] : vector<64x32xf32> to vector<64xf32>
    %458 = vector.shape_cast %457 : vector<64xf32> to vector<64x1xf32>
    %cst_114 = arith.constant 3.200000e+01 : f32
    %459 = vector.broadcast %cst_114 : f32 to vector<64x1xf32>
    %460 = arith.divf %458, %459 : vector<64x1xf32>
    %461 = vector.broadcast %453 : vector<64x1xf32> to vector<64x32xf32>
    %462 = arith.subf %445, %461 : vector<64x32xf32>
    %cst_115 = arith.constant 9.99999996E-13 : f32
    %463 = vector.broadcast %cst_115 : f32 to vector<64x1xf32>
    %464 = arith.addf %460, %463 : vector<64x1xf32>
    %465 = math.rsqrt %464 : vector<64x1xf32>
    %466 = vector.broadcast %465 : vector<64x1xf32> to vector<64x32xf32>
    %467 = arith.mulf %462, %466 : vector<64x32xf32>
    %468 = vector.broadcast %447 : vector<1x32xf32> to vector<64x32xf32>
    %469 = arith.mulf %467, %468 : vector<64x32xf32>
    %470 = vector.broadcast %449 : vector<1x32xf32> to vector<64x32xf32>
    %471 = arith.addf %469, %470 : vector<64x32xf32>
    %472 = vector.shape_cast %471 : vector<64x32xf32> to vector<8x8x32xf32>
    %473 = vector.extract_strided_slice %472 {offsets = [0, 0, 0], sizes = [8, 1, 32], strides = [1, 1, 1]} : vector<8x8x32xf32> to vector<8x1x32xf32>
    %474 = vector.shape_cast %473 : vector<8x1x32xf32> to vector<8x32xf32>
    %c0_116 = arith.constant 0 : index
    %c0_117 = arith.constant 0 : index
    %475 = vector.load %arg10[%c0_116, %c0_117] : memref<8x32xf32, #tpu.memory_space<vmem>>, vector<8x32xf32>
    tpu.vector_store %arg10[%c0_116, %c0_117], %474 {strides = array<i32>} : memref<8x32xf32, #tpu.memory_space<vmem>>, vector<8x32xf32>,
    return
  }
  func.func @transform_0(%arg0: i32) -> (i32, i32, i32) {
    %c0_i32 = arith.constant 0 : i32
    %c0_i32_0 = arith.constant 0 : i32
    %c0_i32_1 = arith.constant 0 : i32
    return %arg0, %c0_i32, %c0_i32_0 : i32, i32, i32
  }
  func.func @transform_1(%arg0: i32) -> (i32, i32, i32) {
    %c0_i32 = arith.constant 0 : i32
    %c0_i32_0 = arith.constant 0 : i32
    %c0_i32_1 = arith.constant 0 : i32
    return %arg0, %c0_i32, %c0_i32_0 : i32, i32, i32
  }
  func.func @transform_2(%arg0: i32) -> (i32, i32, i32) {
    %c0_i32 = arith.constant 0 : i32
    %c0_i32_0 = arith.constant 0 : i32
    %c0_i32_1 = arith.constant 0 : i32
    %c0_i32_2 = arith.constant 0 : i32
    return %c0_i32, %c0_i32_0, %c0_i32_1 : i32, i32, i32
  }
  func.func @transform_3(%arg0: i32) -> (i32, i32, i32) {
    %c0_i32 = arith.constant 0 : i32
    %c0_i32_0 = arith.constant 0 : i32
    %c0_i32_1 = arith.constant 0 : i32
    %c0_i32_2 = arith.constant 0 : i32
    return %c0_i32, %c0_i32_0, %c0_i32_1 : i32, i32, i32
  }
  func.func @transform_4(%arg0: i32) -> (i32, i32, i32) {
    %c0_i32 = arith.constant 0 : i32
    %c0_i32_0 = arith.constant 0 : i32
    %c0_i32_1 = arith.constant 0 : i32
    %c0_i32_2 = arith.constant 0 : i32
    return %c0_i32, %c0_i32_0, %c0_i32_1 : i32, i32, i32
  }
  func.func @transform_5(%arg0: i32) -> (i32, i32, i32) {
    %c0_i32 = arith.constant 0 : i32
    %c0_i32_0 = arith.constant 0 : i32
    %c0_i32_1 = arith.constant 0 : i32
    %c0_i32_2 = arith.constant 0 : i32
    return %c0_i32, %c0_i32_0, %c0_i32_1 : i32, i32, i32
  }
  func.func @transform_6(%arg0: i32) -> (i32, i32, i32) {
    %c0_i32 = arith.constant 0 : i32
    %c0_i32_0 = arith.constant 0 : i32
    %c0_i32_1 = arith.constant 0 : i32
    %c0_i32_2 = arith.constant 0 : i32
    return %c0_i32, %c0_i32_0, %c0_i32_1 : i32, i32, i32
  }
  func.func @transform_7(%arg0: i32) -> (i32, i32, i32) {
    %c0_i32 = arith.constant 0 : i32
    %c0_i32_0 = arith.constant 0 : i32
    %c0_i32_1 = arith.constant 0 : i32
    %c0_i32_2 = arith.constant 0 : i32
    return %c0_i32, %c0_i32_0, %c0_i32_1 : i32, i32, i32
  }
  func.func @transform_8(%arg0: i32) -> (i32, i32, i32) {
    %c0_i32 = arith.constant 0 : i32
    %c0_i32_0 = arith.constant 0 : i32
    %c0_i32_1 = arith.constant 0 : i32
    %c0_i32_2 = arith.constant 0 : i32
    return %c0_i32, %c0_i32_0, %c0_i32_1 : i32, i32, i32
  }
  func.func @transform_9(%arg0: i32) -> (i32, i32) {
    %c0_i32 = arith.constant 0 : i32
    %c0_i32_0 = arith.constant 0 : i32
    return %arg0, %c0_i32 : i32, i32
  }
}

</mosaic_0001>

<llo_original>
// kernel: tpu_custom_call.1
$region0: #{tpu_custom_call.1}
  #allocation0 [shape = 'u32[]', space=smem, size = 0x4, offset = 0x4, fixed_abs, tag = 'smem constant byte address 0x4 - core index']
  #allocation1 [shape = 'u32[72,128]{1,0:T(1,128)}', space=vmem, size = 0x9000, scoped, tag = 'internal scratch']
  %s0 = inlined_call_operand.hbm [shape: f32[16,8,32], index: 0, kind: input, shape index: {}]
  %s1 = inlined_call_operand.vmem [shape: f32[16,1,8], index: 1, kind: input, shape index: {}]
  %s2 = inlined_call_operand.vmem [shape: bf16[2,32,128], index: 2, kind: input, shape index: {}]
  %s3 = inlined_call_operand.vmem [shape: f32[2,1,128], index: 3, kind: input, shape index: {}]
  %s4 = inlined_call_operand.vmem [shape: bf16[2,32,64], index: 4, kind: input, shape index: {}]
  %s5 = inlined_call_operand.vmem [shape: f32[2,1,64], index: 5, kind: input, shape index: {}]
  %s6 = inlined_call_operand.vmem [shape: bf16[2,64,32], index: 6, kind: input, shape index: {}]
  %s7 = inlined_call_operand.vmem [shape: f32[2,1,32], index: 7, kind: input, shape index: {}]
  %s8 = inlined_call_operand.vmem [shape: f32[5,2,32], index: 8, kind: input, shape index: {}]
  %s9 = inlined_call_operand.hbm [shape: f32[16,32], index: 9, kind: output, shape index: {}]
  %s10 = sld [smem:[#allocation0]]
  $region73: #{tpu_custom_call.1} parent=0
    _
  %s12 = ssub.s32 1, %s10
  %s13 = scalar_select 0, %s12, %s10
  $region1: #{tpu_custom_call.1} parent=0
    #allocation2 [shape = 'u8[65536]{0}', space=vmem, size = 0x10000, scoped, tag = 'input window, operand 0']
    #allocation3 [shape = 's32[2]{0}', space=sflag, size = 0x8, scoped, tag = 'scoped memory for tpu_custom_call.1']
    #allocation4 [shape = 's32[2]{0}', space=sflag, size = 0x8, scoped, tag = 'scoped memory for tpu_custom_call.1']
    #allocation5 [shape = 'u8[8192]{0}', space=vmem, size = 0x2000, scoped, tag = 'output window, operand 0']
    %14 = vsyncpa [#allocation3], 0
    %s15 = scalar_lea.sflag [#allocation3], 1
    %16 = vsyncpa %s15, 0
    %17 = vsyncpa [#allocation4], 0
    %s18 = scalar_lea.sflag [#allocation4], 1
    %19 = vsyncpa %s18, 0
    loop: start=0, step=1, limit=4
    $region2: #{tpu_custom_call.1} parent=1 // loop_pre_header
      _
    $region3: #{tpu_custom_call.1} parent=1 // loop_header
      %s21 = sphi 0, %s25
      %p22 = scmp.ge.s32.totalorder %s21, 4
      %s31 = sphi 0, %s33
      %s34 = sphi 0, %s31
      %s35 = sphi 0, %s34
      %s51 = sphi 0, %s35
      %s57 = sphi 0, %s59
      %s60 = sphi 0, %s57
      %s61 = sphi 0, %s60
      %s77 = sphi 0, %s61
      %s81 = sphi 0, %s81
      %s83 = sphi 0, %s81
      %s84 = sphi 0, %s83
      %s98 = sphi 0, %s84
      %s102 = sphi 0, %s102
      %s104 = sphi 0, %s102
      %s105 = sphi 0, %s104
      %s119 = sphi 0, %s105
      %s123 = sphi 0, %s123
      %s125 = sphi 0, %s123
      %s126 = sphi 0, %s125
      %s140 = sphi 0, %s126
      %s144 = sphi 0, %s144
      %s146 = sphi 0, %s144
      %s147 = sphi 0, %s146
      %s161 = sphi 0, %s147
      %s165 = sphi 0, %s165
      %s167 = sphi 0, %s165
      %s168 = sphi 0, %s167
      %s182 = sphi 0, %s168
      %s186 = sphi 0, %s186
      %s188 = sphi 0, %s186
      %s189 = sphi 0, %s188
      %s203 = sphi 0, %s189
      %s207 = sphi 0, %s207
      %s209 = sphi 0, %s207
      %s210 = sphi 0, %s209
      %s224 = sphi 0, %s210
      %s230 = sphi 0, %s232
      %s233 = sphi 0, %s230
      %s234 = sphi 0, %s233
      %s250 = sphi 0, %s234
    $region4: #{tpu_custom_call.1} parent=1 // loop_header_branch
      %24 = sbr.rel (%p22) target = $region8
    $region5: #{tpu_custom_call.1} parent=1 // loop_body
      %s26 = ssub.s32 %s21, 1
      %s27 = ssub.s32 %s21, 2
      %s28 = sadd.s32 %s21, 1
      %s29 = ssub.s32 %s21, %s28
      %p30 = scmp.eq.s32.totalorder %s29, 0
      %s32 = sadd.s32 %s31, 1
      %s33 = scalar_select %p30, %s31, %s32
      %p36 = pneg %p30
      %p37 = scmp.eq.s32.totalorder %s21, 1
      %p38 = por %p36, %p37
      %p39 = scmp.ne.s32.totalorder %s31, %s34
      %p40 = scmp.eq.s32.totalorder %s21, 0
      %p41 = por %p39, %p40
      %p42 = scmp.ne.s32.totalorder %s31, %s34
      %p43 = scmp.eq.s32.totalorder %s26, 1
      %p44 = por %p42, %p43
      %p45 = scmp.ne.s32.totalorder %s34, %s35
      %p46 = scmp.eq.s32.totalorder %s26, 0
      %p47 = por %p45, %p46
      %p48 = scmp.ne.s32.totalorder %s34, %s35
      %p49 = scmp.eq.s32.totalorder %s27, 1
      %p50 = por %p48, %p49
      %p52 = scmp.ne.s32.totalorder %s35, %s51
      %p53 = scmp.eq.s32.totalorder %s27, 0
      %p54 = por %p52, %p53
      %s55 = ssub.s32 %s21, %s28
      %p56 = scmp.eq.s32.totalorder %s55, 0
      %s58 = sadd.s32 %s57, 1
      %s59 = scalar_select %p56, %s57, %s58
      %p62 = pneg %p56
      %p63 = scmp.eq.s32.totalorder %s21, 1
      %p64 = por %p62, %p63
      %p65 = scmp.ne.s32.totalorder %s57, %s60
      %p66 = scmp.eq.s32.totalorder %s21, 0
      %p67 = por %p65, %p66
      %p68 = scmp.ne.s32.totalorder %s57, %s60
      %p69 = scmp.eq.s32.totalorder %s26, 1
      %p70 = por %p68, %p69
      %p71 = scmp.ne.s32.totalorder %s60, %s61
      %p72 = scmp.eq.s32.totalorder %s26, 0
      %p73 = por %p71, %p72
      %p74 = scmp.ne.s32.totalorder %s60, %s61
      %p75 = scmp.eq.s32.totalorder %s27, 1
      %p76 = por %p74, %p75
      %p78 = scmp.ne.s32.totalorder %s61, %s77
      %p79 = scmp.eq.s32.totalorder %s27, 0
      %p80 = por %p78, %p79
      %s82 = sadd.s32 %s81, 1
      %p85 = scmp.eq.s32.totalorder %s21, 1
      %p86 = scmp.ne.s32.totalorder %s81, %s83
      %p87 = scmp.eq.s32.totalorder %s21, 0
      %p88 = por %p86, %p87
      %p89 = scmp.ne.s32.totalorder %s81, %s83
      %p90 = scmp.eq.s32.totalorder %s26, 1
      %p91 = por %p89, %p90
      %p92 = scmp.ne.s32.totalorder %s83, %s84
      %p93 = scmp.eq.s32.totalorder %s26, 0
      %p94 = por %p92, %p93
      %p95 = scmp.ne.s32.totalorder %s83, %s84
      %p96 = scmp.eq.s32.totalorder %s27, 1
      %p97 = por %p95, %p96
      %p99 = scmp.ne.s32.totalorder %s84, %s98
      %p100 = scmp.eq.s32.totalorder %s27, 0
      %p101 = por %p99, %p100
      %s103 = sadd.s32 %s102, 1
      %p106 = scmp.eq.s32.totalorder %s21, 1
      %p107 = scmp.ne.s32.totalorder %s102, %s104
      %p108 = scmp.eq.s32.totalorder %s21, 0
      %p109 = por %p107, %p108
      %p110 = scmp.ne.s32.totalorder %s102, %s104
      %p111 = scmp.eq.s32.totalorder %s26, 1
      %p112 = por %p110, %p111
      %p113 = scmp.ne.s32.totalorder %s104, %s105
      %p114 = scmp.eq.s32.totalorder %s26, 0
      %p115 = por %p113, %p114
      %p116 = scmp.ne.s32.totalorder %s104, %s105
      %p117 = scmp.eq.s32.totalorder %s27, 1
      %p118 = por %p116, %p117
      %p120 = scmp.ne.s32.totalorder %s105, %s119
      %p121 = scmp.eq.s32.totalorder %s27, 0
      %p122 = por %p120, %p121
      %s124 = sadd.s32 %s123, 1
      %p127 = scmp.eq.s32.totalorder %s21, 1
      %p128 = scmp.ne.s32.totalorder %s123, %s125
      %p129 = scmp.eq.s32.totalorder %s21, 0
      %p130 = por %p128, %p129
      %p131 = scmp.ne.s32.totalorder %s123, %s125
      %p132 = scmp.eq.s32.totalorder %s26, 1
      %p133 = por %p131, %p132
      %p134 = scmp.ne.s32.totalorder %s125, %s126
      %p135 = scmp.eq.s32.totalorder %s26, 0
      %p136 = por %p134, %p135
      %p137 = scmp.ne.s32.totalorder %s125, %s126
      %p138 = scmp.eq.s32.totalorder %s27, 1
      %p139 = por %p137, %p138
      %p141 = scmp.ne.s32.totalorder %s126, %s140
      %p142 = scmp.eq.s32.totalorder %s27, 0
      %p143 = por %p141, %p142
      %s145 = sadd.s32 %s144, 1
      %p148 = scmp.eq.s32.totalorder %s21, 1
      %p149 = scmp.ne.s32.totalorder %s144, %s146
      %p150 = scmp.eq.s32.totalorder %s21, 0
      %p151 = por %p149, %p150
      %p152 = scmp.ne.s32.totalorder %s144, %s146
      %p153 = scmp.eq.s32.totalorder %s26, 1
      %p154 = por %p152, %p153
      %p155 = scmp.ne.s32.totalorder %s146, %s147
      %p156 = scmp.eq.s32.totalorder %s26, 0
      %p157 = por %p155, %p156
      %p158 = scmp.ne.s32.totalorder %s146, %s147
      %p159 = scmp.eq.s32.totalorder %s27, 1
      %p160 = por %p158, %p159
      %p162 = scmp.ne.s32.totalorder %s147, %s161
      %p163 = scmp.eq.s32.totalorder %s27, 0
      %p164 = por %p162, %p163
      %s166 = sadd.s32 %s165, 1
      %p169 = scmp.eq.s32.totalorder %s21, 1
      %p170 = scmp.ne.s32.totalorder %s165, %s167
      %p171 = scmp.eq.s32.totalorder %s21, 0
      %p172 = por %p170, %p171
      %p173 = scmp.ne.s32.totalorder %s165, %s167
      %p174 = scmp.eq.s32.totalorder %s26, 1
      %p175 = por %p173, %p174
      %p176 = scmp.ne.s32.totalorder %s167, %s168
      %p177 = scmp.eq.s32.totalorder %s26, 0
      %p178 = por %p176, %p177
      %p179 = scmp.ne.s32.totalorder %s167, %s168
      %p180 = scmp.eq.s32.totalorder %s27, 1
      %p181 = por %p179, %p180
      %p183 = scmp.ne.s32.totalorder %s168, %s182
      %p184 = scmp.eq.s32.totalorder %s27, 0
      %p185 = por %p183, %p184
      %s187 = sadd.s32 %s186, 1
      %p190 = scmp.eq.s32.totalorder %s21, 1
      %p191 = scmp.ne.s32.totalorder %s186, %s188
      %p192 = scmp.eq.s32.totalorder %s21, 0
      %p193 = por %p191, %p192
      %p194 = scmp.ne.s32.totalorder %s186, %s188
      %p195 = scmp.eq.s32.totalorder %s26, 1
      %p196 = por %p194, %p195
      %p197 = scmp.ne.s32.totalorder %s188, %s189
      %p198 = scmp.eq.s32.totalorder %s26, 0
      %p199 = por %p197, %p198
      %p200 = scmp.ne.s32.totalorder %s188, %s189
      %p201 = scmp.eq.s32.totalorder %s27, 1
      %p202 = por %p200, %p201
      %p204 = scmp.ne.s32.totalorder %s189, %s203
      %p205 = scmp.eq.s32.totalorder %s27, 0
      %p206 = por %p204, %p205
      %s208 = sadd.s32 %s207, 1
      %p211 = scmp.eq.s32.totalorder %s21, 1
      %p212 = scmp.ne.s32.totalorder %s207, %s209
      %p213 = scmp.eq.s32.totalorder %s21, 0
      %p214 = por %p212, %p213
      %p215 = scmp.ne.s32.totalorder %s207, %s209
      %p216 = scmp.eq.s32.totalorder %s26, 1
      %p217 = por %p215, %p216
      %p218 = scmp.ne.s32.totalorder %s209, %s210
      %p219 = scmp.eq.s32.totalorder %s26, 0
      %p220 = por %p218, %p219
      %p221 = scmp.ne.s32.totalorder %s209, %s210
      %p222 = scmp.eq.s32.totalorder %s27, 1
      %p223 = por %p221, %p222
      %p225 = scmp.ne.s32.totalorder %s210, %s224
      %p226 = scmp.eq.s32.totalorder %s27, 0
      %p227 = por %p225, %p226
      %s228 = ssub.s32 %s21, %s28
      %p229 = scmp.eq.s32.totalorder %s228, 0
      %s231 = sadd.s32 %s230, 1
      %s232 = scalar_select %p229, %s230, %s231
      %p235 = pneg %p229
      %p236 = scmp.eq.s32.totalorder %s21, 1
      %p237 = por %p235, %p236
      %p238 = scmp.ne.s32.totalorder %s230, %s233
      %p239 = scmp.eq.s32.totalorder %s21, 0
      %p240 = por %p238, %p239
      %p241 = scmp.ne.s32.totalorder %s230, %s233
      %p242 = scmp.eq.s32.totalorder %s26, 1
      %p243 = por %p241, %p242
      %p244 = scmp.ne.s32.totalorder %s233, %s234
      %p245 = scmp.eq.s32.totalorder %s26, 0
      %p246 = por %p244, %p245
      %p247 = scmp.ne.s32.totalorder %s233, %s234
      %p248 = scmp.eq.s32.totalorder %s27, 1
      %p249 = por %p247, %p248
      %p251 = scmp.ne.s32.totalorder %s234, %s250
      %p252 = scmp.eq.s32.totalorder %s27, 0
      %p253 = por %p251, %p252
      %p254 = scmp.le.s32.totalorder 1, %s21
      %p255 = scmp.lt.s32.totalorder %s21, 3
      %p256 = pnand %p254, %p255
      %p257 = pneg %p256
      // Predicated region
      $region9: #{tpu_custom_call.1} parent=5 // pred_check
        _
      $region10: #{tpu_custom_call.1} parent=5 // pred_check_branch
        %259 = sbr.rel (%p256) target = $region12
      $region11: #{tpu_custom_call.1} parent=5 // pred_region
        %s260 = ssub.s32 %s21, 1
        // Predicated region
        $region13: #{tpu_custom_call.1} parent=11 // pred_check
          %p261 = pneg %p94
        $region14: #{tpu_custom_call.1} parent=11 // pred_check_branch
          %263 = sbr.rel (%p261) target = $region16
        $region15: #{tpu_custom_call.1} parent=11 // pred_region
          _
        $region16: #{tpu_custom_call.1} parent=11 // pred_fallthru
          _
        // Predicated region
        $region17: #{tpu_custom_call.1} parent=11 // pred_check
          %p264 = pneg %p115
        $region18: #{tpu_custom_call.1} parent=11 // pred_check_branch
          %266 = sbr.rel (%p264) target = $region20
        $region19: #{tpu_custom_call.1} parent=11 // pred_region
          _
        $region20: #{tpu_custom_call.1} parent=11 // pred_fallthru
          _
        // Predicated region
        $region21: #{tpu_custom_call.1} parent=11 // pred_check
          %p267 = pneg %p136
        $region22: #{tpu_custom_call.1} parent=11 // pred_check_branch
          %269 = sbr.rel (%p267) target = $region24
        $region23: #{tpu_custom_call.1} parent=11 // pred_region
          _
        $region24: #{tpu_custom_call.1} parent=11 // pred_fallthru
          _
        // Predicated region
        $region25: #{tpu_custom_call.1} parent=11 // pred_check
          %p270 = pneg %p157
        $region26: #{tpu_custom_call.1} parent=11 // pred_check_branch
          %272 = sbr.rel (%p270) target = $region28
        $region27: #{tpu_custom_call.1} parent=11 // pred_region
          _
        $region28: #{tpu_custom_call.1} parent=11 // pred_fallthru
          _
        // Predicated region
        $region29: #{tpu_custom_call.1} parent=11 // pred_check
          %p273 = pneg %p178
        $region30: #{tpu_custom_call.1} parent=11 // pred_check_branch
          %275 = sbr.rel (%p273) target = $region32
        $region31: #{tpu_custom_call.1} parent=11 // pred_region
          _
        $region32: #{tpu_custom_call.1} parent=11 // pred_fallthru
          _
        // Predicated region
        $region33: #{tpu_custom_call.1} parent=11 // pred_check
          %p276 = pneg %p199
        $region34: #{tpu_custom_call.1} parent=11 // pred_check_branch
          %278 = sbr.rel (%p276) target = $region36
        $region35: #{tpu_custom_call.1} parent=11 // pred_region
          _
        $region36: #{tpu_custom_call.1} parent=11 // pred_fallthru
          _
        // Predicated region
        $region37: #{tpu_custom_call.1} parent=11 // pred_check
          %p279 = pneg %p220
        $region38: #{tpu_custom_call.1} parent=11 // pred_check_branch
          %281 = sbr.rel (%p279) target = $region40
        $region39: #{tpu_custom_call.1} parent=11 // pred_region
          _
        $region40: #{tpu_custom_call.1} parent=11 // pred_fallthru
          _
      $region12: #{tpu_custom_call.1} parent=5 // pred_fallthru
        _
      %p282 = scmp.lt.s32.totalorder %s21, 2
      // Predicated region
      $region41: #{tpu_custom_call.1} parent=5 // pred_check
        %p283 = pneg %p282
      $region42: #{tpu_custom_call.1} parent=5 // pred_check_branch
        %285 = sbr.rel (%p283) target = $region44
      $region43: #{tpu_custom_call.1} parent=5 // pred_region
        // Predicated region
        $region45: #{tpu_custom_call.1} parent=43 // pred_check
          %p286 = pneg %p41
        $region46: #{tpu_custom_call.1} parent=43 // pred_check_branch
          %288 = sbr.rel (%p286) target = $region48
        $region47: #{tpu_custom_call.1} parent=43 // pred_region
          %s289 = sand.u32 %s31, 1
          %s290 = scalar_lea.sflag [#allocation3], %s289
          %s291 = sand.u32 %s31, 1
          %s292 = smul.addr %s291, 64
          %s293 = scalar_lea.vmem [#allocation2], %s292
          %s294 = smul.u32 8, %s21
          %296 = vsyncadd %s290, 0
          %s297 = smul.addr %s294, 8
          %s298 = scalar_lea.hbm %s0, %s297
          %s299 = sshll.u32 %s298, 4
          %s300 = int_to_ptr.hbm [resolvable:$true] %s299
          %s301 = sshll.u32 %s293, 4
          %s302 = int_to_ptr.vmem [resolvable:$true] %s301
          %307 = dma.hbm_to_vmem [thread:$0]  %s300, 1024, %s302, %s290, 128, 128, 8
        $region48: #{tpu_custom_call.1} parent=43 // pred_fallthru
          _
        // Predicated region
        $region49: #{tpu_custom_call.1} parent=43 // pred_check
          %p308 = pneg %p67
        $region50: #{tpu_custom_call.1} parent=43 // pred_check_branch
          %310 = sbr.rel (%p308) target = $region52
        $region51: #{tpu_custom_call.1} parent=43 // pred_region
          %s311 = smul.u32 8, %s21
          %p312 = scmp.lt.s32.totalorder %s311, 15
          %s313 = scalar_select %p312, %s311, 15
          %s314 = scalar_lea.vmem %s1, %s313
          %s315 = smul.u32 8, %s21
        $region52: #{tpu_custom_call.1} parent=43 // pred_fallthru
          _
      $region44: #{tpu_custom_call.1} parent=5 // pred_fallthru
        _
      %p316 = scmp.le.s32.totalorder 1, %s21
      %p317 = scmp.lt.s32.totalorder %s21, 3
      %p318 = pnand %p316, %p317
      %p319 = pneg %p318
      // Predicated region
      $region53: #{tpu_custom_call.1} parent=5 // pred_check
        _
      $region54: #{tpu_custom_call.1} parent=5 // pred_check_branch
        %321 = sbr.rel (%p318) target = $region56
      $region55: #{tpu_custom_call.1} parent=5 // pred_region
        %s322 = ssub.s32 %s21, 1
        %s323 = sand.u32 %s34, 1
        %s324 = scalar_lea.sflag [#allocation3], %s323
        %s325 = sand.u32 %s34, 1
        %s326 = smul.addr %s325, 64
        %s327 = scalar_lea.vmem [#allocation2], %s326
        // Predicated region
        $region57: #{tpu_custom_call.1} parent=55 // pred_check
          %p328 = pneg %p47
        $region58: #{tpu_custom_call.1} parent=55 // pred_check_branch
          %330 = sbr.rel (%p328) target = $region60
        $region59: #{tpu_custom_call.1} parent=55 // pred_region
          %332 = dma.done %s324, 1024
        $region60: #{tpu_custom_call.1} parent=55 // pred_fallthru
          _
        %s333 = sand.u32 %s34, 1
        %s334 = scalar_lea.sflag [#allocation3], %s333
        %s335 = sand.u32 %s34, 1
        %s336 = smul.addr %s335, 64
        %s337 = scalar_lea.vmem [#allocation2], %s336
        %p338 = pneg %p47
        %p339 = pneg %p44
        %s340 = smul.u32 8, %s26
        %p341 = scmp.lt.s32.totalorder %s340, 15
        %s342 = scalar_select %p341, %s340, 15
        %s343 = scalar_lea.vmem %s1, %s342
        %p344 = pneg %p73
        %p345 = pneg %p70
        %p346 = pneg %p94
        %p347 = pneg %p91
        %p348 = pneg %p115
        %p349 = pneg %p112
        %p350 = pneg %p136
        %p351 = pneg %p133
        %p352 = pneg %p157
        %p353 = pneg %p154
        %p354 = pneg %p178
        %p355 = pneg %p175
        %p356 = pneg %p199
        %p357 = pneg %p196
        %p358 = pneg %p220
        %p359 = pneg %p217
        %p360 = pneg %p246
        %p361 = pneg %p243
        %s362 = sand.u32 %s233, 1
        %s363 = scalar_lea.sflag [#allocation4], %s362
        %s364 = sand.u32 %s233, 1
        %s365 = smul.addr %s364, 8
        %s366 = scalar_lea.vmem [#allocation5], %s365
        %s367 = smul.u32 8, %s26
        %s368 = smul.u32 8, %s26
        %p369 = scmp.lt.s32.totalorder %s368, 15
        %s370 = scalar_select %p369, %s368, 15
        %s371 = scalar_lea.vmem %s1, %s370
        %s372 = smul.u32 8, %s26
        %v374 = vld [vmem:[%s327] sm:$0xff]
        %v375 = vld [vmem:[%s327 + $0x8] sm:$0xff]
        %v376 = vld [vmem:[%s327 + $0x10] sm:$0xff]
        %v377 = vld [vmem:[%s327 + $0x18] sm:$0xff]
        %v378 = vld [vmem:[%s327 + $0x20] sm:$0xff]
        %v379 = vld [vmem:[%s327 + $0x28] sm:$0xff]
        %v380 = vld [vmem:[%s327 + $0x30] sm:$0xff]
        %v381 = vld [vmem:[%s327 + $0x38] sm:$0xff]
        %v382 = vld [vmem:[%s371] sm:$0x1]
        %v383 = vld [vmem:[%s371 + $0x1] sm:$0x1]
        %v384 = vld [vmem:[%s371 + $0x2] sm:$0x1]
        %v385 = vld [vmem:[%s371 + $0x3] sm:$0x1]
        %v386 = vld [vmem:[%s371 + $0x4] sm:$0x1]
        %v387 = vld [vmem:[%s371 + $0x5] sm:$0x1]
        %v388 = vld [vmem:[%s371 + $0x6] sm:$0x1]
        %v389 = vld [vmem:[%s371 + $0x7] sm:$0x1]
        %v390 = vld [vmem:[%s2] sm:$0xf]
        %v391 = vld [vmem:[%s2 + $0x4] sm:$0xf]
        %v392 = vld [vmem:[%s2 + $0x8] sm:$0xf]
        %v393 = vld [vmem:[%s2 + $0xc] sm:$0xf]
        %v394 = vld [vmem:[%s2 + $0x10] sm:$0xf]
        %v395 = vld [vmem:[%s2 + $0x14] sm:$0xf]
        %v396 = vld [vmem:[%s2 + $0x18] sm:$0xf]
        %v397 = vld [vmem:[%s2 + $0x1c] sm:$0xf]
        %v398 = vld [vmem:[%s3] sm:$0x1]
        %v399 = vld [vmem:[%s3 + $0x1] sm:$0x1]
        %v400 = vld [vmem:[%s4] sm:$0xf]
        %v401 = vld [vmem:[%s4 + $0x4] sm:$0xf]
        %v402 = vld [vmem:[%s4 + $0x8] sm:$0xf]
        %v403 = vld [vmem:[%s4 + $0xc] sm:$0xf]
        %v404 = vld [vmem:[%s4 + $0x10] sm:$0xf]
        %v405 = vld [vmem:[%s4 + $0x14] sm:$0xf]
        %v406 = vld [vmem:[%s4 + $0x18] sm:$0xf]
        %v407 = vld [vmem:[%s4 + $0x1c] sm:$0xf]
        %v408 = vld [vmem:[%s5] sm:$0x1]
        %v409 = vld [vmem:[%s5 + $0x1] sm:$0x1]
        %v410 = vld [vmem:[%s6] sm:$0xf]
        %v411 = vld [vmem:[%s6 + $0x4] sm:$0xf]
        %v412 = vld [vmem:[%s6 + $0x8] sm:$0xf]
        %v413 = vld [vmem:[%s6 + $0xc] sm:$0xf]
        %v414 = vld [vmem:[%s6 + $0x10] sm:$0xf]
        %v415 = vld [vmem:[%s6 + $0x14] sm:$0xf]
        %v416 = vld [vmem:[%s6 + $0x18] sm:$0xf]
        %v417 = vld [vmem:[%s6 + $0x1c] sm:$0xf]
        %v418 = vld [vmem:[%s6 + $0x20] sm:$0xf]
        %v419 = vld [vmem:[%s6 + $0x24] sm:$0xf]
        %v420 = vld [vmem:[%s6 + $0x28] sm:$0xf]
        %v421 = vld [vmem:[%s6 + $0x2c] sm:$0xf]
        %v422 = vld [vmem:[%s6 + $0x30] sm:$0xf]
        %v423 = vld [vmem:[%s6 + $0x34] sm:$0xf]
        %v424 = vld [vmem:[%s6 + $0x38] sm:$0xf]
        %v425 = vld [vmem:[%s6 + $0x3c] sm:$0xf]
        %v426 = vld [vmem:[%s7] sm:$0x1]
        %v427 = vld [vmem:[%s7 + $0x1] sm:$0x1]
        %v428 = vld [vmem:[%s8] sm:$0x3]
        %v429 = vld [vmem:[%s8 + $0x2] sm:$0x3]
        %v430 = vld [vmem:[%s8 + $0x4] sm:$0x3]
        %v431 = vld [vmem:[%s8 + $0x6] sm:$0x3]
        %v432 = vld [vmem:[%s8 + $0x8] sm:$0x3]
        %vm433 = vcmask 261120
        %v434 = vsel %vm433, %v374, 0.0
        %435 = vadd.xlane.f32.xlu0 %v434
        %v436 = vpop.xlane.xlu0 %435
        %v437 = vsel %vm433, %v375, 0.0
        %438 = vadd.xlane.f32.xlu0 %v437
        %v439 = vpop.xlane.xlu0 %438
        %v440 = vsel %vm433, %v376, 0.0
        %441 = vadd.xlane.f32.xlu0 %v440
        %v442 = vpop.xlane.xlu0 %441
        %v443 = vsel %vm433, %v377, 0.0
        %444 = vadd.xlane.f32.xlu0 %v443
        %v445 = vpop.xlane.xlu0 %444
        %v446 = vsel %vm433, %v378, 0.0
        %447 = vadd.xlane.f32.xlu0 %v446
        %v448 = vpop.xlane.xlu0 %447
        %v449 = vsel %vm433, %v379, 0.0
        %450 = vadd.xlane.f32.xlu0 %v449
        %v451 = vpop.xlane.xlu0 %450
        %v452 = vsel %vm433, %v380, 0.0
        %453 = vadd.xlane.f32.xlu0 %v452
        %v454 = vpop.xlane.xlu0 %453
        %v455 = vsel %vm433, %v381, 0.0
        %456 = vadd.xlane.f32.xlu0 %v455
        %v457 = vpop.xlane.xlu0 %456
        %v458 = vrcp.pop 32.0
        %v459 = vmul.f32 32.0, %v458
        %v460 = vsub.f32 1.0, %v459
        %v461 = vmul.f32 %v458, %v460
        %v462 = vadd.f32 %v458, %v461
        %vm463 = vweird.f32 %v458
        %v464 = vsel %vm463, %v458, %v462
        %v465 = vmul.f32 %v436, %v464
        %v466 = vmul.f32 %v439, %v464
        %v467 = vmul.f32 %v442, %v464
        %v468 = vmul.f32 %v445, %v464
        %v469 = vmul.f32 %v448, %v464
        %v470 = vmul.f32 %v451, %v464
        %v471 = vmul.f32 %v454, %v464
        %v472 = vmul.f32 %v457, %v464
        %v473 = vsub.f32 %v374, %v465
        %v474 = vsub.f32 %v375, %v466
        %v475 = vsub.f32 %v376, %v467
        %v476 = vsub.f32 %v377, %v468
        %v477 = vsub.f32 %v378, %v469
        %v478 = vsub.f32 %v379, %v470
        %v479 = vsub.f32 %v380, %v471
        %v480 = vsub.f32 %v381, %v472
        %v481 = vmul.f32 %v473, %v473
        %v482 = vmul.f32 %v474, %v474
        %v483 = vmul.f32 %v475, %v475
        %v484 = vmul.f32 %v476, %v476
        %v485 = vmul.f32 %v477, %v477
        %v486 = vmul.f32 %v478, %v478
        %v487 = vmul.f32 %v479, %v479
        %v488 = vmul.f32 %v480, %v480
        %v489 = vsel %vm433, %v481, 0.0
        %490 = vadd.xlane.f32.xlu0 %v489
        %v491 = vpop.xlane.xlu0 %490
        %v492 = vsel %vm433, %v482, 0.0
        %493 = vadd.xlane.f32.xlu0 %v492
        %v494 = vpop.xlane.xlu0 %493
        %v495 = vsel %vm433, %v483, 0.0
        %496 = vadd.xlane.f32.xlu0 %v495
        %v497 = vpop.xlane.xlu0 %496
        %v498 = vsel %vm433, %v484, 0.0
        %499 = vadd.xlane.f32.xlu0 %v498
        %v500 = vpop.xlane.xlu0 %499
        %v501 = vsel %vm433, %v485, 0.0
        %502 = vadd.xlane.f32.xlu0 %v501
        %v503 = vpop.xlane.xlu0 %502
        %v504 = vsel %vm433, %v486, 0.0
        %505 = vadd.xlane.f32.xlu0 %v504
        %v506 = vpop.xlane.xlu0 %505
        %v507 = vsel %vm433, %v487, 0.0
        %508 = vadd.xlane.f32.xlu0 %v507
        %v509 = vpop.xlane.xlu0 %508
        %v510 = vsel %vm433, %v488, 0.0
        %511 = vadd.xlane.f32.xlu0 %v510
        %v512 = vpop.xlane.xlu0 %511
        %v513 = vmul.f32 %v491, %v464
        %v514 = vmul.f32 %v494, %v464
        %v515 = vmul.f32 %v497, %v464
        %v516 = vmul.f32 %v500, %v464
        %v517 = vmul.f32 %v503, %v464
        %v518 = vmul.f32 %v506, %v464
        %v519 = vmul.f32 %v509, %v464
        %v520 = vmul.f32 %v512, %v464
        %v521 = vadd.f32 %v513, 1e-12
        %v522 = vadd.f32 %v514, 1e-12
        %v523 = vadd.f32 %v515, 1e-12
        %v524 = vadd.f32 %v516, 1e-12
        %v525 = vadd.f32 %v517, 1e-12
        %v526 = vadd.f32 %v518, 1e-12
        %v527 = vadd.f32 %v519, 1e-12
        %v528 = vadd.f32 %v520, 1e-12
        %v529 = vrsqrt.pop %v521
        %v530 = vmul.f32 %v529, %v521
        %v531 = vmul.f32 %v530, %v529
        %v532 = vmul.f32 0.5, %v531
        %v533 = vsub.f32 1.5, %v532
        %v534 = vmul.f32 %v529, %v533
        %vm535 = vweird.f32 %v521
        %vm536 = vweird.f32 %v529
        %vm537 = vmor %vm535, %vm536
        %v538 = vsel %vm537, %v529, %v534
        %v539 = vrsqrt.pop %v522
        %v540 = vmul.f32 %v539, %v522
        %v541 = vmul.f32 %v540, %v539
        %v542 = vmul.f32 0.5, %v541
        %v543 = vsub.f32 1.5, %v542
        %v544 = vmul.f32 %v539, %v543
        %vm545 = vweird.f32 %v522
        %vm546 = vweird.f32 %v539
        %vm547 = vmor %vm545, %vm546
        %v548 = vsel %vm547, %v539, %v544
        %v549 = vrsqrt.pop %v523
        %v550 = vmul.f32 %v549, %v523
        %v551 = vmul.f32 %v550, %v549
        %v552 = vmul.f32 0.5, %v551
        %v553 = vsub.f32 1.5, %v552
        %v554 = vmul.f32 %v549, %v553
        %vm555 = vweird.f32 %v523
        %vm556 = vweird.f32 %v549
        %vm557 = vmor %vm555, %vm556
        %v558 = vsel %vm557, %v549, %v554
        %v559 = vrsqrt.pop %v524
        %v560 = vmul.f32 %v559, %v524
        %v561 = vmul.f32 %v560, %v559
        %v562 = vmul.f32 0.5, %v561
        %v563 = vsub.f32 1.5, %v562
        %v564 = vmul.f32 %v559, %v563
        %vm565 = vweird.f32 %v524
        %vm566 = vweird.f32 %v559
        %vm567 = vmor %vm565, %vm566
        %v568 = vsel %vm567, %v559, %v564
        %v569 = vrsqrt.pop %v525
        %v570 = vmul.f32 %v569, %v525
        %v571 = vmul.f32 %v570, %v569
        %v572 = vmul.f32 0.5, %v571
        %v573 = vsub.f32 1.5, %v572
        %v574 = vmul.f32 %v569, %v573
        %vm575 = vweird.f32 %v525
        %vm576 = vweird.f32 %v569
        %vm577 = vmor %vm575, %vm576
        %v578 = vsel %vm577, %v569, %v574
        %v579 = vrsqrt.pop %v526
        %v580 = vmul.f32 %v579, %v526
        %v581 = vmul.f32 %v580, %v579
        %v582 = vmul.f32 0.5, %v581
        %v583 = vsub.f32 1.5, %v582
        %v584 = vmul.f32 %v579, %v583
        %vm585 = vweird.f32 %v526
        %vm586 = vweird.f32 %v579
        %vm587 = vmor %vm585, %vm586
        %v588 = vsel %vm587, %v579, %v584
        %v589 = vrsqrt.pop %v527
        %v590 = vmul.f32 %v589, %v527
        %v591 = vmul.f32 %v590, %v589
        %v592 = vmul.f32 0.5, %v591
        %v593 = vsub.f32 1.5, %v592
        %v594 = vmul.f32 %v589, %v593
        %vm595 = vweird.f32 %v527
        %vm596 = vweird.f32 %v589
        %vm597 = vmor %vm595, %vm596
        %v598 = vsel %vm597, %v589, %v594
        %v599 = vrsqrt.pop %v528
        %v600 = vmul.f32 %v599, %v528
        %v601 = vmul.f32 %v600, %v599
        %v602 = vmul.f32 0.5, %v601
        %v603 = vsub.f32 1.5, %v602
        %v604 = vmul.f32 %v599, %v603
        %vm605 = vweird.f32 %v528
        %vm606 = vweird.f32 %v599
        %vm607 = vmor %vm605, %vm606
        %v608 = vsel %vm607, %v599, %v604
        %v609 = vmul.f32 %v473, %v538
        %v610 = vmul.f32 %v474, %v548
        %v611 = vmul.f32 %v475, %v558
        %v612 = vmul.f32 %v476, %v568
        %v613 = vmul.f32 %v477, %v578
        %v614 = vmul.f32 %v478, %v588
        %v615 = vmul.f32 %v479, %v598
        %v616 = vmul.f32 %v480, %v608
        %v617 = vperm.slane %v428, 0
        %v618 = vmul.f32 %v609, %v617
        %v619 = vmul.f32 %v610, %v617
        %v620 = vmul.f32 %v611, %v617
        %v621 = vmul.f32 %v612, %v617
        %v622 = vmul.f32 %v613, %v617
        %v623 = vmul.f32 %v614, %v617
        %v624 = vmul.f32 %v615, %v617
        %v625 = vmul.f32 %v616, %v617
        %v626 = vperm.slane %v428, 1
        %v627 = vadd.f32 %v618, %v626
        %v628 = vadd.f32 %v619, %v626
        %v629 = vadd.f32 %v620, %v626
        %v630 = vadd.f32 %v621, %v626
        %v631 = vadd.f32 %v622, %v626
        %v632 = vadd.f32 %v623, %v626
        %v633 = vadd.f32 %v624, %v626
        %v634 = vadd.f32 %v625, %v626
        %v635 = vsub.f32 1.0, %v382
        %v636 = vsub.f32 1.0, %v383
        %v637 = vsub.f32 1.0, %v384
        %v638 = vsub.f32 1.0, %v385
        %v639 = vsub.f32 1.0, %v386
        %v640 = vsub.f32 1.0, %v387
        %v641 = vsub.f32 1.0, %v388
        %v642 = vsub.f32 1.0, %v389
        %v643 = vmul.f32 %v635, -1e+09
        %v644 = vmul.f32 %v636, -1e+09
        %v645 = vmul.f32 %v637, -1e+09
        %v646 = vmul.f32 %v638, -1e+09
        %v647 = vmul.f32 %v639, -1e+09
        %v648 = vmul.f32 %v640, -1e+09
        %v649 = vmul.f32 %v641, -1e+09
        %v650 = vmul.f32 %v642, -1e+09
        %v651 = vpack.c.bf16 %v628, %v627
        %v652 = vpack.c.bf16 %v630, %v629
        %v653 = vpack.c.bf16 %v632, %v631
        %v654 = vpack.c.bf16 %v634, %v633
        %v656 = vperm.slane %v398, 0
        %v662 = vunpack.c.l.b16 %v390
        %v663 = vunpack.c.l.b16 %v391
        %v664 = vunpack.c.l.b16 %v392
        %v665 = vunpack.c.l.b16 %v393
        %v666 = vpack.c.b16 %v663, %v662
        %v667 = vpack.c.b16 %v665, %v664
        %v671 = vsel %vm433, %v651, 0
        %v674 = vsel %vm433, %v652, 0
        %v677 = vsel %vm433, %v653, 0
        %v680 = vsel %vm433, %v654, 0
        %682 = vmatpush.bf16.msra.mxu0 0
        %683 = vmatpush.bf16.msra.mxu0 0
        %684 = vmatpush.bf16.msra.mxu0 0
        %685 = vmatpush.bf16.msra.mxu0 0
        %686 = vmatpush.bf16.msra.mxu0 0
        %687 = vmatpush.bf16.msra.mxu0 0
        %688 = vmatpush.bf16.msra.mxu0 %v667
        %689 = vmatpush.bf16.msra.mxu0 %v666
        %690 = vmatmul.bf16.gmra.mxu0 %v671
        %v691 = vpop.f32.mrf.mxu0
        %v692 = vadd.f32 %v656, %v691
        %v693 = vpop.f32.mrf.mxu0
        %v694 = vadd.f32 %v656, %v693
        %695 = vmatmul.bf16.gmra.mxu0 %v674
        %v696 = vpop.f32.mrf.mxu0
        %v697 = vadd.f32 %v656, %v696
        %v698 = vpop.f32.mrf.mxu0
        %v699 = vadd.f32 %v656, %v698
        %700 = vmatmul.bf16.gmra.mxu0 %v677
        %v701 = vpop.f32.mrf.mxu0
        %v702 = vadd.f32 %v656, %v701
        %v703 = vpop.f32.mrf.mxu0
        %v704 = vadd.f32 %v656, %v703
        %705 = vmatmul.bf16.gmra.mxu0 %v680
        %v706 = vpop.f32.mrf.mxu0
        %v707 = vadd.f32 %v656, %v706
        %v708 = vpop.f32.mrf.mxu0
        %v709 = vadd.f32 %v656, %v708
        %710 = vdwg.mxu0
        %v711 = vmul.f32 %v692, 0.35355338
        %v712 = vmul.f32 %v694, 0.35355338
        %v713 = vmul.f32 %v697, 0.35355338
        %v714 = vmul.f32 %v699, 0.35355338
        %v715 = vmul.f32 %v702, 0.35355338
        %v716 = vmul.f32 %v704, 0.35355338
        %v717 = vmul.f32 %v707, 0.35355338
        %v718 = vmul.f32 %v709, 0.35355338
        %v719 = vpack.c.bf16 %v711, %v711
        %v720 = vpack.c.bf16 %v712, %v712
        %v721 = vpack.c.bf16 %v713, %v713
        %v722 = vpack.c.bf16 %v714, %v714
        %v723 = vpack.c.bf16 %v715, %v715
        %v724 = vpack.c.bf16 %v716, %v716
        %v725 = vpack.c.bf16 %v717, %v717
        %v726 = vpack.c.bf16 %v718, %v718
        %v727 = vpack.c.bf16 %v692, %v692
        %v728 = vpack.c.bf16 %v694, %v694
        %v729 = vpack.c.bf16 %v697, %v697
        %v730 = vpack.c.bf16 %v699, %v699
        %v731 = vpack.c.bf16 %v702, %v702
        %v732 = vpack.c.bf16 %v704, %v704
        %v733 = vpack.c.bf16 %v707, %v707
        %v734 = vpack.c.bf16 %v709, %v709
        %v743 = vperm.slane %v643, 0
        %v744 = vperm.slane %v644, 0
        %v745 = vperm.slane %v645, 0
        %v746 = vperm.slane %v646, 0
        %v747 = vperm.slane %v647, 0
        %v748 = vperm.slane %v648, 0
        %v749 = vperm.slane %v649, 0
        %v750 = vperm.slane %v650, 0
        %v760 = vunpack.c.l.b16 %v727
        %v761 = vpack.c.b16 %v760, %v760
        %762 = vrot.lane.b32.xlu0 %v761, 96
        %v763 = vpop.permute.xlu0 %762
        %vm764 = vcmask 64512
        %v766 = vsel %vm764, %v719, 0
        %v769 = vsel %vm764, %v763, 0
        %771 = vmatpush.bf16.xpose.msra.mxu0 0
        %772 = vmatpush.bf16.xpose.msra.mxu0 0
        %773 = vmatpush.bf16.xpose.msra.mxu0 0
        %774 = vmatpush.bf16.xpose.msra.mxu0 0
        %775 = vmatpush.bf16.xpose.msra.mxu0 0
        %776 = vmatpush.bf16.xpose.msra.mxu0 0
        %777 = vmatpush.bf16.xpose.msra.mxu0 0
        %778 = vmatpush.bf16.xpose.msra.mxu0 %v769
        %779 = vmatmul.bf16.gmra.mxu0 %v766
        %v780 = vpop.f32.mrf.mxu0
        %v781 = vadd.f32 %v743, %v780
        %v782 = vpop.f32.mrf.mxu0
        %783 = vdwg.mxu0
        %v785 = vunpack.c.l.b16 %v728
        %v786 = vpack.c.b16 %v785, %v785
        %787 = vrot.lane.b32.xlu0 %v786, 96
        %v788 = vpop.permute.xlu0 %787
        %v790 = vsel %vm764, %v720, 0
        %v793 = vsel %vm764, %v788, 0
        %795 = vmatpush.bf16.xpose.msra.mxu0 0
        %796 = vmatpush.bf16.xpose.msra.mxu0 0
        %797 = vmatpush.bf16.xpose.msra.mxu0 0
        %798 = vmatpush.bf16.xpose.msra.mxu0 0
        %799 = vmatpush.bf16.xpose.msra.mxu0 0
        %800 = vmatpush.bf16.xpose.msra.mxu0 0
        %801 = vmatpush.bf16.xpose.msra.mxu0 0
        %802 = vmatpush.bf16.xpose.msra.mxu0 %v793
        %803 = vmatmul.bf16.gmra.mxu0 %v790
        %v804 = vpop.f32.mrf.mxu0
        %v805 = vadd.f32 %v744, %v804
        %v806 = vpop.f32.mrf.mxu0
        %807 = vdwg.mxu0
        %v809 = vunpack.c.l.b16 %v729
        %v810 = vpack.c.b16 %v809, %v809
        %811 = vrot.lane.b32.xlu0 %v810, 96
        %v812 = vpop.permute.xlu0 %811
        %v814 = vsel %vm764, %v721, 0
        %v817 = vsel %vm764, %v812, 0
        %819 = vmatpush.bf16.xpose.msra.mxu0 0
        %820 = vmatpush.bf16.xpose.msra.mxu0 0
        %821 = vmatpush.bf16.xpose.msra.mxu0 0
        %822 = vmatpush.bf16.xpose.msra.mxu0 0
        %823 = vmatpush.bf16.xpose.msra.mxu0 0
        %824 = vmatpush.bf16.xpose.msra.mxu0 0
        %825 = vmatpush.bf16.xpose.msra.mxu0 0
        %826 = vmatpush.bf16.xpose.msra.mxu0 %v817
        %827 = vmatmul.bf16.gmra.mxu0 %v814
        %v828 = vpop.f32.mrf.mxu0
        %v829 = vadd.f32 %v745, %v828
        %v830 = vpop.f32.mrf.mxu0
        %831 = vdwg.mxu0
        %v833 = vunpack.c.l.b16 %v730
        %v834 = vpack.c.b16 %v833, %v833
        %835 = vrot.lane.b32.xlu0 %v834, 96
        %v836 = vpop.permute.xlu0 %835
        %v838 = vsel %vm764, %v722, 0
        %v841 = vsel %vm764, %v836, 0
        %843 = vmatpush.bf16.xpose.msra.mxu0 0
        %844 = vmatpush.bf16.xpose.msra.mxu0 0
        %845 = vmatpush.bf16.xpose.msra.mxu0 0
        %846 = vmatpush.bf16.xpose.msra.mxu0 0
        %847 = vmatpush.bf16.xpose.msra.mxu0 0
        %848 = vmatpush.bf16.xpose.msra.mxu0 0
        %849 = vmatpush.bf16.xpose.msra.mxu0 0
        %850 = vmatpush.bf16.xpose.msra.mxu0 %v841
        %851 = vmatmul.bf16.gmra.mxu0 %v838
        %v852 = vpop.f32.mrf.mxu0
        %v853 = vadd.f32 %v746, %v852
        %v854 = vpop.f32.mrf.mxu0
        %855 = vdwg.mxu0
        %v857 = vunpack.c.l.b16 %v731
        %v858 = vpack.c.b16 %v857, %v857
        %859 = vrot.lane.b32.xlu0 %v858, 96
        %v860 = vpop.permute.xlu0 %859
        %v862 = vsel %vm764, %v723, 0
        %v865 = vsel %vm764, %v860, 0
        %867 = vmatpush.bf16.xpose.msra.mxu0 0
        %868 = vmatpush.bf16.xpose.msra.mxu0 0
        %869 = vmatpush.bf16.xpose.msra.mxu0 0
        %870 = vmatpush.bf16.xpose.msra.mxu0 0
        %871 = vmatpush.bf16.xpose.msra.mxu0 0
        %872 = vmatpush.bf16.xpose.msra.mxu0 0
        %873 = vmatpush.bf16.xpose.msra.mxu0 0
        %874 = vmatpush.bf16.xpose.msra.mxu0 %v865
        %875 = vmatmul.bf16.gmra.mxu0 %v862
        %v876 = vpop.f32.mrf.mxu0
        %v877 = vadd.f32 %v747, %v876
        %v878 = vpop.f32.mrf.mxu0
        %879 = vdwg.mxu0
        %v881 = vunpack.c.l.b16 %v732
        %v882 = vpack.c.b16 %v881, %v881
        %883 = vrot.lane.b32.xlu0 %v882, 96
        %v884 = vpop.permute.xlu0 %883
        %v886 = vsel %vm764, %v724, 0
        %v889 = vsel %vm764, %v884, 0
        %891 = vmatpush.bf16.xpose.msra.mxu0 0
        %892 = vmatpush.bf16.xpose.msra.mxu0 0
        %893 = vmatpush.bf16.xpose.msra.mxu0 0
        %894 = vmatpush.bf16.xpose.msra.mxu0 0
        %895 = vmatpush.bf16.xpose.msra.mxu0 0
        %896 = vmatpush.bf16.xpose.msra.mxu0 0
        %897 = vmatpush.bf16.xpose.msra.mxu0 0
        %898 = vmatpush.bf16.xpose.msra.mxu0 %v889
        %899 = vmatmul.bf16.gmra.mxu0 %v886
        %v900 = vpop.f32.mrf.mxu0
        %v901 = vadd.f32 %v748, %v900
        %v902 = vpop.f32.mrf.mxu0
        %903 = vdwg.mxu0
        %v905 = vunpack.c.l.b16 %v733
        %v906 = vpack.c.b16 %v905, %v905
        %907 = vrot.lane.b32.xlu0 %v906, 96
        %v908 = vpop.permute.xlu0 %907
        %v910 = vsel %vm764, %v725, 0
        %v913 = vsel %vm764, %v908, 0
        %915 = vmatpush.bf16.xpose.msra.mxu0 0
        %916 = vmatpush.bf16.xpose.msra.mxu0 0
        %917 = vmatpush.bf16.xpose.msra.mxu0 0
        %918 = vmatpush.bf16.xpose.msra.mxu0 0
        %919 = vmatpush.bf16.xpose.msra.mxu0 0
        %920 = vmatpush.bf16.xpose.msra.mxu0 0
        %921 = vmatpush.bf16.xpose.msra.mxu0 0
        %922 = vmatpush.bf16.xpose.msra.mxu0 %v913
        %923 = vmatmul.bf16.gmra.mxu0 %v910
        %v924 = vpop.f32.mrf.mxu0
        %v925 = vadd.f32 %v749, %v924
        %v926 = vpop.f32.mrf.mxu0
        %927 = vdwg.mxu0
        %v929 = vunpack.c.l.b16 %v734
        %v930 = vpack.c.b16 %v929, %v929
        %931 = vrot.lane.b32.xlu0 %v930, 96
        %v932 = vpop.permute.xlu0 %931
        %v934 = vsel %vm764, %v726, 0
        %v937 = vsel %vm764, %v932, 0
        %939 = vmatpush.bf16.xpose.msra.mxu0 0
        %940 = vmatpush.bf16.xpose.msra.mxu0 0
        %941 = vmatpush.bf16.xpose.msra.mxu0 0
        %942 = vmatpush.bf16.xpose.msra.mxu0 0
        %943 = vmatpush.bf16.xpose.msra.mxu0 0
        %944 = vmatpush.bf16.xpose.msra.mxu0 0
        %945 = vmatpush.bf16.xpose.msra.mxu0 0
        %946 = vmatpush.bf16.xpose.msra.mxu0 %v937
        %947 = vmatmul.bf16.gmra.mxu0 %v934
        %v948 = vpop.f32.mrf.mxu0
        %v949 = vadd.f32 %v750, %v948
        %v950 = vpop.f32.mrf.mxu0
        %951 = vdwg.mxu0
        %v952 = vsel %vm764, %v781, -inf
        %953 = vmax.xlane.f32.xlu0 %v952
        %v954 = vpop.xlane.xlu0 %953
        %v955 = vsel %vm764, %v805, -inf
        %956 = vmax.xlane.f32.xlu0 %v955
        %v957 = vpop.xlane.xlu0 %956
        %v958 = vsel %vm764, %v829, -inf
        %959 = vmax.xlane.f32.xlu0 %v958
        %v960 = vpop.xlane.xlu0 %959
        %v961 = vsel %vm764, %v853, -inf
        %962 = vmax.xlane.f32.xlu0 %v961
        %v963 = vpop.xlane.xlu0 %962
        %v964 = vsel %vm764, %v877, -inf
        %965 = vmax.xlane.f32.xlu0 %v964
        %v966 = vpop.xlane.xlu0 %965
        %v967 = vsel %vm764, %v901, -inf
        %968 = vmax.xlane.f32.xlu0 %v967
        %v969 = vpop.xlane.xlu0 %968
        %v970 = vsel %vm764, %v925, -inf
        %971 = vmax.xlane.f32.xlu0 %v970
        %v972 = vpop.xlane.xlu0 %971
        %v973 = vsel %vm764, %v949, -inf
        %974 = vmax.xlane.f32.xlu0 %v973
        %v975 = vpop.xlane.xlu0 %974
        %v976 = vsub.f32 %v781, %v954
        %v977 = vsub.f32 %v805, %v957
        %v978 = vsub.f32 %v829, %v960
        %v979 = vsub.f32 %v853, %v963
        %v980 = vsub.f32 %v877, %v966
        %v981 = vsub.f32 %v901, %v969
        %v982 = vsub.f32 %v925, %v972
        %v983 = vsub.f32 %v949, %v975
        %v984 = vmul.f32 %v976, 1.442695
        %v985 = vpow.pop %v984
        %v986 = vmul.f32 %v977, 1.442695
        %v987 = vpow.pop %v986
        %v988 = vmul.f32 %v978, 1.442695
        %v989 = vpow.pop %v988
        %v990 = vmul.f32 %v979, 1.442695
        %v991 = vpow.pop %v990
        %v992 = vmul.f32 %v980, 1.442695
        %v993 = vpow.pop %v992
        %v994 = vmul.f32 %v981, 1.442695
        %v995 = vpow.pop %v994
        %v996 = vmul.f32 %v982, 1.442695
        %v997 = vpow.pop %v996
        %v998 = vmul.f32 %v983, 1.442695
        %v999 = vpow.pop %v998
        %v1000 = vsel %vm764, %v985, 0.0
        %1001 = vadd.xlane.f32.xlu0 %v1000
        %v1002 = vpop.xlane.xlu0 %1001
        %v1003 = vsel %vm764, %v987, 0.0
        %1004 = vadd.xlane.f32.xlu0 %v1003
        %v1005 = vpop.xlane.xlu0 %1004
        %v1006 = vsel %vm764, %v989, 0.0
        %1007 = vadd.xlane.f32.xlu0 %v1006
        %v1008 = vpop.xlane.xlu0 %1007
        %v1009 = vsel %vm764, %v991, 0.0
        %1010 = vadd.xlane.f32.xlu0 %v1009
        %v1011 = vpop.xlane.xlu0 %1010
        %v1012 = vsel %vm764, %v993, 0.0
        %1013 = vadd.xlane.f32.xlu0 %v1012
        %v1014 = vpop.xlane.xlu0 %1013
        %v1015 = vsel %vm764, %v995, 0.0
        %1016 = vadd.xlane.f32.xlu0 %v1015
        %v1017 = vpop.xlane.xlu0 %1016
        %v1018 = vsel %vm764, %v997, 0.0
        %1019 = vadd.xlane.f32.xlu0 %v1018
        %v1020 = vpop.xlane.xlu0 %1019
        %v1021 = vsel %vm764, %v999, 0.0
        %1022 = vadd.xlane.f32.xlu0 %v1021
        %v1023 = vpop.xlane.xlu0 %1022
        %v1024 = vrcp.pop %v1002
        %v1025 = vrcp.pop %v1005
        %v1026 = vrcp.pop %v1008
        %v1027 = vrcp.pop %v1011
        %v1028 = vrcp.pop %v1014
        %v1029 = vrcp.pop %v1017
        %v1030 = vrcp.pop %v1020
        %v1031 = vrcp.pop %v1023
        %v1032 = vmul.f32 %v985, %v1024
        %v1033 = vmul.f32 %v987, %v1025
        %v1034 = vmul.f32 %v989, %v1026
        %v1035 = vmul.f32 %v991, %v1027
        %v1036 = vmul.f32 %v993, %v1028
        %v1037 = vmul.f32 %v995, %v1029
        %v1038 = vmul.f32 %v997, %v1030
        %v1039 = vmul.f32 %v999, %v1031
        %v1040 = vpack.c.bf16 %v1032, %v1032
        %v1041 = vpack.c.bf16 %v1033, %v1033
        %v1042 = vpack.c.bf16 %v1034, %v1034
        %v1043 = vpack.c.bf16 %v1035, %v1035
        %v1044 = vpack.c.bf16 %v1036, %v1036
        %v1045 = vpack.c.bf16 %v1037, %v1037
        %v1046 = vpack.c.bf16 %v1038, %v1038
        %v1047 = vpack.c.bf16 %v1039, %v1039
        %1048 = vrot.lane.b32.xlu0 %v761, 64
        %v1049 = vpop.permute.xlu0 %1048
        %v1051 = vsel %vm764, %v1040, 0
        %vm1053 = vcmask 1043456
        %v1055 = vsel %vm1053, %v1049, 0
        %1057 = vmatpush.bf16.msra.mxu0 0
        %1058 = vmatpush.bf16.msra.mxu0 0
        %1059 = vmatpush.bf16.msra.mxu0 0
        %1060 = vmatpush.bf16.msra.mxu0 0
        %1061 = vmatpush.bf16.msra.mxu0 0
        %1062 = vmatpush.bf16.msra.mxu0 0
        %1063 = vmatpush.bf16.msra.mxu0 0
        %1064 = vmatpush.bf16.msra.mxu0 %v1055
        %1065 = vmatmul.bf16.gmra.mxu0 %v1051
        %v1066 = vpop.f32.mrf.mxu0
        %v1067 = vadd.f32 0.0, %v1066
        %v1068 = vpop.f32.mrf.mxu0
        %1069 = vdwg.mxu0
        %1070 = vrot.lane.b32.xlu0 %v786, 64
        %v1071 = vpop.permute.xlu0 %1070
        %v1073 = vsel %vm764, %v1041, 0
        %v1076 = vsel %vm1053, %v1071, 0
        %1078 = vmatpush.bf16.msra.mxu0 0
        %1079 = vmatpush.bf16.msra.mxu0 0
        %1080 = vmatpush.bf16.msra.mxu0 0
        %1081 = vmatpush.bf16.msra.mxu0 0
        %1082 = vmatpush.bf16.msra.mxu0 0
        %1083 = vmatpush.bf16.msra.mxu0 0
        %1084 = vmatpush.bf16.msra.mxu0 0
        %1085 = vmatpush.bf16.msra.mxu0 %v1076
        %1086 = vmatmul.bf16.gmra.mxu0 %v1073
        %v1087 = vpop.f32.mrf.mxu0
        %v1088 = vadd.f32 0.0, %v1087
        %v1089 = vpop.f32.mrf.mxu0
        %1090 = vdwg.mxu0
        %1091 = vrot.lane.b32.xlu0 %v810, 64
        %v1092 = vpop.permute.xlu0 %1091
        %v1094 = vsel %vm764, %v1042, 0
        %v1097 = vsel %vm1053, %v1092, 0
        %1099 = vmatpush.bf16.msra.mxu0 0
        %1100 = vmatpush.bf16.msra.mxu0 0
        %1101 = vmatpush.bf16.msra.mxu0 0
        %1102 = vmatpush.bf16.msra.mxu0 0
        %1103 = vmatpush.bf16.msra.mxu0 0
        %1104 = vmatpush.bf16.msra.mxu0 0
        %1105 = vmatpush.bf16.msra.mxu0 0
        %1106 = vmatpush.bf16.msra.mxu0 %v1097
        %1107 = vmatmul.bf16.gmra.mxu0 %v1094
        %v1108 = vpop.f32.mrf.mxu0
        %v1109 = vadd.f32 0.0, %v1108
        %v1110 = vpop.f32.mrf.mxu0
        %1111 = vdwg.mxu0
        %1112 = vrot.lane.b32.xlu0 %v834, 64
        %v1113 = vpop.permute.xlu0 %1112
        %v1115 = vsel %vm764, %v1043, 0
        %v1118 = vsel %vm1053, %v1113, 0
        %1120 = vmatpush.bf16.msra.mxu0 0
        %1121 = vmatpush.bf16.msra.mxu0 0
        %1122 = vmatpush.bf16.msra.mxu0 0
        %1123 = vmatpush.bf16.msra.mxu0 0
        %1124 = vmatpush.bf16.msra.mxu0 0
        %1125 = vmatpush.bf16.msra.mxu0 0
        %1126 = vmatpush.bf16.msra.mxu0 0
        %1127 = vmatpush.bf16.msra.mxu0 %v1118
        %1128 = vmatmul.bf16.gmra.mxu0 %v1115
        %v1129 = vpop.f32.mrf.mxu0
        %v1130 = vadd.f32 0.0, %v1129
        %v1131 = vpop.f32.mrf.mxu0
        %1132 = vdwg.mxu0
        %1133 = vrot.lane.b32.xlu0 %v858, 64
        %v1134 = vpop.permute.xlu0 %1133
        %v1136 = vsel %vm764, %v1044, 0
        %v1139 = vsel %vm1053, %v1134, 0
        %1141 = vmatpush.bf16.msra.mxu0 0
        %1142 = vmatpush.bf16.msra.mxu0 0
        %1143 = vmatpush.bf16.msra.mxu0 0
        %1144 = vmatpush.bf16.msra.mxu0 0
        %1145 = vmatpush.bf16.msra.mxu0 0
        %1146 = vmatpush.bf16.msra.mxu0 0
        %1147 = vmatpush.bf16.msra.mxu0 0
        %1148 = vmatpush.bf16.msra.mxu0 %v1139
        %1149 = vmatmul.bf16.gmra.mxu0 %v1136
        %v1150 = vpop.f32.mrf.mxu0
        %v1151 = vadd.f32 0.0, %v1150
        %v1152 = vpop.f32.mrf.mxu0
        %1153 = vdwg.mxu0
        %1154 = vrot.lane.b32.xlu0 %v882, 64
        %v1155 = vpop.permute.xlu0 %1154
        %v1157 = vsel %vm764, %v1045, 0
        %v1160 = vsel %vm1053, %v1155, 0
        %1162 = vmatpush.bf16.msra.mxu0 0
        %1163 = vmatpush.bf16.msra.mxu0 0
        %1164 = vmatpush.bf16.msra.mxu0 0
        %1165 = vmatpush.bf16.msra.mxu0 0
        %1166 = vmatpush.bf16.msra.mxu0 0
        %1167 = vmatpush.bf16.msra.mxu0 0
        %1168 = vmatpush.bf16.msra.mxu0 0
        %1169 = vmatpush.bf16.msra.mxu0 %v1160
        %1170 = vmatmul.bf16.gmra.mxu0 %v1157
        %v1171 = vpop.f32.mrf.mxu0
        %v1172 = vadd.f32 0.0, %v1171
        %v1173 = vpop.f32.mrf.mxu0
        %1174 = vdwg.mxu0
        %1175 = vrot.lane.b32.xlu0 %v906, 64
        %v1176 = vpop.permute.xlu0 %1175
        %v1178 = vsel %vm764, %v1046, 0
        %v1181 = vsel %vm1053, %v1176, 0
        %1183 = vmatpush.bf16.msra.mxu0 0
        %1184 = vmatpush.bf16.msra.mxu0 0
        %1185 = vmatpush.bf16.msra.mxu0 0
        %1186 = vmatpush.bf16.msra.mxu0 0
        %1187 = vmatpush.bf16.msra.mxu0 0
        %1188 = vmatpush.bf16.msra.mxu0 0
        %1189 = vmatpush.bf16.msra.mxu0 0
        %1190 = vmatpush.bf16.msra.mxu0 %v1181
        %1191 = vmatmul.bf16.gmra.mxu0 %v1178
        %v1192 = vpop.f32.mrf.mxu0
        %v1193 = vadd.f32 0.0, %v1192
        %v1194 = vpop.f32.mrf.mxu0
        %1195 = vdwg.mxu0
        %1196 = vrot.lane.b32.xlu0 %v930, 64
        %v1197 = vpop.permute.xlu0 %1196
        %v1199 = vsel %vm764, %v1047, 0
        %v1202 = vsel %vm1053, %v1197, 0
        %1204 = vmatpush.bf16.msra.mxu0 0
        %1205 = vmatpush.bf16.msra.mxu0 0
        %1206 = vmatpush.bf16.msra.mxu0 0
        %1207 = vmatpush.bf16.msra.mxu0 0
        %1208 = vmatpush.bf16.msra.mxu0 0
        %1209 = vmatpush.bf16.msra.mxu0 0
        %1210 = vmatpush.bf16.msra.mxu0 0
        %1211 = vmatpush.bf16.msra.mxu0 %v1202
        %1212 = vmatmul.bf16.gmra.mxu0 %v1199
        %v1213 = vpop.f32.mrf.mxu0
        %v1214 = vadd.f32 0.0, %v1213
        %v1215 = vpop.f32.mrf.mxu0
        %1216 = vdwg.mxu0
        %v1217 = vpack.c.bf16 %v1088, %v1067
        %v1218 = vpack.c.bf16 %v1130, %v1109
        %v1219 = vpack.c.bf16 %v1172, %v1151
        %v1220 = vpack.c.bf16 %v1214, %v1193
        %v1222 = vunpack.c.l.b16 %v719
        %v1223 = vpack.c.b16 %v1222, %v1222
        %1224 = vrot.lane.b32.xlu0 %v1223, 120
        %v1225 = vpop.permute.xlu0 %1224
        %1226 = vrot.lane.b32.xlu0 %v761, 88
        %v1227 = vpop.permute.xlu0 %1226
        %v1229 = vsel %vm764, %v1225, 0
        %v1232 = vsel %vm764, %v1227, 0
        %1234 = vmatpush.bf16.xpose.msra.mxu0 0
        %1235 = vmatpush.bf16.xpose.msra.mxu0 0
        %1236 = vmatpush.bf16.xpose.msra.mxu0 0
        %1237 = vmatpush.bf16.xpose.msra.mxu0 0
        %1238 = vmatpush.bf16.xpose.msra.mxu0 0
        %1239 = vmatpush.bf16.xpose.msra.mxu0 0
        %1240 = vmatpush.bf16.xpose.msra.mxu0 0
        %1241 = vmatpush.bf16.xpose.msra.mxu0 %v1232
        %1242 = vmatmul.bf16.gmra.mxu0 %v1229
        %v1243 = vpop.f32.mrf.mxu0
        %v1244 = vadd.f32 %v743, %v1243
        %v1245 = vpop.f32.mrf.mxu0
        %1246 = vdwg.mxu0
        %v1248 = vunpack.c.l.b16 %v720
        %v1249 = vpack.c.b16 %v1248, %v1248
        %1250 = vrot.lane.b32.xlu0 %v1249, 120
        %v1251 = vpop.permute.xlu0 %1250
        %1252 = vrot.lane.b32.xlu0 %v786, 88
        %v1253 = vpop.permute.xlu0 %1252
        %v1255 = vsel %vm764, %v1251, 0
        %v1258 = vsel %vm764, %v1253, 0
        %1260 = vmatpush.bf16.xpose.msra.mxu0 0
        %1261 = vmatpush.bf16.xpose.msra.mxu0 0
        %1262 = vmatpush.bf16.xpose.msra.mxu0 0
        %1263 = vmatpush.bf16.xpose.msra.mxu0 0
        %1264 = vmatpush.bf16.xpose.msra.mxu0 0
        %1265 = vmatpush.bf16.xpose.msra.mxu0 0
        %1266 = vmatpush.bf16.xpose.msra.mxu0 0
        %1267 = vmatpush.bf16.xpose.msra.mxu0 %v1258
        %1268 = vmatmul.bf16.gmra.mxu0 %v1255
        %v1269 = vpop.f32.mrf.mxu0
        %v1270 = vadd.f32 %v744, %v1269
        %v1271 = vpop.f32.mrf.mxu0
        %1272 = vdwg.mxu0
        %v1274 = vunpack.c.l.b16 %v721
        %v1275 = vpack.c.b16 %v1274, %v1274
        %1276 = vrot.lane.b32.xlu0 %v1275, 120
        %v1277 = vpop.permute.xlu0 %1276
        %1278 = vrot.lane.b32.xlu0 %v810, 88
        %v1279 = vpop.permute.xlu0 %1278
        %v1281 = vsel %vm764, %v1277, 0
        %v1284 = vsel %vm764, %v1279, 0
        %1286 = vmatpush.bf16.xpose.msra.mxu0 0
        %1287 = vmatpush.bf16.xpose.msra.mxu0 0
        %1288 = vmatpush.bf16.xpose.msra.mxu0 0
        %1289 = vmatpush.bf16.xpose.msra.mxu0 0
        %1290 = vmatpush.bf16.xpose.msra.mxu0 0
        %1291 = vmatpush.bf16.xpose.msra.mxu0 0
        %1292 = vmatpush.bf16.xpose.msra.mxu0 0
        %1293 = vmatpush.bf16.xpose.msra.mxu0 %v1284
        %1294 = vmatmul.bf16.gmra.mxu0 %v1281
        %v1295 = vpop.f32.mrf.mxu0
        %v1296 = vadd.f32 %v745, %v1295
        %v1297 = vpop.f32.mrf.mxu0
        %1298 = vdwg.mxu0
        %v1300 = vunpack.c.l.b16 %v722
        %v1301 = vpack.c.b16 %v1300, %v1300
        %1302 = vrot.lane.b32.xlu0 %v1301, 120
        %v1303 = vpop.permute.xlu0 %1302
        %1304 = vrot.lane.b32.xlu0 %v834, 88
        %v1305 = vpop.permute.xlu0 %1304
        %v1307 = vsel %vm764, %v1303, 0
        %v1310 = vsel %vm764, %v1305, 0
        %1312 = vmatpush.bf16.xpose.msra.mxu0 0
        %1313 = vmatpush.bf16.xpose.msra.mxu0 0
        %1314 = vmatpush.bf16.xpose.msra.mxu0 0
        %1315 = vmatpush.bf16.xpose.msra.mxu0 0
        %1316 = vmatpush.bf16.xpose.msra.mxu0 0
        %1317 = vmatpush.bf16.xpose.msra.mxu0 0
        %1318 = vmatpush.bf16.xpose.msra.mxu0 0
        %1319 = vmatpush.bf16.xpose.msra.mxu0 %v1310
        %1320 = vmatmul.bf16.gmra.mxu0 %v1307
        %v1321 = vpop.f32.mrf.mxu0
        %v1322 = vadd.f32 %v746, %v1321
        %v1323 = vpop.f32.mrf.mxu0
        %1324 = vdwg.mxu0
        %v1326 = vunpack.c.l.b16 %v723
        %v1327 = vpack.c.b16 %v1326, %v1326
        %1328 = vrot.lane.b32.xlu0 %v1327, 120
        %v1329 = vpop.permute.xlu0 %1328
        %1330 = vrot.lane.b32.xlu0 %v858, 88
        %v1331 = vpop.permute.xlu0 %1330
        %v1333 = vsel %vm764, %v1329, 0
        %v1336 = vsel %vm764, %v1331, 0
        %1338 = vmatpush.bf16.xpose.msra.mxu0 0
        %1339 = vmatpush.bf16.xpose.msra.mxu0 0
        %1340 = vmatpush.bf16.xpose.msra.mxu0 0
        %1341 = vmatpush.bf16.xpose.msra.mxu0 0
        %1342 = vmatpush.bf16.xpose.msra.mxu0 0
        %1343 = vmatpush.bf16.xpose.msra.mxu0 0
        %1344 = vmatpush.bf16.xpose.msra.mxu0 0
        %1345 = vmatpush.bf16.xpose.msra.mxu0 %v1336
        %1346 = vmatmul.bf16.gmra.mxu0 %v1333
        %v1347 = vpop.f32.mrf.mxu0
        %v1348 = vadd.f32 %v747, %v1347
        %v1349 = vpop.f32.mrf.mxu0
        %1350 = vdwg.mxu0
        %v1352 = vunpack.c.l.b16 %v724
        %v1353 = vpack.c.b16 %v1352, %v1352
        %1354 = vrot.lane.b32.xlu0 %v1353, 120
        %v1355 = vpop.permute.xlu0 %1354
        %1356 = vrot.lane.b32.xlu0 %v882, 88
        %v1357 = vpop.permute.xlu0 %1356
        %v1359 = vsel %vm764, %v1355, 0
        %v1362 = vsel %vm764, %v1357, 0
        %1364 = vmatpush.bf16.xpose.msra.mxu0 0
        %1365 = vmatpush.bf16.xpose.msra.mxu0 0
        %1366 = vmatpush.bf16.xpose.msra.mxu0 0
        %1367 = vmatpush.bf16.xpose.msra.mxu0 0
        %1368 = vmatpush.bf16.xpose.msra.mxu0 0
        %1369 = vmatpush.bf16.xpose.msra.mxu0 0
        %1370 = vmatpush.bf16.xpose.msra.mxu0 0
        %1371 = vmatpush.bf16.xpose.msra.mxu0 %v1362
        %1372 = vmatmul.bf16.gmra.mxu0 %v1359
        %v1373 = vpop.f32.mrf.mxu0
        %v1374 = vadd.f32 %v748, %v1373
        %v1375 = vpop.f32.mrf.mxu0
        %1376 = vdwg.mxu0
        %v1378 = vunpack.c.l.b16 %v725
        %v1379 = vpack.c.b16 %v1378, %v1378
        %1380 = vrot.lane.b32.xlu0 %v1379, 120
        %v1381 = vpop.permute.xlu0 %1380
        %1382 = vrot.lane.b32.xlu0 %v906, 88
        %v1383 = vpop.permute.xlu0 %1382
        %v1385 = vsel %vm764, %v1381, 0
        %v1388 = vsel %vm764, %v1383, 0
        %1390 = vmatpush.bf16.xpose.msra.mxu0 0
        %1391 = vmatpush.bf16.xpose.msra.mxu0 0
        %1392 = vmatpush.bf16.xpose.msra.mxu0 0
        %1393 = vmatpush.bf16.xpose.msra.mxu0 0
        %1394 = vmatpush.bf16.xpose.msra.mxu0 0
        %1395 = vmatpush.bf16.xpose.msra.mxu0 0
        %1396 = vmatpush.bf16.xpose.msra.mxu0 0
        %1397 = vmatpush.bf16.xpose.msra.mxu0 %v1388
        %1398 = vmatmul.bf16.gmra.mxu0 %v1385
        %v1399 = vpop.f32.mrf.mxu0
        %v1400 = vadd.f32 %v749, %v1399
        %v1401 = vpop.f32.mrf.mxu0
        %1402 = vdwg.mxu0
        %v1404 = vunpack.c.l.b16 %v726
        %v1405 = vpack.c.b16 %v1404, %v1404
        %1406 = vrot.lane.b32.xlu0 %v1405, 120
        %v1407 = vpop.permute.xlu0 %1406
        %1408 = vrot.lane.b32.xlu0 %v930, 88
        %v1409 = vpop.permute.xlu0 %1408
        %v1411 = vsel %vm764, %v1407, 0
        %v1414 = vsel %vm764, %v1409, 0
        %1416 = vmatpush.bf16.xpose.msra.mxu0 0
        %1417 = vmatpush.bf16.xpose.msra.mxu0 0
        %1418 = vmatpush.bf16.xpose.msra.mxu0 0
        %1419 = vmatpush.bf16.xpose.msra.mxu0 0
        %1420 = vmatpush.bf16.xpose.msra.mxu0 0
        %1421 = vmatpush.bf16.xpose.msra.mxu0 0
        %1422 = vmatpush.bf16.xpose.msra.mxu0 0
        %1423 = vmatpush.bf16.xpose.msra.mxu0 %v1414
        %1424 = vmatmul.bf16.gmra.mxu0 %v1411
        %v1425 = vpop.f32.mrf.mxu0
        %v1426 = vadd.f32 %v750, %v1425
        %v1427 = vpop.f32.mrf.mxu0
        %1428 = vdwg.mxu0
        %v1429 = vsel %vm764, %v1244, -inf
        %1430 = vmax.xlane.f32.xlu0 %v1429
        %v1431 = vpop.xlane.xlu0 %1430
        %v1432 = vsel %vm764, %v1270, -inf
        %1433 = vmax.xlane.f32.xlu0 %v1432
        %v1434 = vpop.xlane.xlu0 %1433
        %v1435 = vsel %vm764, %v1296, -inf
        %1436 = vmax.xlane.f32.xlu0 %v1435
        %v1437 = vpop.xlane.xlu0 %1436
        %v1438 = vsel %vm764, %v1322, -inf
        %1439 = vmax.xlane.f32.xlu0 %v1438
        %v1440 = vpop.xlane.xlu0 %1439
        %v1441 = vsel %vm764, %v1348, -inf
        %1442 = vmax.xlane.f32.xlu0 %v1441
        %v1443 = vpop.xlane.xlu0 %1442
        %v1444 = vsel %vm764, %v1374, -inf
        %1445 = vmax.xlane.f32.xlu0 %v1444
        %v1446 = vpop.xlane.xlu0 %1445
        %v1447 = vsel %vm764, %v1400, -inf
        %1448 = vmax.xlane.f32.xlu0 %v1447
        %v1449 = vpop.xlane.xlu0 %1448
        %v1450 = vsel %vm764, %v1426, -inf
        %1451 = vmax.xlane.f32.xlu0 %v1450
        %v1452 = vpop.xlane.xlu0 %1451
        %v1453 = vsub.f32 %v1244, %v1431
        %v1454 = vsub.f32 %v1270, %v1434
        %v1455 = vsub.f32 %v1296, %v1437
        %v1456 = vsub.f32 %v1322, %v1440
        %v1457 = vsub.f32 %v1348, %v1443
        %v1458 = vsub.f32 %v1374, %v1446
        %v1459 = vsub.f32 %v1400, %v1449
        %v1460 = vsub.f32 %v1426, %v1452
        %v1461 = vmul.f32 %v1453, 1.442695
        %v1462 = vpow.pop %v1461
        %v1463 = vmul.f32 %v1454, 1.442695
        %v1464 = vpow.pop %v1463
        %v1465 = vmul.f32 %v1455, 1.442695
        %v1466 = vpow.pop %v1465
        %v1467 = vmul.f32 %v1456, 1.442695
        %v1468 = vpow.pop %v1467
        %v1469 = vmul.f32 %v1457, 1.442695
        %v1470 = vpow.pop %v1469
        %v1471 = vmul.f32 %v1458, 1.442695
        %v1472 = vpow.pop %v1471
        %v1473 = vmul.f32 %v1459, 1.442695
        %v1474 = vpow.pop %v1473
        %v1475 = vmul.f32 %v1460, 1.442695
        %v1476 = vpow.pop %v1475
        %v1477 = vsel %vm764, %v1462, 0.0
        %1478 = vadd.xlane.f32.xlu0 %v1477
        %v1479 = vpop.xlane.xlu0 %1478
        %v1480 = vsel %vm764, %v1464, 0.0
        %1481 = vadd.xlane.f32.xlu0 %v1480
        %v1482 = vpop.xlane.xlu0 %1481
        %v1483 = vsel %vm764, %v1466, 0.0
        %1484 = vadd.xlane.f32.xlu0 %v1483
        %v1485 = vpop.xlane.xlu0 %1484
        %v1486 = vsel %vm764, %v1468, 0.0
        %1487 = vadd.xlane.f32.xlu0 %v1486
        %v1488 = vpop.xlane.xlu0 %1487
        %v1489 = vsel %vm764, %v1470, 0.0
        %1490 = vadd.xlane.f32.xlu0 %v1489
        %v1491 = vpop.xlane.xlu0 %1490
        %v1492 = vsel %vm764, %v1472, 0.0
        %1493 = vadd.xlane.f32.xlu0 %v1492
        %v1494 = vpop.xlane.xlu0 %1493
        %v1495 = vsel %vm764, %v1474, 0.0
        %1496 = vadd.xlane.f32.xlu0 %v1495
        %v1497 = vpop.xlane.xlu0 %1496
        %v1498 = vsel %vm764, %v1476, 0.0
        %1499 = vadd.xlane.f32.xlu0 %v1498
        %v1500 = vpop.xlane.xlu0 %1499
        %v1501 = vrcp.pop %v1479
        %v1502 = vrcp.pop %v1482
        %v1503 = vrcp.pop %v1485
        %v1504 = vrcp.pop %v1488
        %v1505 = vrcp.pop %v1491
        %v1506 = vrcp.pop %v1494
        %v1507 = vrcp.pop %v1497
        %v1508 = vrcp.pop %v1500
        %v1509 = vmul.f32 %v1462, %v1501
        %v1510 = vmul.f32 %v1464, %v1502
        %v1511 = vmul.f32 %v1466, %v1503
        %v1512 = vmul.f32 %v1468, %v1504
        %v1513 = vmul.f32 %v1470, %v1505
        %v1514 = vmul.f32 %v1472, %v1506
        %v1515 = vmul.f32 %v1474, %v1507
        %v1516 = vmul.f32 %v1476, %v1508
        %v1517 = vpack.c.bf16 %v1509, %v1509
        %v1518 = vpack.c.bf16 %v1510, %v1510
        %v1519 = vpack.c.bf16 %v1511, %v1511
        %v1520 = vpack.c.bf16 %v1512, %v1512
        %v1521 = vpack.c.bf16 %v1513, %v1513
        %v1522 = vpack.c.bf16 %v1514, %v1514
        %v1523 = vpack.c.bf16 %v1515, %v1515
        %v1524 = vpack.c.bf16 %v1516, %v1516
        %1525 = vrot.lane.b32.xlu0 %v761, 56
        %v1526 = vpop.permute.xlu0 %1525
        %v1528 = vsel %vm764, %v1517, 0
        %v1531 = vsel %vm1053, %v1526, 0
        %1533 = vmatpush.bf16.msra.mxu0 0
        %1534 = vmatpush.bf16.msra.mxu0 0
        %1535 = vmatpush.bf16.msra.mxu0 0
        %1536 = vmatpush.bf16.msra.mxu0 0
        %1537 = vmatpush.bf16.msra.mxu0 0
        %1538 = vmatpush.bf16.msra.mxu0 0
        %1539 = vmatpush.bf16.msra.mxu0 0
        %1540 = vmatpush.bf16.msra.mxu0 %v1531
        %1541 = vmatmul.bf16.gmra.mxu0 %v1528
        %v1542 = vpop.f32.mrf.mxu0
        %v1543 = vadd.f32 0.0, %v1542
        %v1544 = vpop.f32.mrf.mxu0
        %1545 = vdwg.mxu0
        %1546 = vrot.lane.b32.xlu0 %v786, 56
        %v1547 = vpop.permute.xlu0 %1546
        %v1549 = vsel %vm764, %v1518, 0
        %v1552 = vsel %vm1053, %v1547, 0
        %1554 = vmatpush.bf16.msra.mxu0 0
        %1555 = vmatpush.bf16.msra.mxu0 0
        %1556 = vmatpush.bf16.msra.mxu0 0
        %1557 = vmatpush.bf16.msra.mxu0 0
        %1558 = vmatpush.bf16.msra.mxu0 0
        %1559 = vmatpush.bf16.msra.mxu0 0
        %1560 = vmatpush.bf16.msra.mxu0 0
        %1561 = vmatpush.bf16.msra.mxu0 %v1552
        %1562 = vmatmul.bf16.gmra.mxu0 %v1549
        %v1563 = vpop.f32.mrf.mxu0
        %v1564 = vadd.f32 0.0, %v1563
        %v1565 = vpop.f32.mrf.mxu0
        %1566 = vdwg.mxu0
        %1567 = vrot.lane.b32.xlu0 %v810, 56
        %v1568 = vpop.permute.xlu0 %1567
        %v1570 = vsel %vm764, %v1519, 0
        %v1573 = vsel %vm1053, %v1568, 0
        %1575 = vmatpush.bf16.msra.mxu0 0
        %1576 = vmatpush.bf16.msra.mxu0 0
        %1577 = vmatpush.bf16.msra.mxu0 0
        %1578 = vmatpush.bf16.msra.mxu0 0
        %1579 = vmatpush.bf16.msra.mxu0 0
        %1580 = vmatpush.bf16.msra.mxu0 0
        %1581 = vmatpush.bf16.msra.mxu0 0
        %1582 = vmatpush.bf16.msra.mxu0 %v1573
        %1583 = vmatmul.bf16.gmra.mxu0 %v1570
        %v1584 = vpop.f32.mrf.mxu0
        %v1585 = vadd.f32 0.0, %v1584
        %v1586 = vpop.f32.mrf.mxu0
        %1587 = vdwg.mxu0
        %1588 = vrot.lane.b32.xlu0 %v834, 56
        %v1589 = vpop.permute.xlu0 %1588
        %v1591 = vsel %vm764, %v1520, 0
        %v1594 = vsel %vm1053, %v1589, 0
        %1596 = vmatpush.bf16.msra.mxu0 0
        %1597 = vmatpush.bf16.msra.mxu0 0
        %1598 = vmatpush.bf16.msra.mxu0 0
        %1599 = vmatpush.bf16.msra.mxu0 0
        %1600 = vmatpush.bf16.msra.mxu0 0
        %1601 = vmatpush.bf16.msra.mxu0 0
        %1602 = vmatpush.bf16.msra.mxu0 0
        %1603 = vmatpush.bf16.msra.mxu0 %v1594
        %1604 = vmatmul.bf16.gmra.mxu0 %v1591
        %v1605 = vpop.f32.mrf.mxu0
        %v1606 = vadd.f32 0.0, %v1605
        %v1607 = vpop.f32.mrf.mxu0
        %1608 = vdwg.mxu0
        %1609 = vrot.lane.b32.xlu0 %v858, 56
        %v1610 = vpop.permute.xlu0 %1609
        %v1612 = vsel %vm764, %v1521, 0
        %v1615 = vsel %vm1053, %v1610, 0
        %1617 = vmatpush.bf16.msra.mxu0 0
        %1618 = vmatpush.bf16.msra.mxu0 0
        %1619 = vmatpush.bf16.msra.mxu0 0
        %1620 = vmatpush.bf16.msra.mxu0 0
        %1621 = vmatpush.bf16.msra.mxu0 0
        %1622 = vmatpush.bf16.msra.mxu0 0
        %1623 = vmatpush.bf16.msra.mxu0 0
        %1624 = vmatpush.bf16.msra.mxu0 %v1615
        %1625 = vmatmul.bf16.gmra.mxu0 %v1612
        %v1626 = vpop.f32.mrf.mxu0
        %v1627 = vadd.f32 0.0, %v1626
        %v1628 = vpop.f32.mrf.mxu0
        %1629 = vdwg.mxu0
        %1630 = vrot.lane.b32.xlu0 %v882, 56
        %v1631 = vpop.permute.xlu0 %1630
        %v1633 = vsel %vm764, %v1522, 0
        %v1636 = vsel %vm1053, %v1631, 0
        %1638 = vmatpush.bf16.msra.mxu0 0
        %1639 = vmatpush.bf16.msra.mxu0 0
        %1640 = vmatpush.bf16.msra.mxu0 0
        %1641 = vmatpush.bf16.msra.mxu0 0
        %1642 = vmatpush.bf16.msra.mxu0 0
        %1643 = vmatpush.bf16.msra.mxu0 0
        %1644 = vmatpush.bf16.msra.mxu0 0
        %1645 = vmatpush.bf16.msra.mxu0 %v1636
        %1646 = vmatmul.bf16.gmra.mxu0 %v1633
        %v1647 = vpop.f32.mrf.mxu0
        %v1648 = vadd.f32 0.0, %v1647
        %v1649 = vpop.f32.mrf.mxu0
        %1650 = vdwg.mxu0
        %1651 = vrot.lane.b32.xlu0 %v906, 56
        %v1652 = vpop.permute.xlu0 %1651
        %v1654 = vsel %vm764, %v1523, 0
        %v1657 = vsel %vm1053, %v1652, 0
        %1659 = vmatpush.bf16.msra.mxu0 0
        %1660 = vmatpush.bf16.msra.mxu0 0
        %1661 = vmatpush.bf16.msra.mxu0 0
        %1662 = vmatpush.bf16.msra.mxu0 0
        %1663 = vmatpush.bf16.msra.mxu0 0
        %1664 = vmatpush.bf16.msra.mxu0 0
        %1665 = vmatpush.bf16.msra.mxu0 0
        %1666 = vmatpush.bf16.msra.mxu0 %v1657
        %1667 = vmatmul.bf16.gmra.mxu0 %v1654
        %v1668 = vpop.f32.mrf.mxu0
        %v1669 = vadd.f32 0.0, %v1668
        %v1670 = vpop.f32.mrf.mxu0
        %1671 = vdwg.mxu0
        %1672 = vrot.lane.b32.xlu0 %v930, 56
        %v1673 = vpop.permute.xlu0 %1672
        %v1675 = vsel %vm764, %v1524, 0
        %v1678 = vsel %vm1053, %v1673, 0
        %1680 = vmatpush.bf16.msra.mxu0 0
        %1681 = vmatpush.bf16.msra.mxu0 0
        %1682 = vmatpush.bf16.msra.mxu0 0
        %1683 = vmatpush.bf16.msra.mxu0 0
        %1684 = vmatpush.bf16.msra.mxu0 0
        %1685 = vmatpush.bf16.msra.mxu0 0
        %1686 = vmatpush.bf16.msra.mxu0 0
        %1687 = vmatpush.bf16.msra.mxu0 %v1678
        %1688 = vmatmul.bf16.gmra.mxu0 %v1675
        %v1689 = vpop.f32.mrf.mxu0
        %v1690 = vadd.f32 0.0, %v1689
        %v1691 = vpop.f32.mrf.mxu0
        %1692 = vdwg.mxu0
        %v1693 = vpack.c.bf16 %v1564, %v1543
        %v1694 = vpack.c.bf16 %v1606, %v1585
        %v1695 = vpack.c.bf16 %v1648, %v1627
        %v1696 = vpack.c.bf16 %v1690, %v1669
        %v1697 = vpack.c.b16 %v663, %v663
        %1698 = vrot.lane.b32.xlu0 %v1697, 32
        %v1699 = vpop.permute.xlu0 %1698
        %v1701 = vsel %vm764, %v1693, 0
        %v1704 = vsel %vm764, %v1694, 0
        %v1707 = vsel %vm764, %v1695, 0
        %v1710 = vsel %vm764, %v1696, 0
        %v1713 = vsel %vm1053, %v1699, 0
        %1715 = vmatpush.bf16.msra.mxu0 0
        %1716 = vmatpush.bf16.msra.mxu0 0
        %1717 = vmatpush.bf16.msra.mxu0 0
        %1718 = vmatpush.bf16.msra.mxu0 0
        %1719 = vmatpush.bf16.msra.mxu0 0
        %1720 = vmatpush.bf16.msra.mxu0 0
        %1721 = vmatpush.bf16.msra.mxu0 0
        %1722 = vmatpush.bf16.msra.mxu0 %v1713
        %1723 = vmatmul.bf16.gmra.mxu0 %v1701
        %v1724 = vpop.f32.mrf.mxu0
        %v1725 = vadd.f32 0.0, %v1724
        %v1726 = vpop.f32.mrf.mxu0
        %v1727 = vadd.f32 0.0, %v1726
        %1728 = vmatmul.bf16.gmra.mxu0 %v1704
        %v1729 = vpop.f32.mrf.mxu0
        %v1730 = vadd.f32 0.0, %v1729
        %v1731 = vpop.f32.mrf.mxu0
        %v1732 = vadd.f32 0.0, %v1731
        %1733 = vmatmul.bf16.gmra.mxu0 %v1707
        %v1734 = vpop.f32.mrf.mxu0
        %v1735 = vadd.f32 0.0, %v1734
        %v1736 = vpop.f32.mrf.mxu0
        %v1737 = vadd.f32 0.0, %v1736
        %1738 = vmatmul.bf16.gmra.mxu0 %v1710
        %v1739 = vpop.f32.mrf.mxu0
        %v1740 = vadd.f32 0.0, %v1739
        %v1741 = vpop.f32.mrf.mxu0
        %v1742 = vadd.f32 0.0, %v1741
        %1743 = vdwg.mxu0
        %v1744 = vpack.c.b16 %v662, %v662
        %1745 = vrot.lane.b32.xlu0 %v1744, 32
        %v1746 = vpop.permute.xlu0 %1745
        %v1748 = vsel %vm764, %v1217, 0
        %v1751 = vsel %vm764, %v1218, 0
        %v1754 = vsel %vm764, %v1219, 0
        %v1757 = vsel %vm764, %v1220, 0
        %v1760 = vsel %vm1053, %v1746, 0
        %1762 = vmatpush.bf16.msra.mxu0 0
        %1763 = vmatpush.bf16.msra.mxu0 0
        %1764 = vmatpush.bf16.msra.mxu0 0
        %1765 = vmatpush.bf16.msra.mxu0 0
        %1766 = vmatpush.bf16.msra.mxu0 0
        %1767 = vmatpush.bf16.msra.mxu0 0
        %1768 = vmatpush.bf16.msra.mxu0 0
        %1769 = vmatpush.bf16.msra.mxu0 %v1760
        %1770 = vmatmul.bf16.gmra.mxu0 %v1748
        %v1771 = vpop.f32.mrf.mxu0
        %v1772 = vadd.f32 %v1725, %v1771
        %v1773 = vpop.f32.mrf.mxu0
        %v1774 = vadd.f32 %v1727, %v1773
        %1775 = vmatmul.bf16.gmra.mxu0 %v1751
        %v1776 = vpop.f32.mrf.mxu0
        %v1777 = vadd.f32 %v1730, %v1776
        %v1778 = vpop.f32.mrf.mxu0
        %v1779 = vadd.f32 %v1732, %v1778
        %1780 = vmatmul.bf16.gmra.mxu0 %v1754
        %v1781 = vpop.f32.mrf.mxu0
        %v1782 = vadd.f32 %v1735, %v1781
        %v1783 = vpop.f32.mrf.mxu0
        %v1784 = vadd.f32 %v1737, %v1783
        %1785 = vmatmul.bf16.gmra.mxu0 %v1757
        %v1786 = vpop.f32.mrf.mxu0
        %v1787 = vadd.f32 %v1740, %v1786
        %v1788 = vpop.f32.mrf.mxu0
        %v1789 = vadd.f32 %v1742, %v1788
        %1790 = vdwg.mxu0
        %1791 = vrot.lane.b32.xlu0 %v1223, 112
        %v1792 = vpop.permute.xlu0 %1791
        %1793 = vrot.lane.b32.xlu0 %v761, 80
        %v1794 = vpop.permute.xlu0 %1793
        %v1796 = vsel %vm764, %v1792, 0
        %v1799 = vsel %vm764, %v1794, 0
        %1801 = vmatpush.bf16.xpose.msra.mxu0 0
        %1802 = vmatpush.bf16.xpose.msra.mxu0 0
        %1803 = vmatpush.bf16.xpose.msra.mxu0 0
        %1804 = vmatpush.bf16.xpose.msra.mxu0 0
        %1805 = vmatpush.bf16.xpose.msra.mxu0 0
        %1806 = vmatpush.bf16.xpose.msra.mxu0 0
        %1807 = vmatpush.bf16.xpose.msra.mxu0 0
        %1808 = vmatpush.bf16.xpose.msra.mxu0 %v1799
        %1809 = vmatmul.bf16.gmra.mxu0 %v1796
        %v1810 = vpop.f32.mrf.mxu0
        %v1811 = vadd.f32 %v743, %v1810
        %v1812 = vpop.f32.mrf.mxu0
        %1813 = vdwg.mxu0
        %1814 = vrot.lane.b32.xlu0 %v1249, 112
        %v1815 = vpop.permute.xlu0 %1814
        %1816 = vrot.lane.b32.xlu0 %v786, 80
        %v1817 = vpop.permute.xlu0 %1816
        %v1819 = vsel %vm764, %v1815, 0
        %v1822 = vsel %vm764, %v1817, 0
        %1824 = vmatpush.bf16.xpose.msra.mxu0 0
        %1825 = vmatpush.bf16.xpose.msra.mxu0 0
        %1826 = vmatpush.bf16.xpose.msra.mxu0 0
        %1827 = vmatpush.bf16.xpose.msra.mxu0 0
        %1828 = vmatpush.bf16.xpose.msra.mxu0 0
        %1829 = vmatpush.bf16.xpose.msra.mxu0 0
        %1830 = vmatpush.bf16.xpose.msra.mxu0 0
        %1831 = vmatpush.bf16.xpose.msra.mxu0 %v1822
        %1832 = vmatmul.bf16.gmra.mxu0 %v1819
        %v1833 = vpop.f32.mrf.mxu0
        %v1834 = vadd.f32 %v744, %v1833
        %v1835 = vpop.f32.mrf.mxu0
        %1836 = vdwg.mxu0
        %1837 = vrot.lane.b32.xlu0 %v1275, 112
        %v1838 = vpop.permute.xlu0 %1837
        %1839 = vrot.lane.b32.xlu0 %v810, 80
        %v1840 = vpop.permute.xlu0 %1839
        %v1842 = vsel %vm764, %v1838, 0
        %v1845 = vsel %vm764, %v1840, 0
        %1847 = vmatpush.bf16.xpose.msra.mxu0 0
        %1848 = vmatpush.bf16.xpose.msra.mxu0 0
        %1849 = vmatpush.bf16.xpose.msra.mxu0 0
        %1850 = vmatpush.bf16.xpose.msra.mxu0 0
        %1851 = vmatpush.bf16.xpose.msra.mxu0 0
        %1852 = vmatpush.bf16.xpose.msra.mxu0 0
        %1853 = vmatpush.bf16.xpose.msra.mxu0 0
        %1854 = vmatpush.bf16.xpose.msra.mxu0 %v1845
        %1855 = vmatmul.bf16.gmra.mxu0 %v1842
        %v1856 = vpop.f32.mrf.mxu0
        %v1857 = vadd.f32 %v745, %v1856
        %v1858 = vpop.f32.mrf.mxu0
        %1859 = vdwg.mxu0
        %1860 = vrot.lane.b32.xlu0 %v1301, 112
        %v1861 = vpop.permute.xlu0 %1860
        %1862 = vrot.lane.b32.xlu0 %v834, 80
        %v1863 = vpop.permute.xlu0 %1862
        %v1865 = vsel %vm764, %v1861, 0
        %v1868 = vsel %vm764, %v1863, 0
        %1870 = vmatpush.bf16.xpose.msra.mxu0 0
        %1871 = vmatpush.bf16.xpose.msra.mxu0 0
        %1872 = vmatpush.bf16.xpose.msra.mxu0 0
        %1873 = vmatpush.bf16.xpose.msra.mxu0 0
        %1874 = vmatpush.bf16.xpose.msra.mxu0 0
        %1875 = vmatpush.bf16.xpose.msra.mxu0 0
        %1876 = vmatpush.bf16.xpose.msra.mxu0 0
        %1877 = vmatpush.bf16.xpose.msra.mxu0 %v1868
        %1878 = vmatmul.bf16.gmra.mxu0 %v1865
        %v1879 = vpop.f32.mrf.mxu0
        %v1880 = vadd.f32 %v746, %v1879
        %v1881 = vpop.f32.mrf.mxu0
        %1882 = vdwg.mxu0
        %1883 = vrot.lane.b32.xlu0 %v1327, 112
        %v1884 = vpop.permute.xlu0 %1883
        %1885 = vrot.lane.b32.xlu0 %v858, 80
        %v1886 = vpop.permute.xlu0 %1885
        %v1888 = vsel %vm764, %v1884, 0
        %v1891 = vsel %vm764, %v1886, 0
        %1893 = vmatpush.bf16.xpose.msra.mxu0 0
        %1894 = vmatpush.bf16.xpose.msra.mxu0 0
        %1895 = vmatpush.bf16.xpose.msra.mxu0 0
        %1896 = vmatpush.bf16.xpose.msra.mxu0 0
        %1897 = vmatpush.bf16.xpose.msra.mxu0 0
        %1898 = vmatpush.bf16.xpose.msra.mxu0 0
        %1899 = vmatpush.bf16.xpose.msra.mxu0 0
        %1900 = vmatpush.bf16.xpose.msra.mxu0 %v1891
        %1901 = vmatmul.bf16.gmra.mxu0 %v1888
        %v1902 = vpop.f32.mrf.mxu0
        %v1903 = vadd.f32 %v747, %v1902
        %v1904 = vpop.f32.mrf.mxu0
        %1905 = vdwg.mxu0
        %1906 = vrot.lane.b32.xlu0 %v1353, 112
        %v1907 = vpop.permute.xlu0 %1906
        %1908 = vrot.lane.b32.xlu0 %v882, 80
        %v1909 = vpop.permute.xlu0 %1908
        %v1911 = vsel %vm764, %v1907, 0
        %v1914 = vsel %vm764, %v1909, 0
        %1916 = vmatpush.bf16.xpose.msra.mxu0 0
        %1917 = vmatpush.bf16.xpose.msra.mxu0 0
        %1918 = vmatpush.bf16.xpose.msra.mxu0 0
        %1919 = vmatpush.bf16.xpose.msra.mxu0 0
        %1920 = vmatpush.bf16.xpose.msra.mxu0 0
        %1921 = vmatpush.bf16.xpose.msra.mxu0 0
        %1922 = vmatpush.bf16.xpose.msra.mxu0 0
        %1923 = vmatpush.bf16.xpose.msra.mxu0 %v1914
        %1924 = vmatmul.bf16.gmra.mxu0 %v1911
        %v1925 = vpop.f32.mrf.mxu0
        %v1926 = vadd.f32 %v748, %v1925
        %v1927 = vpop.f32.mrf.mxu0
        %1928 = vdwg.mxu0
        %1929 = vrot.lane.b32.xlu0 %v1379, 112
        %v1930 = vpop.permute.xlu0 %1929
        %1931 = vrot.lane.b32.xlu0 %v906, 80
        %v1932 = vpop.permute.xlu0 %1931
        %v1934 = vsel %vm764, %v1930, 0
        %v1937 = vsel %vm764, %v1932, 0
        %1939 = vmatpush.bf16.xpose.msra.mxu0 0
        %1940 = vmatpush.bf16.xpose.msra.mxu0 0
        %1941 = vmatpush.bf16.xpose.msra.mxu0 0
        %1942 = vmatpush.bf16.xpose.msra.mxu0 0
        %1943 = vmatpush.bf16.xpose.msra.mxu0 0
        %1944 = vmatpush.bf16.xpose.msra.mxu0 0
        %1945 = vmatpush.bf16.xpose.msra.mxu0 0
        %1946 = vmatpush.bf16.xpose.msra.mxu0 %v1937
        %1947 = vmatmul.bf16.gmra.mxu0 %v1934
        %v1948 = vpop.f32.mrf.mxu0
        %v1949 = vadd.f32 %v749, %v1948
        %v1950 = vpop.f32.mrf.mxu0
        %1951 = vdwg.mxu0
        %1952 = vrot.lane.b32.xlu0 %v1405, 112
        %v1953 = vpop.permute.xlu0 %1952
        %1954 = vrot.lane.b32.xlu0 %v930, 80
        %v1955 = vpop.permute.xlu0 %1954
        %v1957 = vsel %vm764, %v1953, 0
        %v1960 = vsel %vm764, %v1955, 0
        %1962 = vmatpush.bf16.xpose.msra.mxu0 0
        %1963 = vmatpush.bf16.xpose.msra.mxu0 0
        %1964 = vmatpush.bf16.xpose.msra.mxu0 0
        %1965 = vmatpush.bf16.xpose.msra.mxu0 0
        %1966 = vmatpush.bf16.xpose.msra.mxu0 0
        %1967 = vmatpush.bf16.xpose.msra.mxu0 0
        %1968 = vmatpush.bf16.xpose.msra.mxu0 0
        %1969 = vmatpush.bf16.xpose.msra.mxu0 %v1960
        %1970 = vmatmul.bf16.gmra.mxu0 %v1957
        %v1971 = vpop.f32.mrf.mxu0
        %v1972 = vadd.f32 %v750, %v1971
        %v1973 = vpop.f32.mrf.mxu0
        %1974 = vdwg.mxu0
        %v1975 = vsel %vm764, %v1811, -inf
        %1976 = vmax.xlane.f32.xlu0 %v1975
        %v1977 = vpop.xlane.xlu0 %1976
        %v1978 = vsel %vm764, %v1834, -inf
        %1979 = vmax.xlane.f32.xlu0 %v1978
        %v1980 = vpop.xlane.xlu0 %1979
        %v1981 = vsel %vm764, %v1857, -inf
        %1982 = vmax.xlane.f32.xlu0 %v1981
        %v1983 = vpop.xlane.xlu0 %1982
        %v1984 = vsel %vm764, %v1880, -inf
        %1985 = vmax.xlane.f32.xlu0 %v1984
        %v1986 = vpop.xlane.xlu0 %1985
        %v1987 = vsel %vm764, %v1903, -inf
        %1988 = vmax.xlane.f32.xlu0 %v1987
        %v1989 = vpop.xlane.xlu0 %1988
        %v1990 = vsel %vm764, %v1926, -inf
        %1991 = vmax.xlane.f32.xlu0 %v1990
        %v1992 = vpop.xlane.xlu0 %1991
        %v1993 = vsel %vm764, %v1949, -inf
        %1994 = vmax.xlane.f32.xlu0 %v1993
        %v1995 = vpop.xlane.xlu0 %1994
        %v1996 = vsel %vm764, %v1972, -inf
        %1997 = vmax.xlane.f32.xlu0 %v1996
        %v1998 = vpop.xlane.xlu0 %1997
        %v1999 = vsub.f32 %v1811, %v1977
        %v2000 = vsub.f32 %v1834, %v1980
        %v2001 = vsub.f32 %v1857, %v1983
        %v2002 = vsub.f32 %v1880, %v1986
        %v2003 = vsub.f32 %v1903, %v1989
        %v2004 = vsub.f32 %v1926, %v1992
        %v2005 = vsub.f32 %v1949, %v1995
        %v2006 = vsub.f32 %v1972, %v1998
        %v2007 = vmul.f32 %v1999, 1.442695
        %v2008 = vpow.pop %v2007
        %v2009 = vmul.f32 %v2000, 1.442695
        %v2010 = vpow.pop %v2009
        %v2011 = vmul.f32 %v2001, 1.442695
        %v2012 = vpow.pop %v2011
        %v2013 = vmul.f32 %v2002, 1.442695
        %v2014 = vpow.pop %v2013
        %v2015 = vmul.f32 %v2003, 1.442695
        %v2016 = vpow.pop %v2015
        %v2017 = vmul.f32 %v2004, 1.442695
        %v2018 = vpow.pop %v2017
        %v2019 = vmul.f32 %v2005, 1.442695
        %v2020 = vpow.pop %v2019
        %v2021 = vmul.f32 %v2006, 1.442695
        %v2022 = vpow.pop %v2021
        %v2023 = vsel %vm764, %v2008, 0.0
        %2024 = vadd.xlane.f32.xlu0 %v2023
        %v2025 = vpop.xlane.xlu0 %2024
        %v2026 = vsel %vm764, %v2010, 0.0
        %2027 = vadd.xlane.f32.xlu0 %v2026
        %v2028 = vpop.xlane.xlu0 %2027
        %v2029 = vsel %vm764, %v2012, 0.0
        %2030 = vadd.xlane.f32.xlu0 %v2029
        %v2031 = vpop.xlane.xlu0 %2030
        %v2032 = vsel %vm764, %v2014, 0.0
        %2033 = vadd.xlane.f32.xlu0 %v2032
        %v2034 = vpop.xlane.xlu0 %2033
        %v2035 = vsel %vm764, %v2016, 0.0
        %2036 = vadd.xlane.f32.xlu0 %v2035
        %v2037 = vpop.xlane.xlu0 %2036
        %v2038 = vsel %vm764, %v2018, 0.0
        %2039 = vadd.xlane.f32.xlu0 %v2038
        %v2040 = vpop.xlane.xlu0 %2039
        %v2041 = vsel %vm764, %v2020, 0.0
        %2042 = vadd.xlane.f32.xlu0 %v2041
        %v2043 = vpop.xlane.xlu0 %2042
        %v2044 = vsel %vm764, %v2022, 0.0
        %2045 = vadd.xlane.f32.xlu0 %v2044
        %v2046 = vpop.xlane.xlu0 %2045
        %v2047 = vrcp.pop %v2025
        %v2048 = vrcp.pop %v2028
        %v2049 = vrcp.pop %v2031
        %v2050 = vrcp.pop %v2034
        %v2051 = vrcp.pop %v2037
        %v2052 = vrcp.pop %v2040
        %v2053 = vrcp.pop %v2043
        %v2054 = vrcp.pop %v2046
        %v2055 = vmul.f32 %v2008, %v2047
        %v2056 = vmul.f32 %v2010, %v2048
        %v2057 = vmul.f32 %v2012, %v2049
        %v2058 = vmul.f32 %v2014, %v2050
        %v2059 = vmul.f32 %v2016, %v2051
        %v2060 = vmul.f32 %v2018, %v2052
        %v2061 = vmul.f32 %v2020, %v2053
        %v2062 = vmul.f32 %v2022, %v2054
        %v2063 = vpack.c.bf16 %v2055, %v2055
        %v2064 = vpack.c.bf16 %v2056, %v2056
        %v2065 = vpack.c.bf16 %v2057, %v2057
        %v2066 = vpack.c.bf16 %v2058, %v2058
        %v2067 = vpack.c.bf16 %v2059, %v2059
        %v2068 = vpack.c.bf16 %v2060, %v2060
        %v2069 = vpack.c.bf16 %v2061, %v2061
        %v2070 = vpack.c.bf16 %v2062, %v2062
        %2071 = vrot.lane.b32.xlu0 %v761, 48
        %v2072 = vpop.permute.xlu0 %2071
        %v2074 = vsel %vm764, %v2063, 0
        %v2077 = vsel %vm1053, %v2072, 0
        %2079 = vmatpush.bf16.msra.mxu0 0
        %2080 = vmatpush.bf16.msra.mxu0 0
        %2081 = vmatpush.bf16.msra.mxu0 0
        %2082 = vmatpush.bf16.msra.mxu0 0
        %2083 = vmatpush.bf16.msra.mxu0 0
        %2084 = vmatpush.bf16.msra.mxu0 0
        %2085 = vmatpush.bf16.msra.mxu0 0
        %2086 = vmatpush.bf16.msra.mxu0 %v2077
        %2087 = vmatmul.bf16.gmra.mxu0 %v2074
        %v2088 = vpop.f32.mrf.mxu0
        %v2089 = vadd.f32 0.0, %v2088
        %v2090 = vpop.f32.mrf.mxu0
        %2091 = vdwg.mxu0
        %2092 = vrot.lane.b32.xlu0 %v786, 48
        %v2093 = vpop.permute.xlu0 %2092
        %v2095 = vsel %vm764, %v2064, 0
        %v2098 = vsel %vm1053, %v2093, 0
        %2100 = vmatpush.bf16.msra.mxu0 0
        %2101 = vmatpush.bf16.msra.mxu0 0
        %2102 = vmatpush.bf16.msra.mxu0 0
        %2103 = vmatpush.bf16.msra.mxu0 0
        %2104 = vmatpush.bf16.msra.mxu0 0
        %2105 = vmatpush.bf16.msra.mxu0 0
        %2106 = vmatpush.bf16.msra.mxu0 0
        %2107 = vmatpush.bf16.msra.mxu0 %v2098
        %2108 = vmatmul.bf16.gmra.mxu0 %v2095
        %v2109 = vpop.f32.mrf.mxu0
        %v2110 = vadd.f32 0.0, %v2109
        %v2111 = vpop.f32.mrf.mxu0
        %2112 = vdwg.mxu0
        %2113 = vrot.lane.b32.xlu0 %v810, 48
        %v2114 = vpop.permute.xlu0 %2113
        %v2116 = vsel %vm764, %v2065, 0
        %v2119 = vsel %vm1053, %v2114, 0
        %2121 = vmatpush.bf16.msra.mxu0 0
        %2122 = vmatpush.bf16.msra.mxu0 0
        %2123 = vmatpush.bf16.msra.mxu0 0
        %2124 = vmatpush.bf16.msra.mxu0 0
        %2125 = vmatpush.bf16.msra.mxu0 0
        %2126 = vmatpush.bf16.msra.mxu0 0
        %2127 = vmatpush.bf16.msra.mxu0 0
        %2128 = vmatpush.bf16.msra.mxu0 %v2119
        %2129 = vmatmul.bf16.gmra.mxu0 %v2116
        %v2130 = vpop.f32.mrf.mxu0
        %v2131 = vadd.f32 0.0, %v2130
        %v2132 = vpop.f32.mrf.mxu0
        %2133 = vdwg.mxu0
        %2134 = vrot.lane.b32.xlu0 %v834, 48
        %v2135 = vpop.permute.xlu0 %2134
        %v2137 = vsel %vm764, %v2066, 0
        %v2140 = vsel %vm1053, %v2135, 0
        %2142 = vmatpush.bf16.msra.mxu0 0
        %2143 = vmatpush.bf16.msra.mxu0 0
        %2144 = vmatpush.bf16.msra.mxu0 0
        %2145 = vmatpush.bf16.msra.mxu0 0
        %2146 = vmatpush.bf16.msra.mxu0 0
        %2147 = vmatpush.bf16.msra.mxu0 0
        %2148 = vmatpush.bf16.msra.mxu0 0
        %2149 = vmatpush.bf16.msra.mxu0 %v2140
        %2150 = vmatmul.bf16.gmra.mxu0 %v2137
        %v2151 = vpop.f32.mrf.mxu0
        %v2152 = vadd.f32 0.0, %v2151
        %v2153 = vpop.f32.mrf.mxu0
        %2154 = vdwg.mxu0
        %2155 = vrot.lane.b32.xlu0 %v858, 48
        %v2156 = vpop.permute.xlu0 %2155
        %v2158 = vsel %vm764, %v2067, 0
        %v2161 = vsel %vm1053, %v2156, 0
        %2163 = vmatpush.bf16.msra.mxu0 0
        %2164 = vmatpush.bf16.msra.mxu0 0
        %2165 = vmatpush.bf16.msra.mxu0 0
        %2166 = vmatpush.bf16.msra.mxu0 0
        %2167 = vmatpush.bf16.msra.mxu0 0
        %2168 = vmatpush.bf16.msra.mxu0 0
        %2169 = vmatpush.bf16.msra.mxu0 0
        %2170 = vmatpush.bf16.msra.mxu0 %v2161
        %2171 = vmatmul.bf16.gmra.mxu0 %v2158
        %v2172 = vpop.f32.mrf.mxu0
        %v2173 = vadd.f32 0.0, %v2172
        %v2174 = vpop.f32.mrf.mxu0
        %2175 = vdwg.mxu0
        %2176 = vrot.lane.b32.xlu0 %v882, 48
        %v2177 = vpop.permute.xlu0 %2176
        %v2179 = vsel %vm764, %v2068, 0
        %v2182 = vsel %vm1053, %v2177, 0
        %2184 = vmatpush.bf16.msra.mxu0 0
        %2185 = vmatpush.bf16.msra.mxu0 0
        %2186 = vmatpush.bf16.msra.mxu0 0
        %2187 = vmatpush.bf16.msra.mxu0 0
        %2188 = vmatpush.bf16.msra.mxu0 0
        %2189 = vmatpush.bf16.msra.mxu0 0
        %2190 = vmatpush.bf16.msra.mxu0 0
        %2191 = vmatpush.bf16.msra.mxu0 %v2182
        %2192 = vmatmul.bf16.gmra.mxu0 %v2179
        %v2193 = vpop.f32.mrf.mxu0
        %v2194 = vadd.f32 0.0, %v2193
        %v2195 = vpop.f32.mrf.mxu0
        %2196 = vdwg.mxu0
        %2197 = vrot.lane.b32.xlu0 %v906, 48
        %v2198 = vpop.permute.xlu0 %2197
        %v2200 = vsel %vm764, %v2069, 0
        %v2203 = vsel %vm1053, %v2198, 0
        %2205 = vmatpush.bf16.msra.mxu0 0
        %2206 = vmatpush.bf16.msra.mxu0 0
        %2207 = vmatpush.bf16.msra.mxu0 0
        %2208 = vmatpush.bf16.msra.mxu0 0
        %2209 = vmatpush.bf16.msra.mxu0 0
        %2210 = vmatpush.bf16.msra.mxu0 0
        %2211 = vmatpush.bf16.msra.mxu0 0
        %2212 = vmatpush.bf16.msra.mxu0 %v2203
        %2213 = vmatmul.bf16.gmra.mxu0 %v2200
        %v2214 = vpop.f32.mrf.mxu0
        %v2215 = vadd.f32 0.0, %v2214
        %v2216 = vpop.f32.mrf.mxu0
        %2217 = vdwg.mxu0
        %2218 = vrot.lane.b32.xlu0 %v930, 48
        %v2219 = vpop.permute.xlu0 %2218
        %v2221 = vsel %vm764, %v2070, 0
        %v2224 = vsel %vm1053, %v2219, 0
        %2226 = vmatpush.bf16.msra.mxu0 0
        %2227 = vmatpush.bf16.msra.mxu0 0
        %2228 = vmatpush.bf16.msra.mxu0 0
        %2229 = vmatpush.bf16.msra.mxu0 0
        %2230 = vmatpush.bf16.msra.mxu0 0
        %2231 = vmatpush.bf16.msra.mxu0 0
        %2232 = vmatpush.bf16.msra.mxu0 0
        %2233 = vmatpush.bf16.msra.mxu0 %v2224
        %2234 = vmatmul.bf16.gmra.mxu0 %v2221
        %v2235 = vpop.f32.mrf.mxu0
        %v2236 = vadd.f32 0.0, %v2235
        %v2237 = vpop.f32.mrf.mxu0
        %2238 = vdwg.mxu0
        %v2239 = vpack.c.bf16 %v2110, %v2089
        %v2240 = vpack.c.bf16 %v2152, %v2131
        %v2241 = vpack.c.bf16 %v2194, %v2173
        %v2242 = vpack.c.bf16 %v2236, %v2215
        %v2243 = vpack.c.b16 %v664, %v664
        %2244 = vrot.lane.b32.xlu0 %v2243, 32
        %v2245 = vpop.permute.xlu0 %2244
        %v2247 = vsel %vm764, %v2239, 0
        %v2250 = vsel %vm764, %v2240, 0
        %v2253 = vsel %vm764, %v2241, 0
        %v2256 = vsel %vm764, %v2242, 0
        %v2259 = vsel %vm1053, %v2245, 0
        %2261 = vmatpush.bf16.msra.mxu0 0
        %2262 = vmatpush.bf16.msra.mxu0 0
        %2263 = vmatpush.bf16.msra.mxu0 0
        %2264 = vmatpush.bf16.msra.mxu0 0
        %2265 = vmatpush.bf16.msra.mxu0 0
        %2266 = vmatpush.bf16.msra.mxu0 0
        %2267 = vmatpush.bf16.msra.mxu0 0
        %2268 = vmatpush.bf16.msra.mxu0 %v2259
        %2269 = vmatmul.bf16.gmra.mxu0 %v2247
        %v2270 = vpop.f32.mrf.mxu0
        %v2271 = vadd.f32 0.0, %v2270
        %v2272 = vpop.f32.mrf.mxu0
        %v2273 = vadd.f32 0.0, %v2272
        %2274 = vmatmul.bf16.gmra.mxu0 %v2250
        %v2275 = vpop.f32.mrf.mxu0
        %v2276 = vadd.f32 0.0, %v2275
        %v2277 = vpop.f32.mrf.mxu0
        %v2278 = vadd.f32 0.0, %v2277
        %2279 = vmatmul.bf16.gmra.mxu0 %v2253
        %v2280 = vpop.f32.mrf.mxu0
        %v2281 = vadd.f32 0.0, %v2280
        %v2282 = vpop.f32.mrf.mxu0
        %v2283 = vadd.f32 0.0, %v2282
        %2284 = vmatmul.bf16.gmra.mxu0 %v2256
        %v2285 = vpop.f32.mrf.mxu0
        %v2286 = vadd.f32 0.0, %v2285
        %v2287 = vpop.f32.mrf.mxu0
        %v2288 = vadd.f32 0.0, %v2287
        %2289 = vdwg.mxu0
        %v2290 = vadd.f32 %v1772, %v2271
        %v2291 = vadd.f32 %v1774, %v2273
        %v2292 = vadd.f32 %v1777, %v2276
        %v2293 = vadd.f32 %v1779, %v2278
        %v2294 = vadd.f32 %v1782, %v2281
        %v2295 = vadd.f32 %v1784, %v2283
        %v2296 = vadd.f32 %v1787, %v2286
        %v2297 = vadd.f32 %v1789, %v2288
        %2298 = vrot.lane.b32.xlu0 %v1223, 104
        %v2299 = vpop.permute.xlu0 %2298
        %2300 = vrot.lane.b32.xlu0 %v761, 72
        %v2301 = vpop.permute.xlu0 %2300
        %v2303 = vsel %vm764, %v2299, 0
        %v2306 = vsel %vm764, %v2301, 0
        %2308 = vmatpush.bf16.xpose.msra.mxu0 0
        %2309 = vmatpush.bf16.xpose.msra.mxu0 0
        %2310 = vmatpush.bf16.xpose.msra.mxu0 0
        %2311 = vmatpush.bf16.xpose.msra.mxu0 0
        %2312 = vmatpush.bf16.xpose.msra.mxu0 0
        %2313 = vmatpush.bf16.xpose.msra.mxu0 0
        %2314 = vmatpush.bf16.xpose.msra.mxu0 0
        %2315 = vmatpush.bf16.xpose.msra.mxu0 %v2306
        %2316 = vmatmul.bf16.gmra.mxu0 %v2303
        %v2317 = vpop.f32.mrf.mxu0
        %v2318 = vadd.f32 %v743, %v2317
        %v2319 = vpop.f32.mrf.mxu0
        %2320 = vdwg.mxu0
        %2321 = vrot.lane.b32.xlu0 %v1249, 104
        %v2322 = vpop.permute.xlu0 %2321
        %2323 = vrot.lane.b32.xlu0 %v786, 72
        %v2324 = vpop.permute.xlu0 %2323
        %v2326 = vsel %vm764, %v2322, 0
        %v2329 = vsel %vm764, %v2324, 0
        %2331 = vmatpush.bf16.xpose.msra.mxu0 0
        %2332 = vmatpush.bf16.xpose.msra.mxu0 0
        %2333 = vmatpush.bf16.xpose.msra.mxu0 0
        %2334 = vmatpush.bf16.xpose.msra.mxu0 0
        %2335 = vmatpush.bf16.xpose.msra.mxu0 0
        %2336 = vmatpush.bf16.xpose.msra.mxu0 0
        %2337 = vmatpush.bf16.xpose.msra.mxu0 0
        %2338 = vmatpush.bf16.xpose.msra.mxu0 %v2329
        %2339 = vmatmul.bf16.gmra.mxu0 %v2326
        %v2340 = vpop.f32.mrf.mxu0
        %v2341 = vadd.f32 %v744, %v2340
        %v2342 = vpop.f32.mrf.mxu0
        %2343 = vdwg.mxu0
        %2344 = vrot.lane.b32.xlu0 %v1275, 104
        %v2345 = vpop.permute.xlu0 %2344
        %2346 = vrot.lane.b32.xlu0 %v810, 72
        %v2347 = vpop.permute.xlu0 %2346
        %v2349 = vsel %vm764, %v2345, 0
        %v2352 = vsel %vm764, %v2347, 0
        %2354 = vmatpush.bf16.xpose.msra.mxu0 0
        %2355 = vmatpush.bf16.xpose.msra.mxu0 0
        %2356 = vmatpush.bf16.xpose.msra.mxu0 0
        %2357 = vmatpush.bf16.xpose.msra.mxu0 0
        %2358 = vmatpush.bf16.xpose.msra.mxu0 0
        %2359 = vmatpush.bf16.xpose.msra.mxu0 0
        %2360 = vmatpush.bf16.xpose.msra.mxu0 0
        %2361 = vmatpush.bf16.xpose.msra.mxu0 %v2352
        %2362 = vmatmul.bf16.gmra.mxu0 %v2349
        %v2363 = vpop.f32.mrf.mxu0
        %v2364 = vadd.f32 %v745, %v2363
        %v2365 = vpop.f32.mrf.mxu0
        %2366 = vdwg.mxu0
        %2367 = vrot.lane.b32.xlu0 %v1301, 104
        %v2368 = vpop.permute.xlu0 %2367
        %2369 = vrot.lane.b32.xlu0 %v834, 72
        %v2370 = vpop.permute.xlu0 %2369
        %v2372 = vsel %vm764, %v2368, 0
        %v2375 = vsel %vm764, %v2370, 0
        %2377 = vmatpush.bf16.xpose.msra.mxu0 0
        %2378 = vmatpush.bf16.xpose.msra.mxu0 0
        %2379 = vmatpush.bf16.xpose.msra.mxu0 0
        %2380 = vmatpush.bf16.xpose.msra.mxu0 0
        %2381 = vmatpush.bf16.xpose.msra.mxu0 0
        %2382 = vmatpush.bf16.xpose.msra.mxu0 0
        %2383 = vmatpush.bf16.xpose.msra.mxu0 0
        %2384 = vmatpush.bf16.xpose.msra.mxu0 %v2375
        %2385 = vmatmul.bf16.gmra.mxu0 %v2372
        %v2386 = vpop.f32.mrf.mxu0
        %v2387 = vadd.f32 %v746, %v2386
        %v2388 = vpop.f32.mrf.mxu0
        %2389 = vdwg.mxu0
        %2390 = vrot.lane.b32.xlu0 %v1327, 104
        %v2391 = vpop.permute.xlu0 %2390
        %2392 = vrot.lane.b32.xlu0 %v858, 72
        %v2393 = vpop.permute.xlu0 %2392
        %v2395 = vsel %vm764, %v2391, 0
        %v2398 = vsel %vm764, %v2393, 0
        %2400 = vmatpush.bf16.xpose.msra.mxu0 0
        %2401 = vmatpush.bf16.xpose.msra.mxu0 0
        %2402 = vmatpush.bf16.xpose.msra.mxu0 0
        %2403 = vmatpush.bf16.xpose.msra.mxu0 0
        %2404 = vmatpush.bf16.xpose.msra.mxu0 0
        %2405 = vmatpush.bf16.xpose.msra.mxu0 0
        %2406 = vmatpush.bf16.xpose.msra.mxu0 0
        %2407 = vmatpush.bf16.xpose.msra.mxu0 %v2398
        %2408 = vmatmul.bf16.gmra.mxu0 %v2395
        %v2409 = vpop.f32.mrf.mxu0
        %v2410 = vadd.f32 %v747, %v2409
        %v2411 = vpop.f32.mrf.mxu0
        %2412 = vdwg.mxu0
        %2413 = vrot.lane.b32.xlu0 %v1353, 104
        %v2414 = vpop.permute.xlu0 %2413
        %2415 = vrot.lane.b32.xlu0 %v882, 72
        %v2416 = vpop.permute.xlu0 %2415
        %v2418 = vsel %vm764, %v2414, 0
        %v2421 = vsel %vm764, %v2416, 0
        %2423 = vmatpush.bf16.xpose.msra.mxu0 0
        %2424 = vmatpush.bf16.xpose.msra.mxu0 0
        %2425 = vmatpush.bf16.xpose.msra.mxu0 0
        %2426 = vmatpush.bf16.xpose.msra.mxu0 0
        %2427 = vmatpush.bf16.xpose.msra.mxu0 0
        %2428 = vmatpush.bf16.xpose.msra.mxu0 0
        %2429 = vmatpush.bf16.xpose.msra.mxu0 0
        %2430 = vmatpush.bf16.xpose.msra.mxu0 %v2421
        %2431 = vmatmul.bf16.gmra.mxu0 %v2418
        %v2432 = vpop.f32.mrf.mxu0
        %v2433 = vadd.f32 %v748, %v2432
        %v2434 = vpop.f32.mrf.mxu0
        %2435 = vdwg.mxu0
        %2436 = vrot.lane.b32.xlu0 %v1379, 104
        %v2437 = vpop.permute.xlu0 %2436
        %2438 = vrot.lane.b32.xlu0 %v906, 72
        %v2439 = vpop.permute.xlu0 %2438
        %v2441 = vsel %vm764, %v2437, 0
        %v2444 = vsel %vm764, %v2439, 0
        %2446 = vmatpush.bf16.xpose.msra.mxu0 0
        %2447 = vmatpush.bf16.xpose.msra.mxu0 0
        %2448 = vmatpush.bf16.xpose.msra.mxu0 0
        %2449 = vmatpush.bf16.xpose.msra.mxu0 0
        %2450 = vmatpush.bf16.xpose.msra.mxu0 0
        %2451 = vmatpush.bf16.xpose.msra.mxu0 0
        %2452 = vmatpush.bf16.xpose.msra.mxu0 0
        %2453 = vmatpush.bf16.xpose.msra.mxu0 %v2444
        %2454 = vmatmul.bf16.gmra.mxu0 %v2441
        %v2455 = vpop.f32.mrf.mxu0
        %v2456 = vadd.f32 %v749, %v2455
        %v2457 = vpop.f32.mrf.mxu0
        %2458 = vdwg.mxu0
        %2459 = vrot.lane.b32.xlu0 %v1405, 104
        %v2460 = vpop.permute.xlu0 %2459
        %2461 = vrot.lane.b32.xlu0 %v930, 72
        %v2462 = vpop.permute.xlu0 %2461
        %v2464 = vsel %vm764, %v2460, 0
        %v2467 = vsel %vm764, %v2462, 0
        %2469 = vmatpush.bf16.xpose.msra.mxu0 0
        %2470 = vmatpush.bf16.xpose.msra.mxu0 0
        %2471 = vmatpush.bf16.xpose.msra.mxu0 0
        %2472 = vmatpush.bf16.xpose.msra.mxu0 0
        %2473 = vmatpush.bf16.xpose.msra.mxu0 0
        %2474 = vmatpush.bf16.xpose.msra.mxu0 0
        %2475 = vmatpush.bf16.xpose.msra.mxu0 0
        %2476 = vmatpush.bf16.xpose.msra.mxu0 %v2467
        %2477 = vmatmul.bf16.gmra.mxu0 %v2464
        %v2478 = vpop.f32.mrf.mxu0
        %v2479 = vadd.f32 %v750, %v2478
        %v2480 = vpop.f32.mrf.mxu0
        %2481 = vdwg.mxu0
        %v2482 = vsel %vm764, %v2318, -inf
        %2483 = vmax.xlane.f32.xlu0 %v2482
        %v2484 = vpop.xlane.xlu0 %2483
        %v2485 = vsel %vm764, %v2341, -inf
        %2486 = vmax.xlane.f32.xlu0 %v2485
        %v2487 = vpop.xlane.xlu0 %2486
        %v2488 = vsel %vm764, %v2364, -inf
        %2489 = vmax.xlane.f32.xlu0 %v2488
        %v2490 = vpop.xlane.xlu0 %2489
        %v2491 = vsel %vm764, %v2387, -inf
        %2492 = vmax.xlane.f32.xlu0 %v2491
        %v2493 = vpop.xlane.xlu0 %2492
        %v2494 = vsel %vm764, %v2410, -inf
        %2495 = vmax.xlane.f32.xlu0 %v2494
        %v2496 = vpop.xlane.xlu0 %2495
        %v2497 = vsel %vm764, %v2433, -inf
        %2498 = vmax.xlane.f32.xlu0 %v2497
        %v2499 = vpop.xlane.xlu0 %2498
        %v2500 = vsel %vm764, %v2456, -inf
        %2501 = vmax.xlane.f32.xlu0 %v2500
        %v2502 = vpop.xlane.xlu0 %2501
        %v2503 = vsel %vm764, %v2479, -inf
        %2504 = vmax.xlane.f32.xlu0 %v2503
        %v2505 = vpop.xlane.xlu0 %2504
        %v2506 = vsub.f32 %v2318, %v2484
        %v2507 = vsub.f32 %v2341, %v2487
        %v2508 = vsub.f32 %v2364, %v2490
        %v2509 = vsub.f32 %v2387, %v2493
        %v2510 = vsub.f32 %v2410, %v2496
        %v2511 = vsub.f32 %v2433, %v2499
        %v2512 = vsub.f32 %v2456, %v2502
        %v2513 = vsub.f32 %v2479, %v2505
        %v2514 = vmul.f32 %v2506, 1.442695
        %v2515 = vpow.pop %v2514
        %v2516 = vmul.f32 %v2507, 1.442695
        %v2517 = vpow.pop %v2516
        %v2518 = vmul.f32 %v2508, 1.442695
        %v2519 = vpow.pop %v2518
        %v2520 = vmul.f32 %v2509, 1.442695
        %v2521 = vpow.pop %v2520
        %v2522 = vmul.f32 %v2510, 1.442695
        %v2523 = vpow.pop %v2522
        %v2524 = vmul.f32 %v2511, 1.442695
        %v2525 = vpow.pop %v2524
        %v2526 = vmul.f32 %v2512, 1.442695
        %v2527 = vpow.pop %v2526
        %v2528 = vmul.f32 %v2513, 1.442695
        %v2529 = vpow.pop %v2528
        %v2530 = vsel %vm764, %v2515, 0.0
        %2531 = vadd.xlane.f32.xlu0 %v2530
        %v2532 = vpop.xlane.xlu0 %2531
        %v2533 = vsel %vm764, %v2517, 0.0
        %2534 = vadd.xlane.f32.xlu0 %v2533
        %v2535 = vpop.xlane.xlu0 %2534
        %v2536 = vsel %vm764, %v2519, 0.0
        %2537 = vadd.xlane.f32.xlu0 %v2536
        %v2538 = vpop.xlane.xlu0 %2537
        %v2539 = vsel %vm764, %v2521, 0.0
        %2540 = vadd.xlane.f32.xlu0 %v2539
        %v2541 = vpop.xlane.xlu0 %2540
        %v2542 = vsel %vm764, %v2523, 0.0
        %2543 = vadd.xlane.f32.xlu0 %v2542
        %v2544 = vpop.xlane.xlu0 %2543
        %v2545 = vsel %vm764, %v2525, 0.0
        %2546 = vadd.xlane.f32.xlu0 %v2545
        %v2547 = vpop.xlane.xlu0 %2546
        %v2548 = vsel %vm764, %v2527, 0.0
        %2549 = vadd.xlane.f32.xlu0 %v2548
        %v2550 = vpop.xlane.xlu0 %2549
        %v2551 = vsel %vm764, %v2529, 0.0
        %2552 = vadd.xlane.f32.xlu0 %v2551
        %v2553 = vpop.xlane.xlu0 %2552
        %v2554 = vrcp.pop %v2532
        %v2555 = vrcp.pop %v2535
        %v2556 = vrcp.pop %v2538
        %v2557 = vrcp.pop %v2541
        %v2558 = vrcp.pop %v2544
        %v2559 = vrcp.pop %v2547
        %v2560 = vrcp.pop %v2550
        %v2561 = vrcp.pop %v2553
        %v2562 = vmul.f32 %v2515, %v2554
        %v2563 = vmul.f32 %v2517, %v2555
        %v2564 = vmul.f32 %v2519, %v2556
        %v2565 = vmul.f32 %v2521, %v2557
        %v2566 = vmul.f32 %v2523, %v2558
        %v2567 = vmul.f32 %v2525, %v2559
        %v2568 = vmul.f32 %v2527, %v2560
        %v2569 = vmul.f32 %v2529, %v2561
        %v2570 = vpack.c.bf16 %v2562, %v2562
        %v2571 = vpack.c.bf16 %v2563, %v2563
        %v2572 = vpack.c.bf16 %v2564, %v2564
        %v2573 = vpack.c.bf16 %v2565, %v2565
        %v2574 = vpack.c.bf16 %v2566, %v2566
        %v2575 = vpack.c.bf16 %v2567, %v2567
        %v2576 = vpack.c.bf16 %v2568, %v2568
        %v2577 = vpack.c.bf16 %v2569, %v2569
        %2578 = vrot.lane.b32.xlu0 %v761, 40
        %v2579 = vpop.permute.xlu0 %2578
        %v2581 = vsel %vm764, %v2570, 0
        %v2584 = vsel %vm1053, %v2579, 0
        %2586 = vmatpush.bf16.msra.mxu0 0
        %2587 = vmatpush.bf16.msra.mxu0 0
        %2588 = vmatpush.bf16.msra.mxu0 0
        %2589 = vmatpush.bf16.msra.mxu0 0
        %2590 = vmatpush.bf16.msra.mxu0 0
        %2591 = vmatpush.bf16.msra.mxu0 0
        %2592 = vmatpush.bf16.msra.mxu0 0
        %2593 = vmatpush.bf16.msra.mxu0 %v2584
        %2594 = vmatmul.bf16.gmra.mxu0 %v2581
        %v2595 = vpop.f32.mrf.mxu0
        %v2596 = vadd.f32 0.0, %v2595
        %v2597 = vpop.f32.mrf.mxu0
        %2598 = vdwg.mxu0
        %2599 = vrot.lane.b32.xlu0 %v786, 40
        %v2600 = vpop.permute.xlu0 %2599
        %v2602 = vsel %vm764, %v2571, 0
        %v2605 = vsel %vm1053, %v2600, 0
        %2607 = vmatpush.bf16.msra.mxu0 0
        %2608 = vmatpush.bf16.msra.mxu0 0
        %2609 = vmatpush.bf16.msra.mxu0 0
        %2610 = vmatpush.bf16.msra.mxu0 0
        %2611 = vmatpush.bf16.msra.mxu0 0
        %2612 = vmatpush.bf16.msra.mxu0 0
        %2613 = vmatpush.bf16.msra.mxu0 0
        %2614 = vmatpush.bf16.msra.mxu0 %v2605
        %2615 = vmatmul.bf16.gmra.mxu0 %v2602
        %v2616 = vpop.f32.mrf.mxu0
        %v2617 = vadd.f32 0.0, %v2616
        %v2618 = vpop.f32.mrf.mxu0
        %2619 = vdwg.mxu0
        %2620 = vrot.lane.b32.xlu0 %v810, 40
        %v2621 = vpop.permute.xlu0 %2620
        %v2623 = vsel %vm764, %v2572, 0
        %v2626 = vsel %vm1053, %v2621, 0
        %2628 = vmatpush.bf16.msra.mxu0 0
        %2629 = vmatpush.bf16.msra.mxu0 0
        %2630 = vmatpush.bf16.msra.mxu0 0
        %2631 = vmatpush.bf16.msra.mxu0 0
        %2632 = vmatpush.bf16.msra.mxu0 0
        %2633 = vmatpush.bf16.msra.mxu0 0
        %2634 = vmatpush.bf16.msra.mxu0 0
        %2635 = vmatpush.bf16.msra.mxu0 %v2626
        %2636 = vmatmul.bf16.gmra.mxu0 %v2623
        %v2637 = vpop.f32.mrf.mxu0
        %v2638 = vadd.f32 0.0, %v2637
        %v2639 = vpop.f32.mrf.mxu0
        %2640 = vdwg.mxu0
        %2641 = vrot.lane.b32.xlu0 %v834, 40
        %v2642 = vpop.permute.xlu0 %2641
        %v2644 = vsel %vm764, %v2573, 0
        %v2647 = vsel %vm1053, %v2642, 0
        %2649 = vmatpush.bf16.msra.mxu0 0
        %2650 = vmatpush.bf16.msra.mxu0 0
        %2651 = vmatpush.bf16.msra.mxu0 0
        %2652 = vmatpush.bf16.msra.mxu0 0
        %2653 = vmatpush.bf16.msra.mxu0 0
        %2654 = vmatpush.bf16.msra.mxu0 0
        %2655 = vmatpush.bf16.msra.mxu0 0
        %2656 = vmatpush.bf16.msra.mxu0 %v2647
        %2657 = vmatmul.bf16.gmra.mxu0 %v2644
        %v2658 = vpop.f32.mrf.mxu0
        %v2659 = vadd.f32 0.0, %v2658
        %v2660 = vpop.f32.mrf.mxu0
        %2661 = vdwg.mxu0
        %2662 = vrot.lane.b32.xlu0 %v858, 40
        %v2663 = vpop.permute.xlu0 %2662
        %v2665 = vsel %vm764, %v2574, 0
        %v2668 = vsel %vm1053, %v2663, 0
        %2670 = vmatpush.bf16.msra.mxu0 0
        %2671 = vmatpush.bf16.msra.mxu0 0
        %2672 = vmatpush.bf16.msra.mxu0 0
        %2673 = vmatpush.bf16.msra.mxu0 0
        %2674 = vmatpush.bf16.msra.mxu0 0
        %2675 = vmatpush.bf16.msra.mxu0 0
        %2676 = vmatpush.bf16.msra.mxu0 0
        %2677 = vmatpush.bf16.msra.mxu0 %v2668
        %2678 = vmatmul.bf16.gmra.mxu0 %v2665
        %v2679 = vpop.f32.mrf.mxu0
        %v2680 = vadd.f32 0.0, %v2679
        %v2681 = vpop.f32.mrf.mxu0
        %2682 = vdwg.mxu0
        %2683 = vrot.lane.b32.xlu0 %v882, 40
        %v2684 = vpop.permute.xlu0 %2683
        %v2686 = vsel %vm764, %v2575, 0
        %v2689 = vsel %vm1053, %v2684, 0
        %2691 = vmatpush.bf16.msra.mxu0 0
        %2692 = vmatpush.bf16.msra.mxu0 0
        %2693 = vmatpush.bf16.msra.mxu0 0
        %2694 = vmatpush.bf16.msra.mxu0 0
        %2695 = vmatpush.bf16.msra.mxu0 0
        %2696 = vmatpush.bf16.msra.mxu0 0
        %2697 = vmatpush.bf16.msra.mxu0 0
        %2698 = vmatpush.bf16.msra.mxu0 %v2689
        %2699 = vmatmul.bf16.gmra.mxu0 %v2686
        %v2700 = vpop.f32.mrf.mxu0
        %v2701 = vadd.f32 0.0, %v2700
        %v2702 = vpop.f32.mrf.mxu0
        %2703 = vdwg.mxu0
        %2704 = vrot.lane.b32.xlu0 %v906, 40
        %v2705 = vpop.permute.xlu0 %2704
        %v2707 = vsel %vm764, %v2576, 0
        %v2710 = vsel %vm1053, %v2705, 0
        %2712 = vmatpush.bf16.msra.mxu0 0
        %2713 = vmatpush.bf16.msra.mxu0 0
        %2714 = vmatpush.bf16.msra.mxu0 0
        %2715 = vmatpush.bf16.msra.mxu0 0
        %2716 = vmatpush.bf16.msra.mxu0 0
        %2717 = vmatpush.bf16.msra.mxu0 0
        %2718 = vmatpush.bf16.msra.mxu0 0
        %2719 = vmatpush.bf16.msra.mxu0 %v2710
        %2720 = vmatmul.bf16.gmra.mxu0 %v2707
        %v2721 = vpop.f32.mrf.mxu0
        %v2722 = vadd.f32 0.0, %v2721
        %v2723 = vpop.f32.mrf.mxu0
        %2724 = vdwg.mxu0
        %2725 = vrot.lane.b32.xlu0 %v930, 40
        %v2726 = vpop.permute.xlu0 %2725
        %v2728 = vsel %vm764, %v2577, 0
        %v2731 = vsel %vm1053, %v2726, 0
        %2733 = vmatpush.bf16.msra.mxu0 0
        %2734 = vmatpush.bf16.msra.mxu0 0
        %2735 = vmatpush.bf16.msra.mxu0 0
        %2736 = vmatpush.bf16.msra.mxu0 0
        %2737 = vmatpush.bf16.msra.mxu0 0
        %2738 = vmatpush.bf16.msra.mxu0 0
        %2739 = vmatpush.bf16.msra.mxu0 0
        %2740 = vmatpush.bf16.msra.mxu0 %v2731
        %2741 = vmatmul.bf16.gmra.mxu0 %v2728
        %v2742 = vpop.f32.mrf.mxu0
        %v2743 = vadd.f32 0.0, %v2742
        %v2744 = vpop.f32.mrf.mxu0
        %2745 = vdwg.mxu0
        %v2746 = vpack.c.bf16 %v2617, %v2596
        %v2747 = vpack.c.bf16 %v2659, %v2638
        %v2748 = vpack.c.bf16 %v2701, %v2680
        %v2749 = vpack.c.bf16 %v2743, %v2722
        %v2750 = vpack.c.b16 %v665, %v665
        %2751 = vrot.lane.b32.xlu0 %v2750, 32
        %v2752 = vpop.permute.xlu0 %2751
        %v2754 = vsel %vm764, %v2746, 0
        %v2757 = vsel %vm764, %v2747, 0
        %v2760 = vsel %vm764, %v2748, 0
        %v2763 = vsel %vm764, %v2749, 0
        %v2766 = vsel %vm1053, %v2752, 0
        %2768 = vmatpush.bf16.msra.mxu0 0
        %2769 = vmatpush.bf16.msra.mxu0 0
        %2770 = vmatpush.bf16.msra.mxu0 0
        %2771 = vmatpush.bf16.msra.mxu0 0
        %2772 = vmatpush.bf16.msra.mxu0 0
        %2773 = vmatpush.bf16.msra.mxu0 0
        %2774 = vmatpush.bf16.msra.mxu0 0
        %2775 = vmatpush.bf16.msra.mxu0 %v2766
        %2776 = vmatmul.bf16.gmra.mxu0 %v2754
        %v2777 = vpop.f32.mrf.mxu0
        %v2778 = vadd.f32 0.0, %v2777
        %v2779 = vpop.f32.mrf.mxu0
        %v2780 = vadd.f32 0.0, %v2779
        %2781 = vmatmul.bf16.gmra.mxu0 %v2757
        %v2782 = vpop.f32.mrf.mxu0
        %v2783 = vadd.f32 0.0, %v2782
        %v2784 = vpop.f32.mrf.mxu0
        %v2785 = vadd.f32 0.0, %v2784
        %2786 = vmatmul.bf16.gmra.mxu0 %v2760
        %v2787 = vpop.f32.mrf.mxu0
        %v2788 = vadd.f32 0.0, %v2787
        %v2789 = vpop.f32.mrf.mxu0
        %v2790 = vadd.f32 0.0, %v2789
        %2791 = vmatmul.bf16.gmra.mxu0 %v2763
        %v2792 = vpop.f32.mrf.mxu0
        %v2793 = vadd.f32 0.0, %v2792
        %v2794 = vpop.f32.mrf.mxu0
        %v2795 = vadd.f32 0.0, %v2794
        %2796 = vdwg.mxu0
        %v2797 = vadd.f32 %v2290, %v2778
        %v2798 = vadd.f32 %v2291, %v2780
        %v2799 = vadd.f32 %v2292, %v2783
        %v2800 = vadd.f32 %v2293, %v2785
        %v2801 = vadd.f32 %v2294, %v2788
        %v2802 = vadd.f32 %v2295, %v2790
        %v2803 = vadd.f32 %v2296, %v2793
        %v2804 = vadd.f32 %v2297, %v2795
        %2805 = vrot.lane.b32.xlu0 %v656, 32
        %v2806 = vpop.permute.xlu0 %2805
        %v2808 = vadd.f32 %v2797, %v2806
        %v2809 = vadd.f32 %v2798, %v2806
        %v2810 = vadd.f32 %v2799, %v2806
        %v2811 = vadd.f32 %v2800, %v2806
        %v2812 = vadd.f32 %v2801, %v2806
        %v2813 = vadd.f32 %v2802, %v2806
        %v2814 = vadd.f32 %v2803, %v2806
        %v2815 = vadd.f32 %v2804, %v2806
        %v2816 = vadd.f32 %v627, %v2808
        %v2817 = vadd.f32 %v628, %v2809
        %v2818 = vadd.f32 %v629, %v2810
        %v2819 = vadd.f32 %v630, %v2811
        %v2820 = vadd.f32 %v631, %v2812
        %v2821 = vadd.f32 %v632, %v2813
        %v2822 = vadd.f32 %v633, %v2814
        %v2823 = vadd.f32 %v634, %v2815
        %v2824 = vsel %vm433, %v2816, 0.0
        %2825 = vadd.xlane.f32.xlu0 %v2824
        %v2826 = vpop.xlane.xlu0 %2825
        %v2827 = vsel %vm433, %v2817, 0.0
        %2828 = vadd.xlane.f32.xlu0 %v2827
        %v2829 = vpop.xlane.xlu0 %2828
        %v2830 = vsel %vm433, %v2818, 0.0
        %2831 = vadd.xlane.f32.xlu0 %v2830
        %v2832 = vpop.xlane.xlu0 %2831
        %v2833 = vsel %vm433, %v2819, 0.0
        %2834 = vadd.xlane.f32.xlu0 %v2833
        %v2835 = vpop.xlane.xlu0 %2834
        %v2836 = vsel %vm433, %v2820, 0.0
        %2837 = vadd.xlane.f32.xlu0 %v2836
        %v2838 = vpop.xlane.xlu0 %2837
        %v2839 = vsel %vm433, %v2821, 0.0
        %2840 = vadd.xlane.f32.xlu0 %v2839
        %v2841 = vpop.xlane.xlu0 %2840
        %v2842 = vsel %vm433, %v2822, 0.0
        %2843 = vadd.xlane.f32.xlu0 %v2842
        %v2844 = vpop.xlane.xlu0 %2843
        %v2845 = vsel %vm433, %v2823, 0.0
        %2846 = vadd.xlane.f32.xlu0 %v2845
        %v2847 = vpop.xlane.xlu0 %2846
        %v2848 = vmul.f32 %v2826, %v464
        %v2849 = vmul.f32 %v2829, %v464
        %v2850 = vmul.f32 %v2832, %v464
        %v2851 = vmul.f32 %v2835, %v464
        %v2852 = vmul.f32 %v2838, %v464
        %v2853 = vmul.f32 %v2841, %v464
        %v2854 = vmul.f32 %v2844, %v464
        %v2855 = vmul.f32 %v2847, %v464
        %v2856 = vsub.f32 %v2816, %v2848
        %v2857 = vsub.f32 %v2817, %v2849
        %v2858 = vsub.f32 %v2818, %v2850
        %v2859 = vsub.f32 %v2819, %v2851
        %v2860 = vsub.f32 %v2820, %v2852
        %v2861 = vsub.f32 %v2821, %v2853
        %v2862 = vsub.f32 %v2822, %v2854
        %v2863 = vsub.f32 %v2823, %v2855
        %v2864 = vmul.f32 %v2856, %v2856
        %v2865 = vmul.f32 %v2857, %v2857
        %v2866 = vmul.f32 %v2858, %v2858
        %v2867 = vmul.f32 %v2859, %v2859
        %v2868 = vmul.f32 %v2860, %v2860
        %v2869 = vmul.f32 %v2861, %v2861
        %v2870 = vmul.f32 %v2862, %v2862
        %v2871 = vmul.f32 %v2863, %v2863
        %v2872 = vsel %vm433, %v2864, 0.0
        %2873 = vadd.xlane.f32.xlu0 %v2872
        %v2874 = vpop.xlane.xlu0 %2873
        %v2875 = vsel %vm433, %v2865, 0.0
        %2876 = vadd.xlane.f32.xlu0 %v2875
        %v2877 = vpop.xlane.xlu0 %2876
        %v2878 = vsel %vm433, %v2866, 0.0
        %2879 = vadd.xlane.f32.xlu0 %v2878
        %v2880 = vpop.xlane.xlu0 %2879
        %v2881 = vsel %vm433, %v2867, 0.0
        %2882 = vadd.xlane.f32.xlu0 %v2881
        %v2883 = vpop.xlane.xlu0 %2882
        %v2884 = vsel %vm433, %v2868, 0.0
        %2885 = vadd.xlane.f32.xlu0 %v2884
        %v2886 = vpop.xlane.xlu0 %2885
        %v2887 = vsel %vm433, %v2869, 0.0
        %2888 = vadd.xlane.f32.xlu0 %v2887
        %v2889 = vpop.xlane.xlu0 %2888
        %v2890 = vsel %vm433, %v2870, 0.0
        %2891 = vadd.xlane.f32.xlu0 %v2890
        %v2892 = vpop.xlane.xlu0 %2891
        %v2893 = vsel %vm433, %v2871, 0.0
        %2894 = vadd.xlane.f32.xlu0 %v2893
        %v2895 = vpop.xlane.xlu0 %2894
        %v2896 = vmul.f32 %v2874, %v464
        %v2897 = vmul.f32 %v2877, %v464
        %v2898 = vmul.f32 %v2880, %v464
        %v2899 = vmul.f32 %v2883, %v464
        %v2900 = vmul.f32 %v2886, %v464
        %v2901 = vmul.f32 %v2889, %v464
        %v2902 = vmul.f32 %v2892, %v464
        %v2903 = vmul.f32 %v2895, %v464
        %v2904 = vadd.f32 %v2896, 1e-12
        %v2905 = vadd.f32 %v2897, 1e-12
        %v2906 = vadd.f32 %v2898, 1e-12
        %v2907 = vadd.f32 %v2899, 1e-12
        %v2908 = vadd.f32 %v2900, 1e-12
        %v2909 = vadd.f32 %v2901, 1e-12
        %v2910 = vadd.f32 %v2902, 1e-12
        %v2911 = vadd.f32 %v2903, 1e-12
        %v2912 = vrsqrt.pop %v2904
        %v2913 = vmul.f32 %v2912, %v2904
        %v2914 = vmul.f32 %v2913, %v2912
        %v2915 = vmul.f32 0.5, %v2914
        %v2916 = vsub.f32 1.5, %v2915
        %v2917 = vmul.f32 %v2912, %v2916
        %vm2918 = vweird.f32 %v2904
        %vm2919 = vweird.f32 %v2912
        %vm2920 = vmor %vm2918, %vm2919
        %v2921 = vsel %vm2920, %v2912, %v2917
        %v2922 = vrsqrt.pop %v2905
        %v2923 = vmul.f32 %v2922, %v2905
        %v2924 = vmul.f32 %v2923, %v2922
        %v2925 = vmul.f32 0.5, %v2924
        %v2926 = vsub.f32 1.5, %v2925
        %v2927 = vmul.f32 %v2922, %v2926
        %vm2928 = vweird.f32 %v2905
        %vm2929 = vweird.f32 %v2922
        %vm2930 = vmor %vm2928, %vm2929
        %v2931 = vsel %vm2930, %v2922, %v2927
        %v2932 = vrsqrt.pop %v2906
        %v2933 = vmul.f32 %v2932, %v2906
        %v2934 = vmul.f32 %v2933, %v2932
        %v2935 = vmul.f32 0.5, %v2934
        %v2936 = vsub.f32 1.5, %v2935
        %v2937 = vmul.f32 %v2932, %v2936
        %vm2938 = vweird.f32 %v2906
        %vm2939 = vweird.f32 %v2932
        %vm2940 = vmor %vm2938, %vm2939
        %v2941 = vsel %vm2940, %v2932, %v2937
        %v2942 = vrsqrt.pop %v2907
        %v2943 = vmul.f32 %v2942, %v2907
        %v2944 = vmul.f32 %v2943, %v2942
        %v2945 = vmul.f32 0.5, %v2944
        %v2946 = vsub.f32 1.5, %v2945
        %v2947 = vmul.f32 %v2942, %v2946
        %vm2948 = vweird.f32 %v2907
        %vm2949 = vweird.f32 %v2942
        %vm2950 = vmor %vm2948, %vm2949
        %v2951 = vsel %vm2950, %v2942, %v2947
        %v2952 = vrsqrt.pop %v2908
        %v2953 = vmul.f32 %v2952, %v2908
        %v2954 = vmul.f32 %v2953, %v2952
        %v2955 = vmul.f32 0.5, %v2954
        %v2956 = vsub.f32 1.5, %v2955
        %v2957 = vmul.f32 %v2952, %v2956
        %vm2958 = vweird.f32 %v2908
        %vm2959 = vweird.f32 %v2952
        %vm2960 = vmor %vm2958, %vm2959
        %v2961 = vsel %vm2960, %v2952, %v2957
        %v2962 = vrsqrt.pop %v2909
        %v2963 = vmul.f32 %v2962, %v2909
        %v2964 = vmul.f32 %v2963, %v2962
        %v2965 = vmul.f32 0.5, %v2964
        %v2966 = vsub.f32 1.5, %v2965
        %v2967 = vmul.f32 %v2962, %v2966
        %vm2968 = vweird.f32 %v2909
        %vm2969 = vweird.f32 %v2962
        %vm2970 = vmor %vm2968, %vm2969
        %v2971 = vsel %vm2970, %v2962, %v2967
        %v2972 = vrsqrt.pop %v2910
        %v2973 = vmul.f32 %v2972, %v2910
        %v2974 = vmul.f32 %v2973, %v2972
        %v2975 = vmul.f32 0.5, %v2974
        %v2976 = vsub.f32 1.5, %v2975
        %v2977 = vmul.f32 %v2972, %v2976
        %vm2978 = vweird.f32 %v2910
        %vm2979 = vweird.f32 %v2972
        %vm2980 = vmor %vm2978, %vm2979
        %v2981 = vsel %vm2980, %v2972, %v2977
        %v2982 = vrsqrt.pop %v2911
        %v2983 = vmul.f32 %v2982, %v2911
        %v2984 = vmul.f32 %v2983, %v2982
        %v2985 = vmul.f32 0.5, %v2984
        %v2986 = vsub.f32 1.5, %v2985
        %v2987 = vmul.f32 %v2982, %v2986
        %vm2988 = vweird.f32 %v2911
        %vm2989 = vweird.f32 %v2982
        %vm2990 = vmor %vm2988, %vm2989
        %v2991 = vsel %vm2990, %v2982, %v2987
        %v2992 = vmul.f32 %v2856, %v2921
        %v2993 = vmul.f32 %v2857, %v2931
        %v2994 = vmul.f32 %v2858, %v2941
        %v2995 = vmul.f32 %v2859, %v2951
        %v2996 = vmul.f32 %v2860, %v2961
        %v2997 = vmul.f32 %v2861, %v2971
        %v2998 = vmul.f32 %v2862, %v2981
        %v2999 = vmul.f32 %v2863, %v2991
        %v3000 = vperm.slane %v429, 0
        %v3001 = vmul.f32 %v2992, %v3000
        %v3002 = vmul.f32 %v2993, %v3000
        %v3003 = vmul.f32 %v2994, %v3000
        %v3004 = vmul.f32 %v2995, %v3000
        %v3005 = vmul.f32 %v2996, %v3000
        %v3006 = vmul.f32 %v2997, %v3000
        %v3007 = vmul.f32 %v2998, %v3000
        %v3008 = vmul.f32 %v2999, %v3000
        %v3009 = vperm.slane %v429, 1
        %v3010 = vadd.f32 %v3001, %v3009
        %v3011 = vadd.f32 %v3002, %v3009
        %v3012 = vadd.f32 %v3003, %v3009
        %v3013 = vadd.f32 %v3004, %v3009
        %v3014 = vadd.f32 %v3005, %v3009
        %v3015 = vadd.f32 %v3006, %v3009
        %v3016 = vadd.f32 %v3007, %v3009
        %v3017 = vadd.f32 %v3008, %v3009
        %v3018 = vpack.c.bf16 %v3011, %v3010
        %v3019 = vpack.c.bf16 %v3013, %v3012
        %v3020 = vpack.c.bf16 %v3015, %v3014
        %v3021 = vpack.c.bf16 %v3017, %v3016
        %v3023 = vperm.slane %v408, 0
        %v3029 = vunpack.c.l.b16 %v400
        %v3030 = vunpack.c.l.b16 %v401
        %v3031 = vunpack.c.l.b16 %v402
        %v3032 = vunpack.c.l.b16 %v403
        %v3033 = vpack.c.b16 %v3030, %v3029
        %v3034 = vpack.c.b16 %v3032, %v3031
        %v3038 = vsel %vm433, %v3018, 0
        %v3041 = vsel %vm433, %v3019, 0
        %v3044 = vsel %vm433, %v3020, 0
        %v3047 = vsel %vm433, %v3021, 0
        %3049 = vmatpush.bf16.msra.mxu0 0
        %3050 = vmatpush.bf16.msra.mxu0 0
        %3051 = vmatpush.bf16.msra.mxu0 0
        %3052 = vmatpush.bf16.msra.mxu0 0
        %3053 = vmatpush.bf16.msra.mxu0 0
        %3054 = vmatpush.bf16.msra.mxu0 0
        %3055 = vmatpush.bf16.msra.mxu0 %v3034
        %3056 = vmatpush.bf16.msra.mxu0 %v3033
        %3057 = vmatmul.bf16.gmra.mxu0 %v3038
        %v3058 = vpop.f32.mrf.mxu0
        %v3059 = vadd.f32 %v3023, %v3058
        %v3060 = vpop.f32.mrf.mxu0
        %v3061 = vadd.f32 %v3023, %v3060
        %3062 = vmatmul.bf16.gmra.mxu0 %v3041
        %v3063 = vpop.f32.mrf.mxu0
        %v3064 = vadd.f32 %v3023, %v3063
        %v3065 = vpop.f32.mrf.mxu0
        %v3066 = vadd.f32 %v3023, %v3065
        %3067 = vmatmul.bf16.gmra.mxu0 %v3044
        %v3068 = vpop.f32.mrf.mxu0
        %v3069 = vadd.f32 %v3023, %v3068
        %v3070 = vpop.f32.mrf.mxu0
        %v3071 = vadd.f32 %v3023, %v3070
        %3072 = vmatmul.bf16.gmra.mxu0 %v3047
        %v3073 = vpop.f32.mrf.mxu0
        %v3074 = vadd.f32 %v3023, %v3073
        %v3075 = vpop.f32.mrf.mxu0
        %v3076 = vadd.f32 %v3023, %v3075
        %3077 = vdwg.mxu0
        %v3078 = vmul.f32 %v3059, %v3059
        %v3079 = vmul.f32 %v3061, %v3061
        %v3080 = vmul.f32 %v3064, %v3064
        %v3081 = vmul.f32 %v3066, %v3066
        %v3082 = vmul.f32 %v3069, %v3069
        %v3083 = vmul.f32 %v3071, %v3071
        %v3084 = vmul.f32 %v3074, %v3074
        %v3085 = vmul.f32 %v3076, %v3076
        %v3086 = vmul.f32 %v3059, %v3078
        %v3087 = vmul.f32 %v3061, %v3079
        %v3088 = vmul.f32 %v3064, %v3080
        %v3089 = vmul.f32 %v3066, %v3081
        %v3090 = vmul.f32 %v3069, %v3082
        %v3091 = vmul.f32 %v3071, %v3083
        %v3092 = vmul.f32 %v3074, %v3084
        %v3093 = vmul.f32 %v3076, %v3085
        %v3094 = vmul.f32 %v3086, 0.044715
        %v3095 = vmul.f32 %v3087, 0.044715
        %v3096 = vmul.f32 %v3088, 0.044715
        %v3097 = vmul.f32 %v3089, 0.044715
        %v3098 = vmul.f32 %v3090, 0.044715
        %v3099 = vmul.f32 %v3091, 0.044715
        %v3100 = vmul.f32 %v3092, 0.044715
        %v3101 = vmul.f32 %v3093, 0.044715
        %v3102 = vadd.f32 %v3059, %v3094
        %v3103 = vadd.f32 %v3061, %v3095
        %v3104 = vadd.f32 %v3064, %v3096
        %v3105 = vadd.f32 %v3066, %v3097
        %v3106 = vadd.f32 %v3069, %v3098
        %v3107 = vadd.f32 %v3071, %v3099
        %v3108 = vadd.f32 %v3074, %v3100
        %v3109 = vadd.f32 %v3076, %v3101
        %v3110 = vmul.f32 %v3102, 0.7978846
        %v3111 = vmul.f32 %v3103, 0.7978846
        %v3112 = vmul.f32 %v3104, 0.7978846
        %v3113 = vmul.f32 %v3105, 0.7978846
        %v3114 = vmul.f32 %v3106, 0.7978846
        %v3115 = vmul.f32 %v3107, 0.7978846
        %v3116 = vmul.f32 %v3108, 0.7978846
        %v3117 = vmul.f32 %v3109, 0.7978846
        %v3118 = vtanh.pop %v3110
        %v3119 = vtanh.pop %v3111
        %v3120 = vtanh.pop %v3112
        %v3121 = vtanh.pop %v3113
        %v3122 = vtanh.pop %v3114
        %v3123 = vtanh.pop %v3115
        %v3124 = vtanh.pop %v3116
        %v3125 = vtanh.pop %v3117
        %v3126 = vadd.f32 %v3118, 1.0
        %v3127 = vadd.f32 %v3119, 1.0
        %v3128 = vadd.f32 %v3120, 1.0
        %v3129 = vadd.f32 %v3121, 1.0
        %v3130 = vadd.f32 %v3122, 1.0
        %v3131 = vadd.f32 %v3123, 1.0
        %v3132 = vadd.f32 %v3124, 1.0
        %v3133 = vadd.f32 %v3125, 1.0
        %v3134 = vmul.f32 %v3126, 0.5
        %v3135 = vmul.f32 %v3127, 0.5
        %v3136 = vmul.f32 %v3128, 0.5
        %v3137 = vmul.f32 %v3129, 0.5
        %v3138 = vmul.f32 %v3130, 0.5
        %v3139 = vmul.f32 %v3131, 0.5
        %v3140 = vmul.f32 %v3132, 0.5
        %v3141 = vmul.f32 %v3133, 0.5
        %v3142 = vmul.f32 %v3059, %v3134
        %v3143 = vmul.f32 %v3061, %v3135
        %v3144 = vmul.f32 %v3064, %v3136
        %v3145 = vmul.f32 %v3066, %v3137
        %v3146 = vmul.f32 %v3069, %v3138
        %v3147 = vmul.f32 %v3071, %v3139
        %v3148 = vmul.f32 %v3074, %v3140
        %v3149 = vmul.f32 %v3076, %v3141
        %v3150 = vpack.c.bf16 %v3143, %v3142
        %v3151 = vpack.c.bf16 %v3145, %v3144
        %v3152 = vpack.c.bf16 %v3147, %v3146
        %v3153 = vpack.c.bf16 %v3149, %v3148
        %v3155 = vperm.slane %v426, 0
        %v3165 = vunpack.c.l.b16 %v410
        %v3166 = vunpack.c.l.b16 %v411
        %v3167 = vunpack.c.l.b16 %v412
        %v3168 = vunpack.c.l.b16 %v413
        %v3169 = vunpack.c.l.b16 %v414
        %v3170 = vunpack.c.l.b16 %v415
        %v3171 = vunpack.c.l.b16 %v416
        %v3172 = vunpack.c.l.b16 %v417
        %v3173 = vpack.c.b16 %v3166, %v3165
        %v3174 = vpack.c.b16 %v3168, %v3167
        %v3175 = vpack.c.b16 %v3170, %v3169
        %v3176 = vpack.c.b16 %v3172, %v3171
        %vm3181 = vcmask 523264
        %v3183 = vsel %vm3181, %v3150, 0
        %v3186 = vsel %vm3181, %v3151, 0
        %v3189 = vsel %vm3181, %v3152, 0
        %v3192 = vsel %vm3181, %v3153, 0
        %3194 = vmatpush.bf16.msra.mxu0 0
        %3195 = vmatpush.bf16.msra.mxu0 0
        %3196 = vmatpush.bf16.msra.mxu0 0
        %3197 = vmatpush.bf16.msra.mxu0 0
        %3198 = vmatpush.bf16.msra.mxu0 %v3176
        %3199 = vmatpush.bf16.msra.mxu0 %v3175
        %3200 = vmatpush.bf16.msra.mxu0 %v3174
        %3201 = vmatpush.bf16.msra.mxu0 %v3173
        %3202 = vmatmul.bf16.gmra.mxu0 %v3183
        %v3203 = vpop.f32.mrf.mxu0
        %v3204 = vadd.f32 %v3155, %v3203
        %v3205 = vpop.f32.mrf.mxu0
        %v3206 = vadd.f32 %v3155, %v3205
        %3207 = vmatmul.bf16.gmra.mxu0 %v3186
        %v3208 = vpop.f32.mrf.mxu0
        %v3209 = vadd.f32 %v3155, %v3208
        %v3210 = vpop.f32.mrf.mxu0
        %v3211 = vadd.f32 %v3155, %v3210
        %3212 = vmatmul.bf16.gmra.mxu0 %v3189
        %v3213 = vpop.f32.mrf.mxu0
        %v3214 = vadd.f32 %v3155, %v3213
        %v3215 = vpop.f32.mrf.mxu0
        %v3216 = vadd.f32 %v3155, %v3215
        %3217 = vmatmul.bf16.gmra.mxu0 %v3192
        %v3218 = vpop.f32.mrf.mxu0
        %v3219 = vadd.f32 %v3155, %v3218
        %v3220 = vpop.f32.mrf.mxu0
        %v3221 = vadd.f32 %v3155, %v3220
        %3222 = vdwg.mxu0
        %v3223 = vadd.f32 %v3010, %v3204
        %v3224 = vadd.f32 %v3011, %v3206
        %v3225 = vadd.f32 %v3012, %v3209
        %v3226 = vadd.f32 %v3013, %v3211
        %v3227 = vadd.f32 %v3014, %v3214
        %v3228 = vadd.f32 %v3015, %v3216
        %v3229 = vadd.f32 %v3016, %v3219
        %v3230 = vadd.f32 %v3017, %v3221
        %v3231 = vsel %vm433, %v3223, 0.0
        %3232 = vadd.xlane.f32.xlu0 %v3231
        %v3233 = vpop.xlane.xlu0 %3232
        %v3234 = vsel %vm433, %v3224, 0.0
        %3235 = vadd.xlane.f32.xlu0 %v3234
        %v3236 = vpop.xlane.xlu0 %3235
        %v3237 = vsel %vm433, %v3225, 0.0
        %3238 = vadd.xlane.f32.xlu0 %v3237
        %v3239 = vpop.xlane.xlu0 %3238
        %v3240 = vsel %vm433, %v3226, 0.0
        %3241 = vadd.xlane.f32.xlu0 %v3240
        %v3242 = vpop.xlane.xlu0 %3241
        %v3243 = vsel %vm433, %v3227, 0.0
        %3244 = vadd.xlane.f32.xlu0 %v3243
        %v3245 = vpop.xlane.xlu0 %3244
        %v3246 = vsel %vm433, %v3228, 0.0
        %3247 = vadd.xlane.f32.xlu0 %v3246
        %v3248 = vpop.xlane.xlu0 %3247
        %v3249 = vsel %vm433, %v3229, 0.0
        %3250 = vadd.xlane.f32.xlu0 %v3249
        %v3251 = vpop.xlane.xlu0 %3250
        %v3252 = vsel %vm433, %v3230, 0.0
        %3253 = vadd.xlane.f32.xlu0 %v3252
        %v3254 = vpop.xlane.xlu0 %3253
        %v3255 = vmul.f32 %v3233, %v464
        %v3256 = vmul.f32 %v3236, %v464
        %v3257 = vmul.f32 %v3239, %v464
        %v3258 = vmul.f32 %v3242, %v464
        %v3259 = vmul.f32 %v3245, %v464
        %v3260 = vmul.f32 %v3248, %v464
        %v3261 = vmul.f32 %v3251, %v464
        %v3262 = vmul.f32 %v3254, %v464
        %v3263 = vsub.f32 %v3223, %v3255
        %v3264 = vsub.f32 %v3224, %v3256
        %v3265 = vsub.f32 %v3225, %v3257
        %v3266 = vsub.f32 %v3226, %v3258
        %v3267 = vsub.f32 %v3227, %v3259
        %v3268 = vsub.f32 %v3228, %v3260
        %v3269 = vsub.f32 %v3229, %v3261
        %v3270 = vsub.f32 %v3230, %v3262
        %v3271 = vmul.f32 %v3263, %v3263
        %v3272 = vmul.f32 %v3264, %v3264
        %v3273 = vmul.f32 %v3265, %v3265
        %v3274 = vmul.f32 %v3266, %v3266
        %v3275 = vmul.f32 %v3267, %v3267
        %v3276 = vmul.f32 %v3268, %v3268
        %v3277 = vmul.f32 %v3269, %v3269
        %v3278 = vmul.f32 %v3270, %v3270
        %v3279 = vsel %vm433, %v3271, 0.0
        %3280 = vadd.xlane.f32.xlu0 %v3279
        %v3281 = vpop.xlane.xlu0 %3280
        %v3282 = vsel %vm433, %v3272, 0.0
        %3283 = vadd.xlane.f32.xlu0 %v3282
        %v3284 = vpop.xlane.xlu0 %3283
        %v3285 = vsel %vm433, %v3273, 0.0
        %3286 = vadd.xlane.f32.xlu0 %v3285
        %v3287 = vpop.xlane.xlu0 %3286
        %v3288 = vsel %vm433, %v3274, 0.0
        %3289 = vadd.xlane.f32.xlu0 %v3288
        %v3290 = vpop.xlane.xlu0 %3289
        %v3291 = vsel %vm433, %v3275, 0.0
        %3292 = vadd.xlane.f32.xlu0 %v3291
        %v3293 = vpop.xlane.xlu0 %3292
        %v3294 = vsel %vm433, %v3276, 0.0
        %3295 = vadd.xlane.f32.xlu0 %v3294
        %v3296 = vpop.xlane.xlu0 %3295
        %v3297 = vsel %vm433, %v3277, 0.0
        %3298 = vadd.xlane.f32.xlu0 %v3297
        %v3299 = vpop.xlane.xlu0 %3298
        %v3300 = vsel %vm433, %v3278, 0.0
        %3301 = vadd.xlane.f32.xlu0 %v3300
        %v3302 = vpop.xlane.xlu0 %3301
        %v3303 = vmul.f32 %v3281, %v464
        %v3304 = vmul.f32 %v3284, %v464
        %v3305 = vmul.f32 %v3287, %v464
        %v3306 = vmul.f32 %v3290, %v464
        %v3307 = vmul.f32 %v3293, %v464
        %v3308 = vmul.f32 %v3296, %v464
        %v3309 = vmul.f32 %v3299, %v464
        %v3310 = vmul.f32 %v3302, %v464
        %v3311 = vadd.f32 %v3303, 1e-12
        %v3312 = vadd.f32 %v3304, 1e-12
        %v3313 = vadd.f32 %v3305, 1e-12
        %v3314 = vadd.f32 %v3306, 1e-12
        %v3315 = vadd.f32 %v3307, 1e-12
        %v3316 = vadd.f32 %v3308, 1e-12
        %v3317 = vadd.f32 %v3309, 1e-12
        %v3318 = vadd.f32 %v3310, 1e-12
        %v3319 = vrsqrt.pop %v3311
        %v3320 = vmul.f32 %v3319, %v3311
        %v3321 = vmul.f32 %v3320, %v3319
        %v3322 = vmul.f32 0.5, %v3321
        %v3323 = vsub.f32 1.5, %v3322
        %v3324 = vmul.f32 %v3319, %v3323
        %vm3325 = vweird.f32 %v3311
        %vm3326 = vweird.f32 %v3319
        %vm3327 = vmor %vm3325, %vm3326
        %v3328 = vsel %vm3327, %v3319, %v3324
        %v3329 = vrsqrt.pop %v3312
        %v3330 = vmul.f32 %v3329, %v3312
        %v3331 = vmul.f32 %v3330, %v3329
        %v3332 = vmul.f32 0.5, %v3331
        %v3333 = vsub.f32 1.5, %v3332
        %v3334 = vmul.f32 %v3329, %v3333
        %vm3335 = vweird.f32 %v3312
        %vm3336 = vweird.f32 %v3329
        %vm3337 = vmor %vm3335, %vm3336
        %v3338 = vsel %vm3337, %v3329, %v3334
        %v3339 = vrsqrt.pop %v3313
        %v3340 = vmul.f32 %v3339, %v3313
        %v3341 = vmul.f32 %v3340, %v3339
        %v3342 = vmul.f32 0.5, %v3341
        %v3343 = vsub.f32 1.5, %v3342
        %v3344 = vmul.f32 %v3339, %v3343
        %vm3345 = vweird.f32 %v3313
        %vm3346 = vweird.f32 %v3339
        %vm3347 = vmor %vm3345, %vm3346
        %v3348 = vsel %vm3347, %v3339, %v3344
        %v3349 = vrsqrt.pop %v3314
        %v3350 = vmul.f32 %v3349, %v3314
        %v3351 = vmul.f32 %v3350, %v3349
        %v3352 = vmul.f32 0.5, %v3351
        %v3353 = vsub.f32 1.5, %v3352
        %v3354 = vmul.f32 %v3349, %v3353
        %vm3355 = vweird.f32 %v3314
        %vm3356 = vweird.f32 %v3349
        %vm3357 = vmor %vm3355, %vm3356
        %v3358 = vsel %vm3357, %v3349, %v3354
        %v3359 = vrsqrt.pop %v3315
        %v3360 = vmul.f32 %v3359, %v3315
        %v3361 = vmul.f32 %v3360, %v3359
        %v3362 = vmul.f32 0.5, %v3361
        %v3363 = vsub.f32 1.5, %v3362
        %v3364 = vmul.f32 %v3359, %v3363
        %vm3365 = vweird.f32 %v3315
        %vm3366 = vweird.f32 %v3359
        %vm3367 = vmor %vm3365, %vm3366
        %v3368 = vsel %vm3367, %v3359, %v3364
        %v3369 = vrsqrt.pop %v3316
        %v3370 = vmul.f32 %v3369, %v3316
        %v3371 = vmul.f32 %v3370, %v3369
        %v3372 = vmul.f32 0.5, %v3371
        %v3373 = vsub.f32 1.5, %v3372
        %v3374 = vmul.f32 %v3369, %v3373
        %vm3375 = vweird.f32 %v3316
        %vm3376 = vweird.f32 %v3369
        %vm3377 = vmor %vm3375, %vm3376
        %v3378 = vsel %vm3377, %v3369, %v3374
        %v3379 = vrsqrt.pop %v3317
        %v3380 = vmul.f32 %v3379, %v3317
        %v3381 = vmul.f32 %v3380, %v3379
        %v3382 = vmul.f32 0.5, %v3381
        %v3383 = vsub.f32 1.5, %v3382
        %v3384 = vmul.f32 %v3379, %v3383
        %vm3385 = vweird.f32 %v3317
        %vm3386 = vweird.f32 %v3379
        %vm3387 = vmor %vm3385, %vm3386
        %v3388 = vsel %vm3387, %v3379, %v3384
        %v3389 = vrsqrt.pop %v3318
        %v3390 = vmul.f32 %v3389, %v3318
        %v3391 = vmul.f32 %v3390, %v3389
        %v3392 = vmul.f32 0.5, %v3391
        %v3393 = vsub.f32 1.5, %v3392
        %v3394 = vmul.f32 %v3389, %v3393
        %vm3395 = vweird.f32 %v3318
        %vm3396 = vweird.f32 %v3389
        %vm3397 = vmor %vm3395, %vm3396
        %v3398 = vsel %vm3397, %v3389, %v3394
        %v3399 = vmul.f32 %v3263, %v3328
        %v3400 = vmul.f32 %v3264, %v3338
        %v3401 = vmul.f32 %v3265, %v3348
        %v3402 = vmul.f32 %v3266, %v3358
        %v3403 = vmul.f32 %v3267, %v3368
        %v3404 = vmul.f32 %v3268, %v3378
        %v3405 = vmul.f32 %v3269, %v3388
        %v3406 = vmul.f32 %v3270, %v3398
        %v3407 = vperm.slane %v430, 0
        %v3408 = vmul.f32 %v3399, %v3407
        %v3409 = vmul.f32 %v3400, %v3407
        %v3410 = vmul.f32 %v3401, %v3407
        %v3411 = vmul.f32 %v3402, %v3407
        %v3412 = vmul.f32 %v3403, %v3407
        %v3413 = vmul.f32 %v3404, %v3407
        %v3414 = vmul.f32 %v3405, %v3407
        %v3415 = vmul.f32 %v3406, %v3407
        %v3416 = vperm.slane %v430, 1
        %v3417 = vadd.f32 %v3408, %v3416
        %v3418 = vadd.f32 %v3409, %v3416
        %v3419 = vadd.f32 %v3410, %v3416
        %v3420 = vadd.f32 %v3411, %v3416
        %v3421 = vadd.f32 %v3412, %v3416
        %v3422 = vadd.f32 %v3413, %v3416
        %v3423 = vadd.f32 %v3414, %v3416
        %v3424 = vadd.f32 %v3415, %v3416
        %v3425 = vpack.c.bf16 %v3418, %v3417
        %v3426 = vpack.c.bf16 %v3420, %v3419
        %v3427 = vpack.c.bf16 %v3422, %v3421
        %v3428 = vpack.c.bf16 %v3424, %v3423
        %v3430 = vperm.slane %v399, 0
        %v3436 = vunpack.c.l.b16 %v394
        %v3437 = vunpack.c.l.b16 %v395
        %v3438 = vunpack.c.l.b16 %v396
        %v3439 = vunpack.c.l.b16 %v397
        %v3440 = vpack.c.b16 %v3437, %v3436
        %v3441 = vpack.c.b16 %v3439, %v3438
        %v3445 = vsel %vm433, %v3425, 0
        %v3448 = vsel %vm433, %v3426, 0
        %v3451 = vsel %vm433, %v3427, 0
        %v3454 = vsel %vm433, %v3428, 0
        %3456 = vmatpush.bf16.msra.mxu0 0
        %3457 = vmatpush.bf16.msra.mxu0 0
        %3458 = vmatpush.bf16.msra.mxu0 0
        %3459 = vmatpush.bf16.msra.mxu0 0
        %3460 = vmatpush.bf16.msra.mxu0 0
        %3461 = vmatpush.bf16.msra.mxu0 0
        %3462 = vmatpush.bf16.msra.mxu0 %v3441
        %3463 = vmatpush.bf16.msra.mxu0 %v3440
        %3464 = vmatmul.bf16.gmra.mxu0 %v3445
        %v3465 = vpop.f32.mrf.mxu0
        %v3466 = vadd.f32 %v3430, %v3465
        %v3467 = vpop.f32.mrf.mxu0
        %v3468 = vadd.f32 %v3430, %v3467
        %3469 = vmatmul.bf16.gmra.mxu0 %v3448
        %v3470 = vpop.f32.mrf.mxu0
        %v3471 = vadd.f32 %v3430, %v3470
        %v3472 = vpop.f32.mrf.mxu0
        %v3473 = vadd.f32 %v3430, %v3472
        %3474 = vmatmul.bf16.gmra.mxu0 %v3451
        %v3475 = vpop.f32.mrf.mxu0
        %v3476 = vadd.f32 %v3430, %v3475
        %v3477 = vpop.f32.mrf.mxu0
        %v3478 = vadd.f32 %v3430, %v3477
        %3479 = vmatmul.bf16.gmra.mxu0 %v3454
        %v3480 = vpop.f32.mrf.mxu0
        %v3481 = vadd.f32 %v3430, %v3480
        %v3482 = vpop.f32.mrf.mxu0
        %v3483 = vadd.f32 %v3430, %v3482
        %3484 = vdwg.mxu0
        %v3485 = vmul.f32 %v3466, 0.35355338
        %v3486 = vmul.f32 %v3468, 0.35355338
        %v3487 = vmul.f32 %v3471, 0.35355338
        %v3488 = vmul.f32 %v3473, 0.35355338
        %v3489 = vmul.f32 %v3476, 0.35355338
        %v3490 = vmul.f32 %v3478, 0.35355338
        %v3491 = vmul.f32 %v3481, 0.35355338
        %v3492 = vmul.f32 %v3483, 0.35355338
        %v3493 = vpack.c.bf16 %v3485, %v3485
        %v3494 = vpack.c.bf16 %v3486, %v3486
        %v3495 = vpack.c.bf16 %v3487, %v3487
        %v3496 = vpack.c.bf16 %v3488, %v3488
        %v3497 = vpack.c.bf16 %v3489, %v3489
        %v3498 = vpack.c.bf16 %v3490, %v3490
        %v3499 = vpack.c.bf16 %v3491, %v3491
        %v3500 = vpack.c.bf16 %v3492, %v3492
        %v3501 = vpack.c.bf16 %v3466, %v3466
        %v3502 = vpack.c.bf16 %v3468, %v3468
        %v3503 = vpack.c.bf16 %v3471, %v3471
        %v3504 = vpack.c.bf16 %v3473, %v3473
        %v3505 = vpack.c.bf16 %v3476, %v3476
        %v3506 = vpack.c.bf16 %v3478, %v3478
        %v3507 = vpack.c.bf16 %v3481, %v3481
        %v3508 = vpack.c.bf16 %v3483, %v3483
        %v3510 = vunpack.c.l.b16 %v3501
        %v3511 = vpack.c.b16 %v3510, %v3510
        %3512 = vrot.lane.b32.xlu0 %v3511, 96
        %v3513 = vpop.permute.xlu0 %3512
        %v3515 = vsel %vm764, %v3493, 0
        %v3518 = vsel %vm764, %v3513, 0
        %3520 = vmatpush.bf16.xpose.msra.mxu0 0
        %3521 = vmatpush.bf16.xpose.msra.mxu0 0
        %3522 = vmatpush.bf16.xpose.msra.mxu0 0
        %3523 = vmatpush.bf16.xpose.msra.mxu0 0
        %3524 = vmatpush.bf16.xpose.msra.mxu0 0
        %3525 = vmatpush.bf16.xpose.msra.mxu0 0
        %3526 = vmatpush.bf16.xpose.msra.mxu0 0
        %3527 = vmatpush.bf16.xpose.msra.mxu0 %v3518
        %3528 = vmatmul.bf16.gmra.mxu0 %v3515
        %v3529 = vpop.f32.mrf.mxu0
        %v3530 = vadd.f32 %v743, %v3529
        %v3531 = vpop.f32.mrf.mxu0
        %3532 = vdwg.mxu0
        %v3534 = vunpack.c.l.b16 %v3502
        %v3535 = vpack.c.b16 %v3534, %v3534
        %3536 = vrot.lane.b32.xlu0 %v3535, 96
        %v3537 = vpop.permute.xlu0 %3536
        %v3539 = vsel %vm764, %v3494, 0
        %v3542 = vsel %vm764, %v3537, 0
        %3544 = vmatpush.bf16.xpose.msra.mxu0 0
        %3545 = vmatpush.bf16.xpose.msra.mxu0 0
        %3546 = vmatpush.bf16.xpose.msra.mxu0 0
        %3547 = vmatpush.bf16.xpose.msra.mxu0 0
        %3548 = vmatpush.bf16.xpose.msra.mxu0 0
        %3549 = vmatpush.bf16.xpose.msra.mxu0 0
        %3550 = vmatpush.bf16.xpose.msra.mxu0 0
        %3551 = vmatpush.bf16.xpose.msra.mxu0 %v3542
        %3552 = vmatmul.bf16.gmra.mxu0 %v3539
        %v3553 = vpop.f32.mrf.mxu0
        %v3554 = vadd.f32 %v744, %v3553
        %v3555 = vpop.f32.mrf.mxu0
        %3556 = vdwg.mxu0
        %v3558 = vunpack.c.l.b16 %v3503
        %v3559 = vpack.c.b16 %v3558, %v3558
        %3560 = vrot.lane.b32.xlu0 %v3559, 96
        %v3561 = vpop.permute.xlu0 %3560
        %v3563 = vsel %vm764, %v3495, 0
        %v3566 = vsel %vm764, %v3561, 0
        %3568 = vmatpush.bf16.xpose.msra.mxu0 0
        %3569 = vmatpush.bf16.xpose.msra.mxu0 0
        %3570 = vmatpush.bf16.xpose.msra.mxu0 0
        %3571 = vmatpush.bf16.xpose.msra.mxu0 0
        %3572 = vmatpush.bf16.xpose.msra.mxu0 0
        %3573 = vmatpush.bf16.xpose.msra.mxu0 0
        %3574 = vmatpush.bf16.xpose.msra.mxu0 0
        %3575 = vmatpush.bf16.xpose.msra.mxu0 %v3566
        %3576 = vmatmul.bf16.gmra.mxu0 %v3563
        %v3577 = vpop.f32.mrf.mxu0
        %v3578 = vadd.f32 %v745, %v3577
        %v3579 = vpop.f32.mrf.mxu0
        %3580 = vdwg.mxu0
        %v3582 = vunpack.c.l.b16 %v3504
        %v3583 = vpack.c.b16 %v3582, %v3582
        %3584 = vrot.lane.b32.xlu0 %v3583, 96
        %v3585 = vpop.permute.xlu0 %3584
        %v3587 = vsel %vm764, %v3496, 0
        %v3590 = vsel %vm764, %v3585, 0
        %3592 = vmatpush.bf16.xpose.msra.mxu0 0
        %3593 = vmatpush.bf16.xpose.msra.mxu0 0
        %3594 = vmatpush.bf16.xpose.msra.mxu0 0
        %3595 = vmatpush.bf16.xpose.msra.mxu0 0
        %3596 = vmatpush.bf16.xpose.msra.mxu0 0
        %3597 = vmatpush.bf16.xpose.msra.mxu0 0
        %3598 = vmatpush.bf16.xpose.msra.mxu0 0
        %3599 = vmatpush.bf16.xpose.msra.mxu0 %v3590
        %3600 = vmatmul.bf16.gmra.mxu0 %v3587
        %v3601 = vpop.f32.mrf.mxu0
        %v3602 = vadd.f32 %v746, %v3601
        %v3603 = vpop.f32.mrf.mxu0
        %3604 = vdwg.mxu0
        %v3606 = vunpack.c.l.b16 %v3505
        %v3607 = vpack.c.b16 %v3606, %v3606
        %3608 = vrot.lane.b32.xlu0 %v3607, 96
        %v3609 = vpop.permute.xlu0 %3608
        %v3611 = vsel %vm764, %v3497, 0
        %v3614 = vsel %vm764, %v3609, 0
        %3616 = vmatpush.bf16.xpose.msra.mxu0 0
        %3617 = vmatpush.bf16.xpose.msra.mxu0 0
        %3618 = vmatpush.bf16.xpose.msra.mxu0 0
        %3619 = vmatpush.bf16.xpose.msra.mxu0 0
        %3620 = vmatpush.bf16.xpose.msra.mxu0 0
        %3621 = vmatpush.bf16.xpose.msra.mxu0 0
        %3622 = vmatpush.bf16.xpose.msra.mxu0 0
        %3623 = vmatpush.bf16.xpose.msra.mxu0 %v3614
        %3624 = vmatmul.bf16.gmra.mxu0 %v3611
        %v3625 = vpop.f32.mrf.mxu0
        %v3626 = vadd.f32 %v747, %v3625
        %v3627 = vpop.f32.mrf.mxu0
        %3628 = vdwg.mxu0
        %v3630 = vunpack.c.l.b16 %v3506
        %v3631 = vpack.c.b16 %v3630, %v3630
        %3632 = vrot.lane.b32.xlu0 %v3631, 96
        %v3633 = vpop.permute.xlu0 %3632
        %v3635 = vsel %vm764, %v3498, 0
        %v3638 = vsel %vm764, %v3633, 0
        %3640 = vmatpush.bf16.xpose.msra.mxu0 0
        %3641 = vmatpush.bf16.xpose.msra.mxu0 0
        %3642 = vmatpush.bf16.xpose.msra.mxu0 0
        %3643 = vmatpush.bf16.xpose.msra.mxu0 0
        %3644 = vmatpush.bf16.xpose.msra.mxu0 0
        %3645 = vmatpush.bf16.xpose.msra.mxu0 0
        %3646 = vmatpush.bf16.xpose.msra.mxu0 0
        %3647 = vmatpush.bf16.xpose.msra.mxu0 %v3638
        %3648 = vmatmul.bf16.gmra.mxu0 %v3635
        %v3649 = vpop.f32.mrf.mxu0
        %v3650 = vadd.f32 %v748, %v3649
        %v3651 = vpop.f32.mrf.mxu0
        %3652 = vdwg.mxu0
        %v3654 = vunpack.c.l.b16 %v3507
        %v3655 = vpack.c.b16 %v3654, %v3654
        %3656 = vrot.lane.b32.xlu0 %v3655, 96
        %v3657 = vpop.permute.xlu0 %3656
        %v3659 = vsel %vm764, %v3499, 0
        %v3662 = vsel %vm764, %v3657, 0
        %3664 = vmatpush.bf16.xpose.msra.mxu0 0
        %3665 = vmatpush.bf16.xpose.msra.mxu0 0
        %3666 = vmatpush.bf16.xpose.msra.mxu0 0
        %3667 = vmatpush.bf16.xpose.msra.mxu0 0
        %3668 = vmatpush.bf16.xpose.msra.mxu0 0
        %3669 = vmatpush.bf16.xpose.msra.mxu0 0
        %3670 = vmatpush.bf16.xpose.msra.mxu0 0
        %3671 = vmatpush.bf16.xpose.msra.mxu0 %v3662
        %3672 = vmatmul.bf16.gmra.mxu0 %v3659
        %v3673 = vpop.f32.mrf.mxu0
        %v3674 = vadd.f32 %v749, %v3673
        %v3675 = vpop.f32.mrf.mxu0
        %3676 = vdwg.mxu0
        %v3678 = vunpack.c.l.b16 %v3508
        %v3679 = vpack.c.b16 %v3678, %v3678
        %3680 = vrot.lane.b32.xlu0 %v3679, 96
        %v3681 = vpop.permute.xlu0 %3680
        %v3683 = vsel %vm764, %v3500, 0
        %v3686 = vsel %vm764, %v3681, 0
        %3688 = vmatpush.bf16.xpose.msra.mxu0 0
        %3689 = vmatpush.bf16.xpose.msra.mxu0 0
        %3690 = vmatpush.bf16.xpose.msra.mxu0 0
        %3691 = vmatpush.bf16.xpose.msra.mxu0 0
        %3692 = vmatpush.bf16.xpose.msra.mxu0 0
        %3693 = vmatpush.bf16.xpose.msra.mxu0 0
        %3694 = vmatpush.bf16.xpose.msra.mxu0 0
        %3695 = vmatpush.bf16.xpose.msra.mxu0 %v3686
        %3696 = vmatmul.bf16.gmra.mxu0 %v3683
        %v3697 = vpop.f32.mrf.mxu0
        %v3698 = vadd.f32 %v750, %v3697
        %v3699 = vpop.f32.mrf.mxu0
        %3700 = vdwg.mxu0
        %v3701 = vsel %vm764, %v3530, -inf
        %3702 = vmax.xlane.f32.xlu0 %v3701
        %v3703 = vpop.xlane.xlu0 %3702
        %v3704 = vsel %vm764, %v3554, -inf
        %3705 = vmax.xlane.f32.xlu0 %v3704
        %v3706 = vpop.xlane.xlu0 %3705
        %v3707 = vsel %vm764, %v3578, -inf
        %3708 = vmax.xlane.f32.xlu0 %v3707
        %v3709 = vpop.xlane.xlu0 %3708
        %v3710 = vsel %vm764, %v3602, -inf
        %3711 = vmax.xlane.f32.xlu0 %v3710
        %v3712 = vpop.xlane.xlu0 %3711
        %v3713 = vsel %vm764, %v3626, -inf
        %3714 = vmax.xlane.f32.xlu0 %v3713
        %v3715 = vpop.xlane.xlu0 %3714
        %v3716 = vsel %vm764, %v3650, -inf
        %3717 = vmax.xlane.f32.xlu0 %v3716
        %v3718 = vpop.xlane.xlu0 %3717
        %v3719 = vsel %vm764, %v3674, -inf
        %3720 = vmax.xlane.f32.xlu0 %v3719
        %v3721 = vpop.xlane.xlu0 %3720
        %v3722 = vsel %vm764, %v3698, -inf
        %3723 = vmax.xlane.f32.xlu0 %v3722
        %v3724 = vpop.xlane.xlu0 %3723
        %v3725 = vsub.f32 %v3530, %v3703
        %v3726 = vsub.f32 %v3554, %v3706
        %v3727 = vsub.f32 %v3578, %v3709
        %v3728 = vsub.f32 %v3602, %v3712
        %v3729 = vsub.f32 %v3626, %v3715
        %v3730 = vsub.f32 %v3650, %v3718
        %v3731 = vsub.f32 %v3674, %v3721
        %v3732 = vsub.f32 %v3698, %v3724
        %v3733 = vmul.f32 %v3725, 1.442695
        %v3734 = vpow.pop %v3733
        %v3735 = vmul.f32 %v3726, 1.442695
        %v3736 = vpow.pop %v3735
        %v3737 = vmul.f32 %v3727, 1.442695
        %v3738 = vpow.pop %v3737
        %v3739 = vmul.f32 %v3728, 1.442695
        %v3740 = vpow.pop %v3739
        %v3741 = vmul.f32 %v3729, 1.442695
        %v3742 = vpow.pop %v3741
        %v3743 = vmul.f32 %v3730, 1.442695
        %v3744 = vpow.pop %v3743
        %v3745 = vmul.f32 %v3731, 1.442695
        %v3746 = vpow.pop %v3745
        %v3747 = vmul.f32 %v3732, 1.442695
        %v3748 = vpow.pop %v3747
        %v3749 = vsel %vm764, %v3734, 0.0
        %3750 = vadd.xlane.f32.xlu0 %v3749
        %v3751 = vpop.xlane.xlu0 %3750
        %v3752 = vsel %vm764, %v3736, 0.0
        %3753 = vadd.xlane.f32.xlu0 %v3752
        %v3754 = vpop.xlane.xlu0 %3753
        %v3755 = vsel %vm764, %v3738, 0.0
        %3756 = vadd.xlane.f32.xlu0 %v3755
        %v3757 = vpop.xlane.xlu0 %3756
        %v3758 = vsel %vm764, %v3740, 0.0
        %3759 = vadd.xlane.f32.xlu0 %v3758
        %v3760 = vpop.xlane.xlu0 %3759
        %v3761 = vsel %vm764, %v3742, 0.0
        %3762 = vadd.xlane.f32.xlu0 %v3761
        %v3763 = vpop.xlane.xlu0 %3762
        %v3764 = vsel %vm764, %v3744, 0.0
        %3765 = vadd.xlane.f32.xlu0 %v3764
        %v3766 = vpop.xlane.xlu0 %3765
        %v3767 = vsel %vm764, %v3746, 0.0
        %3768 = vadd.xlane.f32.xlu0 %v3767
        %v3769 = vpop.xlane.xlu0 %3768
        %v3770 = vsel %vm764, %v3748, 0.0
        %3771 = vadd.xlane.f32.xlu0 %v3770
        %v3772 = vpop.xlane.xlu0 %3771
        %v3773 = vrcp.pop %v3751
        %v3774 = vrcp.pop %v3754
        %v3775 = vrcp.pop %v3757
        %v3776 = vrcp.pop %v3760
        %v3777 = vrcp.pop %v3763
        %v3778 = vrcp.pop %v3766
        %v3779 = vrcp.pop %v3769
        %v3780 = vrcp.pop %v3772
        %v3781 = vmul.f32 %v3734, %v3773
        %v3782 = vmul.f32 %v3736, %v3774
        %v3783 = vmul.f32 %v3738, %v3775
        %v3784 = vmul.f32 %v3740, %v3776
        %v3785 = vmul.f32 %v3742, %v3777
        %v3786 = vmul.f32 %v3744, %v3778
        %v3787 = vmul.f32 %v3746, %v3779
        %v3788 = vmul.f32 %v3748, %v3780
        %v3789 = vpack.c.bf16 %v3781, %v3781
        %v3790 = vpack.c.bf16 %v3782, %v3782
        %v3791 = vpack.c.bf16 %v3783, %v3783
        %v3792 = vpack.c.bf16 %v3784, %v3784
        %v3793 = vpack.c.bf16 %v3785, %v3785
        %v3794 = vpack.c.bf16 %v3786, %v3786
        %v3795 = vpack.c.bf16 %v3787, %v3787
        %v3796 = vpack.c.bf16 %v3788, %v3788
        %3797 = vrot.lane.b32.xlu0 %v3511, 64
        %v3798 = vpop.permute.xlu0 %3797
        %v3800 = vsel %vm764, %v3789, 0
        %v3803 = vsel %vm1053, %v3798, 0
        %3805 = vmatpush.bf16.msra.mxu0 0
        %3806 = vmatpush.bf16.msra.mxu0 0
        %3807 = vmatpush.bf16.msra.mxu0 0
        %3808 = vmatpush.bf16.msra.mxu0 0
        %3809 = vmatpush.bf16.msra.mxu0 0
        %3810 = vmatpush.bf16.msra.mxu0 0
        %3811 = vmatpush.bf16.msra.mxu0 0
        %3812 = vmatpush.bf16.msra.mxu0 %v3803
        %3813 = vmatmul.bf16.gmra.mxu0 %v3800
        %v3814 = vpop.f32.mrf.mxu0
        %v3815 = vadd.f32 0.0, %v3814
        %v3816 = vpop.f32.mrf.mxu0
        %3817 = vdwg.mxu0
        %3818 = vrot.lane.b32.xlu0 %v3535, 64
        %v3819 = vpop.permute.xlu0 %3818
        %v3821 = vsel %vm764, %v3790, 0
        %v3824 = vsel %vm1053, %v3819, 0
        %3826 = vmatpush.bf16.msra.mxu0 0
        %3827 = vmatpush.bf16.msra.mxu0 0
        %3828 = vmatpush.bf16.msra.mxu0 0
        %3829 = vmatpush.bf16.msra.mxu0 0
        %3830 = vmatpush.bf16.msra.mxu0 0
        %3831 = vmatpush.bf16.msra.mxu0 0
        %3832 = vmatpush.bf16.msra.mxu0 0
        %3833 = vmatpush.bf16.msra.mxu0 %v3824
        %3834 = vmatmul.bf16.gmra.mxu0 %v3821
        %v3835 = vpop.f32.mrf.mxu0
        %v3836 = vadd.f32 0.0, %v3835
        %v3837 = vpop.f32.mrf.mxu0
        %3838 = vdwg.mxu0
        %3839 = vrot.lane.b32.xlu0 %v3559, 64
        %v3840 = vpop.permute.xlu0 %3839
        %v3842 = vsel %vm764, %v3791, 0
        %v3845 = vsel %vm1053, %v3840, 0
        %3847 = vmatpush.bf16.msra.mxu0 0
        %3848 = vmatpush.bf16.msra.mxu0 0
        %3849 = vmatpush.bf16.msra.mxu0 0
        %3850 = vmatpush.bf16.msra.mxu0 0
        %3851 = vmatpush.bf16.msra.mxu0 0
        %3852 = vmatpush.bf16.msra.mxu0 0
        %3853 = vmatpush.bf16.msra.mxu0 0
        %3854 = vmatpush.bf16.msra.mxu0 %v3845
        %3855 = vmatmul.bf16.gmra.mxu0 %v3842
        %v3856 = vpop.f32.mrf.mxu0
        %v3857 = vadd.f32 0.0, %v3856
        %v3858 = vpop.f32.mrf.mxu0
        %3859 = vdwg.mxu0
        %3860 = vrot.lane.b32.xlu0 %v3583, 64
        %v3861 = vpop.permute.xlu0 %3860
        %v3863 = vsel %vm764, %v3792, 0
        %v3866 = vsel %vm1053, %v3861, 0
        %3868 = vmatpush.bf16.msra.mxu0 0
        %3869 = vmatpush.bf16.msra.mxu0 0
        %3870 = vmatpush.bf16.msra.mxu0 0
        %3871 = vmatpush.bf16.msra.mxu0 0
        %3872 = vmatpush.bf16.msra.mxu0 0
        %3873 = vmatpush.bf16.msra.mxu0 0
        %3874 = vmatpush.bf16.msra.mxu0 0
        %3875 = vmatpush.bf16.msra.mxu0 %v3866
        %3876 = vmatmul.bf16.gmra.mxu0 %v3863
        %v3877 = vpop.f32.mrf.mxu0
        %v3878 = vadd.f32 0.0, %v3877
        %v3879 = vpop.f32.mrf.mxu0
        %3880 = vdwg.mxu0
        %3881 = vrot.lane.b32.xlu0 %v3607, 64
        %v3882 = vpop.permute.xlu0 %3881
        %v3884 = vsel %vm764, %v3793, 0
        %v3887 = vsel %vm1053, %v3882, 0
        %3889 = vmatpush.bf16.msra.mxu0 0
        %3890 = vmatpush.bf16.msra.mxu0 0
        %3891 = vmatpush.bf16.msra.mxu0 0
        %3892 = vmatpush.bf16.msra.mxu0 0
        %3893 = vmatpush.bf16.msra.mxu0 0
        %3894 = vmatpush.bf16.msra.mxu0 0
        %3895 = vmatpush.bf16.msra.mxu0 0
        %3896 = vmatpush.bf16.msra.mxu0 %v3887
        %3897 = vmatmul.bf16.gmra.mxu0 %v3884
        %v3898 = vpop.f32.mrf.mxu0
        %v3899 = vadd.f32 0.0, %v3898
        %v3900 = vpop.f32.mrf.mxu0
        %3901 = vdwg.mxu0
        %3902 = vrot.lane.b32.xlu0 %v3631, 64
        %v3903 = vpop.permute.xlu0 %3902
        %v3905 = vsel %vm764, %v3794, 0
        %v3908 = vsel %vm1053, %v3903, 0
        %3910 = vmatpush.bf16.msra.mxu0 0
        %3911 = vmatpush.bf16.msra.mxu0 0
        %3912 = vmatpush.bf16.msra.mxu0 0
        %3913 = vmatpush.bf16.msra.mxu0 0
        %3914 = vmatpush.bf16.msra.mxu0 0
        %3915 = vmatpush.bf16.msra.mxu0 0
        %3916 = vmatpush.bf16.msra.mxu0 0
        %3917 = vmatpush.bf16.msra.mxu0 %v3908
        %3918 = vmatmul.bf16.gmra.mxu0 %v3905
        %v3919 = vpop.f32.mrf.mxu0
        %v3920 = vadd.f32 0.0, %v3919
        %v3921 = vpop.f32.mrf.mxu0
        %3922 = vdwg.mxu0
        %3923 = vrot.lane.b32.xlu0 %v3655, 64
        %v3924 = vpop.permute.xlu0 %3923
        %v3926 = vsel %vm764, %v3795, 0
        %v3929 = vsel %vm1053, %v3924, 0
        %3931 = vmatpush.bf16.msra.mxu0 0
        %3932 = vmatpush.bf16.msra.mxu0 0
        %3933 = vmatpush.bf16.msra.mxu0 0
        %3934 = vmatpush.bf16.msra.mxu0 0
        %3935 = vmatpush.bf16.msra.mxu0 0
        %3936 = vmatpush.bf16.msra.mxu0 0
        %3937 = vmatpush.bf16.msra.mxu0 0
        %3938 = vmatpush.bf16.msra.mxu0 %v3929
        %3939 = vmatmul.bf16.gmra.mxu0 %v3926
        %v3940 = vpop.f32.mrf.mxu0
        %v3941 = vadd.f32 0.0, %v3940
        %v3942 = vpop.f32.mrf.mxu0
        %3943 = vdwg.mxu0
        %3944 = vrot.lane.b32.xlu0 %v3679, 64
        %v3945 = vpop.permute.xlu0 %3944
        %v3947 = vsel %vm764, %v3796, 0
        %v3950 = vsel %vm1053, %v3945, 0
        %3952 = vmatpush.bf16.msra.mxu0 0
        %3953 = vmatpush.bf16.msra.mxu0 0
        %3954 = vmatpush.bf16.msra.mxu0 0
        %3955 = vmatpush.bf16.msra.mxu0 0
        %3956 = vmatpush.bf16.msra.mxu0 0
        %3957 = vmatpush.bf16.msra.mxu0 0
        %3958 = vmatpush.bf16.msra.mxu0 0
        %3959 = vmatpush.bf16.msra.mxu0 %v3950
        %3960 = vmatmul.bf16.gmra.mxu0 %v3947
        %v3961 = vpop.f32.mrf.mxu0
        %v3962 = vadd.f32 0.0, %v3961
        %v3963 = vpop.f32.mrf.mxu0
        %3964 = vdwg.mxu0
        %v3965 = vpack.c.bf16 %v3836, %v3815
        %v3966 = vpack.c.bf16 %v3878, %v3857
        %v3967 = vpack.c.bf16 %v3920, %v3899
        %v3968 = vpack.c.bf16 %v3962, %v3941
        %v3970 = vunpack.c.l.b16 %v3493
        %v3971 = vpack.c.b16 %v3970, %v3970
        %3972 = vrot.lane.b32.xlu0 %v3971, 120
        %v3973 = vpop.permute.xlu0 %3972
        %3974 = vrot.lane.b32.xlu0 %v3511, 88
        %v3975 = vpop.permute.xlu0 %3974
        %v3977 = vsel %vm764, %v3973, 0
        %v3980 = vsel %vm764, %v3975, 0
        %3982 = vmatpush.bf16.xpose.msra.mxu0 0
        %3983 = vmatpush.bf16.xpose.msra.mxu0 0
        %3984 = vmatpush.bf16.xpose.msra.mxu0 0
        %3985 = vmatpush.bf16.xpose.msra.mxu0 0
        %3986 = vmatpush.bf16.xpose.msra.mxu0 0
        %3987 = vmatpush.bf16.xpose.msra.mxu0 0
        %3988 = vmatpush.bf16.xpose.msra.mxu0 0
        %3989 = vmatpush.bf16.xpose.msra.mxu0 %v3980
        %3990 = vmatmul.bf16.gmra.mxu0 %v3977
        %v3991 = vpop.f32.mrf.mxu0
        %v3992 = vadd.f32 %v743, %v3991
        %v3993 = vpop.f32.mrf.mxu0
        %3994 = vdwg.mxu0
        %v3996 = vunpack.c.l.b16 %v3494
        %v3997 = vpack.c.b16 %v3996, %v3996
        %3998 = vrot.lane.b32.xlu0 %v3997, 120
        %v3999 = vpop.permute.xlu0 %3998
        %4000 = vrot.lane.b32.xlu0 %v3535, 88
        %v4001 = vpop.permute.xlu0 %4000
        %v4003 = vsel %vm764, %v3999, 0
        %v4006 = vsel %vm764, %v4001, 0
        %4008 = vmatpush.bf16.xpose.msra.mxu0 0
        %4009 = vmatpush.bf16.xpose.msra.mxu0 0
        %4010 = vmatpush.bf16.xpose.msra.mxu0 0
        %4011 = vmatpush.bf16.xpose.msra.mxu0 0
        %4012 = vmatpush.bf16.xpose.msra.mxu0 0
        %4013 = vmatpush.bf16.xpose.msra.mxu0 0
        %4014 = vmatpush.bf16.xpose.msra.mxu0 0
        %4015 = vmatpush.bf16.xpose.msra.mxu0 %v4006
        %4016 = vmatmul.bf16.gmra.mxu0 %v4003
        %v4017 = vpop.f32.mrf.mxu0
        %v4018 = vadd.f32 %v744, %v4017
        %v4019 = vpop.f32.mrf.mxu0
        %4020 = vdwg.mxu0
        %v4022 = vunpack.c.l.b16 %v3495
        %v4023 = vpack.c.b16 %v4022, %v4022
        %4024 = vrot.lane.b32.xlu0 %v4023, 120
        %v4025 = vpop.permute.xlu0 %4024
        %4026 = vrot.lane.b32.xlu0 %v3559, 88
        %v4027 = vpop.permute.xlu0 %4026
        %v4029 = vsel %vm764, %v4025, 0
        %v4032 = vsel %vm764, %v4027, 0
        %4034 = vmatpush.bf16.xpose.msra.mxu0 0
        %4035 = vmatpush.bf16.xpose.msra.mxu0 0
        %4036 = vmatpush.bf16.xpose.msra.mxu0 0
        %4037 = vmatpush.bf16.xpose.msra.mxu0 0
        %4038 = vmatpush.bf16.xpose.msra.mxu0 0
        %4039 = vmatpush.bf16.xpose.msra.mxu0 0
        %4040 = vmatpush.bf16.xpose.msra.mxu0 0
        %4041 = vmatpush.bf16.xpose.msra.mxu0 %v4032
        %4042 = vmatmul.bf16.gmra.mxu0 %v4029
        %v4043 = vpop.f32.mrf.mxu0
        %v4044 = vadd.f32 %v745, %v4043
        %v4045 = vpop.f32.mrf.mxu0
        %4046 = vdwg.mxu0
        %v4048 = vunpack.c.l.b16 %v3496
        %v4049 = vpack.c.b16 %v4048, %v4048
        %4050 = vrot.lane.b32.xlu0 %v4049, 120
        %v4051 = vpop.permute.xlu0 %4050
        %4052 = vrot.lane.b32.xlu0 %v3583, 88
        %v4053 = vpop.permute.xlu0 %4052
        %v4055 = vsel %vm764, %v4051, 0
        %v4058 = vsel %vm764, %v4053, 0
        %4060 = vmatpush.bf16.xpose.msra.mxu0 0
        %4061 = vmatpush.bf16.xpose.msra.mxu0 0
        %4062 = vmatpush.bf16.xpose.msra.mxu0 0
        %4063 = vmatpush.bf16.xpose.msra.mxu0 0
        %4064 = vmatpush.bf16.xpose.msra.mxu0 0
        %4065 = vmatpush.bf16.xpose.msra.mxu0 0
        %4066 = vmatpush.bf16.xpose.msra.mxu0 0
        %4067 = vmatpush.bf16.xpose.msra.mxu0 %v4058
        %4068 = vmatmul.bf16.gmra.mxu0 %v4055
        %v4069 = vpop.f32.mrf.mxu0
        %v4070 = vadd.f32 %v746, %v4069
        %v4071 = vpop.f32.mrf.mxu0
        %4072 = vdwg.mxu0
        %v4074 = vunpack.c.l.b16 %v3497
        %v4075 = vpack.c.b16 %v4074, %v4074
        %4076 = vrot.lane.b32.xlu0 %v4075, 120
        %v4077 = vpop.permute.xlu0 %4076
        %4078 = vrot.lane.b32.xlu0 %v3607, 88
        %v4079 = vpop.permute.xlu0 %4078
        %v4081 = vsel %vm764, %v4077, 0
        %v4084 = vsel %vm764, %v4079, 0
        %4086 = vmatpush.bf16.xpose.msra.mxu0 0
        %4087 = vmatpush.bf16.xpose.msra.mxu0 0
        %4088 = vmatpush.bf16.xpose.msra.mxu0 0
        %4089 = vmatpush.bf16.xpose.msra.mxu0 0
        %4090 = vmatpush.bf16.xpose.msra.mxu0 0
        %4091 = vmatpush.bf16.xpose.msra.mxu0 0
        %4092 = vmatpush.bf16.xpose.msra.mxu0 0
        %4093 = vmatpush.bf16.xpose.msra.mxu0 %v4084
        %4094 = vmatmul.bf16.gmra.mxu0 %v4081
        %v4095 = vpop.f32.mrf.mxu0
        %v4096 = vadd.f32 %v747, %v4095
        %v4097 = vpop.f32.mrf.mxu0
        %4098 = vdwg.mxu0
        %v4100 = vunpack.c.l.b16 %v3498
        %v4101 = vpack.c.b16 %v4100, %v4100
        %4102 = vrot.lane.b32.xlu0 %v4101, 120
        %v4103 = vpop.permute.xlu0 %4102
        %4104 = vrot.lane.b32.xlu0 %v3631, 88
        %v4105 = vpop.permute.xlu0 %4104
        %v4107 = vsel %vm764, %v4103, 0
        %v4110 = vsel %vm764, %v4105, 0
        %4112 = vmatpush.bf16.xpose.msra.mxu0 0
        %4113 = vmatpush.bf16.xpose.msra.mxu0 0
        %4114 = vmatpush.bf16.xpose.msra.mxu0 0
        %4115 = vmatpush.bf16.xpose.msra.mxu0 0
        %4116 = vmatpush.bf16.xpose.msra.mxu0 0
        %4117 = vmatpush.bf16.xpose.msra.mxu0 0
        %4118 = vmatpush.bf16.xpose.msra.mxu0 0
        %4119 = vmatpush.bf16.xpose.msra.mxu0 %v4110
        %4120 = vmatmul.bf16.gmra.mxu0 %v4107
        %v4121 = vpop.f32.mrf.mxu0
        %v4122 = vadd.f32 %v748, %v4121
        %v4123 = vpop.f32.mrf.mxu0
        %4124 = vdwg.mxu0
        %v4126 = vunpack.c.l.b16 %v3499
        %v4127 = vpack.c.b16 %v4126, %v4126
        %4128 = vrot.lane.b32.xlu0 %v4127, 120
        %v4129 = vpop.permute.xlu0 %4128
        %4130 = vrot.lane.b32.xlu0 %v3655, 88
        %v4131 = vpop.permute.xlu0 %4130
        %v4133 = vsel %vm764, %v4129, 0
        %v4136 = vsel %vm764, %v4131, 0
        %4138 = vmatpush.bf16.xpose.msra.mxu0 0
        %4139 = vmatpush.bf16.xpose.msra.mxu0 0
        %4140 = vmatpush.bf16.xpose.msra.mxu0 0
        %4141 = vmatpush.bf16.xpose.msra.mxu0 0
        %4142 = vmatpush.bf16.xpose.msra.mxu0 0
        %4143 = vmatpush.bf16.xpose.msra.mxu0 0
        %4144 = vmatpush.bf16.xpose.msra.mxu0 0
        %4145 = vmatpush.bf16.xpose.msra.mxu0 %v4136
        %4146 = vmatmul.bf16.gmra.mxu0 %v4133
        %v4147 = vpop.f32.mrf.mxu0
        %v4148 = vadd.f32 %v749, %v4147
        %v4149 = vpop.f32.mrf.mxu0
        %4150 = vdwg.mxu0
        %v4152 = vunpack.c.l.b16 %v3500
        %v4153 = vpack.c.b16 %v4152, %v4152
        %4154 = vrot.lane.b32.xlu0 %v4153, 120
        %v4155 = vpop.permute.xlu0 %4154
        %4156 = vrot.lane.b32.xlu0 %v3679, 88
        %v4157 = vpop.permute.xlu0 %4156
        %v4159 = vsel %vm764, %v4155, 0
        %v4162 = vsel %vm764, %v4157, 0
        %4164 = vmatpush.bf16.xpose.msra.mxu0 0
        %4165 = vmatpush.bf16.xpose.msra.mxu0 0
        %4166 = vmatpush.bf16.xpose.msra.mxu0 0
        %4167 = vmatpush.bf16.xpose.msra.mxu0 0
        %4168 = vmatpush.bf16.xpose.msra.mxu0 0
        %4169 = vmatpush.bf16.xpose.msra.mxu0 0
        %4170 = vmatpush.bf16.xpose.msra.mxu0 0
        %4171 = vmatpush.bf16.xpose.msra.mxu0 %v4162
        %4172 = vmatmul.bf16.gmra.mxu0 %v4159
        %v4173 = vpop.f32.mrf.mxu0
        %v4174 = vadd.f32 %v750, %v4173
        %v4175 = vpop.f32.mrf.mxu0
        %4176 = vdwg.mxu0
        %v4177 = vsel %vm764, %v3992, -inf
        %4178 = vmax.xlane.f32.xlu0 %v4177
        %v4179 = vpop.xlane.xlu0 %4178
        %v4180 = vsel %vm764, %v4018, -inf
        %4181 = vmax.xlane.f32.xlu0 %v4180
        %v4182 = vpop.xlane.xlu0 %4181
        %v4183 = vsel %vm764, %v4044, -inf
        %4184 = vmax.xlane.f32.xlu0 %v4183
        %v4185 = vpop.xlane.xlu0 %4184
        %v4186 = vsel %vm764, %v4070, -inf
        %4187 = vmax.xlane.f32.xlu0 %v4186
        %v4188 = vpop.xlane.xlu0 %4187
        %v4189 = vsel %vm764, %v4096, -inf
        %4190 = vmax.xlane.f32.xlu0 %v4189
        %v4191 = vpop.xlane.xlu0 %4190
        %v4192 = vsel %vm764, %v4122, -inf
        %4193 = vmax.xlane.f32.xlu0 %v4192
        %v4194 = vpop.xlane.xlu0 %4193
        %v4195 = vsel %vm764, %v4148, -inf
        %4196 = vmax.xlane.f32.xlu0 %v4195
        %v4197 = vpop.xlane.xlu0 %4196
        %v4198 = vsel %vm764, %v4174, -inf
        %4199 = vmax.xlane.f32.xlu0 %v4198
        %v4200 = vpop.xlane.xlu0 %4199
        %v4201 = vsub.f32 %v3992, %v4179
        %v4202 = vsub.f32 %v4018, %v4182
        %v4203 = vsub.f32 %v4044, %v4185
        %v4204 = vsub.f32 %v4070, %v4188
        %v4205 = vsub.f32 %v4096, %v4191
        %v4206 = vsub.f32 %v4122, %v4194
        %v4207 = vsub.f32 %v4148, %v4197
        %v4208 = vsub.f32 %v4174, %v4200
        %v4209 = vmul.f32 %v4201, 1.442695
        %v4210 = vpow.pop %v4209
        %v4211 = vmul.f32 %v4202, 1.442695
        %v4212 = vpow.pop %v4211
        %v4213 = vmul.f32 %v4203, 1.442695
        %v4214 = vpow.pop %v4213
        %v4215 = vmul.f32 %v4204, 1.442695
        %v4216 = vpow.pop %v4215
        %v4217 = vmul.f32 %v4205, 1.442695
        %v4218 = vpow.pop %v4217
        %v4219 = vmul.f32 %v4206, 1.442695
        %v4220 = vpow.pop %v4219
        %v4221 = vmul.f32 %v4207, 1.442695
        %v4222 = vpow.pop %v4221
        %v4223 = vmul.f32 %v4208, 1.442695
        %v4224 = vpow.pop %v4223
        %v4225 = vsel %vm764, %v4210, 0.0
        %4226 = vadd.xlane.f32.xlu0 %v4225
        %v4227 = vpop.xlane.xlu0 %4226
        %v4228 = vsel %vm764, %v4212, 0.0
        %4229 = vadd.xlane.f32.xlu0 %v4228
        %v4230 = vpop.xlane.xlu0 %4229
        %v4231 = vsel %vm764, %v4214, 0.0
        %4232 = vadd.xlane.f32.xlu0 %v4231
        %v4233 = vpop.xlane.xlu0 %4232
        %v4234 = vsel %vm764, %v4216, 0.0
        %4235 = vadd.xlane.f32.xlu0 %v4234
        %v4236 = vpop.xlane.xlu0 %4235
        %v4237 = vsel %vm764, %v4218, 0.0
        %4238 = vadd.xlane.f32.xlu0 %v4237
        %v4239 = vpop.xlane.xlu0 %4238
        %v4240 = vsel %vm764, %v4220, 0.0
        %4241 = vadd.xlane.f32.xlu0 %v4240
        %v4242 = vpop.xlane.xlu0 %4241
        %v4243 = vsel %vm764, %v4222, 0.0
        %4244 = vadd.xlane.f32.xlu0 %v4243
        %v4245 = vpop.xlane.xlu0 %4244
        %v4246 = vsel %vm764, %v4224, 0.0
        %4247 = vadd.xlane.f32.xlu0 %v4246
        %v4248 = vpop.xlane.xlu0 %4247
        %v4249 = vrcp.pop %v4227
        %v4250 = vrcp.pop %v4230
        %v4251 = vrcp.pop %v4233
        %v4252 = vrcp.pop %v4236
        %v4253 = vrcp.pop %v4239
        %v4254 = vrcp.pop %v4242
        %v4255 = vrcp.pop %v4245
        %v4256 = vrcp.pop %v4248
        %v4257 = vmul.f32 %v4210, %v4249
        %v4258 = vmul.f32 %v4212, %v4250
        %v4259 = vmul.f32 %v4214, %v4251
        %v4260 = vmul.f32 %v4216, %v4252
        %v4261 = vmul.f32 %v4218, %v4253
        %v4262 = vmul.f32 %v4220, %v4254
        %v4263 = vmul.f32 %v4222, %v4255
        %v4264 = vmul.f32 %v4224, %v4256
        %v4265 = vpack.c.bf16 %v4257, %v4257
        %v4266 = vpack.c.bf16 %v4258, %v4258
        %v4267 = vpack.c.bf16 %v4259, %v4259
        %v4268 = vpack.c.bf16 %v4260, %v4260
        %v4269 = vpack.c.bf16 %v4261, %v4261
        %v4270 = vpack.c.bf16 %v4262, %v4262
        %v4271 = vpack.c.bf16 %v4263, %v4263
        %v4272 = vpack.c.bf16 %v4264, %v4264
        %4273 = vrot.lane.b32.xlu0 %v3511, 56
        %v4274 = vpop.permute.xlu0 %4273
        %v4276 = vsel %vm764, %v4265, 0
        %v4279 = vsel %vm1053, %v4274, 0
        %4281 = vmatpush.bf16.msra.mxu0 0
        %4282 = vmatpush.bf16.msra.mxu0 0
        %4283 = vmatpush.bf16.msra.mxu0 0
        %4284 = vmatpush.bf16.msra.mxu0 0
        %4285 = vmatpush.bf16.msra.mxu0 0
        %4286 = vmatpush.bf16.msra.mxu0 0
        %4287 = vmatpush.bf16.msra.mxu0 0
        %4288 = vmatpush.bf16.msra.mxu0 %v4279
        %4289 = vmatmul.bf16.gmra.mxu0 %v4276
        %v4290 = vpop.f32.mrf.mxu0
        %v4291 = vadd.f32 0.0, %v4290
        %v4292 = vpop.f32.mrf.mxu0
        %4293 = vdwg.mxu0
        %4294 = vrot.lane.b32.xlu0 %v3535, 56
        %v4295 = vpop.permute.xlu0 %4294
        %v4297 = vsel %vm764, %v4266, 0
        %v4300 = vsel %vm1053, %v4295, 0
        %4302 = vmatpush.bf16.msra.mxu0 0
        %4303 = vmatpush.bf16.msra.mxu0 0
        %4304 = vmatpush.bf16.msra.mxu0 0
        %4305 = vmatpush.bf16.msra.mxu0 0
        %4306 = vmatpush.bf16.msra.mxu0 0
        %4307 = vmatpush.bf16.msra.mxu0 0
        %4308 = vmatpush.bf16.msra.mxu0 0
        %4309 = vmatpush.bf16.msra.mxu0 %v4300
        %4310 = vmatmul.bf16.gmra.mxu0 %v4297
        %v4311 = vpop.f32.mrf.mxu0
        %v4312 = vadd.f32 0.0, %v4311
        %v4313 = vpop.f32.mrf.mxu0
        %4314 = vdwg.mxu0
        %4315 = vrot.lane.b32.xlu0 %v3559, 56
        %v4316 = vpop.permute.xlu0 %4315
        %v4318 = vsel %vm764, %v4267, 0
        %v4321 = vsel %vm1053, %v4316, 0
        %4323 = vmatpush.bf16.msra.mxu0 0
        %4324 = vmatpush.bf16.msra.mxu0 0
        %4325 = vmatpush.bf16.msra.mxu0 0
        %4326 = vmatpush.bf16.msra.mxu0 0
        %4327 = vmatpush.bf16.msra.mxu0 0
        %4328 = vmatpush.bf16.msra.mxu0 0
        %4329 = vmatpush.bf16.msra.mxu0 0
        %4330 = vmatpush.bf16.msra.mxu0 %v4321
        %4331 = vmatmul.bf16.gmra.mxu0 %v4318
        %v4332 = vpop.f32.mrf.mxu0
        %v4333 = vadd.f32 0.0, %v4332
        %v4334 = vpop.f32.mrf.mxu0
        %4335 = vdwg.mxu0
        %4336 = vrot.lane.b32.xlu0 %v3583, 56
        %v4337 = vpop.permute.xlu0 %4336
        %v4339 = vsel %vm764, %v4268, 0
        %v4342 = vsel %vm1053, %v4337, 0
        %4344 = vmatpush.bf16.msra.mxu0 0
        %4345 = vmatpush.bf16.msra.mxu0 0
        %4346 = vmatpush.bf16.msra.mxu0 0
        %4347 = vmatpush.bf16.msra.mxu0 0
        %4348 = vmatpush.bf16.msra.mxu0 0
        %4349 = vmatpush.bf16.msra.mxu0 0
        %4350 = vmatpush.bf16.msra.mxu0 0
        %4351 = vmatpush.bf16.msra.mxu0 %v4342
        %4352 = vmatmul.bf16.gmra.mxu0 %v4339
        %v4353 = vpop.f32.mrf.mxu0
        %v4354 = vadd.f32 0.0, %v4353
        %v4355 = vpop.f32.mrf.mxu0
        %4356 = vdwg.mxu0
        %4357 = vrot.lane.b32.xlu0 %v3607, 56
        %v4358 = vpop.permute.xlu0 %4357
        %v4360 = vsel %vm764, %v4269, 0
        %v4363 = vsel %vm1053, %v4358, 0
        %4365 = vmatpush.bf16.msra.mxu0 0
        %4366 = vmatpush.bf16.msra.mxu0 0
        %4367 = vmatpush.bf16.msra.mxu0 0
        %4368 = vmatpush.bf16.msra.mxu0 0
        %4369 = vmatpush.bf16.msra.mxu0 0
        %4370 = vmatpush.bf16.msra.mxu0 0
        %4371 = vmatpush.bf16.msra.mxu0 0
        %4372 = vmatpush.bf16.msra.mxu0 %v4363
        %4373 = vmatmul.bf16.gmra.mxu0 %v4360
        %v4374 = vpop.f32.mrf.mxu0
        %v4375 = vadd.f32 0.0, %v4374
        %v4376 = vpop.f32.mrf.mxu0
        %4377 = vdwg.mxu0
        %4378 = vrot.lane.b32.xlu0 %v3631, 56
        %v4379 = vpop.permute.xlu0 %4378
        %v4381 = vsel %vm764, %v4270, 0
        %v4384 = vsel %vm1053, %v4379, 0
        %4386 = vmatpush.bf16.msra.mxu0 0
        %4387 = vmatpush.bf16.msra.mxu0 0
        %4388 = vmatpush.bf16.msra.mxu0 0
        %4389 = vmatpush.bf16.msra.mxu0 0
        %4390 = vmatpush.bf16.msra.mxu0 0
        %4391 = vmatpush.bf16.msra.mxu0 0
        %4392 = vmatpush.bf16.msra.mxu0 0
        %4393 = vmatpush.bf16.msra.mxu0 %v4384
        %4394 = vmatmul.bf16.gmra.mxu0 %v4381
        %v4395 = vpop.f32.mrf.mxu0
        %v4396 = vadd.f32 0.0, %v4395
        %v4397 = vpop.f32.mrf.mxu0
        %4398 = vdwg.mxu0
        %4399 = vrot.lane.b32.xlu0 %v3655, 56
        %v4400 = vpop.permute.xlu0 %4399
        %v4402 = vsel %vm764, %v4271, 0
        %v4405 = vsel %vm1053, %v4400, 0
        %4407 = vmatpush.bf16.msra.mxu0 0
        %4408 = vmatpush.bf16.msra.mxu0 0
        %4409 = vmatpush.bf16.msra.mxu0 0
        %4410 = vmatpush.bf16.msra.mxu0 0
        %4411 = vmatpush.bf16.msra.mxu0 0
        %4412 = vmatpush.bf16.msra.mxu0 0
        %4413 = vmatpush.bf16.msra.mxu0 0
        %4414 = vmatpush.bf16.msra.mxu0 %v4405
        %4415 = vmatmul.bf16.gmra.mxu0 %v4402
        %v4416 = vpop.f32.mrf.mxu0
        %v4417 = vadd.f32 0.0, %v4416
        %v4418 = vpop.f32.mrf.mxu0
        %4419 = vdwg.mxu0
        %4420 = vrot.lane.b32.xlu0 %v3679, 56
        %v4421 = vpop.permute.xlu0 %4420
        %v4423 = vsel %vm764, %v4272, 0
        %v4426 = vsel %vm1053, %v4421, 0
        %4428 = vmatpush.bf16.msra.mxu0 0
        %4429 = vmatpush.bf16.msra.mxu0 0
        %4430 = vmatpush.bf16.msra.mxu0 0
        %4431 = vmatpush.bf16.msra.mxu0 0
        %4432 = vmatpush.bf16.msra.mxu0 0
        %4433 = vmatpush.bf16.msra.mxu0 0
        %4434 = vmatpush.bf16.msra.mxu0 0
        %4435 = vmatpush.bf16.msra.mxu0 %v4426
        %4436 = vmatmul.bf16.gmra.mxu0 %v4423
        %v4437 = vpop.f32.mrf.mxu0
        %v4438 = vadd.f32 0.0, %v4437
        %v4439 = vpop.f32.mrf.mxu0
        %4440 = vdwg.mxu0
        %v4441 = vpack.c.bf16 %v4312, %v4291
        %v4442 = vpack.c.bf16 %v4354, %v4333
        %v4443 = vpack.c.bf16 %v4396, %v4375
        %v4444 = vpack.c.bf16 %v4438, %v4417
        %v4445 = vpack.c.b16 %v3437, %v3437
        %4446 = vrot.lane.b32.xlu0 %v4445, 32
        %v4447 = vpop.permute.xlu0 %4446
        %v4449 = vsel %vm764, %v4441, 0
        %v4452 = vsel %vm764, %v4442, 0
        %v4455 = vsel %vm764, %v4443, 0
        %v4458 = vsel %vm764, %v4444, 0
        %v4461 = vsel %vm1053, %v4447, 0
        %4463 = vmatpush.bf16.msra.mxu0 0
        %4464 = vmatpush.bf16.msra.mxu0 0
        %4465 = vmatpush.bf16.msra.mxu0 0
        %4466 = vmatpush.bf16.msra.mxu0 0
        %4467 = vmatpush.bf16.msra.mxu0 0
        %4468 = vmatpush.bf16.msra.mxu0 0
        %4469 = vmatpush.bf16.msra.mxu0 0
        %4470 = vmatpush.bf16.msra.mxu0 %v4461
        %4471 = vmatmul.bf16.gmra.mxu0 %v4449
        %v4472 = vpop.f32.mrf.mxu0
        %v4473 = vadd.f32 0.0, %v4472
        %v4474 = vpop.f32.mrf.mxu0
        %v4475 = vadd.f32 0.0, %v4474
        %4476 = vmatmul.bf16.gmra.mxu0 %v4452
        %v4477 = vpop.f32.mrf.mxu0
        %v4478 = vadd.f32 0.0, %v4477
        %v4479 = vpop.f32.mrf.mxu0
        %v4480 = vadd.f32 0.0, %v4479
        %4481 = vmatmul.bf16.gmra.mxu0 %v4455
        %v4482 = vpop.f32.mrf.mxu0
        %v4483 = vadd.f32 0.0, %v4482
        %v4484 = vpop.f32.mrf.mxu0
        %v4485 = vadd.f32 0.0, %v4484
        %4486 = vmatmul.bf16.gmra.mxu0 %v4458
        %v4487 = vpop.f32.mrf.mxu0
        %v4488 = vadd.f32 0.0, %v4487
        %v4489 = vpop.f32.mrf.mxu0
        %v4490 = vadd.f32 0.0, %v4489
        %4491 = vdwg.mxu0
        %v4492 = vpack.c.b16 %v3436, %v3436
        %4493 = vrot.lane.b32.xlu0 %v4492, 32
        %v4494 = vpop.permute.xlu0 %4493
        %v4496 = vsel %vm764, %v3965, 0
        %v4499 = vsel %vm764, %v3966, 0
        %v4502 = vsel %vm764, %v3967, 0
        %v4505 = vsel %vm764, %v3968, 0
        %v4508 = vsel %vm1053, %v4494, 0
        %4510 = vmatpush.bf16.msra.mxu0 0
        %4511 = vmatpush.bf16.msra.mxu0 0
        %4512 = vmatpush.bf16.msra.mxu0 0
        %4513 = vmatpush.bf16.msra.mxu0 0
        %4514 = vmatpush.bf16.msra.mxu0 0
        %4515 = vmatpush.bf16.msra.mxu0 0
        %4516 = vmatpush.bf16.msra.mxu0 0
        %4517 = vmatpush.bf16.msra.mxu0 %v4508
        %4518 = vmatmul.bf16.gmra.mxu0 %v4496
        %v4519 = vpop.f32.mrf.mxu0
        %v4520 = vadd.f32 %v4473, %v4519
        %v4521 = vpop.f32.mrf.mxu0
        %v4522 = vadd.f32 %v4475, %v4521
        %4523 = vmatmul.bf16.gmra.mxu0 %v4499
        %v4524 = vpop.f32.mrf.mxu0
        %v4525 = vadd.f32 %v4478, %v4524
        %v4526 = vpop.f32.mrf.mxu0
        %v4527 = vadd.f32 %v4480, %v4526
        %4528 = vmatmul.bf16.gmra.mxu0 %v4502
        %v4529 = vpop.f32.mrf.mxu0
        %v4530 = vadd.f32 %v4483, %v4529
        %v4531 = vpop.f32.mrf.mxu0
        %v4532 = vadd.f32 %v4485, %v4531
        %4533 = vmatmul.bf16.gmra.mxu0 %v4505
        %v4534 = vpop.f32.mrf.mxu0
        %v4535 = vadd.f32 %v4488, %v4534
        %v4536 = vpop.f32.mrf.mxu0
        %v4537 = vadd.f32 %v4490, %v4536
        %4538 = vdwg.mxu0
        %4539 = vrot.lane.b32.xlu0 %v3971, 112
        %v4540 = vpop.permute.xlu0 %4539
        %4541 = vrot.lane.b32.xlu0 %v3511, 80
        %v4542 = vpop.permute.xlu0 %4541
        %v4544 = vsel %vm764, %v4540, 0
        %v4547 = vsel %vm764, %v4542, 0
        %4549 = vmatpush.bf16.xpose.msra.mxu0 0
        %4550 = vmatpush.bf16.xpose.msra.mxu0 0
        %4551 = vmatpush.bf16.xpose.msra.mxu0 0
        %4552 = vmatpush.bf16.xpose.msra.mxu0 0
        %4553 = vmatpush.bf16.xpose.msra.mxu0 0
        %4554 = vmatpush.bf16.xpose.msra.mxu0 0
        %4555 = vmatpush.bf16.xpose.msra.mxu0 0
        %4556 = vmatpush.bf16.xpose.msra.mxu0 %v4547
        %4557 = vmatmul.bf16.gmra.mxu0 %v4544
        %v4558 = vpop.f32.mrf.mxu0
        %v4559 = vadd.f32 %v743, %v4558
        %v4560 = vpop.f32.mrf.mxu0
        %4561 = vdwg.mxu0
        %4562 = vrot.lane.b32.xlu0 %v3997, 112
        %v4563 = vpop.permute.xlu0 %4562
        %4564 = vrot.lane.b32.xlu0 %v3535, 80
        %v4565 = vpop.permute.xlu0 %4564
        %v4567 = vsel %vm764, %v4563, 0
        %v4570 = vsel %vm764, %v4565, 0
        %4572 = vmatpush.bf16.xpose.msra.mxu0 0
        %4573 = vmatpush.bf16.xpose.msra.mxu0 0
        %4574 = vmatpush.bf16.xpose.msra.mxu0 0
        %4575 = vmatpush.bf16.xpose.msra.mxu0 0
        %4576 = vmatpush.bf16.xpose.msra.mxu0 0
        %4577 = vmatpush.bf16.xpose.msra.mxu0 0
        %4578 = vmatpush.bf16.xpose.msra.mxu0 0
        %4579 = vmatpush.bf16.xpose.msra.mxu0 %v4570
        %4580 = vmatmul.bf16.gmra.mxu0 %v4567
        %v4581 = vpop.f32.mrf.mxu0
        %v4582 = vadd.f32 %v744, %v4581
        %v4583 = vpop.f32.mrf.mxu0
        %4584 = vdwg.mxu0
        %4585 = vrot.lane.b32.xlu0 %v4023, 112
        %v4586 = vpop.permute.xlu0 %4585
        %4587 = vrot.lane.b32.xlu0 %v3559, 80
        %v4588 = vpop.permute.xlu0 %4587
        %v4590 = vsel %vm764, %v4586, 0
        %v4593 = vsel %vm764, %v4588, 0
        %4595 = vmatpush.bf16.xpose.msra.mxu0 0
        %4596 = vmatpush.bf16.xpose.msra.mxu0 0
        %4597 = vmatpush.bf16.xpose.msra.mxu0 0
        %4598 = vmatpush.bf16.xpose.msra.mxu0 0
        %4599 = vmatpush.bf16.xpose.msra.mxu0 0
        %4600 = vmatpush.bf16.xpose.msra.mxu0 0
        %4601 = vmatpush.bf16.xpose.msra.mxu0 0
        %4602 = vmatpush.bf16.xpose.msra.mxu0 %v4593
        %4603 = vmatmul.bf16.gmra.mxu0 %v4590
        %v4604 = vpop.f32.mrf.mxu0
        %v4605 = vadd.f32 %v745, %v4604
        %v4606 = vpop.f32.mrf.mxu0
        %4607 = vdwg.mxu0
        %4608 = vrot.lane.b32.xlu0 %v4049, 112
        %v4609 = vpop.permute.xlu0 %4608
        %4610 = vrot.lane.b32.xlu0 %v3583, 80
        %v4611 = vpop.permute.xlu0 %4610
        %v4613 = vsel %vm764, %v4609, 0
        %v4616 = vsel %vm764, %v4611, 0
        %4618 = vmatpush.bf16.xpose.msra.mxu0 0
        %4619 = vmatpush.bf16.xpose.msra.mxu0 0
        %4620 = vmatpush.bf16.xpose.msra.mxu0 0
        %4621 = vmatpush.bf16.xpose.msra.mxu0 0
        %4622 = vmatpush.bf16.xpose.msra.mxu0 0
        %4623 = vmatpush.bf16.xpose.msra.mxu0 0
        %4624 = vmatpush.bf16.xpose.msra.mxu0 0
        %4625 = vmatpush.bf16.xpose.msra.mxu0 %v4616
        %4626 = vmatmul.bf16.gmra.mxu0 %v4613
        %v4627 = vpop.f32.mrf.mxu0
        %v4628 = vadd.f32 %v746, %v4627
        %v4629 = vpop.f32.mrf.mxu0
        %4630 = vdwg.mxu0
        %4631 = vrot.lane.b32.xlu0 %v4075, 112
        %v4632 = vpop.permute.xlu0 %4631
        %4633 = vrot.lane.b32.xlu0 %v3607, 80
        %v4634 = vpop.permute.xlu0 %4633
        %v4636 = vsel %vm764, %v4632, 0
        %v4639 = vsel %vm764, %v4634, 0
        %4641 = vmatpush.bf16.xpose.msra.mxu0 0
        %4642 = vmatpush.bf16.xpose.msra.mxu0 0
        %4643 = vmatpush.bf16.xpose.msra.mxu0 0
        %4644 = vmatpush.bf16.xpose.msra.mxu0 0
        %4645 = vmatpush.bf16.xpose.msra.mxu0 0
        %4646 = vmatpush.bf16.xpose.msra.mxu0 0
        %4647 = vmatpush.bf16.xpose.msra.mxu0 0
        %4648 = vmatpush.bf16.xpose.msra.mxu0 %v4639
        %4649 = vmatmul.bf16.gmra.mxu0 %v4636
        %v4650 = vpop.f32.mrf.mxu0
        %v4651 = vadd.f32 %v747, %v4650
        %v4652 = vpop.f32.mrf.mxu0
        %4653 = vdwg.mxu0
        %4654 = vrot.lane.b32.xlu0 %v4101, 112
        %v4655 = vpop.permute.xlu0 %4654
        %4656 = vrot.lane.b32.xlu0 %v3631, 80
        %v4657 = vpop.permute.xlu0 %4656
        %v4659 = vsel %vm764, %v4655, 0
        %v4662 = vsel %vm764, %v4657, 0
        %4664 = vmatpush.bf16.xpose.msra.mxu0 0
        %4665 = vmatpush.bf16.xpose.msra.mxu0 0
        %4666 = vmatpush.bf16.xpose.msra.mxu0 0
        %4667 = vmatpush.bf16.xpose.msra.mxu0 0
        %4668 = vmatpush.bf16.xpose.msra.mxu0 0
        %4669 = vmatpush.bf16.xpose.msra.mxu0 0
        %4670 = vmatpush.bf16.xpose.msra.mxu0 0
        %4671 = vmatpush.bf16.xpose.msra.mxu0 %v4662
        %4672 = vmatmul.bf16.gmra.mxu0 %v4659
        %v4673 = vpop.f32.mrf.mxu0
        %v4674 = vadd.f32 %v748, %v4673
        %v4675 = vpop.f32.mrf.mxu0
        %4676 = vdwg.mxu0
        %4677 = vrot.lane.b32.xlu0 %v4127, 112
        %v4678 = vpop.permute.xlu0 %4677
        %4679 = vrot.lane.b32.xlu0 %v3655, 80
        %v4680 = vpop.permute.xlu0 %4679
        %v4682 = vsel %vm764, %v4678, 0
        %v4685 = vsel %vm764, %v4680, 0
        %4687 = vmatpush.bf16.xpose.msra.mxu0 0
        %4688 = vmatpush.bf16.xpose.msra.mxu0 0
        %4689 = vmatpush.bf16.xpose.msra.mxu0 0
        %4690 = vmatpush.bf16.xpose.msra.mxu0 0
        %4691 = vmatpush.bf16.xpose.msra.mxu0 0
        %4692 = vmatpush.bf16.xpose.msra.mxu0 0
        %4693 = vmatpush.bf16.xpose.msra.mxu0 0
        %4694 = vmatpush.bf16.xpose.msra.mxu0 %v4685
        %4695 = vmatmul.bf16.gmra.mxu0 %v4682
        %v4696 = vpop.f32.mrf.mxu0
        %v4697 = vadd.f32 %v749, %v4696
        %v4698 = vpop.f32.mrf.mxu0
        %4699 = vdwg.mxu0
        %4700 = vrot.lane.b32.xlu0 %v4153, 112
        %v4701 = vpop.permute.xlu0 %4700
        %4702 = vrot.lane.b32.xlu0 %v3679, 80
        %v4703 = vpop.permute.xlu0 %4702
        %v4705 = vsel %vm764, %v4701, 0
        %v4708 = vsel %vm764, %v4703, 0
        %4710 = vmatpush.bf16.xpose.msra.mxu0 0
        %4711 = vmatpush.bf16.xpose.msra.mxu0 0
        %4712 = vmatpush.bf16.xpose.msra.mxu0 0
        %4713 = vmatpush.bf16.xpose.msra.mxu0 0
        %4714 = vmatpush.bf16.xpose.msra.mxu0 0
        %4715 = vmatpush.bf16.xpose.msra.mxu0 0
        %4716 = vmatpush.bf16.xpose.msra.mxu0 0
        %4717 = vmatpush.bf16.xpose.msra.mxu0 %v4708
        %4718 = vmatmul.bf16.gmra.mxu0 %v4705
        %v4719 = vpop.f32.mrf.mxu0
        %v4720 = vadd.f32 %v750, %v4719
        %v4721 = vpop.f32.mrf.mxu0
        %4722 = vdwg.mxu0
        %v4723 = vsel %vm764, %v4559, -inf
        %4724 = vmax.xlane.f32.xlu0 %v4723
        %v4725 = vpop.xlane.xlu0 %4724
        %v4726 = vsel %vm764, %v4582, -inf
        %4727 = vmax.xlane.f32.xlu0 %v4726
        %v4728 = vpop.xlane.xlu0 %4727
        %v4729 = vsel %vm764, %v4605, -inf
        %4730 = vmax.xlane.f32.xlu0 %v4729
        %v4731 = vpop.xlane.xlu0 %4730
        %v4732 = vsel %vm764, %v4628, -inf
        %4733 = vmax.xlane.f32.xlu0 %v4732
        %v4734 = vpop.xlane.xlu0 %4733
        %v4735 = vsel %vm764, %v4651, -inf
        %4736 = vmax.xlane.f32.xlu0 %v4735
        %v4737 = vpop.xlane.xlu0 %4736
        %v4738 = vsel %vm764, %v4674, -inf
        %4739 = vmax.xlane.f32.xlu0 %v4738
        %v4740 = vpop.xlane.xlu0 %4739
        %v4741 = vsel %vm764, %v4697, -inf
        %4742 = vmax.xlane.f32.xlu0 %v4741
        %v4743 = vpop.xlane.xlu0 %4742
        %v4744 = vsel %vm764, %v4720, -inf
        %4745 = vmax.xlane.f32.xlu0 %v4744
        %v4746 = vpop.xlane.xlu0 %4745
        %v4747 = vsub.f32 %v4559, %v4725
        %v4748 = vsub.f32 %v4582, %v4728
        %v4749 = vsub.f32 %v4605, %v4731
        %v4750 = vsub.f32 %v4628, %v4734
        %v4751 = vsub.f32 %v4651, %v4737
        %v4752 = vsub.f32 %v4674, %v4740
        %v4753 = vsub.f32 %v4697, %v4743
        %v4754 = vsub.f32 %v4720, %v4746
        %v4755 = vmul.f32 %v4747, 1.442695
        %v4756 = vpow.pop %v4755
        %v4757 = vmul.f32 %v4748, 1.442695
        %v4758 = vpow.pop %v4757
        %v4759 = vmul.f32 %v4749, 1.442695
        %v4760 = vpow.pop %v4759
        %v4761 = vmul.f32 %v4750, 1.442695
        %v4762 = vpow.pop %v4761
        %v4763 = vmul.f32 %v4751, 1.442695
        %v4764 = vpow.pop %v4763
        %v4765 = vmul.f32 %v4752, 1.442695
        %v4766 = vpow.pop %v4765
        %v4767 = vmul.f32 %v4753, 1.442695
        %v4768 = vpow.pop %v4767
        %v4769 = vmul.f32 %v4754, 1.442695
        %v4770 = vpow.pop %v4769
        %v4771 = vsel %vm764, %v4756, 0.0
        %4772 = vadd.xlane.f32.xlu0 %v4771
        %v4773 = vpop.xlane.xlu0 %4772
        %v4774 = vsel %vm764, %v4758, 0.0
        %4775 = vadd.xlane.f32.xlu0 %v4774
        %v4776 = vpop.xlane.xlu0 %4775
        %v4777 = vsel %vm764, %v4760, 0.0
        %4778 = vadd.xlane.f32.xlu0 %v4777
        %v4779 = vpop.xlane.xlu0 %4778
        %v4780 = vsel %vm764, %v4762, 0.0
        %4781 = vadd.xlane.f32.xlu0 %v4780
        %v4782 = vpop.xlane.xlu0 %4781
        %v4783 = vsel %vm764, %v4764, 0.0
        %4784 = vadd.xlane.f32.xlu0 %v4783
        %v4785 = vpop.xlane.xlu0 %4784
        %v4786 = vsel %vm764, %v4766, 0.0
        %4787 = vadd.xlane.f32.xlu0 %v4786
        %v4788 = vpop.xlane.xlu0 %4787
        %v4789 = vsel %vm764, %v4768, 0.0
        %4790 = vadd.xlane.f32.xlu0 %v4789
        %v4791 = vpop.xlane.xlu0 %4790
        %v4792 = vsel %vm764, %v4770, 0.0
        %4793 = vadd.xlane.f32.xlu0 %v4792
        %v4794 = vpop.xlane.xlu0 %4793
        %v4795 = vrcp.pop %v4773
        %v4796 = vrcp.pop %v4776
        %v4797 = vrcp.pop %v4779
        %v4798 = vrcp.pop %v4782
        %v4799 = vrcp.pop %v4785
        %v4800 = vrcp.pop %v4788
        %v4801 = vrcp.pop %v4791
        %v4802 = vrcp.pop %v4794
        %v4803 = vmul.f32 %v4756, %v4795
        %v4804 = vmul.f32 %v4758, %v4796
        %v4805 = vmul.f32 %v4760, %v4797
        %v4806 = vmul.f32 %v4762, %v4798
        %v4807 = vmul.f32 %v4764, %v4799
        %v4808 = vmul.f32 %v4766, %v4800
        %v4809 = vmul.f32 %v4768, %v4801
        %v4810 = vmul.f32 %v4770, %v4802
        %v4811 = vpack.c.bf16 %v4803, %v4803
        %v4812 = vpack.c.bf16 %v4804, %v4804
        %v4813 = vpack.c.bf16 %v4805, %v4805
        %v4814 = vpack.c.bf16 %v4806, %v4806
        %v4815 = vpack.c.bf16 %v4807, %v4807
        %v4816 = vpack.c.bf16 %v4808, %v4808
        %v4817 = vpack.c.bf16 %v4809, %v4809
        %v4818 = vpack.c.bf16 %v4810, %v4810
        %4819 = vrot.lane.b32.xlu0 %v3511, 48
        %v4820 = vpop.permute.xlu0 %4819
        %v4822 = vsel %vm764, %v4811, 0
        %v4825 = vsel %vm1053, %v4820, 0
        %4827 = vmatpush.bf16.msra.mxu0 0
        %4828 = vmatpush.bf16.msra.mxu0 0
        %4829 = vmatpush.bf16.msra.mxu0 0
        %4830 = vmatpush.bf16.msra.mxu0 0
        %4831 = vmatpush.bf16.msra.mxu0 0
        %4832 = vmatpush.bf16.msra.mxu0 0
        %4833 = vmatpush.bf16.msra.mxu0 0
        %4834 = vmatpush.bf16.msra.mxu0 %v4825
        %4835 = vmatmul.bf16.gmra.mxu0 %v4822
        %v4836 = vpop.f32.mrf.mxu0
        %v4837 = vadd.f32 0.0, %v4836
        %v4838 = vpop.f32.mrf.mxu0
        %4839 = vdwg.mxu0
        %4840 = vrot.lane.b32.xlu0 %v3535, 48
        %v4841 = vpop.permute.xlu0 %4840
        %v4843 = vsel %vm764, %v4812, 0
        %v4846 = vsel %vm1053, %v4841, 0
        %4848 = vmatpush.bf16.msra.mxu0 0
        %4849 = vmatpush.bf16.msra.mxu0 0
        %4850 = vmatpush.bf16.msra.mxu0 0
        %4851 = vmatpush.bf16.msra.mxu0 0
        %4852 = vmatpush.bf16.msra.mxu0 0
        %4853 = vmatpush.bf16.msra.mxu0 0
        %4854 = vmatpush.bf16.msra.mxu0 0
        %4855 = vmatpush.bf16.msra.mxu0 %v4846
        %4856 = vmatmul.bf16.gmra.mxu0 %v4843
        %v4857 = vpop.f32.mrf.mxu0
        %v4858 = vadd.f32 0.0, %v4857
        %v4859 = vpop.f32.mrf.mxu0
        %4860 = vdwg.mxu0
        %4861 = vrot.lane.b32.xlu0 %v3559, 48
        %v4862 = vpop.permute.xlu0 %4861
        %v4864 = vsel %vm764, %v4813, 0
        %v4867 = vsel %vm1053, %v4862, 0
        %4869 = vmatpush.bf16.msra.mxu0 0
        %4870 = vmatpush.bf16.msra.mxu0 0
        %4871 = vmatpush.bf16.msra.mxu0 0
        %4872 = vmatpush.bf16.msra.mxu0 0
        %4873 = vmatpush.bf16.msra.mxu0 0
        %4874 = vmatpush.bf16.msra.mxu0 0
        %4875 = vmatpush.bf16.msra.mxu0 0
        %4876 = vmatpush.bf16.msra.mxu0 %v4867
        %4877 = vmatmul.bf16.gmra.mxu0 %v4864
        %v4878 = vpop.f32.mrf.mxu0
        %v4879 = vadd.f32 0.0, %v4878
        %v4880 = vpop.f32.mrf.mxu0
        %4881 = vdwg.mxu0
        %4882 = vrot.lane.b32.xlu0 %v3583, 48
        %v4883 = vpop.permute.xlu0 %4882
        %v4885 = vsel %vm764, %v4814, 0
        %v4888 = vsel %vm1053, %v4883, 0
        %4890 = vmatpush.bf16.msra.mxu0 0
        %4891 = vmatpush.bf16.msra.mxu0 0
        %4892 = vmatpush.bf16.msra.mxu0 0
        %4893 = vmatpush.bf16.msra.mxu0 0
        %4894 = vmatpush.bf16.msra.mxu0 0
        %4895 = vmatpush.bf16.msra.mxu0 0
        %4896 = vmatpush.bf16.msra.mxu0 0
        %4897 = vmatpush.bf16.msra.mxu0 %v4888
        %4898 = vmatmul.bf16.gmra.mxu0 %v4885
        %v4899 = vpop.f32.mrf.mxu0
        %v4900 = vadd.f32 0.0, %v4899
        %v4901 = vpop.f32.mrf.mxu0
        %4902 = vdwg.mxu0
        %4903 = vrot.lane.b32.xlu0 %v3607, 48
        %v4904 = vpop.permute.xlu0 %4903
        %v4906 = vsel %vm764, %v4815, 0
        %v4909 = vsel %vm1053, %v4904, 0
        %4911 = vmatpush.bf16.msra.mxu0 0
        %4912 = vmatpush.bf16.msra.mxu0 0
        %4913 = vmatpush.bf16.msra.mxu0 0
        %4914 = vmatpush.bf16.msra.mxu0 0
        %4915 = vmatpush.bf16.msra.mxu0 0
        %4916 = vmatpush.bf16.msra.mxu0 0
        %4917 = vmatpush.bf16.msra.mxu0 0
        %4918 = vmatpush.bf16.msra.mxu0 %v4909
        %4919 = vmatmul.bf16.gmra.mxu0 %v4906
        %v4920 = vpop.f32.mrf.mxu0
        %v4921 = vadd.f32 0.0, %v4920
        %v4922 = vpop.f32.mrf.mxu0
        %4923 = vdwg.mxu0
        %4924 = vrot.lane.b32.xlu0 %v3631, 48
        %v4925 = vpop.permute.xlu0 %4924
        %v4927 = vsel %vm764, %v4816, 0
        %v4930 = vsel %vm1053, %v4925, 0
        %4932 = vmatpush.bf16.msra.mxu0 0
        %4933 = vmatpush.bf16.msra.mxu0 0
        %4934 = vmatpush.bf16.msra.mxu0 0
        %4935 = vmatpush.bf16.msra.mxu0 0
        %4936 = vmatpush.bf16.msra.mxu0 0
        %4937 = vmatpush.bf16.msra.mxu0 0
        %4938 = vmatpush.bf16.msra.mxu0 0
        %4939 = vmatpush.bf16.msra.mxu0 %v4930
        %4940 = vmatmul.bf16.gmra.mxu0 %v4927
        %v4941 = vpop.f32.mrf.mxu0
        %v4942 = vadd.f32 0.0, %v4941
        %v4943 = vpop.f32.mrf.mxu0
        %4944 = vdwg.mxu0
        %4945 = vrot.lane.b32.xlu0 %v3655, 48
        %v4946 = vpop.permute.xlu0 %4945
        %v4948 = vsel %vm764, %v4817, 0
        %v4951 = vsel %vm1053, %v4946, 0
        %4953 = vmatpush.bf16.msra.mxu0 0
        %4954 = vmatpush.bf16.msra.mxu0 0
        %4955 = vmatpush.bf16.msra.mxu0 0
        %4956 = vmatpush.bf16.msra.mxu0 0
        %4957 = vmatpush.bf16.msra.mxu0 0
        %4958 = vmatpush.bf16.msra.mxu0 0
        %4959 = vmatpush.bf16.msra.mxu0 0
        %4960 = vmatpush.bf16.msra.mxu0 %v4951
        %4961 = vmatmul.bf16.gmra.mxu0 %v4948
        %v4962 = vpop.f32.mrf.mxu0
        %v4963 = vadd.f32 0.0, %v4962
        %v4964 = vpop.f32.mrf.mxu0
        %4965 = vdwg.mxu0
        %4966 = vrot.lane.b32.xlu0 %v3679, 48
        %v4967 = vpop.permute.xlu0 %4966
        %v4969 = vsel %vm764, %v4818, 0
        %v4972 = vsel %vm1053, %v4967, 0
        %4974 = vmatpush.bf16.msra.mxu0 0
        %4975 = vmatpush.bf16.msra.mxu0 0
        %4976 = vmatpush.bf16.msra.mxu0 0
        %4977 = vmatpush.bf16.msra.mxu0 0
        %4978 = vmatpush.bf16.msra.mxu0 0
        %4979 = vmatpush.bf16.msra.mxu0 0
        %4980 = vmatpush.bf16.msra.mxu0 0
        %4981 = vmatpush.bf16.msra.mxu0 %v4972
        %4982 = vmatmul.bf16.gmra.mxu0 %v4969
        %v4983 = vpop.f32.mrf.mxu0
        %v4984 = vadd.f32 0.0, %v4983
        %v4985 = vpop.f32.mrf.mxu0
        %4986 = vdwg.mxu0
        %v4987 = vpack.c.bf16 %v4858, %v4837
        %v4988 = vpack.c.bf16 %v4900, %v4879
        %v4989 = vpack.c.bf16 %v4942, %v4921
        %v4990 = vpack.c.bf16 %v4984, %v4963
        %v4991 = vpack.c.b16 %v3438, %v3438
        %4992 = vrot.lane.b32.xlu0 %v4991, 32
        %v4993 = vpop.permute.xlu0 %4992
        %v4995 = vsel %vm764, %v4987, 0
        %v4998 = vsel %vm764, %v4988, 0
        %v5001 = vsel %vm764, %v4989, 0
        %v5004 = vsel %vm764, %v4990, 0
        %v5007 = vsel %vm1053, %v4993, 0
        %5009 = vmatpush.bf16.msra.mxu0 0
        %5010 = vmatpush.bf16.msra.mxu0 0
        %5011 = vmatpush.bf16.msra.mxu0 0
        %5012 = vmatpush.bf16.msra.mxu0 0
        %5013 = vmatpush.bf16.msra.mxu0 0
        %5014 = vmatpush.bf16.msra.mxu0 0
        %5015 = vmatpush.bf16.msra.mxu0 0
        %5016 = vmatpush.bf16.msra.mxu0 %v5007
        %5017 = vmatmul.bf16.gmra.mxu0 %v4995
        %v5018 = vpop.f32.mrf.mxu0
        %v5019 = vadd.f32 0.0, %v5018
        %v5020 = vpop.f32.mrf.mxu0
        %v5021 = vadd.f32 0.0, %v5020
        %5022 = vmatmul.bf16.gmra.mxu0 %v4998
        %v5023 = vpop.f32.mrf.mxu0
        %v5024 = vadd.f32 0.0, %v5023
        %v5025 = vpop.f32.mrf.mxu0
        %v5026 = vadd.f32 0.0, %v5025
        %5027 = vmatmul.bf16.gmra.mxu0 %v5001
        %v5028 = vpop.f32.mrf.mxu0
        %v5029 = vadd.f32 0.0, %v5028
        %v5030 = vpop.f32.mrf.mxu0
        %v5031 = vadd.f32 0.0, %v5030
        %5032 = vmatmul.bf16.gmra.mxu0 %v5004
        %v5033 = vpop.f32.mrf.mxu0
        %v5034 = vadd.f32 0.0, %v5033
        %v5035 = vpop.f32.mrf.mxu0
        %v5036 = vadd.f32 0.0, %v5035
        %5037 = vdwg.mxu0
        %v5038 = vadd.f32 %v4520, %v5019
        %v5039 = vadd.f32 %v4522, %v5021
        %v5040 = vadd.f32 %v4525, %v5024
        %v5041 = vadd.f32 %v4527, %v5026
        %v5042 = vadd.f32 %v4530, %v5029
        %v5043 = vadd.f32 %v4532, %v5031
        %v5044 = vadd.f32 %v4535, %v5034
        %v5045 = vadd.f32 %v4537, %v5036
        %5046 = vrot.lane.b32.xlu0 %v3971, 104
        %v5047 = vpop.permute.xlu0 %5046
        %5048 = vrot.lane.b32.xlu0 %v3511, 72
        %v5049 = vpop.permute.xlu0 %5048
        %v5051 = vsel %vm764, %v5047, 0
        %v5054 = vsel %vm764, %v5049, 0
        %5056 = vmatpush.bf16.xpose.msra.mxu0 0
        %5057 = vmatpush.bf16.xpose.msra.mxu0 0
        %5058 = vmatpush.bf16.xpose.msra.mxu0 0
        %5059 = vmatpush.bf16.xpose.msra.mxu0 0
        %5060 = vmatpush.bf16.xpose.msra.mxu0 0
        %5061 = vmatpush.bf16.xpose.msra.mxu0 0
        %5062 = vmatpush.bf16.xpose.msra.mxu0 0
        %5063 = vmatpush.bf16.xpose.msra.mxu0 %v5054
        %5064 = vmatmul.bf16.gmra.mxu0 %v5051
        %v5065 = vpop.f32.mrf.mxu0
        %v5066 = vadd.f32 %v743, %v5065
        %v5067 = vpop.f32.mrf.mxu0
        %5068 = vdwg.mxu0
        %5069 = vrot.lane.b32.xlu0 %v3997, 104
        %v5070 = vpop.permute.xlu0 %5069
        %5071 = vrot.lane.b32.xlu0 %v3535, 72
        %v5072 = vpop.permute.xlu0 %5071
        %v5074 = vsel %vm764, %v5070, 0
        %v5077 = vsel %vm764, %v5072, 0
        %5079 = vmatpush.bf16.xpose.msra.mxu0 0
        %5080 = vmatpush.bf16.xpose.msra.mxu0 0
        %5081 = vmatpush.bf16.xpose.msra.mxu0 0
        %5082 = vmatpush.bf16.xpose.msra.mxu0 0
        %5083 = vmatpush.bf16.xpose.msra.mxu0 0
        %5084 = vmatpush.bf16.xpose.msra.mxu0 0
        %5085 = vmatpush.bf16.xpose.msra.mxu0 0
        %5086 = vmatpush.bf16.xpose.msra.mxu0 %v5077
        %5087 = vmatmul.bf16.gmra.mxu0 %v5074
        %v5088 = vpop.f32.mrf.mxu0
        %v5089 = vadd.f32 %v744, %v5088
        %v5090 = vpop.f32.mrf.mxu0
        %5091 = vdwg.mxu0
        %5092 = vrot.lane.b32.xlu0 %v4023, 104
        %v5093 = vpop.permute.xlu0 %5092
        %5094 = vrot.lane.b32.xlu0 %v3559, 72
        %v5095 = vpop.permute.xlu0 %5094
        %v5097 = vsel %vm764, %v5093, 0
        %v5100 = vsel %vm764, %v5095, 0
        %5102 = vmatpush.bf16.xpose.msra.mxu0 0
        %5103 = vmatpush.bf16.xpose.msra.mxu0 0
        %5104 = vmatpush.bf16.xpose.msra.mxu0 0
        %5105 = vmatpush.bf16.xpose.msra.mxu0 0
        %5106 = vmatpush.bf16.xpose.msra.mxu0 0
        %5107 = vmatpush.bf16.xpose.msra.mxu0 0
        %5108 = vmatpush.bf16.xpose.msra.mxu0 0
        %5109 = vmatpush.bf16.xpose.msra.mxu0 %v5100
        %5110 = vmatmul.bf16.gmra.mxu0 %v5097
        %v5111 = vpop.f32.mrf.mxu0
        %v5112 = vadd.f32 %v745, %v5111
        %v5113 = vpop.f32.mrf.mxu0
        %5114 = vdwg.mxu0
        %5115 = vrot.lane.b32.xlu0 %v4049, 104
        %v5116 = vpop.permute.xlu0 %5115
        %5117 = vrot.lane.b32.xlu0 %v3583, 72
        %v5118 = vpop.permute.xlu0 %5117
        %v5120 = vsel %vm764, %v5116, 0
        %v5123 = vsel %vm764, %v5118, 0
        %5125 = vmatpush.bf16.xpose.msra.mxu0 0
        %5126 = vmatpush.bf16.xpose.msra.mxu0 0
        %5127 = vmatpush.bf16.xpose.msra.mxu0 0
        %5128 = vmatpush.bf16.xpose.msra.mxu0 0
        %5129 = vmatpush.bf16.xpose.msra.mxu0 0
        %5130 = vmatpush.bf16.xpose.msra.mxu0 0
        %5131 = vmatpush.bf16.xpose.msra.mxu0 0
        %5132 = vmatpush.bf16.xpose.msra.mxu0 %v5123
        %5133 = vmatmul.bf16.gmra.mxu0 %v5120
        %v5134 = vpop.f32.mrf.mxu0
        %v5135 = vadd.f32 %v746, %v5134
        %v5136 = vpop.f32.mrf.mxu0
        %5137 = vdwg.mxu0
        %5138 = vrot.lane.b32.xlu0 %v4075, 104
        %v5139 = vpop.permute.xlu0 %5138
        %5140 = vrot.lane.b32.xlu0 %v3607, 72
        %v5141 = vpop.permute.xlu0 %5140
        %v5143 = vsel %vm764, %v5139, 0
        %v5146 = vsel %vm764, %v5141, 0
        %5148 = vmatpush.bf16.xpose.msra.mxu0 0
        %5149 = vmatpush.bf16.xpose.msra.mxu0 0
        %5150 = vmatpush.bf16.xpose.msra.mxu0 0
        %5151 = vmatpush.bf16.xpose.msra.mxu0 0
        %5152 = vmatpush.bf16.xpose.msra.mxu0 0
        %5153 = vmatpush.bf16.xpose.msra.mxu0 0
        %5154 = vmatpush.bf16.xpose.msra.mxu0 0
        %5155 = vmatpush.bf16.xpose.msra.mxu0 %v5146
        %5156 = vmatmul.bf16.gmra.mxu0 %v5143
        %v5157 = vpop.f32.mrf.mxu0
        %v5158 = vadd.f32 %v747, %v5157
        %v5159 = vpop.f32.mrf.mxu0
        %5160 = vdwg.mxu0
        %5161 = vrot.lane.b32.xlu0 %v4101, 104
        %v5162 = vpop.permute.xlu0 %5161
        %5163 = vrot.lane.b32.xlu0 %v3631, 72
        %v5164 = vpop.permute.xlu0 %5163
        %v5166 = vsel %vm764, %v5162, 0
        %v5169 = vsel %vm764, %v5164, 0
        %5171 = vmatpush.bf16.xpose.msra.mxu0 0
        %5172 = vmatpush.bf16.xpose.msra.mxu0 0
        %5173 = vmatpush.bf16.xpose.msra.mxu0 0
        %5174 = vmatpush.bf16.xpose.msra.mxu0 0
        %5175 = vmatpush.bf16.xpose.msra.mxu0 0
        %5176 = vmatpush.bf16.xpose.msra.mxu0 0
        %5177 = vmatpush.bf16.xpose.msra.mxu0 0
        %5178 = vmatpush.bf16.xpose.msra.mxu0 %v5169
        %5179 = vmatmul.bf16.gmra.mxu0 %v5166
        %v5180 = vpop.f32.mrf.mxu0
        %v5181 = vadd.f32 %v748, %v5180
        %v5182 = vpop.f32.mrf.mxu0
        %5183 = vdwg.mxu0
        %5184 = vrot.lane.b32.xlu0 %v4127, 104
        %v5185 = vpop.permute.xlu0 %5184
        %5186 = vrot.lane.b32.xlu0 %v3655, 72
        %v5187 = vpop.permute.xlu0 %5186
        %v5189 = vsel %vm764, %v5185, 0
        %v5192 = vsel %vm764, %v5187, 0
        %5194 = vmatpush.bf16.xpose.msra.mxu0 0
        %5195 = vmatpush.bf16.xpose.msra.mxu0 0
        %5196 = vmatpush.bf16.xpose.msra.mxu0 0
        %5197 = vmatpush.bf16.xpose.msra.mxu0 0
        %5198 = vmatpush.bf16.xpose.msra.mxu0 0
        %5199 = vmatpush.bf16.xpose.msra.mxu0 0
        %5200 = vmatpush.bf16.xpose.msra.mxu0 0
        %5201 = vmatpush.bf16.xpose.msra.mxu0 %v5192
        %5202 = vmatmul.bf16.gmra.mxu0 %v5189
        %v5203 = vpop.f32.mrf.mxu0
        %v5204 = vadd.f32 %v749, %v5203
        %v5205 = vpop.f32.mrf.mxu0
        %5206 = vdwg.mxu0
        %5207 = vrot.lane.b32.xlu0 %v4153, 104
        %v5208 = vpop.permute.xlu0 %5207
        %5209 = vrot.lane.b32.xlu0 %v3679, 72
        %v5210 = vpop.permute.xlu0 %5209
        %v5212 = vsel %vm764, %v5208, 0
        %v5215 = vsel %vm764, %v5210, 0
        %5217 = vmatpush.bf16.xpose.msra.mxu0 0
        %5218 = vmatpush.bf16.xpose.msra.mxu0 0
        %5219 = vmatpush.bf16.xpose.msra.mxu0 0
        %5220 = vmatpush.bf16.xpose.msra.mxu0 0
        %5221 = vmatpush.bf16.xpose.msra.mxu0 0
        %5222 = vmatpush.bf16.xpose.msra.mxu0 0
        %5223 = vmatpush.bf16.xpose.msra.mxu0 0
        %5224 = vmatpush.bf16.xpose.msra.mxu0 %v5215
        %5225 = vmatmul.bf16.gmra.mxu0 %v5212
        %v5226 = vpop.f32.mrf.mxu0
        %v5227 = vadd.f32 %v750, %v5226
        %v5228 = vpop.f32.mrf.mxu0
        %5229 = vdwg.mxu0
        %v5230 = vsel %vm764, %v5066, -inf
        %5231 = vmax.xlane.f32.xlu0 %v5230
        %v5232 = vpop.xlane.xlu0 %5231
        %v5233 = vsel %vm764, %v5089, -inf
        %5234 = vmax.xlane.f32.xlu0 %v5233
        %v5235 = vpop.xlane.xlu0 %5234
        %v5236 = vsel %vm764, %v5112, -inf
        %5237 = vmax.xlane.f32.xlu0 %v5236
        %v5238 = vpop.xlane.xlu0 %5237
        %v5239 = vsel %vm764, %v5135, -inf
        %5240 = vmax.xlane.f32.xlu0 %v5239
        %v5241 = vpop.xlane.xlu0 %5240
        %v5242 = vsel %vm764, %v5158, -inf
        %5243 = vmax.xlane.f32.xlu0 %v5242
        %v5244 = vpop.xlane.xlu0 %5243
        %v5245 = vsel %vm764, %v5181, -inf
        %5246 = vmax.xlane.f32.xlu0 %v5245
        %v5247 = vpop.xlane.xlu0 %5246
        %v5248 = vsel %vm764, %v5204, -inf
        %5249 = vmax.xlane.f32.xlu0 %v5248
        %v5250 = vpop.xlane.xlu0 %5249
        %v5251 = vsel %vm764, %v5227, -inf
        %5252 = vmax.xlane.f32.xlu0 %v5251
        %v5253 = vpop.xlane.xlu0 %5252
        %v5254 = vsub.f32 %v5066, %v5232
        %v5255 = vsub.f32 %v5089, %v5235
        %v5256 = vsub.f32 %v5112, %v5238
        %v5257 = vsub.f32 %v5135, %v5241
        %v5258 = vsub.f32 %v5158, %v5244
        %v5259 = vsub.f32 %v5181, %v5247
        %v5260 = vsub.f32 %v5204, %v5250
        %v5261 = vsub.f32 %v5227, %v5253
        %v5262 = vmul.f32 %v5254, 1.442695
        %v5263 = vpow.pop %v5262
        %v5264 = vmul.f32 %v5255, 1.442695
        %v5265 = vpow.pop %v5264
        %v5266 = vmul.f32 %v5256, 1.442695
        %v5267 = vpow.pop %v5266
        %v5268 = vmul.f32 %v5257, 1.442695
        %v5269 = vpow.pop %v5268
        %v5270 = vmul.f32 %v5258, 1.442695
        %v5271 = vpow.pop %v5270
        %v5272 = vmul.f32 %v5259, 1.442695
        %v5273 = vpow.pop %v5272
        %v5274 = vmul.f32 %v5260, 1.442695
        %v5275 = vpow.pop %v5274
        %v5276 = vmul.f32 %v5261, 1.442695
        %v5277 = vpow.pop %v5276
        %v5278 = vsel %vm764, %v5263, 0.0
        %5279 = vadd.xlane.f32.xlu0 %v5278
        %v5280 = vpop.xlane.xlu0 %5279
        %v5281 = vsel %vm764, %v5265, 0.0
        %5282 = vadd.xlane.f32.xlu0 %v5281
        %v5283 = vpop.xlane.xlu0 %5282
        %v5284 = vsel %vm764, %v5267, 0.0
        %5285 = vadd.xlane.f32.xlu0 %v5284
        %v5286 = vpop.xlane.xlu0 %5285
        %v5287 = vsel %vm764, %v5269, 0.0
        %5288 = vadd.xlane.f32.xlu0 %v5287
        %v5289 = vpop.xlane.xlu0 %5288
        %v5290 = vsel %vm764, %v5271, 0.0
        %5291 = vadd.xlane.f32.xlu0 %v5290
        %v5292 = vpop.xlane.xlu0 %5291
        %v5293 = vsel %vm764, %v5273, 0.0
        %5294 = vadd.xlane.f32.xlu0 %v5293
        %v5295 = vpop.xlane.xlu0 %5294
        %v5296 = vsel %vm764, %v5275, 0.0
        %5297 = vadd.xlane.f32.xlu0 %v5296
        %v5298 = vpop.xlane.xlu0 %5297
        %v5299 = vsel %vm764, %v5277, 0.0
        %5300 = vadd.xlane.f32.xlu0 %v5299
        %v5301 = vpop.xlane.xlu0 %5300
        %v5302 = vrcp.pop %v5280
        %v5303 = vrcp.pop %v5283
        %v5304 = vrcp.pop %v5286
        %v5305 = vrcp.pop %v5289
        %v5306 = vrcp.pop %v5292
        %v5307 = vrcp.pop %v5295
        %v5308 = vrcp.pop %v5298
        %v5309 = vrcp.pop %v5301
        %v5310 = vmul.f32 %v5263, %v5302
        %v5311 = vmul.f32 %v5265, %v5303
        %v5312 = vmul.f32 %v5267, %v5304
        %v5313 = vmul.f32 %v5269, %v5305
        %v5314 = vmul.f32 %v5271, %v5306
        %v5315 = vmul.f32 %v5273, %v5307
        %v5316 = vmul.f32 %v5275, %v5308
        %v5317 = vmul.f32 %v5277, %v5309
        %v5318 = vpack.c.bf16 %v5310, %v5310
        %v5319 = vpack.c.bf16 %v5311, %v5311
        %v5320 = vpack.c.bf16 %v5312, %v5312
        %v5321 = vpack.c.bf16 %v5313, %v5313
        %v5322 = vpack.c.bf16 %v5314, %v5314
        %v5323 = vpack.c.bf16 %v5315, %v5315
        %v5324 = vpack.c.bf16 %v5316, %v5316
        %v5325 = vpack.c.bf16 %v5317, %v5317
        %5326 = vrot.lane.b32.xlu0 %v3511, 40
        %v5327 = vpop.permute.xlu0 %5326
        %v5329 = vsel %vm764, %v5318, 0
        %v5332 = vsel %vm1053, %v5327, 0
        %5334 = vmatpush.bf16.msra.mxu0 0
        %5335 = vmatpush.bf16.msra.mxu0 0
        %5336 = vmatpush.bf16.msra.mxu0 0
        %5337 = vmatpush.bf16.msra.mxu0 0
        %5338 = vmatpush.bf16.msra.mxu0 0
        %5339 = vmatpush.bf16.msra.mxu0 0
        %5340 = vmatpush.bf16.msra.mxu0 0
        %5341 = vmatpush.bf16.msra.mxu0 %v5332
        %5342 = vmatmul.bf16.gmra.mxu0 %v5329
        %v5343 = vpop.f32.mrf.mxu0
        %v5344 = vadd.f32 0.0, %v5343
        %v5345 = vpop.f32.mrf.mxu0
        %5346 = vdwg.mxu0
        %5347 = vrot.lane.b32.xlu0 %v3535, 40
        %v5348 = vpop.permute.xlu0 %5347
        %v5350 = vsel %vm764, %v5319, 0
        %v5353 = vsel %vm1053, %v5348, 0
        %5355 = vmatpush.bf16.msra.mxu0 0
        %5356 = vmatpush.bf16.msra.mxu0 0
        %5357 = vmatpush.bf16.msra.mxu0 0
        %5358 = vmatpush.bf16.msra.mxu0 0
        %5359 = vmatpush.bf16.msra.mxu0 0
        %5360 = vmatpush.bf16.msra.mxu0 0
        %5361 = vmatpush.bf16.msra.mxu0 0
        %5362 = vmatpush.bf16.msra.mxu0 %v5353
        %5363 = vmatmul.bf16.gmra.mxu0 %v5350
        %v5364 = vpop.f32.mrf.mxu0
        %v5365 = vadd.f32 0.0, %v5364
        %v5366 = vpop.f32.mrf.mxu0
        %5367 = vdwg.mxu0
        %5368 = vrot.lane.b32.xlu0 %v3559, 40
        %v5369 = vpop.permute.xlu0 %5368
        %v5371 = vsel %vm764, %v5320, 0
        %v5374 = vsel %vm1053, %v5369, 0
        %5376 = vmatpush.bf16.msra.mxu0 0
        %5377 = vmatpush.bf16.msra.mxu0 0
        %5378 = vmatpush.bf16.msra.mxu0 0
        %5379 = vmatpush.bf16.msra.mxu0 0
        %5380 = vmatpush.bf16.msra.mxu0 0
        %5381 = vmatpush.bf16.msra.mxu0 0
        %5382 = vmatpush.bf16.msra.mxu0 0
        %5383 = vmatpush.bf16.msra.mxu0 %v5374
        %5384 = vmatmul.bf16.gmra.mxu0 %v5371
        %v5385 = vpop.f32.mrf.mxu0
        %v5386 = vadd.f32 0.0, %v5385
        %v5387 = vpop.f32.mrf.mxu0
        %5388 = vdwg.mxu0
        %5389 = vrot.lane.b32.xlu0 %v3583, 40
        %v5390 = vpop.permute.xlu0 %5389
        %v5392 = vsel %vm764, %v5321, 0
        %v5395 = vsel %vm1053, %v5390, 0
        %5397 = vmatpush.bf16.msra.mxu0 0
        %5398 = vmatpush.bf16.msra.mxu0 0
        %5399 = vmatpush.bf16.msra.mxu0 0
        %5400 = vmatpush.bf16.msra.mxu0 0
        %5401 = vmatpush.bf16.msra.mxu0 0
        %5402 = vmatpush.bf16.msra.mxu0 0
        %5403 = vmatpush.bf16.msra.mxu0 0
        %5404 = vmatpush.bf16.msra.mxu0 %v5395
        %5405 = vmatmul.bf16.gmra.mxu0 %v5392
        %v5406 = vpop.f32.mrf.mxu0
        %v5407 = vadd.f32 0.0, %v5406
        %v5408 = vpop.f32.mrf.mxu0
        %5409 = vdwg.mxu0
        %5410 = vrot.lane.b32.xlu0 %v3607, 40
        %v5411 = vpop.permute.xlu0 %5410
        %v5413 = vsel %vm764, %v5322, 0
        %v5416 = vsel %vm1053, %v5411, 0
        %5418 = vmatpush.bf16.msra.mxu0 0
        %5419 = vmatpush.bf16.msra.mxu0 0
        %5420 = vmatpush.bf16.msra.mxu0 0
        %5421 = vmatpush.bf16.msra.mxu0 0
        %5422 = vmatpush.bf16.msra.mxu0 0
        %5423 = vmatpush.bf16.msra.mxu0 0
        %5424 = vmatpush.bf16.msra.mxu0 0
        %5425 = vmatpush.bf16.msra.mxu0 %v5416
        %5426 = vmatmul.bf16.gmra.mxu0 %v5413
        %v5427 = vpop.f32.mrf.mxu0
        %v5428 = vadd.f32 0.0, %v5427
        %v5429 = vpop.f32.mrf.mxu0
        %5430 = vdwg.mxu0
        %5431 = vrot.lane.b32.xlu0 %v3631, 40
        %v5432 = vpop.permute.xlu0 %5431
        %v5434 = vsel %vm764, %v5323, 0
        %v5437 = vsel %vm1053, %v5432, 0
        %5439 = vmatpush.bf16.msra.mxu0 0
        %5440 = vmatpush.bf16.msra.mxu0 0
        %5441 = vmatpush.bf16.msra.mxu0 0
        %5442 = vmatpush.bf16.msra.mxu0 0
        %5443 = vmatpush.bf16.msra.mxu0 0
        %5444 = vmatpush.bf16.msra.mxu0 0
        %5445 = vmatpush.bf16.msra.mxu0 0
        %5446 = vmatpush.bf16.msra.mxu0 %v5437
        %5447 = vmatmul.bf16.gmra.mxu0 %v5434
        %v5448 = vpop.f32.mrf.mxu0
        %v5449 = vadd.f32 0.0, %v5448
        %v5450 = vpop.f32.mrf.mxu0
        %5451 = vdwg.mxu0
        %5452 = vrot.lane.b32.xlu0 %v3655, 40
        %v5453 = vpop.permute.xlu0 %5452
        %v5455 = vsel %vm764, %v5324, 0
        %v5458 = vsel %vm1053, %v5453, 0
        %5460 = vmatpush.bf16.msra.mxu0 0
        %5461 = vmatpush.bf16.msra.mxu0 0
        %5462 = vmatpush.bf16.msra.mxu0 0
        %5463 = vmatpush.bf16.msra.mxu0 0
        %5464 = vmatpush.bf16.msra.mxu0 0
        %5465 = vmatpush.bf16.msra.mxu0 0
        %5466 = vmatpush.bf16.msra.mxu0 0
        %5467 = vmatpush.bf16.msra.mxu0 %v5458
        %5468 = vmatmul.bf16.gmra.mxu0 %v5455
        %v5469 = vpop.f32.mrf.mxu0
        %v5470 = vadd.f32 0.0, %v5469
        %v5471 = vpop.f32.mrf.mxu0
        %5472 = vdwg.mxu0
        %5473 = vrot.lane.b32.xlu0 %v3679, 40
        %v5474 = vpop.permute.xlu0 %5473
        %v5476 = vsel %vm764, %v5325, 0
        %v5479 = vsel %vm1053, %v5474, 0
        %5481 = vmatpush.bf16.msra.mxu0 0
        %5482 = vmatpush.bf16.msra.mxu0 0
        %5483 = vmatpush.bf16.msra.mxu0 0
        %5484 = vmatpush.bf16.msra.mxu0 0
        %5485 = vmatpush.bf16.msra.mxu0 0
        %5486 = vmatpush.bf16.msra.mxu0 0
        %5487 = vmatpush.bf16.msra.mxu0 0
        %5488 = vmatpush.bf16.msra.mxu0 %v5479
        %5489 = vmatmul.bf16.gmra.mxu0 %v5476
        %v5490 = vpop.f32.mrf.mxu0
        %v5491 = vadd.f32 0.0, %v5490
        %v5492 = vpop.f32.mrf.mxu0
        %5493 = vdwg.mxu0
        %v5494 = vpack.c.bf16 %v5365, %v5344
        %v5495 = vpack.c.bf16 %v5407, %v5386
        %v5496 = vpack.c.bf16 %v5449, %v5428
        %v5497 = vpack.c.bf16 %v5491, %v5470
        %v5498 = vpack.c.b16 %v3439, %v3439
        %5499 = vrot.lane.b32.xlu0 %v5498, 32
        %v5500 = vpop.permute.xlu0 %5499
        %v5502 = vsel %vm764, %v5494, 0
        %v5505 = vsel %vm764, %v5495, 0
        %v5508 = vsel %vm764, %v5496, 0
        %v5511 = vsel %vm764, %v5497, 0
        %v5514 = vsel %vm1053, %v5500, 0
        %5516 = vmatpush.bf16.msra.mxu0 0
        %5517 = vmatpush.bf16.msra.mxu0 0
        %5518 = vmatpush.bf16.msra.mxu0 0
        %5519 = vmatpush.bf16.msra.mxu0 0
        %5520 = vmatpush.bf16.msra.mxu0 0
        %5521 = vmatpush.bf16.msra.mxu0 0
        %5522 = vmatpush.bf16.msra.mxu0 0
        %5523 = vmatpush.bf16.msra.mxu0 %v5514
        %5524 = vmatmul.bf16.gmra.mxu0 %v5502
        %v5525 = vpop.f32.mrf.mxu0
        %v5526 = vadd.f32 0.0, %v5525
        %v5527 = vpop.f32.mrf.mxu0
        %v5528 = vadd.f32 0.0, %v5527
        %5529 = vmatmul.bf16.gmra.mxu0 %v5505
        %v5530 = vpop.f32.mrf.mxu0
        %v5531 = vadd.f32 0.0, %v5530
        %v5532 = vpop.f32.mrf.mxu0
        %v5533 = vadd.f32 0.0, %v5532
        %5534 = vmatmul.bf16.gmra.mxu0 %v5508
        %v5535 = vpop.f32.mrf.mxu0
        %v5536 = vadd.f32 0.0, %v5535
        %v5537 = vpop.f32.mrf.mxu0
        %v5538 = vadd.f32 0.0, %v5537
        %5539 = vmatmul.bf16.gmra.mxu0 %v5511
        %v5540 = vpop.f32.mrf.mxu0
        %v5541 = vadd.f32 0.0, %v5540
        %v5542 = vpop.f32.mrf.mxu0
        %v5543 = vadd.f32 0.0, %v5542
        %5544 = vdwg.mxu0
        %v5545 = vadd.f32 %v5038, %v5526
        %v5546 = vadd.f32 %v5039, %v5528
        %v5547 = vadd.f32 %v5040, %v5531
        %v5548 = vadd.f32 %v5041, %v5533
        %v5549 = vadd.f32 %v5042, %v5536
        %v5550 = vadd.f32 %v5043, %v5538
        %v5551 = vadd.f32 %v5044, %v5541
        %v5552 = vadd.f32 %v5045, %v5543
        %5553 = vrot.lane.b32.xlu0 %v3430, 32
        %v5554 = vpop.permute.xlu0 %5553
        %v5556 = vadd.f32 %v5545, %v5554
        %v5557 = vadd.f32 %v5546, %v5554
        %v5558 = vadd.f32 %v5547, %v5554
        %v5559 = vadd.f32 %v5548, %v5554
        %v5560 = vadd.f32 %v5549, %v5554
        %v5561 = vadd.f32 %v5550, %v5554
        %v5562 = vadd.f32 %v5551, %v5554
        %v5563 = vadd.f32 %v5552, %v5554
        %v5564 = vadd.f32 %v3417, %v5556
        %v5565 = vadd.f32 %v3418, %v5557
        %v5566 = vadd.f32 %v3419, %v5558
        %v5567 = vadd.f32 %v3420, %v5559
        %v5568 = vadd.f32 %v3421, %v5560
        %v5569 = vadd.f32 %v3422, %v5561
        %v5570 = vadd.f32 %v3423, %v5562
        %v5571 = vadd.f32 %v3424, %v5563
        %v5572 = vsel %vm433, %v5564, 0.0
        %5573 = vadd.xlane.f32.xlu0 %v5572
        %v5574 = vpop.xlane.xlu0 %5573
        %v5575 = vsel %vm433, %v5565, 0.0
        %5576 = vadd.xlane.f32.xlu0 %v5575
        %v5577 = vpop.xlane.xlu0 %5576
        %v5578 = vsel %vm433, %v5566, 0.0
        %5579 = vadd.xlane.f32.xlu0 %v5578
        %v5580 = vpop.xlane.xlu0 %5579
        %v5581 = vsel %vm433, %v5567, 0.0
        %5582 = vadd.xlane.f32.xlu0 %v5581
        %v5583 = vpop.xlane.xlu0 %5582
        %v5584 = vsel %vm433, %v5568, 0.0
        %5585 = vadd.xlane.f32.xlu0 %v5584
        %v5586 = vpop.xlane.xlu0 %5585
        %v5587 = vsel %vm433, %v5569, 0.0
        %5588 = vadd.xlane.f32.xlu0 %v5587
        %v5589 = vpop.xlane.xlu0 %5588
        %v5590 = vsel %vm433, %v5570, 0.0
        %5591 = vadd.xlane.f32.xlu0 %v5590
        %v5592 = vpop.xlane.xlu0 %5591
        %v5593 = vsel %vm433, %v5571, 0.0
        %5594 = vadd.xlane.f32.xlu0 %v5593
        %v5595 = vpop.xlane.xlu0 %5594
        %v5596 = vmul.f32 %v5574, %v464
        %v5597 = vmul.f32 %v5577, %v464
        %v5598 = vmul.f32 %v5580, %v464
        %v5599 = vmul.f32 %v5583, %v464
        %v5600 = vmul.f32 %v5586, %v464
        %v5601 = vmul.f32 %v5589, %v464
        %v5602 = vmul.f32 %v5592, %v464
        %v5603 = vmul.f32 %v5595, %v464
        %v5604 = vsub.f32 %v5564, %v5596
        %v5605 = vsub.f32 %v5565, %v5597
        %v5606 = vsub.f32 %v5566, %v5598
        %v5607 = vsub.f32 %v5567, %v5599
        %v5608 = vsub.f32 %v5568, %v5600
        %v5609 = vsub.f32 %v5569, %v5601
        %v5610 = vsub.f32 %v5570, %v5602
        %v5611 = vsub.f32 %v5571, %v5603
        %v5612 = vmul.f32 %v5604, %v5604
        %v5613 = vmul.f32 %v5605, %v5605
        %v5614 = vmul.f32 %v5606, %v5606
        %v5615 = vmul.f32 %v5607, %v5607
        %v5616 = vmul.f32 %v5608, %v5608
        %v5617 = vmul.f32 %v5609, %v5609
        %v5618 = vmul.f32 %v5610, %v5610
        %v5619 = vmul.f32 %v5611, %v5611
        %v5620 = vsel %vm433, %v5612, 0.0
        %5621 = vadd.xlane.f32.xlu0 %v5620
        %v5622 = vpop.xlane.xlu0 %5621
        %v5623 = vsel %vm433, %v5613, 0.0
        %5624 = vadd.xlane.f32.xlu0 %v5623
        %v5625 = vpop.xlane.xlu0 %5624
        %v5626 = vsel %vm433, %v5614, 0.0
        %5627 = vadd.xlane.f32.xlu0 %v5626
        %v5628 = vpop.xlane.xlu0 %5627
        %v5629 = vsel %vm433, %v5615, 0.0
        %5630 = vadd.xlane.f32.xlu0 %v5629
        %v5631 = vpop.xlane.xlu0 %5630
        %v5632 = vsel %vm433, %v5616, 0.0
        %5633 = vadd.xlane.f32.xlu0 %v5632
        %v5634 = vpop.xlane.xlu0 %5633
        %v5635 = vsel %vm433, %v5617, 0.0
        %5636 = vadd.xlane.f32.xlu0 %v5635
        %v5637 = vpop.xlane.xlu0 %5636
        %v5638 = vsel %vm433, %v5618, 0.0
        %5639 = vadd.xlane.f32.xlu0 %v5638
        %v5640 = vpop.xlane.xlu0 %5639
        %v5641 = vsel %vm433, %v5619, 0.0
        %5642 = vadd.xlane.f32.xlu0 %v5641
        %v5643 = vpop.xlane.xlu0 %5642
        %v5644 = vmul.f32 %v5622, %v464
        %v5645 = vmul.f32 %v5625, %v464
        %v5646 = vmul.f32 %v5628, %v464
        %v5647 = vmul.f32 %v5631, %v464
        %v5648 = vmul.f32 %v5634, %v464
        %v5649 = vmul.f32 %v5637, %v464
        %v5650 = vmul.f32 %v5640, %v464
        %v5651 = vmul.f32 %v5643, %v464
        %v5652 = vadd.f32 %v5644, 1e-12
        %v5653 = vadd.f32 %v5645, 1e-12
        %v5654 = vadd.f32 %v5646, 1e-12
        %v5655 = vadd.f32 %v5647, 1e-12
        %v5656 = vadd.f32 %v5648, 1e-12
        %v5657 = vadd.f32 %v5649, 1e-12
        %v5658 = vadd.f32 %v5650, 1e-12
        %v5659 = vadd.f32 %v5651, 1e-12
        %v5660 = vrsqrt.pop %v5652
        %v5661 = vmul.f32 %v5660, %v5652
        %v5662 = vmul.f32 %v5661, %v5660
        %v5663 = vmul.f32 0.5, %v5662
        %v5664 = vsub.f32 1.5, %v5663
        %v5665 = vmul.f32 %v5660, %v5664
        %vm5666 = vweird.f32 %v5652
        %vm5667 = vweird.f32 %v5660
        %vm5668 = vmor %vm5666, %vm5667
        %v5669 = vsel %vm5668, %v5660, %v5665
        %v5670 = vrsqrt.pop %v5653
        %v5671 = vmul.f32 %v5670, %v5653
        %v5672 = vmul.f32 %v5671, %v5670
        %v5673 = vmul.f32 0.5, %v5672
        %v5674 = vsub.f32 1.5, %v5673
        %v5675 = vmul.f32 %v5670, %v5674
        %vm5676 = vweird.f32 %v5653
        %vm5677 = vweird.f32 %v5670
        %vm5678 = vmor %vm5676, %vm5677
        %v5679 = vsel %vm5678, %v5670, %v5675
        %v5680 = vrsqrt.pop %v5654
        %v5681 = vmul.f32 %v5680, %v5654
        %v5682 = vmul.f32 %v5681, %v5680
        %v5683 = vmul.f32 0.5, %v5682
        %v5684 = vsub.f32 1.5, %v5683
        %v5685 = vmul.f32 %v5680, %v5684
        %vm5686 = vweird.f32 %v5654
        %vm5687 = vweird.f32 %v5680
        %vm5688 = vmor %vm5686, %vm5687
        %v5689 = vsel %vm5688, %v5680, %v5685
        %v5690 = vrsqrt.pop %v5655
        %v5691 = vmul.f32 %v5690, %v5655
        %v5692 = vmul.f32 %v5691, %v5690
        %v5693 = vmul.f32 0.5, %v5692
        %v5694 = vsub.f32 1.5, %v5693
        %v5695 = vmul.f32 %v5690, %v5694
        %vm5696 = vweird.f32 %v5655
        %vm5697 = vweird.f32 %v5690
        %vm5698 = vmor %vm5696, %vm5697
        %v5699 = vsel %vm5698, %v5690, %v5695
        %v5700 = vrsqrt.pop %v5656
        %v5701 = vmul.f32 %v5700, %v5656
        %v5702 = vmul.f32 %v5701, %v5700
        %v5703 = vmul.f32 0.5, %v5702
        %v5704 = vsub.f32 1.5, %v5703
        %v5705 = vmul.f32 %v5700, %v5704
        %vm5706 = vweird.f32 %v5656
        %vm5707 = vweird.f32 %v5700
        %vm5708 = vmor %vm5706, %vm5707
        %v5709 = vsel %vm5708, %v5700, %v5705
        %v5710 = vrsqrt.pop %v5657
        %v5711 = vmul.f32 %v5710, %v5657
        %v5712 = vmul.f32 %v5711, %v5710
        %v5713 = vmul.f32 0.5, %v5712
        %v5714 = vsub.f32 1.5, %v5713
        %v5715 = vmul.f32 %v5710, %v5714
        %vm5716 = vweird.f32 %v5657
        %vm5717 = vweird.f32 %v5710
        %vm5718 = vmor %vm5716, %vm5717
        %v5719 = vsel %vm5718, %v5710, %v5715
        %v5720 = vrsqrt.pop %v5658
        %v5721 = vmul.f32 %v5720, %v5658
        %v5722 = vmul.f32 %v5721, %v5720
        %v5723 = vmul.f32 0.5, %v5722
        %v5724 = vsub.f32 1.5, %v5723
        %v5725 = vmul.f32 %v5720, %v5724
        %vm5726 = vweird.f32 %v5658
        %vm5727 = vweird.f32 %v5720
        %vm5728 = vmor %vm5726, %vm5727
        %v5729 = vsel %vm5728, %v5720, %v5725
        %v5730 = vrsqrt.pop %v5659
        %v5731 = vmul.f32 %v5730, %v5659
        %v5732 = vmul.f32 %v5731, %v5730
        %v5733 = vmul.f32 0.5, %v5732
        %v5734 = vsub.f32 1.5, %v5733
        %v5735 = vmul.f32 %v5730, %v5734
        %vm5736 = vweird.f32 %v5659
        %vm5737 = vweird.f32 %v5730
        %vm5738 = vmor %vm5736, %vm5737
        %v5739 = vsel %vm5738, %v5730, %v5735
        %v5740 = vmul.f32 %v5604, %v5669
        %v5741 = vmul.f32 %v5605, %v5679
        %v5742 = vmul.f32 %v5606, %v5689
        %v5743 = vmul.f32 %v5607, %v5699
        %v5744 = vmul.f32 %v5608, %v5709
        %v5745 = vmul.f32 %v5609, %v5719
        %v5746 = vmul.f32 %v5610, %v5729
        %v5747 = vmul.f32 %v5611, %v5739
        %v5748 = vperm.slane %v431, 0
        %v5749 = vmul.f32 %v5740, %v5748
        %v5750 = vmul.f32 %v5741, %v5748
        %v5751 = vmul.f32 %v5742, %v5748
        %v5752 = vmul.f32 %v5743, %v5748
        %v5753 = vmul.f32 %v5744, %v5748
        %v5754 = vmul.f32 %v5745, %v5748
        %v5755 = vmul.f32 %v5746, %v5748
        %v5756 = vmul.f32 %v5747, %v5748
        %v5757 = vperm.slane %v431, 1
        %v5758 = vadd.f32 %v5749, %v5757
        %v5759 = vadd.f32 %v5750, %v5757
        %v5760 = vadd.f32 %v5751, %v5757
        %v5761 = vadd.f32 %v5752, %v5757
        %v5762 = vadd.f32 %v5753, %v5757
        %v5763 = vadd.f32 %v5754, %v5757
        %v5764 = vadd.f32 %v5755, %v5757
        %v5765 = vadd.f32 %v5756, %v5757
        %v5766 = vpack.c.bf16 %v5759, %v5758
        %v5767 = vpack.c.bf16 %v5761, %v5760
        %v5768 = vpack.c.bf16 %v5763, %v5762
        %v5769 = vpack.c.bf16 %v5765, %v5764
        %v5771 = vperm.slane %v409, 0
        %v5777 = vunpack.c.l.b16 %v404
        %v5778 = vunpack.c.l.b16 %v405
        %v5779 = vunpack.c.l.b16 %v406
        %v5780 = vunpack.c.l.b16 %v407
        %v5781 = vpack.c.b16 %v5778, %v5777
        %v5782 = vpack.c.b16 %v5780, %v5779
        %v5786 = vsel %vm433, %v5766, 0
        %v5789 = vsel %vm433, %v5767, 0
        %v5792 = vsel %vm433, %v5768, 0
        %v5795 = vsel %vm433, %v5769, 0
        %5797 = vmatpush.bf16.msra.mxu0 0
        %5798 = vmatpush.bf16.msra.mxu0 0
        %5799 = vmatpush.bf16.msra.mxu0 0
        %5800 = vmatpush.bf16.msra.mxu0 0
        %5801 = vmatpush.bf16.msra.mxu0 0
        %5802 = vmatpush.bf16.msra.mxu0 0
        %5803 = vmatpush.bf16.msra.mxu0 %v5782
        %5804 = vmatpush.bf16.msra.mxu0 %v5781
        %5805 = vmatmul.bf16.gmra.mxu0 %v5786
        %v5806 = vpop.f32.mrf.mxu0
        %v5807 = vadd.f32 %v5771, %v5806
        %v5808 = vpop.f32.mrf.mxu0
        %v5809 = vadd.f32 %v5771, %v5808
        %5810 = vmatmul.bf16.gmra.mxu0 %v5789
        %v5811 = vpop.f32.mrf.mxu0
        %v5812 = vadd.f32 %v5771, %v5811
        %v5813 = vpop.f32.mrf.mxu0
        %v5814 = vadd.f32 %v5771, %v5813
        %5815 = vmatmul.bf16.gmra.mxu0 %v5792
        %v5816 = vpop.f32.mrf.mxu0
        %v5817 = vadd.f32 %v5771, %v5816
        %v5818 = vpop.f32.mrf.mxu0
        %v5819 = vadd.f32 %v5771, %v5818
        %5820 = vmatmul.bf16.gmra.mxu0 %v5795
        %v5821 = vpop.f32.mrf.mxu0
        %v5822 = vadd.f32 %v5771, %v5821
        %v5823 = vpop.f32.mrf.mxu0
        %v5824 = vadd.f32 %v5771, %v5823
        %5825 = vdwg.mxu0
        %v5826 = vmul.f32 %v5807, %v5807
        %v5827 = vmul.f32 %v5809, %v5809
        %v5828 = vmul.f32 %v5812, %v5812
        %v5829 = vmul.f32 %v5814, %v5814
        %v5830 = vmul.f32 %v5817, %v5817
        %v5831 = vmul.f32 %v5819, %v5819
        %v5832 = vmul.f32 %v5822, %v5822
        %v5833 = vmul.f32 %v5824, %v5824
        %v5834 = vmul.f32 %v5807, %v5826
        %v5835 = vmul.f32 %v5809, %v5827
        %v5836 = vmul.f32 %v5812, %v5828
        %v5837 = vmul.f32 %v5814, %v5829
        %v5838 = vmul.f32 %v5817, %v5830
        %v5839 = vmul.f32 %v5819, %v5831
        %v5840 = vmul.f32 %v5822, %v5832
        %v5841 = vmul.f32 %v5824, %v5833
        %v5842 = vmul.f32 %v5834, 0.044715
        %v5843 = vmul.f32 %v5835, 0.044715
        %v5844 = vmul.f32 %v5836, 0.044715
        %v5845 = vmul.f32 %v5837, 0.044715
        %v5846 = vmul.f32 %v5838, 0.044715
        %v5847 = vmul.f32 %v5839, 0.044715
        %v5848 = vmul.f32 %v5840, 0.044715
        %v5849 = vmul.f32 %v5841, 0.044715
        %v5850 = vadd.f32 %v5807, %v5842
        %v5851 = vadd.f32 %v5809, %v5843
        %v5852 = vadd.f32 %v5812, %v5844
        %v5853 = vadd.f32 %v5814, %v5845
        %v5854 = vadd.f32 %v5817, %v5846
        %v5855 = vadd.f32 %v5819, %v5847
        %v5856 = vadd.f32 %v5822, %v5848
        %v5857 = vadd.f32 %v5824, %v5849
        %v5858 = vmul.f32 %v5850, 0.7978846
        %v5859 = vmul.f32 %v5851, 0.7978846
        %v5860 = vmul.f32 %v5852, 0.7978846
        %v5861 = vmul.f32 %v5853, 0.7978846
        %v5862 = vmul.f32 %v5854, 0.7978846
        %v5863 = vmul.f32 %v5855, 0.7978846
        %v5864 = vmul.f32 %v5856, 0.7978846
        %v5865 = vmul.f32 %v5857, 0.7978846
        %v5866 = vtanh.pop %v5858
        %v5867 = vtanh.pop %v5859
        %v5868 = vtanh.pop %v5860
        %v5869 = vtanh.pop %v5861
        %v5870 = vtanh.pop %v5862
        %v5871 = vtanh.pop %v5863
        %v5872 = vtanh.pop %v5864
        %v5873 = vtanh.pop %v5865
        %v5874 = vadd.f32 %v5866, 1.0
        %v5875 = vadd.f32 %v5867, 1.0
        %v5876 = vadd.f32 %v5868, 1.0
        %v5877 = vadd.f32 %v5869, 1.0
        %v5878 = vadd.f32 %v5870, 1.0
        %v5879 = vadd.f32 %v5871, 1.0
        %v5880 = vadd.f32 %v5872, 1.0
        %v5881 = vadd.f32 %v5873, 1.0
        %v5882 = vmul.f32 %v5874, 0.5
        %v5883 = vmul.f32 %v5875, 0.5
        %v5884 = vmul.f32 %v5876, 0.5
        %v5885 = vmul.f32 %v5877, 0.5
        %v5886 = vmul.f32 %v5878, 0.5
        %v5887 = vmul.f32 %v5879, 0.5
        %v5888 = vmul.f32 %v5880, 0.5
        %v5889 = vmul.f32 %v5881, 0.5
        %v5890 = vmul.f32 %v5807, %v5882
        %v5891 = vmul.f32 %v5809, %v5883
        %v5892 = vmul.f32 %v5812, %v5884
        %v5893 = vmul.f32 %v5814, %v5885
        %v5894 = vmul.f32 %v5817, %v5886
        %v5895 = vmul.f32 %v5819, %v5887
        %v5896 = vmul.f32 %v5822, %v5888
        %v5897 = vmul.f32 %v5824, %v5889
        %v5898 = vpack.c.bf16 %v5891, %v5890
        %v5899 = vpack.c.bf16 %v5893, %v5892
        %v5900 = vpack.c.bf16 %v5895, %v5894
        %v5901 = vpack.c.bf16 %v5897, %v5896
        %v5903 = vperm.slane %v427, 0
        %v5913 = vunpack.c.l.b16 %v418
        %v5914 = vunpack.c.l.b16 %v419
        %v5915 = vunpack.c.l.b16 %v420
        %v5916 = vunpack.c.l.b16 %v421
        %v5917 = vunpack.c.l.b16 %v422
        %v5918 = vunpack.c.l.b16 %v423
        %v5919 = vunpack.c.l.b16 %v424
        %v5920 = vunpack.c.l.b16 %v425
        %v5921 = vpack.c.b16 %v5914, %v5913
        %v5922 = vpack.c.b16 %v5916, %v5915
        %v5923 = vpack.c.b16 %v5918, %v5917
        %v5924 = vpack.c.b16 %v5920, %v5919
        %v5930 = vsel %vm3181, %v5898, 0
        %v5933 = vsel %vm3181, %v5899, 0
        %v5936 = vsel %vm3181, %v5900, 0
        %v5939 = vsel %vm3181, %v5901, 0
        %5941 = vmatpush.bf16.msra.mxu0 0
        %5942 = vmatpush.bf16.msra.mxu0 0
        %5943 = vmatpush.bf16.msra.mxu0 0
        %5944 = vmatpush.bf16.msra.mxu0 0
        %5945 = vmatpush.bf16.msra.mxu0 %v5924
        %5946 = vmatpush.bf16.msra.mxu0 %v5923
        %5947 = vmatpush.bf16.msra.mxu0 %v5922
        %5948 = vmatpush.bf16.msra.mxu0 %v5921
        %5949 = vmatmul.bf16.gmra.mxu0 %v5930
        %v5950 = vpop.f32.mrf.mxu0
        %v5951 = vadd.f32 %v5903, %v5950
        %v5952 = vpop.f32.mrf.mxu0
        %v5953 = vadd.f32 %v5903, %v5952
        %5954 = vmatmul.bf16.gmra.mxu0 %v5933
        %v5955 = vpop.f32.mrf.mxu0
        %v5956 = vadd.f32 %v5903, %v5955
        %v5957 = vpop.f32.mrf.mxu0
        %v5958 = vadd.f32 %v5903, %v5957
        %5959 = vmatmul.bf16.gmra.mxu0 %v5936
        %v5960 = vpop.f32.mrf.mxu0
        %v5961 = vadd.f32 %v5903, %v5960
        %v5962 = vpop.f32.mrf.mxu0
        %v5963 = vadd.f32 %v5903, %v5962
        %5964 = vmatmul.bf16.gmra.mxu0 %v5939
        %v5965 = vpop.f32.mrf.mxu0
        %v5966 = vadd.f32 %v5903, %v5965
        %v5967 = vpop.f32.mrf.mxu0
        %v5968 = vadd.f32 %v5903, %v5967
        %5969 = vdwg.mxu0
        %v5970 = vadd.f32 %v5758, %v5951
        %v5971 = vadd.f32 %v5759, %v5953
        %v5972 = vadd.f32 %v5760, %v5956
        %v5973 = vadd.f32 %v5761, %v5958
        %v5974 = vadd.f32 %v5762, %v5961
        %v5975 = vadd.f32 %v5763, %v5963
        %v5976 = vadd.f32 %v5764, %v5966
        %v5977 = vadd.f32 %v5765, %v5968
        %v5978 = vsel %vm433, %v5970, 0.0
        %5979 = vadd.xlane.f32.xlu0 %v5978
        %v5980 = vpop.xlane.xlu0 %5979
        %v5981 = vsel %vm433, %v5971, 0.0
        %5982 = vadd.xlane.f32.xlu0 %v5981
        %v5983 = vpop.xlane.xlu0 %5982
        %v5984 = vsel %vm433, %v5972, 0.0
        %5985 = vadd.xlane.f32.xlu0 %v5984
        %v5986 = vpop.xlane.xlu0 %5985
        %v5987 = vsel %vm433, %v5973, 0.0
        %5988 = vadd.xlane.f32.xlu0 %v5987
        %v5989 = vpop.xlane.xlu0 %5988
        %v5990 = vsel %vm433, %v5974, 0.0
        %5991 = vadd.xlane.f32.xlu0 %v5990
        %v5992 = vpop.xlane.xlu0 %5991
        %v5993 = vsel %vm433, %v5975, 0.0
        %5994 = vadd.xlane.f32.xlu0 %v5993
        %v5995 = vpop.xlane.xlu0 %5994
        %v5996 = vsel %vm433, %v5976, 0.0
        %5997 = vadd.xlane.f32.xlu0 %v5996
        %v5998 = vpop.xlane.xlu0 %5997
        %v5999 = vsel %vm433, %v5977, 0.0
        %6000 = vadd.xlane.f32.xlu0 %v5999
        %v6001 = vpop.xlane.xlu0 %6000
        %v6002 = vmul.f32 %v5980, %v464
        %v6003 = vmul.f32 %v5983, %v464
        %v6004 = vmul.f32 %v5986, %v464
        %v6005 = vmul.f32 %v5989, %v464
        %v6006 = vmul.f32 %v5992, %v464
        %v6007 = vmul.f32 %v5995, %v464
        %v6008 = vmul.f32 %v5998, %v464
        %v6009 = vmul.f32 %v6001, %v464
        %v6010 = vsub.f32 %v5970, %v6002
        %v6011 = vsub.f32 %v5971, %v6003
        %v6012 = vsub.f32 %v5972, %v6004
        %v6013 = vsub.f32 %v5973, %v6005
        %v6014 = vsub.f32 %v5974, %v6006
        %v6015 = vsub.f32 %v5975, %v6007
        %v6016 = vsub.f32 %v5976, %v6008
        %v6017 = vsub.f32 %v5977, %v6009
        %v6018 = vmul.f32 %v6010, %v6010
        %v6019 = vmul.f32 %v6011, %v6011
        %v6020 = vmul.f32 %v6012, %v6012
        %v6021 = vmul.f32 %v6013, %v6013
        %v6022 = vmul.f32 %v6014, %v6014
        %v6023 = vmul.f32 %v6015, %v6015
        %v6024 = vmul.f32 %v6016, %v6016
        %v6025 = vmul.f32 %v6017, %v6017
        %v6026 = vsel %vm433, %v6018, 0.0
        %6027 = vadd.xlane.f32.xlu0 %v6026
        %v6028 = vpop.xlane.xlu0 %6027
        %v6029 = vsel %vm433, %v6019, 0.0
        %6030 = vadd.xlane.f32.xlu0 %v6029
        %v6031 = vpop.xlane.xlu0 %6030
        %v6032 = vsel %vm433, %v6020, 0.0
        %6033 = vadd.xlane.f32.xlu0 %v6032
        %v6034 = vpop.xlane.xlu0 %6033
        %v6035 = vsel %vm433, %v6021, 0.0
        %6036 = vadd.xlane.f32.xlu0 %v6035
        %v6037 = vpop.xlane.xlu0 %6036
        %v6038 = vsel %vm433, %v6022, 0.0
        %6039 = vadd.xlane.f32.xlu0 %v6038
        %v6040 = vpop.xlane.xlu0 %6039
        %v6041 = vsel %vm433, %v6023, 0.0
        %6042 = vadd.xlane.f32.xlu0 %v6041
        %v6043 = vpop.xlane.xlu0 %6042
        %v6044 = vsel %vm433, %v6024, 0.0
        %6045 = vadd.xlane.f32.xlu0 %v6044
        %v6046 = vpop.xlane.xlu0 %6045
        %v6047 = vsel %vm433, %v6025, 0.0
        %6048 = vadd.xlane.f32.xlu0 %v6047
        %v6049 = vpop.xlane.xlu0 %6048
        %v6050 = vmul.f32 %v6028, %v464
        %v6051 = vmul.f32 %v6031, %v464
        %v6052 = vmul.f32 %v6034, %v464
        %v6053 = vmul.f32 %v6037, %v464
        %v6054 = vmul.f32 %v6040, %v464
        %v6055 = vmul.f32 %v6043, %v464
        %v6056 = vmul.f32 %v6046, %v464
        %v6057 = vmul.f32 %v6049, %v464
        %v6058 = vadd.f32 %v6050, 1e-12
        %v6059 = vadd.f32 %v6051, 1e-12
        %v6060 = vadd.f32 %v6052, 1e-12
        %v6061 = vadd.f32 %v6053, 1e-12
        %v6062 = vadd.f32 %v6054, 1e-12
        %v6063 = vadd.f32 %v6055, 1e-12
        %v6064 = vadd.f32 %v6056, 1e-12
        %v6065 = vadd.f32 %v6057, 1e-12
        %v6066 = vrsqrt.pop %v6058
        %v6067 = vmul.f32 %v6066, %v6058
        %v6068 = vmul.f32 %v6067, %v6066
        %v6069 = vmul.f32 0.5, %v6068
        %v6070 = vsub.f32 1.5, %v6069
        %v6071 = vmul.f32 %v6066, %v6070
        %vm6072 = vweird.f32 %v6058
        %vm6073 = vweird.f32 %v6066
        %vm6074 = vmor %vm6072, %vm6073
        %v6075 = vsel %vm6074, %v6066, %v6071
        %v6076 = vrsqrt.pop %v6059
        %v6077 = vmul.f32 %v6076, %v6059
        %v6078 = vmul.f32 %v6077, %v6076
        %v6079 = vmul.f32 0.5, %v6078
        %v6080 = vsub.f32 1.5, %v6079
        %v6081 = vmul.f32 %v6076, %v6080
        %vm6082 = vweird.f32 %v6059
        %vm6083 = vweird.f32 %v6076
        %vm6084 = vmor %vm6082, %vm6083
        %v6085 = vsel %vm6084, %v6076, %v6081
        %v6086 = vrsqrt.pop %v6060
        %v6087 = vmul.f32 %v6086, %v6060
        %v6088 = vmul.f32 %v6087, %v6086
        %v6089 = vmul.f32 0.5, %v6088
        %v6090 = vsub.f32 1.5, %v6089
        %v6091 = vmul.f32 %v6086, %v6090
        %vm6092 = vweird.f32 %v6060
        %vm6093 = vweird.f32 %v6086
        %vm6094 = vmor %vm6092, %vm6093
        %v6095 = vsel %vm6094, %v6086, %v6091
        %v6096 = vrsqrt.pop %v6061
        %v6097 = vmul.f32 %v6096, %v6061
        %v6098 = vmul.f32 %v6097, %v6096
        %v6099 = vmul.f32 0.5, %v6098
        %v6100 = vsub.f32 1.5, %v6099
        %v6101 = vmul.f32 %v6096, %v6100
        %vm6102 = vweird.f32 %v6061
        %vm6103 = vweird.f32 %v6096
        %vm6104 = vmor %vm6102, %vm6103
        %v6105 = vsel %vm6104, %v6096, %v6101
        %v6106 = vrsqrt.pop %v6062
        %v6107 = vmul.f32 %v6106, %v6062
        %v6108 = vmul.f32 %v6107, %v6106
        %v6109 = vmul.f32 0.5, %v6108
        %v6110 = vsub.f32 1.5, %v6109
        %v6111 = vmul.f32 %v6106, %v6110
        %vm6112 = vweird.f32 %v6062
        %vm6113 = vweird.f32 %v6106
        %vm6114 = vmor %vm6112, %vm6113
        %v6115 = vsel %vm6114, %v6106, %v6111
        %v6116 = vrsqrt.pop %v6063
        %v6117 = vmul.f32 %v6116, %v6063
        %v6118 = vmul.f32 %v6117, %v6116
        %v6119 = vmul.f32 0.5, %v6118
        %v6120 = vsub.f32 1.5, %v6119
        %v6121 = vmul.f32 %v6116, %v6120
        %vm6122 = vweird.f32 %v6063
        %vm6123 = vweird.f32 %v6116
        %vm6124 = vmor %vm6122, %vm6123
        %v6125 = vsel %vm6124, %v6116, %v6121
        %v6126 = vrsqrt.pop %v6064
        %v6127 = vmul.f32 %v6126, %v6064
        %v6128 = vmul.f32 %v6127, %v6126
        %v6129 = vmul.f32 0.5, %v6128
        %v6130 = vsub.f32 1.5, %v6129
        %v6131 = vmul.f32 %v6126, %v6130
        %vm6132 = vweird.f32 %v6064
        %vm6133 = vweird.f32 %v6126
        %vm6134 = vmor %vm6132, %vm6133
        %v6135 = vsel %vm6134, %v6126, %v6131
        %v6136 = vrsqrt.pop %v6065
        %v6137 = vmul.f32 %v6136, %v6065
        %v6138 = vmul.f32 %v6137, %v6136
        %v6139 = vmul.f32 0.5, %v6138
        %v6140 = vsub.f32 1.5, %v6139
        %v6141 = vmul.f32 %v6136, %v6140
        %vm6142 = vweird.f32 %v6065
        %vm6143 = vweird.f32 %v6136
        %vm6144 = vmor %vm6142, %vm6143
        %v6145 = vsel %vm6144, %v6136, %v6141
        %v6146 = vmul.f32 %v6010, %v6075
        %v6147 = vmul.f32 %v6011, %v6085
        %v6148 = vmul.f32 %v6012, %v6095
        %v6149 = vmul.f32 %v6013, %v6105
        %v6150 = vmul.f32 %v6014, %v6115
        %v6151 = vmul.f32 %v6015, %v6125
        %v6152 = vmul.f32 %v6016, %v6135
        %v6153 = vmul.f32 %v6017, %v6145
        %v6154 = vperm.slane %v432, 0
        %v6155 = vmul.f32 %v6146, %v6154
        %v6156 = vmul.f32 %v6147, %v6154
        %v6157 = vmul.f32 %v6148, %v6154
        %v6158 = vmul.f32 %v6149, %v6154
        %v6159 = vmul.f32 %v6150, %v6154
        %v6160 = vmul.f32 %v6151, %v6154
        %v6161 = vmul.f32 %v6152, %v6154
        %v6162 = vmul.f32 %v6153, %v6154
        %v6163 = vperm.slane %v432, 1
        %v6164 = vadd.f32 %v6155, %v6163
        %v6165 = vadd.f32 %v6156, %v6163
        %v6166 = vadd.f32 %v6157, %v6163
        %v6167 = vadd.f32 %v6158, %v6163
        %v6168 = vadd.f32 %v6159, %v6163
        %v6169 = vadd.f32 %v6160, %v6163
        %v6170 = vadd.f32 %v6161, %v6163
        %v6171 = vadd.f32 %v6162, %v6163
        %v6180 = vrot.slane %v6165, 7
        %vm6181 = vcmask 1041409
        %v6182 = vsel %vm6181, %v6180, %v6164
        %v6183 = vrot.slane %v6166, 6
        %vm6184 = vcmask 1042434
        %v6185 = vsel %vm6184, %v6183, %v6182
        %v6186 = vrot.slane %v6167, 5
        %vm6187 = vcmask 1043459
        %v6188 = vsel %vm6187, %v6186, %v6185
        %v6189 = vrot.slane %v6168, 4
        %vm6190 = vcmask 1044484
        %v6191 = vsel %vm6190, %v6189, %v6188
        %v6192 = vrot.slane %v6169, 3
        %vm6193 = vcmask 1045509
        %v6194 = vsel %vm6193, %v6192, %v6191
        %v6195 = vrot.slane %v6170, 2
        %vm6196 = vcmask 1046534
        %v6197 = vsel %vm6196, %v6195, %v6194
        %v6198 = vrot.slane %v6171, 1
        %vm6199 = vcmask 1047559
        %v6200 = vsel %vm6199, %v6198, %v6197
        %6202 = vst.msk [vmem:[%s366] sm:$0xff] %vm433, %v6200
        %s6203 = sand.u32 %s233, 1
        %s6204 = scalar_lea.sflag [#allocation4], %s6203
        %s6205 = sand.u32 %s233, 1
        %s6206 = smul.addr %s6205, 8
        %s6207 = scalar_lea.vmem [#allocation5], %s6206
        // Predicated region
        $region61: #{tpu_custom_call.1} parent=55 // pred_check
          %p6208 = pneg %p243
        $region62: #{tpu_custom_call.1} parent=55 // pred_check_branch
          %6210 = sbr.rel (%p6208) target = $region64
        $region63: #{tpu_custom_call.1} parent=55 // pred_region
          %6212 = vsyncadd %s6204, 0
          %s6213 = smul.addr %s26, 8
          %s6214 = scalar_lea.hbm %s9, %s6213
          %s6216 = sshll.u32 %s6207, 4
          %s6217 = int_to_ptr.vmem [resolvable:$true] %s6216
          %s6218 = sshll.u32 %s6214, 4
          %s6219 = int_to_ptr.hbm [resolvable:$true] %s6218
          %6221 = dma.vmem_to_hbm [thread:$0]  %s6217, 128, %s6219, %s6204
        $region64: #{tpu_custom_call.1} parent=55 // pred_fallthru
          _
      $region56: #{tpu_custom_call.1} parent=5 // pred_fallthru
        _
      %p6222 = scmp.le.s32.totalorder 2, %s21
      // Predicated region
      $region65: #{tpu_custom_call.1} parent=5 // pred_check
        %p6223 = pneg %p6222
      $region66: #{tpu_custom_call.1} parent=5 // pred_check_branch
        %6225 = sbr.rel (%p6223) target = $region68
      $region67: #{tpu_custom_call.1} parent=5 // pred_region
        %s6226 = ssub.s32 %s21, 2
        // Predicated region
        $region69: #{tpu_custom_call.1} parent=67 // pred_check
          %p6227 = pneg %p249
        $region70: #{tpu_custom_call.1} parent=67 // pred_check_branch
          %6229 = sbr.rel (%p6227) target = $region72
        $region71: #{tpu_custom_call.1} parent=67 // pred_region
          %s6230 = sand.u32 %s234, 1
          %s6231 = scalar_lea.sflag [#allocation4], %s6230
          %s6232 = sand.u32 %s234, 1
          %s6233 = smul.addr %s6232, 8
          %s6234 = scalar_lea.vmem [#allocation5], %s6233
          %6236 = dma.done %s6231, 128
        $region72: #{tpu_custom_call.1} parent=67 // pred_fallthru
          _
      $region68: #{tpu_custom_call.1} parent=5 // pred_fallthru
        _
    $region6: #{tpu_custom_call.1} parent=1 // loop_footer
      %s25 = sadd.s32 1, %s21
    $region7: #{tpu_custom_call.1} parent=1 // loop_footer_branch
      %20 = sbr.rel target = $region3
    $region8: #{tpu_custom_call.1} parent=1 // loop_exit
      _
    %6237 = vsyncpa [#allocation3], 1
    %s6238 = scalar_lea.sflag [#allocation3], 1
    %6239 = vsyncpa %s6238, 1
    %6240 = vsyncpa [#allocation4], 1
    %s6241 = scalar_lea.sflag [#allocation4], 1
    %6242 = vsyncpa %s6241, 1

</llo_original>
